<compile_context>
chip_gen: v5e
topology: v5e:2x2
jax: 0.10.0
libtpu: 0.0.40
codegen_flags: <defaults>
</compile_context>

<pallas_src>
import functools

import jax
import jax.numpy as jnp
from jax.experimental import pallas as pl
from jax.experimental.pallas import tpu as pltpu

LANE = 128              # pad Cout / K to multiples of the lane width
TILE_M_HARD_MAX = 4096  # upper bound on rows per grid step


def _round_up(x, m):
    return ((x + m - 1) // m) * m


def _vmem_budget_bytes():
    """~75% of physical VMEM: ~48 MiB on v7x (64 MiB), ~96 MiB on v5e/v6e."""
    try:
        cap = int(pltpu.get_tpu_info().vmem_capacity_bytes)
    except Exception:
        cap = 64 * 1024 * 1024
    return max(32 * 1024 * 1024, min((3 * cap) // 4, 100 * 1024 * 1024))


VMEM_BUDGET = _vmem_budget_bytes()


def _probe_buffered_1():
    """True iff pipeline_mode=pl.Buffered(1) is accepted by this jax/libtpu."""
    try:
        def _k(x_ref, o_ref):
            o_ref[...] = x_ref[...]

        spec = pl.BlockSpec((8, 128), lambda i: (0, 0),
                            pipeline_mode=pl.Buffered(1))
        out = pl.pallas_call(
            _k,
            out_shape=jax.ShapeDtypeStruct((8, 128), jnp.float32),
            grid=(1,),
            in_specs=[spec],
            out_specs=pl.BlockSpec((8, 128), lambda i: (0, 0)),
        )(jnp.zeros((8, 128), jnp.float32))
        jax.block_until_ready(out)
        return True
    except Exception:
        return False


# Probe runs eagerly at import (never under a jit trace).
_SINGLE_BUFFER_W = _probe_buffered_1()


# ----------------------------------------------------------------------------
# Kernel A: matmul + optional LeakyReLU / Sigmoid (layers without BatchNorm).
# Grid: (M tiles,), every tile independent -> "parallel".
# ----------------------------------------------------------------------------
def _conv_act_kernel(x_ref, w_ref, o_ref, *, use_lrelu, use_sigmoid, neg_slope):
    acc = jnp.dot(x_ref[...], w_ref[...], preferred_element_type=jnp.float32)
    if use_lrelu:
        acc = jnp.where(acc >= 0, acc, neg_slope * acc)
    if use_sigmoid:
        # Exact f32 sigmoid (keeps the final output strictly in [0, 1]).
        acc = 1.0 / (1.0 + jnp.exp(-acc))
    o_ref[...] = acc.astype(o_ref.dtype)


# ----------------------------------------------------------------------------
# Kernel B1 (BN pass 1): matmul, write bf16 conv output, and write PER-TILE
# partial sum / sum-of-squares (computed from the f32 accumulator) into the
# stats slab owned by this grid step (index_map i -> (i, 0)).  No cross-step
# accumulator -> the M axis stays "parallel" (v7x megacore-friendly).
# Zero-padded rows / channels contribute exactly 0 to both sums.
# ----------------------------------------------------------------------------
def _conv_stats_kernel(x_ref, w_ref, conv_ref, stats_ref):
    acc = jnp.dot(x_ref[...], w_ref[...], preferred_element_type=jnp.float32)
    conv_ref[...] = acc.astype(conv_ref.dtype)
    stats_ref[0:1, :] = jnp.sum(acc, axis=0, keepdims=True)
    stats_ref[1:2, :] = jnp.sum(acc * acc, axis=0, keepdims=True)
    # rows 2..7 of the slab are never read.


# ----------------------------------------------------------------------------
# Kernel B2 (BN pass 2): y = x*scale + shift (scale/shift precomputed from the
# reduced batch statistics in the wrapper) + LeakyReLU, tiled over M.
# ----------------------------------------------------------------------------
def _bn_lrelu_kernel(conv_ref, scale_ref, shift_ref, o_ref, *, neg_slope):
    x = conv_ref[...].astype(jnp.float32)
    y = x * scale_ref[...] + shift_ref[...]
    o_ref[...] = jnp.where(y >= 0, y, neg_slope * y).astype(o_ref.dtype)


# ----------------------------------------------------------------------------
# Tiling: largest M tile that fits the per-generation VMEM budget.
# ----------------------------------------------------------------------------
def _pick_tile_m(rows, k_pad, cout_pad, out_bytes, budget):
    """VMEM model per grid step: patches double-buffered (bf16), weights
    resident single-buffered (bf16), conv/output blocks double-buffered,
    plus fixed headroom for the stats slabs / scale vectors.  Prefers a
    tile that divides the true row count so no row padding (and no jnp.pad
    copy of the patch matrix) is needed."""
    w_bytes = k_pad * cout_pad * 2
    fixed = w_bytes + 256 * 1024
    per_row = 2 * k_pad * 2 + 4 * cout_pad * max(out_bytes, 2)
    avail = max(budget - fixed, 8 * per_row)
    # TODO(synk): if the resident weight alone approaches the budget (very
    # large conv_dim on v7x), switch to a K-tiled accumulator kernel instead
    # of shrinking tile_m further.
    cap = max(8, min(TILE_M_HARD_MAX, (avail // per_row) // 8 * 8))
    if rows % 8 == 0:
        t = min(cap, rows)
        while t > 8 and rows % t != 0:
            t -= 8
        return t, rows
    tile_m = min(cap, _round_up(rows, 8))
    return tile_m, _round_up(rows, tile_m)


# ----------------------------------------------------------------------------
# Layer wrapper: lane-dense padded shapes, grid over M, slice padding off.
# ----------------------------------------------------------------------------
def conv_layer(patches, w2d, gamma, beta, *, use_bn, use_lrelu, use_sigmoid,
               out_dtype=jnp.bfloat16):
    rows, k_dim = patches.shape          # rows == true N*Ho*Wo
    cout = w2d.shape[1]
    cout_pad = _round_up(cout, LANE)
    k_pad = _round_up(k_dim, LANE)       # == k_dim whenever Cin % 8 == 0
    out_bytes = jnp.dtype(out_dtype).itemsize

    tile_m, rows_pad = _pick_tile_m(rows, k_pad, cout_pad, out_bytes, VMEM_BUDGET)
    grid_m = rows_pad // tile_m

    # These pads are no-ops for every layer except the tiny final conv
    # (rows = N -> 8): Cin padding keeps K a multiple of 128 and tile_m
    # divides rows, so no full-size HBM copy of the patch matrix is made.
    if rows_pad != rows or k_pad != k_dim:
        patches = jnp.pad(patches, ((0, rows_pad - rows), (0, k_pad - k_dim)))
    patches = patches.astype(jnp.bfloat16)          # no-op: already bf16
    w_p = jnp.pad(w2d, ((0, k_pad - k_dim), (0, cout_pad - cout))
                  ).astype(jnp.bfloat16)

    x_spec = pl.BlockSpec((tile_m, k_pad), lambda i: (i, 0))
    o_spec = pl.BlockSpec((tile_m, cout_pad), lambda i: (i, 0))
    if _SINGLE_BUFFER_W:
        # Constant index_map -> a single VMEM copy of the resident weight.
        w_spec = pl.BlockSpec((k_pad, cout_pad), lambda i: (0, 0),
                              pipeline_mode=pl.Buffered(1))
    else:
        w_spec = pl.BlockSpec((k_pad, cout_pad), lambda i: (0, 0))

    mm_flops = 2 * rows_pad * k_pad * cout_pad
    mm_bytes = (rows_pad * k_pad * 2 + k_pad * cout_pad * 2
                + rows_pad * cout_pad * out_bytes)

    if not use_bn:
        # NOTE (conv5): cout=1 is padded to 128 lanes; the waste is N rows
        # only, so it is not worth a special-cased VPU reduction.
        kern = functools.partial(_conv_act_kernel, use_lrelu=use_lrelu,
                                 use_sigmoid=use_sigmoid, neg_slope=0.2)
        out = pl.pallas_call(
            kern,
            out_shape=jax.ShapeDtypeStruct((rows_pad, cout_pad), out_dtype),
            grid_spec=pltpu.PrefetchScalarGridSpec(
                num_scalar_prefetch=0,
                grid=(grid_m,),
                in_specs=[x_spec, w_spec],
                out_specs=o_spec),
            compiler_params=pltpu.CompilerParams(
                dimension_semantics=("parallel",),
                vmem_limit_bytes=VMEM_BUDGET),
            cost_estimate=pl.CostEstimate(
                flops=mm_flops,
                transcendentals=rows_pad * cout_pad if use_sigmoid else 0,
                bytes_accessed=mm_bytes),
        )(patches, w_p)
        return out[:rows, :cout]

    # ---- BatchNorm layer: two passes ---------------------------------------
    # Pass 1: tiled matmul -> bf16 conv output + per-tile f32 partial stats.
    stats_spec = pl.BlockSpec((8, cout_pad), lambda i: (i, 0))
    conv_out, stats = pl.pallas_call(
        _conv_stats_kernel,
        out_shape=(jax.ShapeDtypeStruct((rows_pad, cout_pad), jnp.bfloat16),
                   jax.ShapeDtypeStruct((grid_m * 8, cout_pad), jnp.float32)),
        grid_spec=pltpu.PrefetchScalarGridSpec(
            num_scalar_prefetch=0,
            grid=(grid_m,),
            in_specs=[x_spec, w_spec],
            out_specs=(o_spec, stats_spec)),
        compiler_params=pltpu.CompilerParams(
            dimension_semantics=("parallel",),
            vmem_limit_bytes=VMEM_BUDGET),
        cost_estimate=pl.CostEstimate(
            flops=mm_flops + 3 * rows_pad * cout_pad,
            transcendentals=0,
            bytes_accessed=(rows_pad * k_pad * 2 + k_pad * cout_pad * 2
                            + rows_pad * cout_pad * 2
                            + grid_m * 8 * cout_pad * 4)),
    )(patches, w_p)

    # Tiny XLA reduction of the per-tile partials + BN scale/shift precompute.
    # Biased variance over the TRUE row count, eps=1e-5 (training-mode batch
    # statistics, matching nn.BatchNorm2d in train()).
    gamma_p = jnp.pad(gamma, ((0, 0), (0, cout_pad - cout)), constant_values=1.0)
    beta_p = jnp.pad(beta, ((0, 0), (0, cout_pad - cout)))
    part = stats.reshape(grid_m, 8, cout_pad)
    inv_n = 1.0 / float(rows)
    mean = part[:, 0, :].sum(axis=0, keepdims=True) * inv_n
    ex2 = part[:, 1, :].sum(axis=0, keepdims=True) * inv_n
    # TODO(synk): E[x^2]-E[x]^2 can cancel in f32 for large-mean activations;
    # switch to Welford-style merging of the per-tile partials if that bites.
    var = jnp.maximum(ex2 - mean * mean, 0.0)
    scale = gamma_p * jax.lax.rsqrt(var + 1e-5)
    shift = beta_p - mean * scale

    # Pass 2: y = x*scale + shift, LeakyReLU, bf16 out; tiled over M.
    vec_spec = pl.BlockSpec((1, cout_pad), lambda i: (0, 0))
    out = pl.pallas_call(
        functools.partial(_bn_lrelu_kernel, neg_slope=0.2),
        out_shape=jax.ShapeDtypeStruct((rows_pad, cout_pad), out_dtype),
        grid_spec=pltpu.PrefetchScalarGridSpec(
            num_scalar_prefetch=0,
            grid=(grid_m,),
            in_specs=[o_spec, vec_spec, vec_spec],
            out_specs=o_spec),
        compiler_params=pltpu.CompilerParams(
            dimension_semantics=("parallel",),
            vmem_limit_bytes=VMEM_BUDGET),
        cost_estimate=pl.CostEstimate(
            flops=4 * rows_pad * cout_pad,
            transcendentals=0,
            bytes_accessed=2 * rows_pad * cout_pad * 2 + 2 * cout_pad * 4),
    )(conv_out, scale, shift)
    return out[:rows, :cout]


# ----------------------------------------------------------------------------
# Glue: im2col patch extraction, weight layout, parameter init, forward pass
# ----------------------------------------------------------------------------
def im2col(x_nhwc, k, s, p):
    N, H, W, C = x_nhwc.shape
    if p:
        x_nhwc = jnp.pad(x_nhwc, ((0, 0), (p, p), (p, p), (0, 0)))
    Ho = (H + 2 * p - k) // s + 1
    Wo = (W + 2 * p - k) // s + 1
    cols = []
    for kh in range(k):
        for kw in range(k):
            cols.append(x_nhwc[:, kh:kh + s * Ho:s, kw:kw + s * Wo:s, :])
    pat = jnp.stack(cols, axis=3)                 # (N, Ho, Wo, k*k, C)
    return pat.reshape(N * Ho * Wo, k * k * C), Ho, Wo


def _weight_to_2d(w4d, cin_pad):
    """(Cout, Cin, KH, KW) -> (KH*KW*Cin_pad, Cout), matching the im2col
    column ordering (kh, kw, ci); zero rows for padded input channels."""
    cout, cin, kh, kw = w4d.shape
    if cin_pad != cin:
        w4d = jnp.pad(w4d, ((0, 0), (0, cin_pad - cin), (0, 0), (0, 0)))
    return jnp.transpose(w4d, (2, 3, 1, 0)).reshape(kh * kw * cin_pad, cout)


def init_params(key, num_channels, conv_dim):
    """DCGAN-style deterministic init: W ~ N(0, 0.02), gamma ~ N(1, 0.02)."""
    dims = [(num_channels, conv_dim),
            (conv_dim, conv_dim * 2),
            (conv_dim * 2, conv_dim * 4),
            (conv_dim * 4, conv_dim * 8),
            (conv_dim * 8, 1)]
    bn_flags = [False, True, True, True, False]
    params = {}
    for i, ((cin, cout), bn) in enumerate(zip(dims, bn_flags), 1):
        key, k1, k2 = jax.random.split(key, 3)
        w = 0.02 * jax.random.normal(k1, (cout, cin, 4, 4), jnp.float32)
        if bn:
            gamma = 1.0 + 0.02 * jax.random.normal(k2, (cout,), jnp.float32)
        else:
            gamma = jnp.ones((cout,), jnp.float32)
        beta = jnp.zeros((cout,), jnp.float32)
        params[f"conv{i}"] = {"w": w, "gamma": gamma, "beta": beta}
    return params


def discriminator_forward(x_nchw, params):
    """Forward pass; input is NCHW float32 (as in PyTorch), returns shape (N,)."""
    # num_gpu / nn.parallel.data_parallel branch is CUDA-specific: no-op here.
    x = jnp.transpose(x_nchw, (0, 2, 3, 1)).astype(jnp.bfloat16)   # NCHW -> NHWC
    N = x.shape[0]
    # (name, stride, pad, use_bn, use_lrelu, use_sigmoid)
    layer_cfg = [
        ("conv1", 2, 1, False, True, False),
        ("conv2", 2, 1, True, True, False),
        ("conv3", 2, 1, True, True, False),
        ("conv4", 2, 1, True, True, False),
        ("conv5", 1, 0, False, False, True),
    ]
    for name, s, p, bn, lr, sg in layer_cfg:
        w4d = params[name]["w"]
        gamma = params[name]["gamma"][None, :]
        beta = params[name]["beta"][None, :]
        cin = w4d.shape[1]
        cout = w4d.shape[0]
        cin_pad = _round_up(cin, 8)           # keeps K = 16*Cin a multiple of 128
        if x.shape[-1] != cin_pad:
            x = jnp.pad(x, ((0, 0), (0, 0), (0, 0), (0, cin_pad - x.shape[-1])))
        w2d = _weight_to_2d(w4d, cin_pad)
        # TODO(synk): fold the im2col into the Pallas kernel (16 shifted
        # matmuls over the NHWC map) to remove the ~4x activation duplication
        # in HBM for the memory-bound early layers.
        patches, Ho, Wo = im2col(x, 4, s, p)
        out_dtype = jnp.float32 if sg else jnp.bfloat16
        out = conv_layer(patches, w2d, gamma, beta, use_bn=bn,
                         use_lrelu=lr, use_sigmoid=sg, out_dtype=out_dtype)
        x = out.reshape(N, Ho, Wo, cout)
    # final feature map is (N, 1, 1, 1) -> out.view(-1, 1).squeeze(1) -> (N,)
    return x.reshape(-1).astype(jnp.float32)


if __name__ == "__main__":
    num_channels = 3
    conv_dim = 8          # small conv_dim for the synthetic test
    batch = 2
    spatial = 64          # DCGAN discriminator requires 64x64 input to reach 1x1

    key = jax.random.PRNGKey(0)
    k_x, k_p = jax.random.split(key)
    x = jax.random.normal(k_x, (batch, num_channels, spatial, spatial), jnp.float32)
    params = init_params(k_p, num_channels, conv_dim)

    out = jax.jit(discriminator_forward)(x, params)
    out = jax.block_until_ready(out)

    assert out.shape == (batch,), out.shape
    assert bool(jnp.all((out >= 0.0) & (out <= 1.0))), "sigmoid range violated"
    assert bool(jnp.all(jnp.isfinite(out))), "non-finite output"
    print("KERNEL_OK")
</pallas_src>

<mosaic_0001>
module attributes {stable_mosaic.version = 11 : i64} {
  func.func @_k(%arg0: i32, %arg1: memref<8x128xf32, #tpu.memory_space<vmem>>, %arg2: memref<8x128xf32, #tpu.memory_space<vmem>>) attributes {dimension_semantics = [#tpu.dimension_semantics<arbitrary>], iteration_bounds = array<i64: 1>, scalar_prefetch = 0 : i64, scratch_operands = 0 : i64, tpu.core_type = #tpu.core_type<tc>, window_params = [{pipeline_mode = #tpu.pipeline_mode<synchronous>, transform_indices = @transform_0, window_bounds = array<i64: 8, 128>}, {pipeline_mode = #tpu.pipeline_mode<synchronous>, transform_indices = @transform_1, window_bounds = array<i64: 8, 128>}]} {
    %c0 = arith.constant 0 : index
    %c0_0 = arith.constant 0 : index
    %0 = vector.load %arg1[%c0, %c0_0] : memref<8x128xf32, #tpu.memory_space<vmem>>, vector<8x128xf32>
    %c0_1 = arith.constant 0 : index
    %c0_2 = arith.constant 0 : index
    %1 = vector.load %arg2[%c0_1, %c0_2] : memref<8x128xf32, #tpu.memory_space<vmem>>, vector<8x128xf32>
    tpu.vector_store %arg2[%c0_1, %c0_2], %0 {strides = array<i32>} : memref<8x128xf32, #tpu.memory_space<vmem>>, vector<8x128xf32>,
    return
  }
  func.func @transform_0(%arg0: i32) -> (i32, i32) {
    %c0_i32 = arith.constant 0 : i32
    %c0_i32_0 = arith.constant 0 : i32
    %c0_i32_1 = arith.constant 0 : i32
    return %c0_i32, %c0_i32_0 : i32, i32
  }
  func.func @transform_1(%arg0: i32) -> (i32, i32) {
    %c0_i32 = arith.constant 0 : i32
    %c0_i32_0 = arith.constant 0 : i32
    %c0_i32_1 = arith.constant 0 : i32
    return %c0_i32, %c0_i32_0 : i32, i32
  }
}

module attributes {stable_mosaic.version = 11 : i64} {
  func.func @_conv_act_kernel(%arg0: i32, %arg1: memref<2048x128xbf16, #tpu.memory_space<vmem>>, %arg2: memref<128x128xbf16, #tpu.memory_space<vmem>>, %arg3: memref<2048x128xbf16, #tpu.memory_space<vmem>>) attributes {dimension_semantics = [#tpu.dimension_semantics<parallel>], iteration_bounds = array<i64: 1>, scalar_prefetch = 0 : i64, scratch_operands = 0 : i64, tpu.core_type = #tpu.core_type<tc>, window_params = [{transform_indices = @transform_0, window_bounds = array<i64: 2048, 128>}, {pipeline_mode = #tpu.pipeline_mode<synchronous>, transform_indices = @transform_1, window_bounds = array<i64: 128, 128>}, {transform_indices = @transform_2, window_bounds = array<i64: 2048, 128>}]} {
    %c0 = arith.constant 0 : index
    %c0_0 = arith.constant 0 : index
    %0 = vector.load %arg1[%c0, %c0_0] : memref<2048x128xbf16, #tpu.memory_space<vmem>>, vector<2048x128xbf16>
    %c0_1 = arith.constant 0 : index
    %c0_2 = arith.constant 0 : index
    %1 = vector.load %arg2[%c0_1, %c0_2] : memref<128x128xbf16, #tpu.memory_space<vmem>>, vector<128x128xbf16>
    %cst = arith.constant dense<0.000000e+00> : vector<2048x128xf32>
    %2 = tpu.matmul %0, %1, %cst {dimension_numbers = #tpu.dot_dimension_numbers<[1], [0], [0], [1], [0, 0, 1, 1], [], []>} : vector<2048x128xbf16>, vector<128x128xbf16>, vector<2048x128xf32> -> vector<2048x128xf32>
    %cst_3 = arith.constant 0.000000e+00 : f32
    %3 = vector.broadcast %cst_3 : f32 to vector<2048x128xf32>
    %4 = arith.cmpf oge, %2, %3 : vector<2048x128xf32>
    %cst_4 = arith.constant 2.000000e-01 : f32
    %5 = vector.broadcast %cst_4 : f32 to vector<2048x128xf32>
    %6 = arith.mulf %5, %2 : vector<2048x128xf32>
    %7 = arith.select %4, %2, %6 : vector<2048x128xi1>, vector<2048x128xf32>
    %8 = arith.truncf %7 : vector<2048x128xf32> to vector<2048x128xbf16>
    %c0_5 = arith.constant 0 : index
    %c0_6 = arith.constant 0 : index
    %9 = vector.load %arg3[%c0_5, %c0_6] : memref<2048x128xbf16, #tpu.memory_space<vmem>>, vector<2048x128xbf16>
    tpu.vector_store %arg3[%c0_5, %c0_6], %8 {strides = array<i32>} : memref<2048x128xbf16, #tpu.memory_space<vmem>>, vector<2048x128xbf16>,
    return
  }
  func.func @transform_0(%arg0: i32) -> (i32, i32) {
    %c0_i32 = arith.constant 0 : i32
    %c0_i32_0 = arith.constant 0 : i32
    return %arg0, %c0_i32 : i32, i32
  }
  func.func @transform_1(%arg0: i32) -> (i32, i32) {
    %c0_i32 = arith.constant 0 : i32
    %c0_i32_0 = arith.constant 0 : i32
    %c0_i32_1 = arith.constant 0 : i32
    return %c0_i32, %c0_i32_0 : i32, i32
  }
  func.func @transform_2(%arg0: i32) -> (i32, i32) {
    %c0_i32 = arith.constant 0 : i32
    %c0_i32_0 = arith.constant 0 : i32
    return %arg0, %c0_i32 : i32, i32
  }
}

module attributes {stable_mosaic.version = 11 : i64} {
  func.func @_conv_stats_kernel(%arg0: i32, %arg1: memref<512x128xbf16, #tpu.memory_space<vmem>>, %arg2: memref<128x128xbf16, #tpu.memory_space<vmem>>, %arg3: memref<512x128xbf16, #tpu.memory_space<vmem>>, %arg4: memref<8x128xf32, #tpu.memory_space<vmem>>) attributes {dimension_semantics = [#tpu.dimension_semantics<parallel>], iteration_bounds = array<i64: 1>, scalar_prefetch = 0 : i64, scratch_operands = 0 : i64, tpu.core_type = #tpu.core_type<tc>, window_params = [{transform_indices = @transform_0, window_bounds = array<i64: 512, 128>}, {pipeline_mode = #tpu.pipeline_mode<synchronous>, transform_indices = @transform_1, window_bounds = array<i64: 128, 128>}, {transform_indices = @transform_2, window_bounds = array<i64: 512, 128>}, {transform_indices = @transform_3, window_bounds = array<i64: 8, 128>}]} {
    %c0 = arith.constant 0 : index
    %c0_0 = arith.constant 0 : index
    %0 = vector.load %arg1[%c0, %c0_0] : memref<512x128xbf16, #tpu.memory_space<vmem>>, vector<512x128xbf16>
    %c0_1 = arith.constant 0 : index
    %c0_2 = arith.constant 0 : index
    %1 = vector.load %arg2[%c0_1, %c0_2] : memref<128x128xbf16, #tpu.memory_space<vmem>>, vector<128x128xbf16>
    %cst = arith.constant dense<0.000000e+00> : vector<512x128xf32>
    %2 = tpu.matmul %0, %1, %cst {dimension_numbers = #tpu.dot_dimension_numbers<[1], [0], [0], [1], [0, 0, 1, 1], [], []>} : vector<512x128xbf16>, vector<128x128xbf16>, vector<512x128xf32> -> vector<512x128xf32>
    %3 = arith.truncf %2 : vector<512x128xf32> to vector<512x128xbf16>
    %c0_3 = arith.constant 0 : index
    %c0_4 = arith.constant 0 : index
    %4 = vector.load %arg3[%c0_3, %c0_4] : memref<512x128xbf16, #tpu.memory_space<vmem>>, vector<512x128xbf16>
    tpu.vector_store %arg3[%c0_3, %c0_4], %3 {strides = array<i32>} : memref<512x128xbf16, #tpu.memory_space<vmem>>, vector<512x128xbf16>,
    %cst_5 = arith.constant dense<0.000000e+00> : vector<128xf32>
    %5 = vector.multi_reduction <add>, %2, %cst_5 [0] : vector<512x128xf32> to vector<128xf32>
    %6 = vector.shape_cast %5 : vector<128xf32> to vector<1x128xf32>
    %c0_6 = arith.constant 0 : index
    %c0_7 = arith.constant 0 : index
    %7 = vector.load %arg4[%c0_6, %c0_7] : memref<8x128xf32, #tpu.memory_space<vmem>>, vector<1x128xf32>
    tpu.vector_store %arg4[%c0_6, %c0_7], %6 {strides = array<i32>} : memref<8x128xf32, #tpu.memory_space<vmem>>, vector<1x128xf32>,
    %8 = arith.mulf %2, %2 : vector<512x128xf32>
    %cst_8 = arith.constant dense<0.000000e+00> : vector<128xf32>
    %9 = vector.multi_reduction <add>, %8, %cst_8 [0] : vector<512x128xf32> to vector<128xf32>
    %10 = vector.shape_cast %9 : vector<128xf32> to vector<1x128xf32>
    %c1 = arith.constant 1 : index
    %c0_9 = arith.constant 0 : index
    %11 = vector.load %arg4[%c1, %c0_9] : memref<8x128xf32, #tpu.memory_space<vmem>>, vector<1x128xf32>
    tpu.vector_store %arg4[%c1, %c0_9], %10 {strides = array<i32>} : memref<8x128xf32, #tpu.memory_space<vmem>>, vector<1x128xf32>,
    return
  }
  func.func @transform_0(%arg0: i32) -> (i32, i32) {
    %c0_i32 = arith.constant 0 : i32
    %c0_i32_0 = arith.constant 0 : i32
    return %arg0, %c0_i32 : i32, i32
  }
  func.func @transform_1(%arg0: i32) -> (i32, i32) {
    %c0_i32 = arith.constant 0 : i32
    %c0_i32_0 = arith.constant 0 : i32
    %c0_i32_1 = arith.constant 0 : i32
    return %c0_i32, %c0_i32_0 : i32, i32
  }
  func.func @transform_2(%arg0: i32) -> (i32, i32) {
    %c0_i32 = arith.constant 0 : i32
    %c0_i32_0 = arith.constant 0 : i32
    return %arg0, %c0_i32 : i32, i32
  }
  func.func @transform_3(%arg0: i32) -> (i32, i32) {
    %c0_i32 = arith.constant 0 : i32
    %c0_i32_0 = arith.constant 0 : i32
    return %arg0, %c0_i32 : i32, i32
  }
}

module attributes {stable_mosaic.version = 11 : i64} {
  func.func @_bn_lrelu_kernel(%arg0: i32, %arg1: memref<512x128xbf16, #tpu.memory_space<vmem>>, %arg2: memref<1x128xf32, #tpu.memory_space<vmem>>, %arg3: memref<1x128xf32, #tpu.memory_space<vmem>>, %arg4: memref<512x128xbf16, #tpu.memory_space<vmem>>) attributes {dimension_semantics = [#tpu.dimension_semantics<parallel>], iteration_bounds = array<i64: 1>, scalar_prefetch = 0 : i64, scratch_operands = 0 : i64, tpu.core_type = #tpu.core_type<tc>, window_params = [{transform_indices = @transform_0, window_bounds = array<i64: 512, 128>}, {pipeline_mode = #tpu.pipeline_mode<synchronous>, transform_indices = @transform_1, window_bounds = array<i64: 1, 128>}, {pipeline_mode = #tpu.pipeline_mode<synchronous>, transform_indices = @transform_2, window_bounds = array<i64: 1, 128>}, {transform_indices = @transform_3, window_bounds = array<i64: 512, 128>}]} {
    %c0 = arith.constant 0 : index
    %c0_0 = arith.constant 0 : index
    %0 = vector.load %arg1[%c0, %c0_0] : memref<512x128xbf16, #tpu.memory_space<vmem>>, vector<512x128xbf16>
    %1 = arith.extf %0 : vector<512x128xbf16> to vector<512x128xf32>
    %c0_1 = arith.constant 0 : index
    %c0_2 = arith.constant 0 : index
    %2 = vector.load %arg2[%c0_1, %c0_2] : memref<1x128xf32, #tpu.memory_space<vmem>>, vector<1x128xf32>
    %3 = vector.broadcast %2 : vector<1x128xf32> to vector<512x128xf32>
    %4 = arith.mulf %1, %3 : vector<512x128xf32>
    %c0_3 = arith.constant 0 : index
    %c0_4 = arith.constant 0 : index
    %5 = vector.load %arg3[%c0_3, %c0_4] : memref<1x128xf32, #tpu.memory_space<vmem>>, vector<1x128xf32>
    %6 = vector.broadcast %5 : vector<1x128xf32> to vector<512x128xf32>
    %7 = arith.addf %4, %6 : vector<512x128xf32>
    %cst = arith.constant 0.000000e+00 : f32
    %8 = vector.broadcast %cst : f32 to vector<512x128xf32>
    %9 = arith.cmpf oge, %7, %8 : vector<512x128xf32>
    %cst_5 = arith.constant 2.000000e-01 : f32
    %10 = vector.broadcast %cst_5 : f32 to vector<512x128xf32>
    %11 = arith.mulf %10, %7 : vector<512x128xf32>
    %12 = arith.select %9, %7, %11 : vector<512x128xi1>, vector<512x128xf32>
    %13 = arith.truncf %12 : vector<512x128xf32> to vector<512x128xbf16>
    %c0_6 = arith.constant 0 : index
    %c0_7 = arith.constant 0 : index
    %14 = vector.load %arg4[%c0_6, %c0_7] : memref<512x128xbf16, #tpu.memory_space<vmem>>, vector<512x128xbf16>
    tpu.vector_store %arg4[%c0_6, %c0_7], %13 {strides = array<i32>} : memref<512x128xbf16, #tpu.memory_space<vmem>>, vector<512x128xbf16>,
    return
  }
  func.func @transform_0(%arg0: i32) -> (i32, i32) {
    %c0_i32 = arith.constant 0 : i32
    %c0_i32_0 = arith.constant 0 : i32
    return %arg0, %c0_i32 : i32, i32
  }
  func.func @transform_1(%arg0: i32) -> (i32, i32) {
    %c0_i32 = arith.constant 0 : i32
    %c0_i32_0 = arith.constant 0 : i32
    %c0_i32_1 = arith.constant 0 : i32
    return %c0_i32, %c0_i32_0 : i32, i32
  }
  func.func @transform_2(%arg0: i32) -> (i32, i32) {
    %c0_i32 = arith.constant 0 : i32
    %c0_i32_0 = arith.constant 0 : i32
    %c0_i32_1 = arith.constant 0 : i32
    return %c0_i32, %c0_i32_0 : i32, i32
  }
  func.func @transform_3(%arg0: i32) -> (i32, i32) {
    %c0_i32 = arith.constant 0 : i32
    %c0_i32_0 = arith.constant 0 : i32
    return %arg0, %c0_i32 : i32, i32
  }
}

module attributes {stable_mosaic.version = 11 : i64} {
  func.func @_conv_stats_kernel(%arg0: i32, %arg1: memref<128x256xbf16, #tpu.memory_space<vmem>>, %arg2: memref<256x128xbf16, #tpu.memory_space<vmem>>, %arg3: memref<128x128xbf16, #tpu.memory_space<vmem>>, %arg4: memref<8x128xf32, #tpu.memory_space<vmem>>) attributes {dimension_semantics = [#tpu.dimension_semantics<parallel>], iteration_bounds = array<i64: 1>, scalar_prefetch = 0 : i64, scratch_operands = 0 : i64, tpu.core_type = #tpu.core_type<tc>, window_params = [{transform_indices = @transform_0, window_bounds = array<i64: 128, 256>}, {pipeline_mode = #tpu.pipeline_mode<synchronous>, transform_indices = @transform_1, window_bounds = array<i64: 256, 128>}, {transform_indices = @transform_2, window_bounds = array<i64: 128, 128>}, {transform_indices = @transform_3, window_bounds = array<i64: 8, 128>}]} {
    %c0 = arith.constant 0 : index
    %c0_0 = arith.constant 0 : index
    %0 = vector.load %arg1[%c0, %c0_0] : memref<128x256xbf16, #tpu.memory_space<vmem>>, vector<128x256xbf16>
    %c0_1 = arith.constant 0 : index
    %c0_2 = arith.constant 0 : index
    %1 = vector.load %arg2[%c0_1, %c0_2] : memref<256x128xbf16, #tpu.memory_space<vmem>>, vector<256x128xbf16>
    %cst = arith.constant dense<0.000000e+00> : vector<128x128xf32>
    %2 = tpu.matmul %0, %1, %cst {dimension_numbers = #tpu.dot_dimension_numbers<[1], [0], [0], [1], [0, 0, 1, 1], [], []>} : vector<128x256xbf16>, vector<256x128xbf16>, vector<128x128xf32> -> vector<128x128xf32>
    %3 = arith.truncf %2 : vector<128x128xf32> to vector<128x128xbf16>
    %c0_3 = arith.constant 0 : index
    %c0_4 = arith.constant 0 : index
    %4 = vector.load %arg3[%c0_3, %c0_4] : memref<128x128xbf16, #tpu.memory_space<vmem>>, vector<128x128xbf16>
    tpu.vector_store %arg3[%c0_3, %c0_4], %3 {strides = array<i32>} : memref<128x128xbf16, #tpu.memory_space<vmem>>, vector<128x128xbf16>,
    %cst_5 = arith.constant dense<0.000000e+00> : vector<128xf32>
    %5 = vector.multi_reduction <add>, %2, %cst_5 [0] : vector<128x128xf32> to vector<128xf32>
    %6 = vector.shape_cast %5 : vector<128xf32> to vector<1x128xf32>
    %c0_6 = arith.constant 0 : index
    %c0_7 = arith.constant 0 : index
    %7 = vector.load %arg4[%c0_6, %c0_7] : memref<8x128xf32, #tpu.memory_space<vmem>>, vector<1x128xf32>
    tpu.vector_store %arg4[%c0_6, %c0_7], %6 {strides = array<i32>} : memref<8x128xf32, #tpu.memory_space<vmem>>, vector<1x128xf32>,
    %8 = arith.mulf %2, %2 : vector<128x128xf32>
    %cst_8 = arith.constant dense<0.000000e+00> : vector<128xf32>
    %9 = vector.multi_reduction <add>, %8, %cst_8 [0] : vector<128x128xf32> to vector<128xf32>
    %10 = vector.shape_cast %9 : vector<128xf32> to vector<1x128xf32>
    %c1 = arith.constant 1 : index
    %c0_9 = arith.constant 0 : index
    %11 = vector.load %arg4[%c1, %c0_9] : memref<8x128xf32, #tpu.memory_space<vmem>>, vector<1x128xf32>
    tpu.vector_store %arg4[%c1, %c0_9], %10 {strides = array<i32>} : memref<8x128xf32, #tpu.memory_space<vmem>>, vector<1x128xf32>,
    return
  }
  func.func @transform_0(%arg0: i32) -> (i32, i32) {
    %c0_i32 = arith.constant 0 : i32
    %c0_i32_0 = arith.constant 0 : i32
    return %arg0, %c0_i32 : i32, i32
  }
  func.func @transform_1(%arg0: i32) -> (i32, i32) {
    %c0_i32 = arith.constant 0 : i32
    %c0_i32_0 = arith.constant 0 : i32
    %c0_i32_1 = arith.constant 0 : i32
    return %c0_i32, %c0_i32_0 : i32, i32
  }
  func.func @transform_2(%arg0: i32) -> (i32, i32) {
    %c0_i32 = arith.constant 0 : i32
    %c0_i32_0 = arith.constant 0 : i32
    return %arg0, %c0_i32 : i32, i32
  }
  func.func @transform_3(%arg0: i32) -> (i32, i32) {
    %c0_i32 = arith.constant 0 : i32
    %c0_i32_0 = arith.constant 0 : i32
    return %arg0, %c0_i32 : i32, i32
  }
}

module attributes {stable_mosaic.version = 11 : i64} {
  func.func @_bn_lrelu_kernel(%arg0: i32, %arg1: memref<128x128xbf16, #tpu.memory_space<vmem>>, %arg2: memref<1x128xf32, #tpu.memory_space<vmem>>, %arg3: memref<1x128xf32, #tpu.memory_space<vmem>>, %arg4: memref<128x128xbf16, #tpu.memory_space<vmem>>) attributes {dimension_semantics = [#tpu.dimension_semantics<parallel>], iteration_bounds = array<i64: 1>, scalar_prefetch = 0 : i64, scratch_operands = 0 : i64, tpu.core_type = #tpu.core_type<tc>, window_params = [{transform_indices = @transform_0, window_bounds = array<i64: 128, 128>}, {pipeline_mode = #tpu.pipeline_mode<synchronous>, transform_indices = @transform_1, window_bounds = array<i64: 1, 128>}, {pipeline_mode = #tpu.pipeline_mode<synchronous>, transform_indices = @transform_2, window_bounds = array<i64: 1, 128>}, {transform_indices = @transform_3, window_bounds = array<i64: 128, 128>}]} {
    %c0 = arith.constant 0 : index
    %c0_0 = arith.constant 0 : index
    %0 = vector.load %arg1[%c0, %c0_0] : memref<128x128xbf16, #tpu.memory_space<vmem>>, vector<128x128xbf16>
    %1 = arith.extf %0 : vector<128x128xbf16> to vector<128x128xf32>
    %c0_1 = arith.constant 0 : index
    %c0_2 = arith.constant 0 : index
    %2 = vector.load %arg2[%c0_1, %c0_2] : memref<1x128xf32, #tpu.memory_space<vmem>>, vector<1x128xf32>
    %3 = vector.broadcast %2 : vector<1x128xf32> to vector<128x128xf32>
    %4 = arith.mulf %1, %3 : vector<128x128xf32>
    %c0_3 = arith.constant 0 : index
    %c0_4 = arith.constant 0 : index
    %5 = vector.load %arg3[%c0_3, %c0_4] : memref<1x128xf32, #tpu.memory_space<vmem>>, vector<1x128xf32>
    %6 = vector.broadcast %5 : vector<1x128xf32> to vector<128x128xf32>
    %7 = arith.addf %4, %6 : vector<128x128xf32>
    %cst = arith.constant 0.000000e+00 : f32
    %8 = vector.broadcast %cst : f32 to vector<128x128xf32>
    %9 = arith.cmpf oge, %7, %8 : vector<128x128xf32>
    %cst_5 = arith.constant 2.000000e-01 : f32
    %10 = vector.broadcast %cst_5 : f32 to vector<128x128xf32>
    %11 = arith.mulf %10, %7 : vector<128x128xf32>
    %12 = arith.select %9, %7, %11 : vector<128x128xi1>, vector<128x128xf32>
    %13 = arith.truncf %12 : vector<128x128xf32> to vector<128x128xbf16>
    %c0_6 = arith.constant 0 : index
    %c0_7 = arith.constant 0 : index
    %14 = vector.load %arg4[%c0_6, %c0_7] : memref<128x128xbf16, #tpu.memory_space<vmem>>, vector<128x128xbf16>
    tpu.vector_store %arg4[%c0_6, %c0_7], %13 {strides = array<i32>} : memref<128x128xbf16, #tpu.memory_space<vmem>>, vector<128x128xbf16>,
    return
  }
  func.func @transform_0(%arg0: i32) -> (i32, i32) {
    %c0_i32 = arith.constant 0 : i32
    %c0_i32_0 = arith.constant 0 : i32
    return %arg0, %c0_i32 : i32, i32
  }
  func.func @transform_1(%arg0: i32) -> (i32, i32) {
    %c0_i32 = arith.constant 0 : i32
    %c0_i32_0 = arith.constant 0 : i32
    %c0_i32_1 = arith.constant 0 : i32
    return %c0_i32, %c0_i32_0 : i32, i32
  }
  func.func @transform_2(%arg0: i32) -> (i32, i32) {
    %c0_i32 = arith.constant 0 : i32
    %c0_i32_0 = arith.constant 0 : i32
    %c0_i32_1 = arith.constant 0 : i32
    return %c0_i32, %c0_i32_0 : i32, i32
  }
  func.func @transform_3(%arg0: i32) -> (i32, i32) {
    %c0_i32 = arith.constant 0 : i32
    %c0_i32_0 = arith.constant 0 : i32
    return %arg0, %c0_i32 : i32, i32
  }
}

module attributes {stable_mosaic.version = 11 : i64} {
  func.func @_conv_stats_kernel(%arg0: i32, %arg1: memref<32x512xbf16, #tpu.memory_space<vmem>>, %arg2: memref<512x128xbf16, #tpu.memory_space<vmem>>, %arg3: memref<32x128xbf16, #tpu.memory_space<vmem>>, %arg4: memref<8x128xf32, #tpu.memory_space<vmem>>) attributes {dimension_semantics = [#tpu.dimension_semantics<parallel>], iteration_bounds = array<i64: 1>, scalar_prefetch = 0 : i64, scratch_operands = 0 : i64, tpu.core_type = #tpu.core_type<tc>, window_params = [{transform_indices = @transform_0, window_bounds = array<i64: 32, 512>}, {pipeline_mode = #tpu.pipeline_mode<synchronous>, transform_indices = @transform_1, window_bounds = array<i64: 512, 128>}, {transform_indices = @transform_2, window_bounds = array<i64: 32, 128>}, {transform_indices = @transform_3, window_bounds = array<i64: 8, 128>}]} {
    %c0 = arith.constant 0 : index
    %c0_0 = arith.constant 0 : index
    %0 = vector.load %arg1[%c0, %c0_0] : memref<32x512xbf16, #tpu.memory_space<vmem>>, vector<32x512xbf16>
    %c0_1 = arith.constant 0 : index
    %c0_2 = arith.constant 0 : index
    %1 = vector.load %arg2[%c0_1, %c0_2] : memref<512x128xbf16, #tpu.memory_space<vmem>>, vector<512x128xbf16>
    %cst = arith.constant dense<0.000000e+00> : vector<32x128xf32>
    %2 = tpu.matmul %0, %1, %cst {dimension_numbers = #tpu.dot_dimension_numbers<[1], [0], [0], [1], [0, 0, 1, 1], [], []>} : vector<32x512xbf16>, vector<512x128xbf16>, vector<32x128xf32> -> vector<32x128xf32>
    %3 = arith.truncf %2 : vector<32x128xf32> to vector<32x128xbf16>
    %c0_3 = arith.constant 0 : index
    %c0_4 = arith.constant 0 : index
    %4 = vector.load %arg3[%c0_3, %c0_4] : memref<32x128xbf16, #tpu.memory_space<vmem>>, vector<32x128xbf16>
    tpu.vector_store %arg3[%c0_3, %c0_4], %3 {strides = array<i32>} : memref<32x128xbf16, #tpu.memory_space<vmem>>, vector<32x128xbf16>,
    %cst_5 = arith.constant dense<0.000000e+00> : vector<128xf32>
    %5 = vector.multi_reduction <add>, %2, %cst_5 [0] : vector<32x128xf32> to vector<128xf32>
    %6 = vector.shape_cast %5 : vector<128xf32> to vector<1x128xf32>
    %c0_6 = arith.constant 0 : index
    %c0_7 = arith.constant 0 : index
    %7 = vector.load %arg4[%c0_6, %c0_7] : memref<8x128xf32, #tpu.memory_space<vmem>>, vector<1x128xf32>
    tpu.vector_store %arg4[%c0_6, %c0_7], %6 {strides = array<i32>} : memref<8x128xf32, #tpu.memory_space<vmem>>, vector<1x128xf32>,
    %8 = arith.mulf %2, %2 : vector<32x128xf32>
    %cst_8 = arith.constant dense<0.000000e+00> : vector<128xf32>
    %9 = vector.multi_reduction <add>, %8, %cst_8 [0] : vector<32x128xf32> to vector<128xf32>
    %10 = vector.shape_cast %9 : vector<128xf32> to vector<1x128xf32>
    %c1 = arith.constant 1 : index
    %c0_9 = arith.constant 0 : index
    %11 = vector.load %arg4[%c1, %c0_9] : memref<8x128xf32, #tpu.memory_space<vmem>>, vector<1x128xf32>
    tpu.vector_store %arg4[%c1, %c0_9], %10 {strides = array<i32>} : memref<8x128xf32, #tpu.memory_space<vmem>>, vector<1x128xf32>,
    return
  }
  func.func @transform_0(%arg0: i32) -> (i32, i32) {
    %c0_i32 = arith.constant 0 : i32
    %c0_i32_0 = arith.constant 0 : i32
    return %arg0, %c0_i32 : i32, i32
  }
  func.func @transform_1(%arg0: i32) -> (i32, i32) {
    %c0_i32 = arith.constant 0 : i32
    %c0_i32_0 = arith.constant 0 : i32
    %c0_i32_1 = arith.constant 0 : i32
    return %c0_i32, %c0_i32_0 : i32, i32
  }
  func.func @transform_2(%arg0: i32) -> (i32, i32) {
    %c0_i32 = arith.constant 0 : i32
    %c0_i32_0 = arith.constant 0 : i32
    return %arg0, %c0_i32 : i32, i32
  }
  func.func @transform_3(%arg0: i32) -> (i32, i32) {
    %c0_i32 = arith.constant 0 : i32
    %c0_i32_0 = arith.constant 0 : i32
    return %arg0, %c0_i32 : i32, i32
  }
}

module attributes {stable_mosaic.version = 11 : i64} {
  func.func @_bn_lrelu_kernel(%arg0: i32, %arg1: memref<32x128xbf16, #tpu.memory_space<vmem>>, %arg2: memref<1x128xf32, #tpu.memory_space<vmem>>, %arg3: memref<1x128xf32, #tpu.memory_space<vmem>>, %arg4: memref<32x128xbf16, #tpu.memory_space<vmem>>) attributes {dimension_semantics = [#tpu.dimension_semantics<parallel>], iteration_bounds = array<i64: 1>, scalar_prefetch = 0 : i64, scratch_operands = 0 : i64, tpu.core_type = #tpu.core_type<tc>, window_params = [{transform_indices = @transform_0, window_bounds = array<i64: 32, 128>}, {pipeline_mode = #tpu.pipeline_mode<synchronous>, transform_indices = @transform_1, window_bounds = array<i64: 1, 128>}, {pipeline_mode = #tpu.pipeline_mode<synchronous>, transform_indices = @transform_2, window_bounds = array<i64: 1, 128>}, {transform_indices = @transform_3, window_bounds = array<i64: 32, 128>}]} {
    %c0 = arith.constant 0 : index
    %c0_0 = arith.constant 0 : index
    %0 = vector.load %arg1[%c0, %c0_0] : memref<32x128xbf16, #tpu.memory_space<vmem>>, vector<32x128xbf16>
    %1 = arith.extf %0 : vector<32x128xbf16> to vector<32x128xf32>
    %c0_1 = arith.constant 0 : index
    %c0_2 = arith.constant 0 : index
    %2 = vector.load %arg2[%c0_1, %c0_2] : memref<1x128xf32, #tpu.memory_space<vmem>>, vector<1x128xf32>
    %3 = vector.broadcast %2 : vector<1x128xf32> to vector<32x128xf32>
    %4 = arith.mulf %1, %3 : vector<32x128xf32>
    %c0_3 = arith.constant 0 : index
    %c0_4 = arith.constant 0 : index
    %5 = vector.load %arg3[%c0_3, %c0_4] : memref<1x128xf32, #tpu.memory_space<vmem>>, vector<1x128xf32>
    %6 = vector.broadcast %5 : vector<1x128xf32> to vector<32x128xf32>
    %7 = arith.addf %4, %6 : vector<32x128xf32>
    %cst = arith.constant 0.000000e+00 : f32
    %8 = vector.broadcast %cst : f32 to vector<32x128xf32>
    %9 = arith.cmpf oge, %7, %8 : vector<32x128xf32>
    %cst_5 = arith.constant 2.000000e-01 : f32
    %10 = vector.broadcast %cst_5 : f32 to vector<32x128xf32>
    %11 = arith.mulf %10, %7 : vector<32x128xf32>
    %12 = arith.select %9, %7, %11 : vector<32x128xi1>, vector<32x128xf32>
    %13 = arith.truncf %12 : vector<32x128xf32> to vector<32x128xbf16>
    %c0_6 = arith.constant 0 : index
    %c0_7 = arith.constant 0 : index
    %14 = vector.load %arg4[%c0_6, %c0_7] : memref<32x128xbf16, #tpu.memory_space<vmem>>, vector<32x128xbf16>
    tpu.vector_store %arg4[%c0_6, %c0_7], %13 {strides = array<i32>} : memref<32x128xbf16, #tpu.memory_space<vmem>>, vector<32x128xbf16>,
    return
  }
  func.func @transform_0(%arg0: i32) -> (i32, i32) {
    %c0_i32 = arith.constant 0 : i32
    %c0_i32_0 = arith.constant 0 : i32
    return %arg0, %c0_i32 : i32, i32
  }
  func.func @transform_1(%arg0: i32) -> (i32, i32) {
    %c0_i32 = arith.constant 0 : i32
    %c0_i32_0 = arith.constant 0 : i32
    %c0_i32_1 = arith.constant 0 : i32
    return %c0_i32, %c0_i32_0 : i32, i32
  }
  func.func @transform_2(%arg0: i32) -> (i32, i32) {
    %c0_i32 = arith.constant 0 : i32
    %c0_i32_0 = arith.constant 0 : i32
    %c0_i32_1 = arith.constant 0 : i32
    return %c0_i32, %c0_i32_0 : i32, i32
  }
  func.func @transform_3(%arg0: i32) -> (i32, i32) {
    %c0_i32 = arith.constant 0 : i32
    %c0_i32_0 = arith.constant 0 : i32
    return %arg0, %c0_i32 : i32, i32
  }
}

module attributes {stable_mosaic.version = 11 : i64} {
  func.func @_conv_act_kernel(%arg0: i32, %arg1: memref<8x1024xbf16, #tpu.memory_space<vmem>>, %arg2: memref<1024x128xbf16, #tpu.memory_space<vmem>>, %arg3: memref<8x128xf32, #tpu.memory_space<vmem>>) attributes {dimension_semantics = [#tpu.dimension_semantics<parallel>], iteration_bounds = array<i64: 1>, scalar_prefetch = 0 : i64, scratch_operands = 0 : i64, tpu.core_type = #tpu.core_type<tc>, window_params = [{transform_indices = @transform_0, window_bounds = array<i64: 8, 1024>}, {pipeline_mode = #tpu.pipeline_mode<synchronous>, transform_indices = @transform_1, window_bounds = array<i64: 1024, 128>}, {transform_indices = @transform_2, window_bounds = array<i64: 8, 128>}]} {
    %c0 = arith.constant 0 : index
    %c0_0 = arith.constant 0 : index
    %0 = vector.load %arg1[%c0, %c0_0] : memref<8x1024xbf16, #tpu.memory_space<vmem>>, vector<8x1024xbf16>
    %c0_1 = arith.constant 0 : index
    %c0_2 = arith.constant 0 : index
    %1 = vector.load %arg2[%c0_1, %c0_2] : memref<1024x128xbf16, #tpu.memory_space<vmem>>, vector<1024x128xbf16>
    %cst = arith.constant dense<0.000000e+00> : vector<8x128xf32>
    %2 = tpu.matmul %0, %1, %cst {dimension_numbers = #tpu.dot_dimension_numbers<[1], [0], [0], [1], [0, 0, 1, 1], [], []>} : vector<8x1024xbf16>, vector<1024x128xbf16>, vector<8x128xf32> -> vector<8x128xf32>
    %cst_3 = arith.constant 0.000000e+00 : f32
    %3 = vector.broadcast %cst_3 : f32 to vector<8x128xf32>
    %4 = arith.subf %3, %2 : vector<8x128xf32>
    %5 = math.exp %4 : vector<8x128xf32>
    %cst_4 = arith.constant 1.000000e+00 : f32
    %6 = vector.broadcast %cst_4 : f32 to vector<8x128xf32>
    %7 = arith.addf %6, %5 : vector<8x128xf32>
    %cst_5 = arith.constant 1.000000e+00 : f32
    %8 = vector.broadcast %cst_5 : f32 to vector<8x128xf32>
    %9 = arith.divf %8, %7 : vector<8x128xf32>
    %c0_6 = arith.constant 0 : index
    %c0_7 = arith.constant 0 : index
    %10 = vector.load %arg3[%c0_6, %c0_7] : memref<8x128xf32, #tpu.memory_space<vmem>>, vector<8x128xf32>
    tpu.vector_store %arg3[%c0_6, %c0_7], %9 {strides = array<i32>} : memref<8x128xf32, #tpu.memory_space<vmem>>, vector<8x128xf32>,
    return
  }
  func.func @transform_0(%arg0: i32) -> (i32, i32) {
    %c0_i32 = arith.constant 0 : i32
    %c0_i32_0 = arith.constant 0 : i32
    return %arg0, %c0_i32 : i32, i32
  }
  func.func @transform_1(%arg0: i32) -> (i32, i32) {
    %c0_i32 = arith.constant 0 : i32
    %c0_i32_0 = arith.constant 0 : i32
    %c0_i32_1 = arith.constant 0 : i32
    return %c0_i32, %c0_i32_0 : i32, i32
  }
  func.func @transform_2(%arg0: i32) -> (i32, i32) {
    %c0_i32 = arith.constant 0 : i32
    %c0_i32_0 = arith.constant 0 : i32
    return %arg0, %c0_i32 : i32, i32
  }
}

</mosaic_0001>

<llo_original>
// kernel: tpu_custom_call.1
$region0: #{tpu_custom_call.1}
  #allocation0 [shape = 'u32[]', space=smem, size = 0x4, offset = 0x4, fixed_abs, tag = 'smem constant byte address 0x4 - core index']
  #allocation1 [shape = 'u32[72,128]{1,0:T(1,128)}', space=vmem, size = 0x9000, scoped, tag = 'internal scratch']
  %s0 = inlined_call_operand.hbm [shape: f32[8,128], index: 0, kind: input, shape index: {}]
  %s1 = inlined_call_operand.hbm [shape: f32[8,128], index: 1, kind: output, shape index: {}]
  %s2 = sld [smem:[#allocation0]]
  $region18: #{tpu_custom_call.1} parent=0
    _
  %s4 = ssub.s32 1, %s2
  %s5 = scalar_select 0, %s4, %s2
  $region1: #{tpu_custom_call.1} parent=0
    #allocation2 [shape = 'u8[4096]{0}', space=vmem, size = 0x1000, scoped, tag = 'input window, operand 0, single buffered']
    #allocation3 [shape = 's32[1]{0}', space=sflag, size = 0x4, scoped, tag = 'scoped memory for tpu_custom_call.1']
    #allocation4 [shape = 's32[1]{0}', space=sflag, size = 0x4, scoped, tag = 'scoped memory for tpu_custom_call.1']
    #allocation5 [shape = 'u8[4096]{0}', space=vmem, size = 0x1000, scoped, tag = 'output window, operand 0, single buffered']
    %6 = vsyncpa [#allocation3], 0
    %7 = vsyncpa [#allocation4], 0
    // Predicated region
    $region2: #{tpu_custom_call.1} parent=1 // pred_check
      _
    $region3: #{tpu_custom_call.1} parent=1 // pred_check_branch
      %9 = sbr.rel (0) target = $region5
    $region4: #{tpu_custom_call.1} parent=1 // pred_region
      %11 = vsyncadd [#allocation3], 0
      %s13 = sshll.u32 %s0, 4
      %s14 = int_to_ptr.hbm [resolvable:$true] %s13
      %s15 = sshll.u32 [#allocation2], 4
      %s16 = int_to_ptr.vmem [resolvable:$true] %s15
      %18 = dma.hbm_to_vmem [thread:$0]  %s14, 128, %s16, [#allocation3]
    $region5: #{tpu_custom_call.1} parent=1 // pred_fallthru
      _
    // Predicated region
    $region6: #{tpu_custom_call.1} parent=1 // pred_check
      _
    $region7: #{tpu_custom_call.1} parent=1 // pred_check_branch
      %20 = sbr.rel (0) target = $region9
    $region8: #{tpu_custom_call.1} parent=1 // pred_region
      %22 = dma.done [#allocation3], 128
    $region9: #{tpu_custom_call.1} parent=1 // pred_fallthru
      _
    %v23 = vld [vmem:[#allocation2] sm:$0xff]
    %24 = vst [vmem:[#allocation5] sm:$0xff] %v23
    // Predicated region
    $region10: #{tpu_custom_call.1} parent=1 // pred_check
      _
    $region11: #{tpu_custom_call.1} parent=1 // pred_check_branch
      %26 = sbr.rel (0) target = $region13
    $region12: #{tpu_custom_call.1} parent=1 // pred_region
      %28 = vsyncadd [#allocation4], 0
      %s30 = sshll.u32 [#allocation5], 4
      %s31 = int_to_ptr.vmem [resolvable:$true] %s30
      %s32 = sshll.u32 %s1, 4
      %s33 = int_to_ptr.hbm [resolvable:$true] %s32
      %35 = dma.vmem_to_hbm [thread:$0]  %s31, 128, %s33, [#allocation4]
    $region13: #{tpu_custom_call.1} parent=1 // pred_fallthru
      _
    // Predicated region
    $region14: #{tpu_custom_call.1} parent=1 // pred_check
      _
    $region15: #{tpu_custom_call.1} parent=1 // pred_check_branch
      %37 = sbr.rel (0) target = $region17
    $region16: #{tpu_custom_call.1} parent=1 // pred_region
      %39 = dma.done [#allocation4], 128
    $region17: #{tpu_custom_call.1} parent=1 // pred_fallthru
      _
    %40 = vsyncpa [#allocation3], 1
    %41 = vsyncpa [#allocation4], 1

// kernel: discriminator_forward.8
$region0: #{discriminator_forward.8}
  #allocation0 [shape = 'u32[]', space=smem, size = 0x4, offset = 0x4, fixed_abs, tag = 'smem constant byte address 0x4 - core index']
  #allocation1 [shape = 'u32[72,128]{1,0:T(1,128)}', space=vmem, size = 0x9000, scoped, tag = 'internal scratch']
  %s0 = inlined_call_operand.vmem [shape: bf16[2048,128], index: 0, kind: input, shape index: {}]
  %s1 = inlined_call_operand.vmem [shape: bf16[128,128], index: 1, kind: input, shape index: {}]
  %s2 = inlined_call_operand.vmem [shape: bf16[2048,128], index: 2, kind: output, shape index: {}]
  %s3 = sld [smem:[#allocation0]]
  $region18: #{discriminator_forward.8} parent=0
    _
  %s5 = ssub.s32 1, %s3
  %s6 = scalar_select 0, %s5, %s3
  // Predicated region
  $region2: #{discriminator_forward.8} parent=0 // pred_check
    _
  $region3: #{discriminator_forward.8} parent=0 // pred_check_branch
    %8 = sbr.rel (0) target = $region5
  $region4: #{discriminator_forward.8} parent=0 // pred_region
    _
  $region5: #{discriminator_forward.8} parent=0 // pred_fallthru
    _
  // Predicated region
  $region6: #{discriminator_forward.8} parent=0 // pred_check
    _
  $region7: #{discriminator_forward.8} parent=0 // pred_check_branch
    %10 = sbr.rel (0) target = $region9
  $region8: #{discriminator_forward.8} parent=0 // pred_region
    _
  $region9: #{discriminator_forward.8} parent=0 // pred_fallthru
    _
  %v11 = vld [vmem:[%s0] sm:$0xf]
  %v12 = vld [vmem:[%s0 + $0x4] sm:$0xf]
  %v13 = vld [vmem:[%s0 + $0x8] sm:$0xf]
  %v14 = vld [vmem:[%s0 + $0xc] sm:$0xf]
  %v15 = vld [vmem:[%s0 + $0x10] sm:$0xf]
  %v16 = vld [vmem:[%s0 + $0x14] sm:$0xf]
  %v17 = vld [vmem:[%s0 + $0x18] sm:$0xf]
  %v18 = vld [vmem:[%s0 + $0x1c] sm:$0xf]
  %v19 = vld [vmem:[%s0 + $0x20] sm:$0xf]
  %v20 = vld [vmem:[%s0 + $0x24] sm:$0xf]
  %v21 = vld [vmem:[%s0 + $0x28] sm:$0xf]
  %v22 = vld [vmem:[%s0 + $0x2c] sm:$0xf]
  %v23 = vld [vmem:[%s0 + $0x30] sm:$0xf]
  %v24 = vld [vmem:[%s0 + $0x34] sm:$0xf]
  %v25 = vld [vmem:[%s0 + $0x38] sm:$0xf]
  %v26 = vld [vmem:[%s0 + $0x3c] sm:$0xf]
  %v27 = vld [vmem:[%s0 + $0x40] sm:$0xf]
  %v28 = vld [vmem:[%s0 + $0x44] sm:$0xf]
  %v29 = vld [vmem:[%s0 + $0x48] sm:$0xf]
  %v30 = vld [vmem:[%s0 + $0x4c] sm:$0xf]
  %v31 = vld [vmem:[%s0 + $0x50] sm:$0xf]
  %v32 = vld [vmem:[%s0 + $0x54] sm:$0xf]
  %v33 = vld [vmem:[%s0 + $0x58] sm:$0xf]
  %v34 = vld [vmem:[%s0 + $0x5c] sm:$0xf]
  %v35 = vld [vmem:[%s0 + $0x60] sm:$0xf]
  %v36 = vld [vmem:[%s0 + $0x64] sm:$0xf]
  %v37 = vld [vmem:[%s0 + $0x68] sm:$0xf]
  %v38 = vld [vmem:[%s0 + $0x6c] sm:$0xf]
  %v39 = vld [vmem:[%s0 + $0x70] sm:$0xf]
  %v40 = vld [vmem:[%s0 + $0x74] sm:$0xf]
  %v41 = vld [vmem:[%s0 + $0x78] sm:$0xf]
  %v42 = vld [vmem:[%s0 + $0x7c] sm:$0xf]
  %v43 = vld [vmem:[%s0 + $0x80] sm:$0xf]
  %v44 = vld [vmem:[%s0 + $0x84] sm:$0xf]
  %v45 = vld [vmem:[%s0 + $0x88] sm:$0xf]
  %v46 = vld [vmem:[%s0 + $0x8c] sm:$0xf]
  %v47 = vld [vmem:[%s0 + $0x90] sm:$0xf]
  %v48 = vld [vmem:[%s0 + $0x94] sm:$0xf]
  %v49 = vld [vmem:[%s0 + $0x98] sm:$0xf]
  %v50 = vld [vmem:[%s0 + $0x9c] sm:$0xf]
  %v51 = vld [vmem:[%s0 + $0xa0] sm:$0xf]
  %v52 = vld [vmem:[%s0 + $0xa4] sm:$0xf]
  %v53 = vld [vmem:[%s0 + $0xa8] sm:$0xf]
  %v54 = vld [vmem:[%s0 + $0xac] sm:$0xf]
  %v55 = vld [vmem:[%s0 + $0xb0] sm:$0xf]
  %v56 = vld [vmem:[%s0 + $0xb4] sm:$0xf]
  %v57 = vld [vmem:[%s0 + $0xb8] sm:$0xf]
  %v58 = vld [vmem:[%s0 + $0xbc] sm:$0xf]
  %v59 = vld [vmem:[%s0 + $0xc0] sm:$0xf]
  %v60 = vld [vmem:[%s0 + $0xc4] sm:$0xf]
  %v61 = vld [vmem:[%s0 + $0xc8] sm:$0xf]
  %v62 = vld [vmem:[%s0 + $0xcc] sm:$0xf]
  %v63 = vld [vmem:[%s0 + $0xd0] sm:$0xf]
  %v64 = vld [vmem:[%s0 + $0xd4] sm:$0xf]
  %v65 = vld [vmem:[%s0 + $0xd8] sm:$0xf]
  %v66 = vld [vmem:[%s0 + $0xdc] sm:$0xf]
  %v67 = vld [vmem:[%s0 + $0xe0] sm:$0xf]
  %v68 = vld [vmem:[%s0 + $0xe4] sm:$0xf]
  %v69 = vld [vmem:[%s0 + $0xe8] sm:$0xf]
  %v70 = vld [vmem:[%s0 + $0xec] sm:$0xf]
  %v71 = vld [vmem:[%s0 + $0xf0] sm:$0xf]
  %v72 = vld [vmem:[%s0 + $0xf4] sm:$0xf]
  %v73 = vld [vmem:[%s0 + $0xf8] sm:$0xf]
  %v74 = vld [vmem:[%s0 + $0xfc] sm:$0xf]
  %v75 = vld [vmem:[%s0 + $0x100] sm:$0xf]
  %v76 = vld [vmem:[%s0 + $0x104] sm:$0xf]
  %v77 = vld [vmem:[%s0 + $0x108] sm:$0xf]
  %v78 = vld [vmem:[%s0 + $0x10c] sm:$0xf]
  %v79 = vld [vmem:[%s0 + $0x110] sm:$0xf]
  %v80 = vld [vmem:[%s0 + $0x114] sm:$0xf]
  %v81 = vld [vmem:[%s0 + $0x118] sm:$0xf]
  %v82 = vld [vmem:[%s0 + $0x11c] sm:$0xf]
  %v83 = vld [vmem:[%s0 + $0x120] sm:$0xf]
  %v84 = vld [vmem:[%s0 + $0x124] sm:$0xf]
  %v85 = vld [vmem:[%s0 + $0x128] sm:$0xf]
  %v86 = vld [vmem:[%s0 + $0x12c] sm:$0xf]
  %v87 = vld [vmem:[%s0 + $0x130] sm:$0xf]
  %v88 = vld [vmem:[%s0 + $0x134] sm:$0xf]
  %v89 = vld [vmem:[%s0 + $0x138] sm:$0xf]
  %v90 = vld [vmem:[%s0 + $0x13c] sm:$0xf]
  %v91 = vld [vmem:[%s0 + $0x140] sm:$0xf]
  %v92 = vld [vmem:[%s0 + $0x144] sm:$0xf]
  %v93 = vld [vmem:[%s0 + $0x148] sm:$0xf]
  %v94 = vld [vmem:[%s0 + $0x14c] sm:$0xf]
  %v95 = vld [vmem:[%s0 + $0x150] sm:$0xf]
  %v96 = vld [vmem:[%s0 + $0x154] sm:$0xf]
  %v97 = vld [vmem:[%s0 + $0x158] sm:$0xf]
  %v98 = vld [vmem:[%s0 + $0x15c] sm:$0xf]
  %v99 = vld [vmem:[%s0 + $0x160] sm:$0xf]
  %v100 = vld [vmem:[%s0 + $0x164] sm:$0xf]
  %v101 = vld [vmem:[%s0 + $0x168] sm:$0xf]
  %v102 = vld [vmem:[%s0 + $0x16c] sm:$0xf]
  %v103 = vld [vmem:[%s0 + $0x170] sm:$0xf]
  %v104 = vld [vmem:[%s0 + $0x174] sm:$0xf]
  %v105 = vld [vmem:[%s0 + $0x178] sm:$0xf]
  %v106 = vld [vmem:[%s0 + $0x17c] sm:$0xf]
  %v107 = vld [vmem:[%s0 + $0x180] sm:$0xf]
  %v108 = vld [vmem:[%s0 + $0x184] sm:$0xf]
  %v109 = vld [vmem:[%s0 + $0x188] sm:$0xf]
  %v110 = vld [vmem:[%s0 + $0x18c] sm:$0xf]
  %v111 = vld [vmem:[%s0 + $0x190] sm:$0xf]
  %v112 = vld [vmem:[%s0 + $0x194] sm:$0xf]
  %v113 = vld [vmem:[%s0 + $0x198] sm:$0xf]
  %v114 = vld [vmem:[%s0 + $0x19c] sm:$0xf]
  %v115 = vld [vmem:[%s0 + $0x1a0] sm:$0xf]
  %v116 = vld [vmem:[%s0 + $0x1a4] sm:$0xf]
  %v117 = vld [vmem:[%s0 + $0x1a8] sm:$0xf]
  %v118 = vld [vmem:[%s0 + $0x1ac] sm:$0xf]
  %v119 = vld [vmem:[%s0 + $0x1b0] sm:$0xf]
  %v120 = vld [vmem:[%s0 + $0x1b4] sm:$0xf]
  %v121 = vld [vmem:[%s0 + $0x1b8] sm:$0xf]
  %v122 = vld [vmem:[%s0 + $0x1bc] sm:$0xf]
  %v123 = vld [vmem:[%s0 + $0x1c0] sm:$0xf]
  %v124 = vld [vmem:[%s0 + $0x1c4] sm:$0xf]
  %v125 = vld [vmem:[%s0 + $0x1c8] sm:$0xf]
  %v126 = vld [vmem:[%s0 + $0x1cc] sm:$0xf]
  %v127 = vld [vmem:[%s0 + $0x1d0] sm:$0xf]
  %v128 = vld [vmem:[%s0 + $0x1d4] sm:$0xf]
  %v129 = vld [vmem:[%s0 + $0x1d8] sm:$0xf]
  %v130 = vld [vmem:[%s0 + $0x1dc] sm:$0xf]
  %v131 = vld [vmem:[%s0 + $0x1e0] sm:$0xf]
  %v132 = vld [vmem:[%s0 + $0x1e4] sm:$0xf]
  %v133 = vld [vmem:[%s0 + $0x1e8] sm:$0xf]
  %v134 = vld [vmem:[%s0 + $0x1ec] sm:$0xf]
  %v135 = vld [vmem:[%s0 + $0x1f0] sm:$0xf]
  %v136 = vld [vmem:[%s0 + $0x1f4] sm:$0xf]
  %v137 = vld [vmem:[%s0 + $0x1f8] sm:$0xf]
  %v138 = vld [vmem:[%s0 + $0x1fc] sm:$0xf]
  %v139 = vld [vmem:[%s0 + $0x200] sm:$0xf]
  %v140 = vld [vmem:[%s0 + $0x204] sm:$0xf]
  %v141 = vld [vmem:[%s0 + $0x208] sm:$0xf]
  %v142 = vld [vmem:[%s0 + $0x20c] sm:$0xf]
  %v143 = vld [vmem:[%s0 + $0x210] sm:$0xf]
  %v144 = vld [vmem:[%s0 + $0x214] sm:$0xf]
  %v145 = vld [vmem:[%s0 + $0x218] sm:$0xf]
  %v146 = vld [vmem:[%s0 + $0x21c] sm:$0xf]
  %v147 = vld [vmem:[%s0 + $0x220] sm:$0xf]
  %v148 = vld [vmem:[%s0 + $0x224] sm:$0xf]
  %v149 = vld [vmem:[%s0 + $0x228] sm:$0xf]
  %v150 = vld [vmem:[%s0 + $0x22c] sm:$0xf]
  %v151 = vld [vmem:[%s0 + $0x230] sm:$0xf]
  %v152 = vld [vmem:[%s0 + $0x234] sm:$0xf]
  %v153 = vld [vmem:[%s0 + $0x238] sm:$0xf]
  %v154 = vld [vmem:[%s0 + $0x23c] sm:$0xf]
  %v155 = vld [vmem:[%s0 + $0x240] sm:$0xf]
  %v156 = vld [vmem:[%s0 + $0x244] sm:$0xf]
  %v157 = vld [vmem:[%s0 + $0x248] sm:$0xf]
  %v158 = vld [vmem:[%s0 + $0x24c] sm:$0xf]
  %v159 = vld [vmem:[%s0 + $0x250] sm:$0xf]
  %v160 = vld [vmem:[%s0 + $0x254] sm:$0xf]
  %v161 = vld [vmem:[%s0 + $0x258] sm:$0xf]
  %v162 = vld [vmem:[%s0 + $0x25c] sm:$0xf]
  %v163 = vld [vmem:[%s0 + $0x260] sm:$0xf]
  %v164 = vld [vmem:[%s0 + $0x264] sm:$0xf]
  %v165 = vld [vmem:[%s0 + $0x268] sm:$0xf]
  %v166 = vld [vmem:[%s0 + $0x26c] sm:$0xf]
  %v167 = vld [vmem:[%s0 + $0x270] sm:$0xf]
  %v168 = vld [vmem:[%s0 + $0x274] sm:$0xf]
  %v169 = vld [vmem:[%s0 + $0x278] sm:$0xf]
  %v170 = vld [vmem:[%s0 + $0x27c] sm:$0xf]
  %v171 = vld [vmem:[%s0 + $0x280] sm:$0xf]
  %v172 = vld [vmem:[%s0 + $0x284] sm:$0xf]
  %v173 = vld [vmem:[%s0 + $0x288] sm:$0xf]
  %v174 = vld [vmem:[%s0 + $0x28c] sm:$0xf]
  %v175 = vld [vmem:[%s0 + $0x290] sm:$0xf]
  %v176 = vld [vmem:[%s0 + $0x294] sm:$0xf]
  %v177 = vld [vmem:[%s0 + $0x298] sm:$0xf]
  %v178 = vld [vmem:[%s0 + $0x29c] sm:$0xf]
  %v179 = vld [vmem:[%s0 + $0x2a0] sm:$0xf]
  %v180 = vld [vmem:[%s0 + $0x2a4] sm:$0xf]
  %v181 = vld [vmem:[%s0 + $0x2a8] sm:$0xf]
  %v182 = vld [vmem:[%s0 + $0x2ac] sm:$0xf]
  %v183 = vld [vmem:[%s0 + $0x2b0] sm:$0xf]
  %v184 = vld [vmem:[%s0 + $0x2b4] sm:$0xf]
  %v185 = vld [vmem:[%s0 + $0x2b8] sm:$0xf]
  %v186 = vld [vmem:[%s0 + $0x2bc] sm:$0xf]
  %v187 = vld [vmem:[%s0 + $0x2c0] sm:$0xf]
  %v188 = vld [vmem:[%s0 + $0x2c4] sm:$0xf]
  %v189 = vld [vmem:[%s0 + $0x2c8] sm:$0xf]
  %v190 = vld [vmem:[%s0 + $0x2cc] sm:$0xf]
  %v191 = vld [vmem:[%s0 + $0x2d0] sm:$0xf]
  %v192 = vld [vmem:[%s0 + $0x2d4] sm:$0xf]
  %v193 = vld [vmem:[%s0 + $0x2d8] sm:$0xf]
  %v194 = vld [vmem:[%s0 + $0x2dc] sm:$0xf]
  %v195 = vld [vmem:[%s0 + $0x2e0] sm:$0xf]
  %v196 = vld [vmem:[%s0 + $0x2e4] sm:$0xf]
  %v197 = vld [vmem:[%s0 + $0x2e8] sm:$0xf]
  %v198 = vld [vmem:[%s0 + $0x2ec] sm:$0xf]
  %v199 = vld [vmem:[%s0 + $0x2f0] sm:$0xf]
  %v200 = vld [vmem:[%s0 + $0x2f4] sm:$0xf]
  %v201 = vld [vmem:[%s0 + $0x2f8] sm:$0xf]
  %v202 = vld [vmem:[%s0 + $0x2fc] sm:$0xf]
  %v203 = vld [vmem:[%s0 + $0x300] sm:$0xf]
  %v204 = vld [vmem:[%s0 + $0x304] sm:$0xf]
  %v205 = vld [vmem:[%s0 + $0x308] sm:$0xf]
  %v206 = vld [vmem:[%s0 + $0x30c] sm:$0xf]
  %v207 = vld [vmem:[%s0 + $0x310] sm:$0xf]
  %v208 = vld [vmem:[%s0 + $0x314] sm:$0xf]
  %v209 = vld [vmem:[%s0 + $0x318] sm:$0xf]
  %v210 = vld [vmem:[%s0 + $0x31c] sm:$0xf]
  %v211 = vld [vmem:[%s0 + $0x320] sm:$0xf]
  %v212 = vld [vmem:[%s0 + $0x324] sm:$0xf]
  %v213 = vld [vmem:[%s0 + $0x328] sm:$0xf]
  %v214 = vld [vmem:[%s0 + $0x32c] sm:$0xf]
  %v215 = vld [vmem:[%s0 + $0x330] sm:$0xf]
  %v216 = vld [vmem:[%s0 + $0x334] sm:$0xf]
  %v217 = vld [vmem:[%s0 + $0x338] sm:$0xf]
  %v218 = vld [vmem:[%s0 + $0x33c] sm:$0xf]
  %v219 = vld [vmem:[%s0 + $0x340] sm:$0xf]
  %v220 = vld [vmem:[%s0 + $0x344] sm:$0xf]
  %v221 = vld [vmem:[%s0 + $0x348] sm:$0xf]
  %v222 = vld [vmem:[%s0 + $0x34c] sm:$0xf]
  %v223 = vld [vmem:[%s0 + $0x350] sm:$0xf]
  %v224 = vld [vmem:[%s0 + $0x354] sm:$0xf]
  %v225 = vld [vmem:[%s0 + $0x358] sm:$0xf]
  %v226 = vld [vmem:[%s0 + $0x35c] sm:$0xf]
  %v227 = vld [vmem:[%s0 + $0x360] sm:$0xf]
  %v228 = vld [vmem:[%s0 + $0x364] sm:$0xf]
  %v229 = vld [vmem:[%s0 + $0x368] sm:$0xf]
  %v230 = vld [vmem:[%s0 + $0x36c] sm:$0xf]
  %v231 = vld [vmem:[%s0 + $0x370] sm:$0xf]
  %v232 = vld [vmem:[%s0 + $0x374] sm:$0xf]
  %v233 = vld [vmem:[%s0 + $0x378] sm:$0xf]
  %v234 = vld [vmem:[%s0 + $0x37c] sm:$0xf]
  %v235 = vld [vmem:[%s0 + $0x380] sm:$0xf]
  %v236 = vld [vmem:[%s0 + $0x384] sm:$0xf]
  %v237 = vld [vmem:[%s0 + $0x388] sm:$0xf]
  %v238 = vld [vmem:[%s0 + $0x38c] sm:$0xf]
  %v239 = vld [vmem:[%s0 + $0x390] sm:$0xf]
  %v240 = vld [vmem:[%s0 + $0x394] sm:$0xf]
  %v241 = vld [vmem:[%s0 + $0x398] sm:$0xf]
  %v242 = vld [vmem:[%s0 + $0x39c] sm:$0xf]
  %v243 = vld [vmem:[%s0 + $0x3a0] sm:$0xf]
  %v244 = vld [vmem:[%s0 + $0x3a4] sm:$0xf]
  %v245 = vld [vmem:[%s0 + $0x3a8] sm:$0xf]
  %v246 = vld [vmem:[%s0 + $0x3ac] sm:$0xf]
  %v247 = vld [vmem:[%s0 + $0x3b0] sm:$0xf]
  %v248 = vld [vmem:[%s0 + $0x3b4] sm:$0xf]
  %v249 = vld [vmem:[%s0 + $0x3b8] sm:$0xf]
  %v250 = vld [vmem:[%s0 + $0x3bc] sm:$0xf]
  %v251 = vld [vmem:[%s0 + $0x3c0] sm:$0xf]
  %v252 = vld [vmem:[%s0 + $0x3c4] sm:$0xf]
  %v253 = vld [vmem:[%s0 + $0x3c8] sm:$0xf]
  %v254 = vld [vmem:[%s0 + $0x3cc] sm:$0xf]
  %v255 = vld [vmem:[%s0 + $0x3d0] sm:$0xf]
  %v256 = vld [vmem:[%s0 + $0x3d4] sm:$0xf]
  %v257 = vld [vmem:[%s0 + $0x3d8] sm:$0xf]
  %v258 = vld [vmem:[%s0 + $0x3dc] sm:$0xf]
  %v259 = vld [vmem:[%s0 + $0x3e0] sm:$0xf]
  %v260 = vld [vmem:[%s0 + $0x3e4] sm:$0xf]
  %v261 = vld [vmem:[%s0 + $0x3e8] sm:$0xf]
  %v262 = vld [vmem:[%s0 + $0x3ec] sm:$0xf]
  %v263 = vld [vmem:[%s0 + $0x3f0] sm:$0xf]
  %v264 = vld [vmem:[%s0 + $0x3f4] sm:$0xf]
  %v265 = vld [vmem:[%s0 + $0x3f8] sm:$0xf]
  %v266 = vld [vmem:[%s0 + $0x3fc] sm:$0xf]
  %v267 = vld [vmem:[%s1] sm:$0xf]
  %v268 = vld [vmem:[%s1 + $0x4] sm:$0xf]
  %v269 = vld [vmem:[%s1 + $0x8] sm:$0xf]
  %v270 = vld [vmem:[%s1 + $0xc] sm:$0xf]
  %v271 = vld [vmem:[%s1 + $0x10] sm:$0xf]
  %v272 = vld [vmem:[%s1 + $0x14] sm:$0xf]
  %v273 = vld [vmem:[%s1 + $0x18] sm:$0xf]
  %v274 = vld [vmem:[%s1 + $0x1c] sm:$0xf]
  %v275 = vld [vmem:[%s1 + $0x20] sm:$0xf]
  %v276 = vld [vmem:[%s1 + $0x24] sm:$0xf]
  %v277 = vld [vmem:[%s1 + $0x28] sm:$0xf]
  %v278 = vld [vmem:[%s1 + $0x2c] sm:$0xf]
  %v279 = vld [vmem:[%s1 + $0x30] sm:$0xf]
  %v280 = vld [vmem:[%s1 + $0x34] sm:$0xf]
  %v281 = vld [vmem:[%s1 + $0x38] sm:$0xf]
  %v282 = vld [vmem:[%s1 + $0x3c] sm:$0xf]
  %v539 = vunpack.c.l.b16 %v11
  %v540 = vunpack.c.l.b16 %v12
  %v541 = vunpack.c.l.b16 %v13
  %v542 = vunpack.c.l.b16 %v14
  %v543 = vunpack.c.l.b16 %v15
  %v544 = vunpack.c.l.b16 %v16
  %v545 = vunpack.c.l.b16 %v17
  %v546 = vunpack.c.l.b16 %v18
  %v547 = vunpack.c.l.b16 %v19
  %v548 = vunpack.c.l.b16 %v20
  %v549 = vunpack.c.l.b16 %v21
  %v550 = vunpack.c.l.b16 %v22
  %v551 = vunpack.c.l.b16 %v23
  %v552 = vunpack.c.l.b16 %v24
  %v553 = vunpack.c.l.b16 %v25
  %v554 = vunpack.c.l.b16 %v26
  %v555 = vunpack.c.l.b16 %v27
  %v556 = vunpack.c.l.b16 %v28
  %v557 = vunpack.c.l.b16 %v29
  %v558 = vunpack.c.l.b16 %v30
  %v559 = vunpack.c.l.b16 %v31
  %v560 = vunpack.c.l.b16 %v32
  %v561 = vunpack.c.l.b16 %v33
  %v562 = vunpack.c.l.b16 %v34
  %v563 = vunpack.c.l.b16 %v35
  %v564 = vunpack.c.l.b16 %v36
  %v565 = vunpack.c.l.b16 %v37
  %v566 = vunpack.c.l.b16 %v38
  %v567 = vunpack.c.l.b16 %v39
  %v568 = vunpack.c.l.b16 %v40
  %v569 = vunpack.c.l.b16 %v41
  %v570 = vunpack.c.l.b16 %v42
  %v571 = vunpack.c.l.b16 %v43
  %v572 = vunpack.c.l.b16 %v44
  %v573 = vunpack.c.l.b16 %v45
  %v574 = vunpack.c.l.b16 %v46
  %v575 = vunpack.c.l.b16 %v47
  %v576 = vunpack.c.l.b16 %v48
  %v577 = vunpack.c.l.b16 %v49
  %v578 = vunpack.c.l.b16 %v50
  %v579 = vunpack.c.l.b16 %v51
  %v580 = vunpack.c.l.b16 %v52
  %v581 = vunpack.c.l.b16 %v53
  %v582 = vunpack.c.l.b16 %v54
  %v583 = vunpack.c.l.b16 %v55
  %v584 = vunpack.c.l.b16 %v56
  %v585 = vunpack.c.l.b16 %v57
  %v586 = vunpack.c.l.b16 %v58
  %v587 = vunpack.c.l.b16 %v59
  %v588 = vunpack.c.l.b16 %v60
  %v589 = vunpack.c.l.b16 %v61
  %v590 = vunpack.c.l.b16 %v62
  %v591 = vunpack.c.l.b16 %v63
  %v592 = vunpack.c.l.b16 %v64
  %v593 = vunpack.c.l.b16 %v65
  %v594 = vunpack.c.l.b16 %v66
  %v595 = vunpack.c.l.b16 %v67
  %v596 = vunpack.c.l.b16 %v68
  %v597 = vunpack.c.l.b16 %v69
  %v598 = vunpack.c.l.b16 %v70
  %v599 = vunpack.c.l.b16 %v71
  %v600 = vunpack.c.l.b16 %v72
  %v601 = vunpack.c.l.b16 %v73
  %v602 = vunpack.c.l.b16 %v74
  %v603 = vunpack.c.l.b16 %v75
  %v604 = vunpack.c.l.b16 %v76
  %v605 = vunpack.c.l.b16 %v77
  %v606 = vunpack.c.l.b16 %v78
  %v607 = vunpack.c.l.b16 %v79
  %v608 = vunpack.c.l.b16 %v80
  %v609 = vunpack.c.l.b16 %v81
  %v610 = vunpack.c.l.b16 %v82
  %v611 = vunpack.c.l.b16 %v83
  %v612 = vunpack.c.l.b16 %v84
  %v613 = vunpack.c.l.b16 %v85
  %v614 = vunpack.c.l.b16 %v86
  %v615 = vunpack.c.l.b16 %v87
  %v616 = vunpack.c.l.b16 %v88
  %v617 = vunpack.c.l.b16 %v89
  %v618 = vunpack.c.l.b16 %v90
  %v619 = vunpack.c.l.b16 %v91
  %v620 = vunpack.c.l.b16 %v92
  %v621 = vunpack.c.l.b16 %v93
  %v622 = vunpack.c.l.b16 %v94
  %v623 = vunpack.c.l.b16 %v95
  %v624 = vunpack.c.l.b16 %v96
  %v625 = vunpack.c.l.b16 %v97
  %v626 = vunpack.c.l.b16 %v98
  %v627 = vunpack.c.l.b16 %v99
  %v628 = vunpack.c.l.b16 %v100
  %v629 = vunpack.c.l.b16 %v101
  %v630 = vunpack.c.l.b16 %v102
  %v631 = vunpack.c.l.b16 %v103
  %v632 = vunpack.c.l.b16 %v104
  %v633 = vunpack.c.l.b16 %v105
  %v634 = vunpack.c.l.b16 %v106
  %v635 = vunpack.c.l.b16 %v107
  %v636 = vunpack.c.l.b16 %v108
  %v637 = vunpack.c.l.b16 %v109
  %v638 = vunpack.c.l.b16 %v110
  %v639 = vunpack.c.l.b16 %v111
  %v640 = vunpack.c.l.b16 %v112
  %v641 = vunpack.c.l.b16 %v113
  %v642 = vunpack.c.l.b16 %v114
  %v643 = vunpack.c.l.b16 %v115
  %v644 = vunpack.c.l.b16 %v116
  %v645 = vunpack.c.l.b16 %v117
  %v646 = vunpack.c.l.b16 %v118
  %v647 = vunpack.c.l.b16 %v119
  %v648 = vunpack.c.l.b16 %v120
  %v649 = vunpack.c.l.b16 %v121
  %v650 = vunpack.c.l.b16 %v122
  %v651 = vunpack.c.l.b16 %v123
  %v652 = vunpack.c.l.b16 %v124
  %v653 = vunpack.c.l.b16 %v125
  %v654 = vunpack.c.l.b16 %v126
  %v655 = vunpack.c.l.b16 %v127
  %v656 = vunpack.c.l.b16 %v128
  %v657 = vunpack.c.l.b16 %v129
  %v658 = vunpack.c.l.b16 %v130
  %v659 = vunpack.c.l.b16 %v131
  %v660 = vunpack.c.l.b16 %v132
  %v661 = vunpack.c.l.b16 %v133
  %v662 = vunpack.c.l.b16 %v134
  %v663 = vunpack.c.l.b16 %v135
  %v664 = vunpack.c.l.b16 %v136
  %v665 = vunpack.c.l.b16 %v137
  %v666 = vunpack.c.l.b16 %v138
  %v667 = vunpack.c.l.b16 %v139
  %v668 = vunpack.c.l.b16 %v140
  %v669 = vunpack.c.l.b16 %v141
  %v670 = vunpack.c.l.b16 %v142
  %v671 = vunpack.c.l.b16 %v143
  %v672 = vunpack.c.l.b16 %v144
  %v673 = vunpack.c.l.b16 %v145
  %v674 = vunpack.c.l.b16 %v146
  %v675 = vunpack.c.l.b16 %v147
  %v676 = vunpack.c.l.b16 %v148
  %v677 = vunpack.c.l.b16 %v149
  %v678 = vunpack.c.l.b16 %v150
  %v679 = vunpack.c.l.b16 %v151
  %v680 = vunpack.c.l.b16 %v152
  %v681 = vunpack.c.l.b16 %v153
  %v682 = vunpack.c.l.b16 %v154
  %v683 = vunpack.c.l.b16 %v155
  %v684 = vunpack.c.l.b16 %v156
  %v685 = vunpack.c.l.b16 %v157
  %v686 = vunpack.c.l.b16 %v158
  %v687 = vunpack.c.l.b16 %v159
  %v688 = vunpack.c.l.b16 %v160
  %v689 = vunpack.c.l.b16 %v161
  %v690 = vunpack.c.l.b16 %v162
  %v691 = vunpack.c.l.b16 %v163
  %v692 = vunpack.c.l.b16 %v164
  %v693 = vunpack.c.l.b16 %v165
  %v694 = vunpack.c.l.b16 %v166
  %v695 = vunpack.c.l.b16 %v167
  %v696 = vunpack.c.l.b16 %v168
  %v697 = vunpack.c.l.b16 %v169
  %v698 = vunpack.c.l.b16 %v170
  %v699 = vunpack.c.l.b16 %v171
  %v700 = vunpack.c.l.b16 %v172
  %v701 = vunpack.c.l.b16 %v173
  %v702 = vunpack.c.l.b16 %v174
  %v703 = vunpack.c.l.b16 %v175
  %v704 = vunpack.c.l.b16 %v176
  %v705 = vunpack.c.l.b16 %v177
  %v706 = vunpack.c.l.b16 %v178
  %v707 = vunpack.c.l.b16 %v179
  %v708 = vunpack.c.l.b16 %v180
  %v709 = vunpack.c.l.b16 %v181
  %v710 = vunpack.c.l.b16 %v182
  %v711 = vunpack.c.l.b16 %v183
  %v712 = vunpack.c.l.b16 %v184
  %v713 = vunpack.c.l.b16 %v185
  %v714 = vunpack.c.l.b16 %v186
  %v715 = vunpack.c.l.b16 %v187
  %v716 = vunpack.c.l.b16 %v188
  %v717 = vunpack.c.l.b16 %v189
  %v718 = vunpack.c.l.b16 %v190
  %v719 = vunpack.c.l.b16 %v191
  %v720 = vunpack.c.l.b16 %v192
  %v721 = vunpack.c.l.b16 %v193
  %v722 = vunpack.c.l.b16 %v194
  %v723 = vunpack.c.l.b16 %v195
  %v724 = vunpack.c.l.b16 %v196
  %v725 = vunpack.c.l.b16 %v197
  %v726 = vunpack.c.l.b16 %v198
  %v727 = vunpack.c.l.b16 %v199
  %v728 = vunpack.c.l.b16 %v200
  %v729 = vunpack.c.l.b16 %v201
  %v730 = vunpack.c.l.b16 %v202
  %v731 = vunpack.c.l.b16 %v203
  %v732 = vunpack.c.l.b16 %v204
  %v733 = vunpack.c.l.b16 %v205
  %v734 = vunpack.c.l.b16 %v206
  %v735 = vunpack.c.l.b16 %v207
  %v736 = vunpack.c.l.b16 %v208
  %v737 = vunpack.c.l.b16 %v209
  %v738 = vunpack.c.l.b16 %v210
  %v739 = vunpack.c.l.b16 %v211
  %v740 = vunpack.c.l.b16 %v212
  %v741 = vunpack.c.l.b16 %v213
  %v742 = vunpack.c.l.b16 %v214
  %v743 = vunpack.c.l.b16 %v215
  %v744 = vunpack.c.l.b16 %v216
  %v745 = vunpack.c.l.b16 %v217
  %v746 = vunpack.c.l.b16 %v218
  %v747 = vunpack.c.l.b16 %v219
  %v748 = vunpack.c.l.b16 %v220
  %v749 = vunpack.c.l.b16 %v221
  %v750 = vunpack.c.l.b16 %v222
  %v751 = vunpack.c.l.b16 %v223
  %v752 = vunpack.c.l.b16 %v224
  %v753 = vunpack.c.l.b16 %v225
  %v754 = vunpack.c.l.b16 %v226
  %v755 = vunpack.c.l.b16 %v227
  %v756 = vunpack.c.l.b16 %v228
  %v757 = vunpack.c.l.b16 %v229
  %v758 = vunpack.c.l.b16 %v230
  %v759 = vunpack.c.l.b16 %v231
  %v760 = vunpack.c.l.b16 %v232
  %v761 = vunpack.c.l.b16 %v233
  %v762 = vunpack.c.l.b16 %v234
  %v763 = vunpack.c.l.b16 %v235
  %v764 = vunpack.c.l.b16 %v236
  %v765 = vunpack.c.l.b16 %v237
  %v766 = vunpack.c.l.b16 %v238
  %v767 = vunpack.c.l.b16 %v239
  %v768 = vunpack.c.l.b16 %v240
  %v769 = vunpack.c.l.b16 %v241
  %v770 = vunpack.c.l.b16 %v242
  %v771 = vunpack.c.l.b16 %v243
  %v772 = vunpack.c.l.b16 %v244
  %v773 = vunpack.c.l.b16 %v245
  %v774 = vunpack.c.l.b16 %v246
  %v775 = vunpack.c.l.b16 %v247
  %v776 = vunpack.c.l.b16 %v248
  %v777 = vunpack.c.l.b16 %v249
  %v778 = vunpack.c.l.b16 %v250
  %v779 = vunpack.c.l.b16 %v251
  %v780 = vunpack.c.l.b16 %v252
  %v781 = vunpack.c.l.b16 %v253
  %v782 = vunpack.c.l.b16 %v254
  %v783 = vunpack.c.l.b16 %v255
  %v784 = vunpack.c.l.b16 %v256
  %v785 = vunpack.c.l.b16 %v257
  %v786 = vunpack.c.l.b16 %v258
  %v787 = vunpack.c.l.b16 %v259
  %v788 = vunpack.c.l.b16 %v260
  %v789 = vunpack.c.l.b16 %v261
  %v790 = vunpack.c.l.b16 %v262
  %v791 = vunpack.c.l.b16 %v263
  %v792 = vunpack.c.l.b16 %v264
  %v793 = vunpack.c.l.b16 %v265
  %v794 = vunpack.c.l.b16 %v266
  %v795 = vpack.c.b16 %v540, %v539
  %v796 = vpack.c.b16 %v542, %v541
  %v797 = vpack.c.b16 %v544, %v543
  %v798 = vpack.c.b16 %v546, %v545
  %v799 = vpack.c.b16 %v548, %v547
  %v800 = vpack.c.b16 %v550, %v549
  %v801 = vpack.c.b16 %v552, %v551
  %v802 = vpack.c.b16 %v554, %v553
  %v803 = vpack.c.b16 %v556, %v555
  %v804 = vpack.c.b16 %v558, %v557
  %v805 = vpack.c.b16 %v560, %v559
  %v806 = vpack.c.b16 %v562, %v561
  %v807 = vpack.c.b16 %v564, %v563
  %v808 = vpack.c.b16 %v566, %v565
  %v809 = vpack.c.b16 %v568, %v567
  %v810 = vpack.c.b16 %v570, %v569
  %v811 = vpack.c.b16 %v572, %v571
  %v812 = vpack.c.b16 %v574, %v573
  %v813 = vpack.c.b16 %v576, %v575
  %v814 = vpack.c.b16 %v578, %v577
  %v815 = vpack.c.b16 %v580, %v579
  %v816 = vpack.c.b16 %v582, %v581
  %v817 = vpack.c.b16 %v584, %v583
  %v818 = vpack.c.b16 %v586, %v585
  %v819 = vpack.c.b16 %v588, %v587
  %v820 = vpack.c.b16 %v590, %v589
  %v821 = vpack.c.b16 %v592, %v591
  %v822 = vpack.c.b16 %v594, %v593
  %v823 = vpack.c.b16 %v596, %v595
  %v824 = vpack.c.b16 %v598, %v597
  %v825 = vpack.c.b16 %v600, %v599
  %v826 = vpack.c.b16 %v602, %v601
  %v827 = vpack.c.b16 %v604, %v603
  %v828 = vpack.c.b16 %v606, %v605
  %v829 = vpack.c.b16 %v608, %v607
  %v830 = vpack.c.b16 %v610, %v609
  %v831 = vpack.c.b16 %v612, %v611
  %v832 = vpack.c.b16 %v614, %v613
  %v833 = vpack.c.b16 %v616, %v615
  %v834 = vpack.c.b16 %v618, %v617
  %v835 = vpack.c.b16 %v620, %v619
  %v836 = vpack.c.b16 %v622, %v621
  %v837 = vpack.c.b16 %v624, %v623
  %v838 = vpack.c.b16 %v626, %v625
  %v839 = vpack.c.b16 %v628, %v627
  %v840 = vpack.c.b16 %v630, %v629
  %v841 = vpack.c.b16 %v632, %v631
  %v842 = vpack.c.b16 %v634, %v633
  %v843 = vpack.c.b16 %v636, %v635
  %v844 = vpack.c.b16 %v638, %v637
  %v845 = vpack.c.b16 %v640, %v639
  %v846 = vpack.c.b16 %v642, %v641
  %v847 = vpack.c.b16 %v644, %v643
  %v848 = vpack.c.b16 %v646, %v645
  %v849 = vpack.c.b16 %v648, %v647
  %v850 = vpack.c.b16 %v650, %v649
  %v851 = vpack.c.b16 %v652, %v651
  %v852 = vpack.c.b16 %v654, %v653
  %v853 = vpack.c.b16 %v656, %v655
  %v854 = vpack.c.b16 %v658, %v657
  %v855 = vpack.c.b16 %v660, %v659
  %v856 = vpack.c.b16 %v662, %v661
  %v857 = vpack.c.b16 %v664, %v663
  %v858 = vpack.c.b16 %v666, %v665
  %v859 = vpack.c.b16 %v668, %v667
  %v860 = vpack.c.b16 %v670, %v669
  %v861 = vpack.c.b16 %v672, %v671
  %v862 = vpack.c.b16 %v674, %v673
  %v863 = vpack.c.b16 %v676, %v675
  %v864 = vpack.c.b16 %v678, %v677
  %v865 = vpack.c.b16 %v680, %v679
  %v866 = vpack.c.b16 %v682, %v681
  %v867 = vpack.c.b16 %v684, %v683
  %v868 = vpack.c.b16 %v686, %v685
  %v869 = vpack.c.b16 %v688, %v687
  %v870 = vpack.c.b16 %v690, %v689
  %v871 = vpack.c.b16 %v692, %v691
  %v872 = vpack.c.b16 %v694, %v693
  %v873 = vpack.c.b16 %v696, %v695
  %v874 = vpack.c.b16 %v698, %v697
  %v875 = vpack.c.b16 %v700, %v699
  %v876 = vpack.c.b16 %v702, %v701
  %v877 = vpack.c.b16 %v704, %v703
  %v878 = vpack.c.b16 %v706, %v705
  %v879 = vpack.c.b16 %v708, %v707
  %v880 = vpack.c.b16 %v710, %v709
  %v881 = vpack.c.b16 %v712, %v711
  %v882 = vpack.c.b16 %v714, %v713
  %v883 = vpack.c.b16 %v716, %v715
  %v884 = vpack.c.b16 %v718, %v717
  %v885 = vpack.c.b16 %v720, %v719
  %v886 = vpack.c.b16 %v722, %v721
  %v887 = vpack.c.b16 %v724, %v723
  %v888 = vpack.c.b16 %v726, %v725
  %v889 = vpack.c.b16 %v728, %v727
  %v890 = vpack.c.b16 %v730, %v729
  %v891 = vpack.c.b16 %v732, %v731
  %v892 = vpack.c.b16 %v734, %v733
  %v893 = vpack.c.b16 %v736, %v735
  %v894 = vpack.c.b16 %v738, %v737
  %v895 = vpack.c.b16 %v740, %v739
  %v896 = vpack.c.b16 %v742, %v741
  %v897 = vpack.c.b16 %v744, %v743
  %v898 = vpack.c.b16 %v746, %v745
  %v899 = vpack.c.b16 %v748, %v747
  %v900 = vpack.c.b16 %v750, %v749
  %v901 = vpack.c.b16 %v752, %v751
  %v902 = vpack.c.b16 %v754, %v753
  %v903 = vpack.c.b16 %v756, %v755
  %v904 = vpack.c.b16 %v758, %v757
  %v905 = vpack.c.b16 %v760, %v759
  %v906 = vpack.c.b16 %v762, %v761
  %v907 = vpack.c.b16 %v764, %v763
  %v908 = vpack.c.b16 %v766, %v765
  %v909 = vpack.c.b16 %v768, %v767
  %v910 = vpack.c.b16 %v770, %v769
  %v911 = vpack.c.b16 %v772, %v771
  %v912 = vpack.c.b16 %v774, %v773
  %v913 = vpack.c.b16 %v776, %v775
  %v914 = vpack.c.b16 %v778, %v777
  %v915 = vpack.c.b16 %v780, %v779
  %v916 = vpack.c.b16 %v782, %v781
  %v917 = vpack.c.b16 %v784, %v783
  %v918 = vpack.c.b16 %v786, %v785
  %v919 = vpack.c.b16 %v788, %v787
  %v920 = vpack.c.b16 %v790, %v789
  %v921 = vpack.c.b16 %v792, %v791
  %v922 = vpack.c.b16 %v794, %v793
  %v1067 = vunpack.c.l.b16 %v267
  %v1068 = vunpack.c.l.b16 %v268
  %v1069 = vunpack.c.l.b16 %v269
  %v1070 = vunpack.c.l.b16 %v270
  %v1071 = vunpack.c.l.b16 %v271
  %v1072 = vunpack.c.l.b16 %v272
  %v1073 = vunpack.c.l.b16 %v273
  %v1074 = vunpack.c.l.b16 %v274
  %v1075 = vunpack.c.l.b16 %v275
  %v1076 = vunpack.c.l.b16 %v276
  %v1077 = vunpack.c.l.b16 %v277
  %v1078 = vunpack.c.l.b16 %v278
  %v1079 = vunpack.c.l.b16 %v279
  %v1080 = vunpack.c.l.b16 %v280
  %v1081 = vunpack.c.l.b16 %v281
  %v1082 = vunpack.c.l.b16 %v282
  %v1083 = vpack.c.b16 %v1068, %v1067
  %v1084 = vpack.c.b16 %v1070, %v1069
  %v1085 = vpack.c.b16 %v1072, %v1071
  %v1086 = vpack.c.b16 %v1074, %v1073
  %v1087 = vpack.c.b16 %v1076, %v1075
  %v1088 = vpack.c.b16 %v1078, %v1077
  %v1089 = vpack.c.b16 %v1080, %v1079
  %v1090 = vpack.c.b16 %v1082, %v1081
  %1099 = vmatpush.bf16.msra.mxu0 %v1090
  %1100 = vmatpush.bf16.msra.mxu0 %v1089
  %1101 = vmatpush.bf16.msra.mxu0 %v1088
  %1102 = vmatpush.bf16.msra.mxu0 %v1087
  %1103 = vmatpush.bf16.msra.mxu0 %v1086
  %1104 = vmatpush.bf16.msra.mxu0 %v1085
  %1105 = vmatpush.bf16.msra.mxu0 %v1084
  %1106 = vmatpush.bf16.msra.mxu0 %v1083
  %1107 = vmatmul.bf16.gmra.mxu0 %v795
  %v1108 = vpop.f32.mrf.mxu0
  %v1109 = vadd.f32 0.0, %v1108
  %v1110 = vpop.f32.mrf.mxu0
  %v1111 = vadd.f32 0.0, %v1110
  %1112 = vmatmul.bf16.gmra.mxu0 %v796
  %v1113 = vpop.f32.mrf.mxu0
  %v1114 = vadd.f32 0.0, %v1113
  %v1115 = vpop.f32.mrf.mxu0
  %v1116 = vadd.f32 0.0, %v1115
  %1117 = vmatmul.bf16.gmra.mxu0 %v797
  %v1118 = vpop.f32.mrf.mxu0
  %v1119 = vadd.f32 0.0, %v1118
  %v1120 = vpop.f32.mrf.mxu0
  %v1121 = vadd.f32 0.0, %v1120
  %1122 = vmatmul.bf16.gmra.mxu0 %v798
  %v1123 = vpop.f32.mrf.mxu0
  %v1124 = vadd.f32 0.0, %v1123
  %v1125 = vpop.f32.mrf.mxu0
  %v1126 = vadd.f32 0.0, %v1125
  %1127 = vmatmul.bf16.gmra.mxu0 %v799
  %v1128 = vpop.f32.mrf.mxu0
  %v1129 = vadd.f32 0.0, %v1128
  %v1130 = vpop.f32.mrf.mxu0
  %v1131 = vadd.f32 0.0, %v1130
  %1132 = vmatmul.bf16.gmra.mxu0 %v800
  %v1133 = vpop.f32.mrf.mxu0
  %v1134 = vadd.f32 0.0, %v1133
  %v1135 = vpop.f32.mrf.mxu0
  %v1136 = vadd.f32 0.0, %v1135
  %1137 = vmatmul.bf16.gmra.mxu0 %v801
  %v1138 = vpop.f32.mrf.mxu0
  %v1139 = vadd.f32 0.0, %v1138
  %v1140 = vpop.f32.mrf.mxu0
  %v1141 = vadd.f32 0.0, %v1140
  %1142 = vmatmul.bf16.gmra.mxu0 %v802
  %v1143 = vpop.f32.mrf.mxu0
  %v1144 = vadd.f32 0.0, %v1143
  %v1145 = vpop.f32.mrf.mxu0
  %v1146 = vadd.f32 0.0, %v1145
  %1147 = vmatmul.bf16.gmra.mxu0 %v803
  %v1148 = vpop.f32.mrf.mxu0
  %v1149 = vadd.f32 0.0, %v1148
  %v1150 = vpop.f32.mrf.mxu0
  %v1151 = vadd.f32 0.0, %v1150
  %1152 = vmatmul.bf16.gmra.mxu0 %v804
  %v1153 = vpop.f32.mrf.mxu0
  %v1154 = vadd.f32 0.0, %v1153
  %v1155 = vpop.f32.mrf.mxu0
  %v1156 = vadd.f32 0.0, %v1155
  %1157 = vmatmul.bf16.gmra.mxu0 %v805
  %v1158 = vpop.f32.mrf.mxu0
  %v1159 = vadd.f32 0.0, %v1158
  %v1160 = vpop.f32.mrf.mxu0
  %v1161 = vadd.f32 0.0, %v1160
  %1162 = vmatmul.bf16.gmra.mxu0 %v806
  %v1163 = vpop.f32.mrf.mxu0
  %v1164 = vadd.f32 0.0, %v1163
  %v1165 = vpop.f32.mrf.mxu0
  %v1166 = vadd.f32 0.0, %v1165
  %1167 = vmatmul.bf16.gmra.mxu0 %v807
  %v1168 = vpop.f32.mrf.mxu0
  %v1169 = vadd.f32 0.0, %v1168
  %v1170 = vpop.f32.mrf.mxu0
  %v1171 = vadd.f32 0.0, %v1170
  %1172 = vmatmul.bf16.gmra.mxu0 %v808
  %v1173 = vpop.f32.mrf.mxu0
  %v1174 = vadd.f32 0.0, %v1173
  %v1175 = vpop.f32.mrf.mxu0
  %v1176 = vadd.f32 0.0, %v1175
  %1177 = vmatmul.bf16.gmra.mxu0 %v809
  %v1178 = vpop.f32.mrf.mxu0
  %v1179 = vadd.f32 0.0, %v1178
  %v1180 = vpop.f32.mrf.mxu0
  %v1181 = vadd.f32 0.0, %v1180
  %1182 = vmatmul.bf16.gmra.mxu0 %v810
  %v1183 = vpop.f32.mrf.mxu0
  %v1184 = vadd.f32 0.0, %v1183
  %v1185 = vpop.f32.mrf.mxu0
  %v1186 = vadd.f32 0.0, %v1185
  %1187 = vmatmul.bf16.gmra.mxu0 %v811
  %v1188 = vpop.f32.mrf.mxu0
  %v1189 = vadd.f32 0.0, %v1188
  %v1190 = vpop.f32.mrf.mxu0
  %v1191 = vadd.f32 0.0, %v1190
  %1192 = vmatmul.bf16.gmra.mxu0 %v812
  %v1193 = vpop.f32.mrf.mxu0
  %v1194 = vadd.f32 0.0, %v1193
  %v1195 = vpop.f32.mrf.mxu0
  %v1196 = vadd.f32 0.0, %v1195
  %1197 = vmatmul.bf16.gmra.mxu0 %v813
  %v1198 = vpop.f32.mrf.mxu0
  %v1199 = vadd.f32 0.0, %v1198
  %v1200 = vpop.f32.mrf.mxu0
  %v1201 = vadd.f32 0.0, %v1200
  %1202 = vmatmul.bf16.gmra.mxu0 %v814
  %v1203 = vpop.f32.mrf.mxu0
  %v1204 = vadd.f32 0.0, %v1203
  %v1205 = vpop.f32.mrf.mxu0
  %v1206 = vadd.f32 0.0, %v1205
  %1207 = vmatmul.bf16.gmra.mxu0 %v815
  %v1208 = vpop.f32.mrf.mxu0
  %v1209 = vadd.f32 0.0, %v1208
  %v1210 = vpop.f32.mrf.mxu0
  %v1211 = vadd.f32 0.0, %v1210
  %1212 = vmatmul.bf16.gmra.mxu0 %v816
  %v1213 = vpop.f32.mrf.mxu0
  %v1214 = vadd.f32 0.0, %v1213
  %v1215 = vpop.f32.mrf.mxu0
  %v1216 = vadd.f32 0.0, %v1215
  %1217 = vmatmul.bf16.gmra.mxu0 %v817
  %v1218 = vpop.f32.mrf.mxu0
  %v1219 = vadd.f32 0.0, %v1218
  %v1220 = vpop.f32.mrf.mxu0
  %v1221 = vadd.f32 0.0, %v1220
  %1222 = vmatmul.bf16.gmra.mxu0 %v818
  %v1223 = vpop.f32.mrf.mxu0
  %v1224 = vadd.f32 0.0, %v1223
  %v1225 = vpop.f32.mrf.mxu0
  %v1226 = vadd.f32 0.0, %v1225
  %1227 = vmatmul.bf16.gmra.mxu0 %v819
  %v1228 = vpop.f32.mrf.mxu0
  %v1229 = vadd.f32 0.0, %v1228
  %v1230 = vpop.f32.mrf.mxu0
  %v1231 = vadd.f32 0.0, %v1230
  %1232 = vmatmul.bf16.gmra.mxu0 %v820
  %v1233 = vpop.f32.mrf.mxu0
  %v1234 = vadd.f32 0.0, %v1233
  %v1235 = vpop.f32.mrf.mxu0
  %v1236 = vadd.f32 0.0, %v1235
  %1237 = vmatmul.bf16.gmra.mxu0 %v821
  %v1238 = vpop.f32.mrf.mxu0
  %v1239 = vadd.f32 0.0, %v1238
  %v1240 = vpop.f32.mrf.mxu0
  %v1241 = vadd.f32 0.0, %v1240
  %1242 = vmatmul.bf16.gmra.mxu0 %v822
  %v1243 = vpop.f32.mrf.mxu0
  %v1244 = vadd.f32 0.0, %v1243
  %v1245 = vpop.f32.mrf.mxu0
  %v1246 = vadd.f32 0.0, %v1245
  %1247 = vmatmul.bf16.gmra.mxu0 %v823
  %v1248 = vpop.f32.mrf.mxu0
  %v1249 = vadd.f32 0.0, %v1248
  %v1250 = vpop.f32.mrf.mxu0
  %v1251 = vadd.f32 0.0, %v1250
  %1252 = vmatmul.bf16.gmra.mxu0 %v824
  %v1253 = vpop.f32.mrf.mxu0
  %v1254 = vadd.f32 0.0, %v1253
  %v1255 = vpop.f32.mrf.mxu0
  %v1256 = vadd.f32 0.0, %v1255
  %1257 = vmatmul.bf16.gmra.mxu0 %v825
  %v1258 = vpop.f32.mrf.mxu0
  %v1259 = vadd.f32 0.0, %v1258
  %v1260 = vpop.f32.mrf.mxu0
  %v1261 = vadd.f32 0.0, %v1260
  %1262 = vmatmul.bf16.gmra.mxu0 %v826
  %v1263 = vpop.f32.mrf.mxu0
  %v1264 = vadd.f32 0.0, %v1263
  %v1265 = vpop.f32.mrf.mxu0
  %v1266 = vadd.f32 0.0, %v1265
  %1267 = vmatmul.bf16.gmra.mxu0 %v827
  %v1268 = vpop.f32.mrf.mxu0
  %v1269 = vadd.f32 0.0, %v1268
  %v1270 = vpop.f32.mrf.mxu0
  %v1271 = vadd.f32 0.0, %v1270
  %1272 = vmatmul.bf16.gmra.mxu0 %v828
  %v1273 = vpop.f32.mrf.mxu0
  %v1274 = vadd.f32 0.0, %v1273
  %v1275 = vpop.f32.mrf.mxu0
  %v1276 = vadd.f32 0.0, %v1275
  %1277 = vmatmul.bf16.gmra.mxu0 %v829
  %v1278 = vpop.f32.mrf.mxu0
  %v1279 = vadd.f32 0.0, %v1278
  %v1280 = vpop.f32.mrf.mxu0
  %v1281 = vadd.f32 0.0, %v1280
  %1282 = vmatmul.bf16.gmra.mxu0 %v830
  %v1283 = vpop.f32.mrf.mxu0
  %v1284 = vadd.f32 0.0, %v1283
  %v1285 = vpop.f32.mrf.mxu0
  %v1286 = vadd.f32 0.0, %v1285
  %1287 = vmatmul.bf16.gmra.mxu0 %v831
  %v1288 = vpop.f32.mrf.mxu0
  %v1289 = vadd.f32 0.0, %v1288
  %v1290 = vpop.f32.mrf.mxu0
  %v1291 = vadd.f32 0.0, %v1290
  %1292 = vmatmul.bf16.gmra.mxu0 %v832
  %v1293 = vpop.f32.mrf.mxu0
  %v1294 = vadd.f32 0.0, %v1293
  %v1295 = vpop.f32.mrf.mxu0
  %v1296 = vadd.f32 0.0, %v1295
  %1297 = vmatmul.bf16.gmra.mxu0 %v833
  %v1298 = vpop.f32.mrf.mxu0
  %v1299 = vadd.f32 0.0, %v1298
  %v1300 = vpop.f32.mrf.mxu0
  %v1301 = vadd.f32 0.0, %v1300
  %1302 = vmatmul.bf16.gmra.mxu0 %v834
  %v1303 = vpop.f32.mrf.mxu0
  %v1304 = vadd.f32 0.0, %v1303
  %v1305 = vpop.f32.mrf.mxu0
  %v1306 = vadd.f32 0.0, %v1305
  %1307 = vmatmul.bf16.gmra.mxu0 %v835
  %v1308 = vpop.f32.mrf.mxu0
  %v1309 = vadd.f32 0.0, %v1308
  %v1310 = vpop.f32.mrf.mxu0
  %v1311 = vadd.f32 0.0, %v1310
  %1312 = vmatmul.bf16.gmra.mxu0 %v836
  %v1313 = vpop.f32.mrf.mxu0
  %v1314 = vadd.f32 0.0, %v1313
  %v1315 = vpop.f32.mrf.mxu0
  %v1316 = vadd.f32 0.0, %v1315
  %1317 = vmatmul.bf16.gmra.mxu0 %v837
  %v1318 = vpop.f32.mrf.mxu0
  %v1319 = vadd.f32 0.0, %v1318
  %v1320 = vpop.f32.mrf.mxu0
  %v1321 = vadd.f32 0.0, %v1320
  %1322 = vmatmul.bf16.gmra.mxu0 %v838
  %v1323 = vpop.f32.mrf.mxu0
  %v1324 = vadd.f32 0.0, %v1323
  %v1325 = vpop.f32.mrf.mxu0
  %v1326 = vadd.f32 0.0, %v1325
  %1327 = vmatmul.bf16.gmra.mxu0 %v839
  %v1328 = vpop.f32.mrf.mxu0
  %v1329 = vadd.f32 0.0, %v1328
  %v1330 = vpop.f32.mrf.mxu0
  %v1331 = vadd.f32 0.0, %v1330
  %1332 = vmatmul.bf16.gmra.mxu0 %v840
  %v1333 = vpop.f32.mrf.mxu0
  %v1334 = vadd.f32 0.0, %v1333
  %v1335 = vpop.f32.mrf.mxu0
  %v1336 = vadd.f32 0.0, %v1335
  %1337 = vmatmul.bf16.gmra.mxu0 %v841
  %v1338 = vpop.f32.mrf.mxu0
  %v1339 = vadd.f32 0.0, %v1338
  %v1340 = vpop.f32.mrf.mxu0
  %v1341 = vadd.f32 0.0, %v1340
  %1342 = vmatmul.bf16.gmra.mxu0 %v842
  %v1343 = vpop.f32.mrf.mxu0
  %v1344 = vadd.f32 0.0, %v1343
  %v1345 = vpop.f32.mrf.mxu0
  %v1346 = vadd.f32 0.0, %v1345
  %1347 = vmatmul.bf16.gmra.mxu0 %v843
  %v1348 = vpop.f32.mrf.mxu0
  %v1349 = vadd.f32 0.0, %v1348
  %v1350 = vpop.f32.mrf.mxu0
  %v1351 = vadd.f32 0.0, %v1350
  %1352 = vmatmul.bf16.gmra.mxu0 %v844
  %v1353 = vpop.f32.mrf.mxu0
  %v1354 = vadd.f32 0.0, %v1353
  %v1355 = vpop.f32.mrf.mxu0
  %v1356 = vadd.f32 0.0, %v1355
  %1357 = vmatmul.bf16.gmra.mxu0 %v845
  %v1358 = vpop.f32.mrf.mxu0
  %v1359 = vadd.f32 0.0, %v1358
  %v1360 = vpop.f32.mrf.mxu0
  %v1361 = vadd.f32 0.0, %v1360
  %1362 = vmatmul.bf16.gmra.mxu0 %v846
  %v1363 = vpop.f32.mrf.mxu0
  %v1364 = vadd.f32 0.0, %v1363
  %v1365 = vpop.f32.mrf.mxu0
  %v1366 = vadd.f32 0.0, %v1365
  %1367 = vmatmul.bf16.gmra.mxu0 %v847
  %v1368 = vpop.f32.mrf.mxu0
  %v1369 = vadd.f32 0.0, %v1368
  %v1370 = vpop.f32.mrf.mxu0
  %v1371 = vadd.f32 0.0, %v1370
  %1372 = vmatmul.bf16.gmra.mxu0 %v848
  %v1373 = vpop.f32.mrf.mxu0
  %v1374 = vadd.f32 0.0, %v1373
  %v1375 = vpop.f32.mrf.mxu0
  %v1376 = vadd.f32 0.0, %v1375
  %1377 = vmatmul.bf16.gmra.mxu0 %v849
  %v1378 = vpop.f32.mrf.mxu0
  %v1379 = vadd.f32 0.0, %v1378
  %v1380 = vpop.f32.mrf.mxu0
  %v1381 = vadd.f32 0.0, %v1380
  %1382 = vmatmul.bf16.gmra.mxu0 %v850
  %v1383 = vpop.f32.mrf.mxu0
  %v1384 = vadd.f32 0.0, %v1383
  %v1385 = vpop.f32.mrf.mxu0
  %v1386 = vadd.f32 0.0, %v1385
  %1387 = vmatmul.bf16.gmra.mxu0 %v851
  %v1388 = vpop.f32.mrf.mxu0
  %v1389 = vadd.f32 0.0, %v1388
  %v1390 = vpop.f32.mrf.mxu0
  %v1391 = vadd.f32 0.0, %v1390
  %1392 = vmatmul.bf16.gmra.mxu0 %v852
  %v1393 = vpop.f32.mrf.mxu0
  %v1394 = vadd.f32 0.0, %v1393
  %v1395 = vpop.f32.mrf.mxu0
  %v1396 = vadd.f32 0.0, %v1395
  %1397 = vmatmul.bf16.gmra.mxu0 %v853
  %v1398 = vpop.f32.mrf.mxu0
  %v1399 = vadd.f32 0.0, %v1398
  %v1400 = vpop.f32.mrf.mxu0
  %v1401 = vadd.f32 0.0, %v1400
  %1402 = vmatmul.bf16.gmra.mxu0 %v854
  %v1403 = vpop.f32.mrf.mxu0
  %v1404 = vadd.f32 0.0, %v1403
  %v1405 = vpop.f32.mrf.mxu0
  %v1406 = vadd.f32 0.0, %v1405
  %1407 = vmatmul.bf16.gmra.mxu0 %v855
  %v1408 = vpop.f32.mrf.mxu0
  %v1409 = vadd.f32 0.0, %v1408
  %v1410 = vpop.f32.mrf.mxu0
  %v1411 = vadd.f32 0.0, %v1410
  %1412 = vmatmul.bf16.gmra.mxu0 %v856
  %v1413 = vpop.f32.mrf.mxu0
  %v1414 = vadd.f32 0.0, %v1413
  %v1415 = vpop.f32.mrf.mxu0
  %v1416 = vadd.f32 0.0, %v1415
  %1417 = vmatmul.bf16.gmra.mxu0 %v857
  %v1418 = vpop.f32.mrf.mxu0
  %v1419 = vadd.f32 0.0, %v1418
  %v1420 = vpop.f32.mrf.mxu0
  %v1421 = vadd.f32 0.0, %v1420
  %1422 = vmatmul.bf16.gmra.mxu0 %v858
  %v1423 = vpop.f32.mrf.mxu0
  %v1424 = vadd.f32 0.0, %v1423
  %v1425 = vpop.f32.mrf.mxu0
  %v1426 = vadd.f32 0.0, %v1425
  %1427 = vmatmul.bf16.gmra.mxu0 %v859
  %v1428 = vpop.f32.mrf.mxu0
  %v1429 = vadd.f32 0.0, %v1428
  %v1430 = vpop.f32.mrf.mxu0
  %v1431 = vadd.f32 0.0, %v1430
  %1432 = vmatmul.bf16.gmra.mxu0 %v860
  %v1433 = vpop.f32.mrf.mxu0
  %v1434 = vadd.f32 0.0, %v1433
  %v1435 = vpop.f32.mrf.mxu0
  %v1436 = vadd.f32 0.0, %v1435
  %1437 = vmatmul.bf16.gmra.mxu0 %v861
  %v1438 = vpop.f32.mrf.mxu0
  %v1439 = vadd.f32 0.0, %v1438
  %v1440 = vpop.f32.mrf.mxu0
  %v1441 = vadd.f32 0.0, %v1440
  %1442 = vmatmul.bf16.gmra.mxu0 %v862
  %v1443 = vpop.f32.mrf.mxu0
  %v1444 = vadd.f32 0.0, %v1443
  %v1445 = vpop.f32.mrf.mxu0
  %v1446 = vadd.f32 0.0, %v1445
  %1447 = vmatmul.bf16.gmra.mxu0 %v863
  %v1448 = vpop.f32.mrf.mxu0
  %v1449 = vadd.f32 0.0, %v1448
  %v1450 = vpop.f32.mrf.mxu0
  %v1451 = vadd.f32 0.0, %v1450
  %1452 = vmatmul.bf16.gmra.mxu0 %v864
  %v1453 = vpop.f32.mrf.mxu0
  %v1454 = vadd.f32 0.0, %v1453
  %v1455 = vpop.f32.mrf.mxu0
  %v1456 = vadd.f32 0.0, %v1455
  %1457 = vmatmul.bf16.gmra.mxu0 %v865
  %v1458 = vpop.f32.mrf.mxu0
  %v1459 = vadd.f32 0.0, %v1458
  %v1460 = vpop.f32.mrf.mxu0
  %v1461 = vadd.f32 0.0, %v1460
  %1462 = vmatmul.bf16.gmra.mxu0 %v866
  %v1463 = vpop.f32.mrf.mxu0
  %v1464 = vadd.f32 0.0, %v1463
  %v1465 = vpop.f32.mrf.mxu0
  %v1466 = vadd.f32 0.0, %v1465
  %1467 = vmatmul.bf16.gmra.mxu0 %v867
  %v1468 = vpop.f32.mrf.mxu0
  %v1469 = vadd.f32 0.0, %v1468
  %v1470 = vpop.f32.mrf.mxu0
  %v1471 = vadd.f32 0.0, %v1470
  %1472 = vmatmul.bf16.gmra.mxu0 %v868
  %v1473 = vpop.f32.mrf.mxu0
  %v1474 = vadd.f32 0.0, %v1473
  %v1475 = vpop.f32.mrf.mxu0
  %v1476 = vadd.f32 0.0, %v1475
  %1477 = vmatmul.bf16.gmra.mxu0 %v869
  %v1478 = vpop.f32.mrf.mxu0
  %v1479 = vadd.f32 0.0, %v1478
  %v1480 = vpop.f32.mrf.mxu0
  %v1481 = vadd.f32 0.0, %v1480
  %1482 = vmatmul.bf16.gmra.mxu0 %v870
  %v1483 = vpop.f32.mrf.mxu0
  %v1484 = vadd.f32 0.0, %v1483
  %v1485 = vpop.f32.mrf.mxu0
  %v1486 = vadd.f32 0.0, %v1485
  %1487 = vmatmul.bf16.gmra.mxu0 %v871
  %v1488 = vpop.f32.mrf.mxu0
  %v1489 = vadd.f32 0.0, %v1488
  %v1490 = vpop.f32.mrf.mxu0
  %v1491 = vadd.f32 0.0, %v1490
  %1492 = vmatmul.bf16.gmra.mxu0 %v872
  %v1493 = vpop.f32.mrf.mxu0
  %v1494 = vadd.f32 0.0, %v1493
  %v1495 = vpop.f32.mrf.mxu0
  %v1496 = vadd.f32 0.0, %v1495
  %1497 = vmatmul.bf16.gmra.mxu0 %v873
  %v1498 = vpop.f32.mrf.mxu0
  %v1499 = vadd.f32 0.0, %v1498
  %v1500 = vpop.f32.mrf.mxu0
  %v1501 = vadd.f32 0.0, %v1500
  %1502 = vmatmul.bf16.gmra.mxu0 %v874
  %v1503 = vpop.f32.mrf.mxu0
  %v1504 = vadd.f32 0.0, %v1503
  %v1505 = vpop.f32.mrf.mxu0
  %v1506 = vadd.f32 0.0, %v1505
  %1507 = vmatmul.bf16.gmra.mxu0 %v875
  %v1508 = vpop.f32.mrf.mxu0
  %v1509 = vadd.f32 0.0, %v1508
  %v1510 = vpop.f32.mrf.mxu0
  %v1511 = vadd.f32 0.0, %v1510
  %1512 = vmatmul.bf16.gmra.mxu0 %v876
  %v1513 = vpop.f32.mrf.mxu0
  %v1514 = vadd.f32 0.0, %v1513
  %v1515 = vpop.f32.mrf.mxu0
  %v1516 = vadd.f32 0.0, %v1515
  %1517 = vmatmul.bf16.gmra.mxu0 %v877
  %v1518 = vpop.f32.mrf.mxu0
  %v1519 = vadd.f32 0.0, %v1518
  %v1520 = vpop.f32.mrf.mxu0
  %v1521 = vadd.f32 0.0, %v1520
  %1522 = vmatmul.bf16.gmra.mxu0 %v878
  %v1523 = vpop.f32.mrf.mxu0
  %v1524 = vadd.f32 0.0, %v1523
  %v1525 = vpop.f32.mrf.mxu0
  %v1526 = vadd.f32 0.0, %v1525
  %1527 = vmatmul.bf16.gmra.mxu0 %v879
  %v1528 = vpop.f32.mrf.mxu0
  %v1529 = vadd.f32 0.0, %v1528
  %v1530 = vpop.f32.mrf.mxu0
  %v1531 = vadd.f32 0.0, %v1530
  %1532 = vmatmul.bf16.gmra.mxu0 %v880
  %v1533 = vpop.f32.mrf.mxu0
  %v1534 = vadd.f32 0.0, %v1533
  %v1535 = vpop.f32.mrf.mxu0
  %v1536 = vadd.f32 0.0, %v1535
  %1537 = vmatmul.bf16.gmra.mxu0 %v881
  %v1538 = vpop.f32.mrf.mxu0
  %v1539 = vadd.f32 0.0, %v1538
  %v1540 = vpop.f32.mrf.mxu0
  %v1541 = vadd.f32 0.0, %v1540
  %1542 = vmatmul.bf16.gmra.mxu0 %v882
  %v1543 = vpop.f32.mrf.mxu0
  %v1544 = vadd.f32 0.0, %v1543
  %v1545 = vpop.f32.mrf.mxu0
  %v1546 = vadd.f32 0.0, %v1545
  %1547 = vmatmul.bf16.gmra.mxu0 %v883
  %v1548 = vpop.f32.mrf.mxu0
  %v1549 = vadd.f32 0.0, %v1548
  %v1550 = vpop.f32.mrf.mxu0
  %v1551 = vadd.f32 0.0, %v1550
  %1552 = vmatmul.bf16.gmra.mxu0 %v884
  %v1553 = vpop.f32.mrf.mxu0
  %v1554 = vadd.f32 0.0, %v1553
  %v1555 = vpop.f32.mrf.mxu0
  %v1556 = vadd.f32 0.0, %v1555
  %1557 = vmatmul.bf16.gmra.mxu0 %v885
  %v1558 = vpop.f32.mrf.mxu0
  %v1559 = vadd.f32 0.0, %v1558
  %v1560 = vpop.f32.mrf.mxu0
  %v1561 = vadd.f32 0.0, %v1560
  %1562 = vmatmul.bf16.gmra.mxu0 %v886
  %v1563 = vpop.f32.mrf.mxu0
  %v1564 = vadd.f32 0.0, %v1563
  %v1565 = vpop.f32.mrf.mxu0
  %v1566 = vadd.f32 0.0, %v1565
  %1567 = vmatmul.bf16.gmra.mxu0 %v887
  %v1568 = vpop.f32.mrf.mxu0
  %v1569 = vadd.f32 0.0, %v1568
  %v1570 = vpop.f32.mrf.mxu0
  %v1571 = vadd.f32 0.0, %v1570
  %1572 = vmatmul.bf16.gmra.mxu0 %v888
  %v1573 = vpop.f32.mrf.mxu0
  %v1574 = vadd.f32 0.0, %v1573
  %v1575 = vpop.f32.mrf.mxu0
  %v1576 = vadd.f32 0.0, %v1575
  %1577 = vmatmul.bf16.gmra.mxu0 %v889
  %v1578 = vpop.f32.mrf.mxu0
  %v1579 = vadd.f32 0.0, %v1578
  %v1580 = vpop.f32.mrf.mxu0
  %v1581 = vadd.f32 0.0, %v1580
  %1582 = vmatmul.bf16.gmra.mxu0 %v890
  %v1583 = vpop.f32.mrf.mxu0
  %v1584 = vadd.f32 0.0, %v1583
  %v1585 = vpop.f32.mrf.mxu0
  %v1586 = vadd.f32 0.0, %v1585
  %1587 = vmatmul.bf16.gmra.mxu0 %v891
  %v1588 = vpop.f32.mrf.mxu0
  %v1589 = vadd.f32 0.0, %v1588
  %v1590 = vpop.f32.mrf.mxu0
  %v1591 = vadd.f32 0.0, %v1590
  %1592 = vmatmul.bf16.gmra.mxu0 %v892
  %v1593 = vpop.f32.mrf.mxu0
  %v1594 = vadd.f32 0.0, %v1593
  %v1595 = vpop.f32.mrf.mxu0
  %v1596 = vadd.f32 0.0, %v1595
  %1597 = vmatmul.bf16.gmra.mxu0 %v893
  %v1598 = vpop.f32.mrf.mxu0
  %v1599 = vadd.f32 0.0, %v1598
  %v1600 = vpop.f32.mrf.mxu0
  %v1601 = vadd.f32 0.0, %v1600
  %1602 = vmatmul.bf16.gmra.mxu0 %v894
  %v1603 = vpop.f32.mrf.mxu0
  %v1604 = vadd.f32 0.0, %v1603
  %v1605 = vpop.f32.mrf.mxu0
  %v1606 = vadd.f32 0.0, %v1605
  %1607 = vmatmul.bf16.gmra.mxu0 %v895
  %v1608 = vpop.f32.mrf.mxu0
  %v1609 = vadd.f32 0.0, %v1608
  %v1610 = vpop.f32.mrf.mxu0
  %v1611 = vadd.f32 0.0, %v1610
  %1612 = vmatmul.bf16.gmra.mxu0 %v896
  %v1613 = vpop.f32.mrf.mxu0
  %v1614 = vadd.f32 0.0, %v1613
  %v1615 = vpop.f32.mrf.mxu0
  %v1616 = vadd.f32 0.0, %v1615
  %1617 = vmatmul.bf16.gmra.mxu0 %v897
  %v1618 = vpop.f32.mrf.mxu0
  %v1619 = vadd.f32 0.0, %v1618
  %v1620 = vpop.f32.mrf.mxu0
  %v1621 = vadd.f32 0.0, %v1620
  %1622 = vmatmul.bf16.gmra.mxu0 %v898
  %v1623 = vpop.f32.mrf.mxu0
  %v1624 = vadd.f32 0.0, %v1623
  %v1625 = vpop.f32.mrf.mxu0
  %v1626 = vadd.f32 0.0, %v1625
  %1627 = vmatmul.bf16.gmra.mxu0 %v899
  %v1628 = vpop.f32.mrf.mxu0
  %v1629 = vadd.f32 0.0, %v1628
  %v1630 = vpop.f32.mrf.mxu0
  %v1631 = vadd.f32 0.0, %v1630
  %1632 = vmatmul.bf16.gmra.mxu0 %v900
  %v1633 = vpop.f32.mrf.mxu0
  %v1634 = vadd.f32 0.0, %v1633
  %v1635 = vpop.f32.mrf.mxu0
  %v1636 = vadd.f32 0.0, %v1635
  %1637 = vmatmul.bf16.gmra.mxu0 %v901
  %v1638 = vpop.f32.mrf.mxu0
  %v1639 = vadd.f32 0.0, %v1638
  %v1640 = vpop.f32.mrf.mxu0
  %v1641 = vadd.f32 0.0, %v1640
  %1642 = vmatmul.bf16.gmra.mxu0 %v902
  %v1643 = vpop.f32.mrf.mxu0
  %v1644 = vadd.f32 0.0, %v1643
  %v1645 = vpop.f32.mrf.mxu0
  %v1646 = vadd.f32 0.0, %v1645
  %1647 = vmatmul.bf16.gmra.mxu0 %v903
  %v1648 = vpop.f32.mrf.mxu0
  %v1649 = vadd.f32 0.0, %v1648
  %v1650 = vpop.f32.mrf.mxu0
  %v1651 = vadd.f32 0.0, %v1650
  %1652 = vmatmul.bf16.gmra.mxu0 %v904
  %v1653 = vpop.f32.mrf.mxu0
  %v1654 = vadd.f32 0.0, %v1653
  %v1655 = vpop.f32.mrf.mxu0
  %v1656 = vadd.f32 0.0, %v1655
  %1657 = vmatmul.bf16.gmra.mxu0 %v905
  %v1658 = vpop.f32.mrf.mxu0
  %v1659 = vadd.f32 0.0, %v1658
  %v1660 = vpop.f32.mrf.mxu0
  %v1661 = vadd.f32 0.0, %v1660
  %1662 = vmatmul.bf16.gmra.mxu0 %v906
  %v1663 = vpop.f32.mrf.mxu0
  %v1664 = vadd.f32 0.0, %v1663
  %v1665 = vpop.f32.mrf.mxu0
  %v1666 = vadd.f32 0.0, %v1665
  %1667 = vmatmul.bf16.gmra.mxu0 %v907
  %v1668 = vpop.f32.mrf.mxu0
  %v1669 = vadd.f32 0.0, %v1668
  %v1670 = vpop.f32.mrf.mxu0
  %v1671 = vadd.f32 0.0, %v1670
  %1672 = vmatmul.bf16.gmra.mxu0 %v908
  %v1673 = vpop.f32.mrf.mxu0
  %v1674 = vadd.f32 0.0, %v1673
  %v1675 = vpop.f32.mrf.mxu0
  %v1676 = vadd.f32 0.0, %v1675
  %1677 = vmatmul.bf16.gmra.mxu0 %v909
  %v1678 = vpop.f32.mrf.mxu0
  %v1679 = vadd.f32 0.0, %v1678
  %v1680 = vpop.f32.mrf.mxu0
  %v1681 = vadd.f32 0.0, %v1680
  %1682 = vmatmul.bf16.gmra.mxu0 %v910
  %v1683 = vpop.f32.mrf.mxu0
  %v1684 = vadd.f32 0.0, %v1683
  %v1685 = vpop.f32.mrf.mxu0
  %v1686 = vadd.f32 0.0, %v1685
  %1687 = vmatmul.bf16.gmra.mxu0 %v911
  %v1688 = vpop.f32.mrf.mxu0
  %v1689 = vadd.f32 0.0, %v1688
  %v1690 = vpop.f32.mrf.mxu0
  %v1691 = vadd.f32 0.0, %v1690
  %1692 = vmatmul.bf16.gmra.mxu0 %v912
  %v1693 = vpop.f32.mrf.mxu0
  %v1694 = vadd.f32 0.0, %v1693
  %v1695 = vpop.f32.mrf.mxu0
  %v1696 = vadd.f32 0.0, %v1695
  %1697 = vmatmul.bf16.gmra.mxu0 %v913
  %v1698 = vpop.f32.mrf.mxu0
  %v1699 = vadd.f32 0.0, %v1698
  %v1700 = vpop.f32.mrf.mxu0
  %v1701 = vadd.f32 0.0, %v1700
  %1702 = vmatmul.bf16.gmra.mxu0 %v914
  %v1703 = vpop.f32.mrf.mxu0
  %v1704 = vadd.f32 0.0, %v1703
  %v1705 = vpop.f32.mrf.mxu0
  %v1706 = vadd.f32 0.0, %v1705
  %1707 = vmatmul.bf16.gmra.mxu0 %v915
  %v1708 = vpop.f32.mrf.mxu0
  %v1709 = vadd.f32 0.0, %v1708
  %v1710 = vpop.f32.mrf.mxu0
  %v1711 = vadd.f32 0.0, %v1710
  %1712 = vmatmul.bf16.gmra.mxu0 %v916
  %v1713 = vpop.f32.mrf.mxu0
  %v1714 = vadd.f32 0.0, %v1713
  %v1715 = vpop.f32.mrf.mxu0
  %v1716 = vadd.f32 0.0, %v1715
  %1717 = vmatmul.bf16.gmra.mxu0 %v917
  %v1718 = vpop.f32.mrf.mxu0
  %v1719 = vadd.f32 0.0, %v1718
  %v1720 = vpop.f32.mrf.mxu0
  %v1721 = vadd.f32 0.0, %v1720
  %1722 = vmatmul.bf16.gmra.mxu0 %v918
  %v1723 = vpop.f32.mrf.mxu0
  %v1724 = vadd.f32 0.0, %v1723
  %v1725 = vpop.f32.mrf.mxu0
  %v1726 = vadd.f32 0.0, %v1725
  %1727 = vmatmul.bf16.gmra.mxu0 %v919
  %v1728 = vpop.f32.mrf.mxu0
  %v1729 = vadd.f32 0.0, %v1728
  %v1730 = vpop.f32.mrf.mxu0
  %v1731 = vadd.f32 0.0, %v1730
  %1732 = vmatmul.bf16.gmra.mxu0 %v920
  %v1733 = vpop.f32.mrf.mxu0
  %v1734 = vadd.f32 0.0, %v1733
  %v1735 = vpop.f32.mrf.mxu0
  %v1736 = vadd.f32 0.0, %v1735
  %1737 = vmatmul.bf16.gmra.mxu0 %v921
  %v1738 = vpop.f32.mrf.mxu0
  %v1739 = vadd.f32 0.0, %v1738
  %v1740 = vpop.f32.mrf.mxu0
  %v1741 = vadd.f32 0.0, %v1740
  %1742 = vmatmul.bf16.gmra.mxu0 %v922
  %v1743 = vpop.f32.mrf.mxu0
  %v1744 = vadd.f32 0.0, %v1743
  %v1745 = vpop.f32.mrf.mxu0
  %v1746 = vadd.f32 0.0, %v1745
  %1747 = vdwg.mxu0
  %vm1748 = vcmp.ge.f32.partialorder %v1109, 0.0
  %vm1749 = vcmp.ge.f32.partialorder %v1111, 0.0
  %vm1750 = vcmp.ge.f32.partialorder %v1114, 0.0
  %vm1751 = vcmp.ge.f32.partialorder %v1116, 0.0
  %vm1752 = vcmp.ge.f32.partialorder %v1119, 0.0
  %vm1753 = vcmp.ge.f32.partialorder %v1121, 0.0
  %vm1754 = vcmp.ge.f32.partialorder %v1124, 0.0
  %vm1755 = vcmp.ge.f32.partialorder %v1126, 0.0
  %vm1756 = vcmp.ge.f32.partialorder %v1129, 0.0
  %vm1757 = vcmp.ge.f32.partialorder %v1131, 0.0
  %vm1758 = vcmp.ge.f32.partialorder %v1134, 0.0
  %vm1759 = vcmp.ge.f32.partialorder %v1136, 0.0
  %vm1760 = vcmp.ge.f32.partialorder %v1139, 0.0
  %vm1761 = vcmp.ge.f32.partialorder %v1141, 0.0
  %vm1762 = vcmp.ge.f32.partialorder %v1144, 0.0
  %vm1763 = vcmp.ge.f32.partialorder %v1146, 0.0
  %vm1764 = vcmp.ge.f32.partialorder %v1149, 0.0
  %vm1765 = vcmp.ge.f32.partialorder %v1151, 0.0
  %vm1766 = vcmp.ge.f32.partialorder %v1154, 0.0
  %vm1767 = vcmp.ge.f32.partialorder %v1156, 0.0
  %vm1768 = vcmp.ge.f32.partialorder %v1159, 0.0
  %vm1769 = vcmp.ge.f32.partialorder %v1161, 0.0
  %vm1770 = vcmp.ge.f32.partialorder %v1164, 0.0
  %vm1771 = vcmp.ge.f32.partialorder %v1166, 0.0
  %vm1772 = vcmp.ge.f32.partialorder %v1169, 0.0
  %vm1773 = vcmp.ge.f32.partialorder %v1171, 0.0
  %vm1774 = vcmp.ge.f32.partialorder %v1174, 0.0
  %vm1775 = vcmp.ge.f32.partialorder %v1176, 0.0
  %vm1776 = vcmp.ge.f32.partialorder %v1179, 0.0
  %vm1777 = vcmp.ge.f32.partialorder %v1181, 0.0
  %vm1778 = vcmp.ge.f32.partialorder %v1184, 0.0
  %vm1779 = vcmp.ge.f32.partialorder %v1186, 0.0
  %vm1780 = vcmp.ge.f32.partialorder %v1189, 0.0
  %vm1781 = vcmp.ge.f32.partialorder %v1191, 0.0
  %vm1782 = vcmp.ge.f32.partialorder %v1194, 0.0
  %vm1783 = vcmp.ge.f32.partialorder %v1196, 0.0
  %vm1784 = vcmp.ge.f32.partialorder %v1199, 0.0
  %vm1785 = vcmp.ge.f32.partialorder %v1201, 0.0
  %vm1786 = vcmp.ge.f32.partialorder %v1204, 0.0
  %vm1787 = vcmp.ge.f32.partialorder %v1206, 0.0
  %vm1788 = vcmp.ge.f32.partialorder %v1209, 0.0
  %vm1789 = vcmp.ge.f32.partialorder %v1211, 0.0
  %vm1790 = vcmp.ge.f32.partialorder %v1214, 0.0
  %vm1791 = vcmp.ge.f32.partialorder %v1216, 0.0
  %vm1792 = vcmp.ge.f32.partialorder %v1219, 0.0
  %vm1793 = vcmp.ge.f32.partialorder %v1221, 0.0
  %vm1794 = vcmp.ge.f32.partialorder %v1224, 0.0
  %vm1795 = vcmp.ge.f32.partialorder %v1226, 0.0
  %vm1796 = vcmp.ge.f32.partialorder %v1229, 0.0
  %vm1797 = vcmp.ge.f32.partialorder %v1231, 0.0
  %vm1798 = vcmp.ge.f32.partialorder %v1234, 0.0
  %vm1799 = vcmp.ge.f32.partialorder %v1236, 0.0
  %vm1800 = vcmp.ge.f32.partialorder %v1239, 0.0
  %vm1801 = vcmp.ge.f32.partialorder %v1241, 0.0
  %vm1802 = vcmp.ge.f32.partialorder %v1244, 0.0
  %vm1803 = vcmp.ge.f32.partialorder %v1246, 0.0
  %vm1804 = vcmp.ge.f32.partialorder %v1249, 0.0
  %vm1805 = vcmp.ge.f32.partialorder %v1251, 0.0
  %vm1806 = vcmp.ge.f32.partialorder %v1254, 0.0
  %vm1807 = vcmp.ge.f32.partialorder %v1256, 0.0
  %vm1808 = vcmp.ge.f32.partialorder %v1259, 0.0
  %vm1809 = vcmp.ge.f32.partialorder %v1261, 0.0
  %vm1810 = vcmp.ge.f32.partialorder %v1264, 0.0
  %vm1811 = vcmp.ge.f32.partialorder %v1266, 0.0
  %vm1812 = vcmp.ge.f32.partialorder %v1269, 0.0
  %vm1813 = vcmp.ge.f32.partialorder %v1271, 0.0
  %vm1814 = vcmp.ge.f32.partialorder %v1274, 0.0
  %vm1815 = vcmp.ge.f32.partialorder %v1276, 0.0
  %vm1816 = vcmp.ge.f32.partialorder %v1279, 0.0
  %vm1817 = vcmp.ge.f32.partialorder %v1281, 0.0
  %vm1818 = vcmp.ge.f32.partialorder %v1284, 0.0
  %vm1819 = vcmp.ge.f32.partialorder %v1286, 0.0
  %vm1820 = vcmp.ge.f32.partialorder %v1289, 0.0
  %vm1821 = vcmp.ge.f32.partialorder %v1291, 0.0
  %vm1822 = vcmp.ge.f32.partialorder %v1294, 0.0
  %vm1823 = vcmp.ge.f32.partialorder %v1296, 0.0
  %vm1824 = vcmp.ge.f32.partialorder %v1299, 0.0
  %vm1825 = vcmp.ge.f32.partialorder %v1301, 0.0
  %vm1826 = vcmp.ge.f32.partialorder %v1304, 0.0
  %vm1827 = vcmp.ge.f32.partialorder %v1306, 0.0
  %vm1828 = vcmp.ge.f32.partialorder %v1309, 0.0
  %vm1829 = vcmp.ge.f32.partialorder %v1311, 0.0
  %vm1830 = vcmp.ge.f32.partialorder %v1314, 0.0
  %vm1831 = vcmp.ge.f32.partialorder %v1316, 0.0
  %vm1832 = vcmp.ge.f32.partialorder %v1319, 0.0
  %vm1833 = vcmp.ge.f32.partialorder %v1321, 0.0
  %vm1834 = vcmp.ge.f32.partialorder %v1324, 0.0
  %vm1835 = vcmp.ge.f32.partialorder %v1326, 0.0
  %vm1836 = vcmp.ge.f32.partialorder %v1329, 0.0
  %vm1837 = vcmp.ge.f32.partialorder %v1331, 0.0
  %vm1838 = vcmp.ge.f32.partialorder %v1334, 0.0
  %vm1839 = vcmp.ge.f32.partialorder %v1336, 0.0
  %vm1840 = vcmp.ge.f32.partialorder %v1339, 0.0
  %vm1841 = vcmp.ge.f32.partialorder %v1341, 0.0
  %vm1842 = vcmp.ge.f32.partialorder %v1344, 0.0
  %vm1843 = vcmp.ge.f32.partialorder %v1346, 0.0
  %vm1844 = vcmp.ge.f32.partialorder %v1349, 0.0
  %vm1845 = vcmp.ge.f32.partialorder %v1351, 0.0
  %vm1846 = vcmp.ge.f32.partialorder %v1354, 0.0
  %vm1847 = vcmp.ge.f32.partialorder %v1356, 0.0
  %vm1848 = vcmp.ge.f32.partialorder %v1359, 0.0
  %vm1849 = vcmp.ge.f32.partialorder %v1361, 0.0
  %vm1850 = vcmp.ge.f32.partialorder %v1364, 0.0
  %vm1851 = vcmp.ge.f32.partialorder %v1366, 0.0
  %vm1852 = vcmp.ge.f32.partialorder %v1369, 0.0
  %vm1853 = vcmp.ge.f32.partialorder %v1371, 0.0
  %vm1854 = vcmp.ge.f32.partialorder %v1374, 0.0
  %vm1855 = vcmp.ge.f32.partialorder %v1376, 0.0
  %vm1856 = vcmp.ge.f32.partialorder %v1379, 0.0
  %vm1857 = vcmp.ge.f32.partialorder %v1381, 0.0
  %vm1858 = vcmp.ge.f32.partialorder %v1384, 0.0
  %vm1859 = vcmp.ge.f32.partialorder %v1386, 0.0
  %vm1860 = vcmp.ge.f32.partialorder %v1389, 0.0
  %vm1861 = vcmp.ge.f32.partialorder %v1391, 0.0
  %vm1862 = vcmp.ge.f32.partialorder %v1394, 0.0
  %vm1863 = vcmp.ge.f32.partialorder %v1396, 0.0
  %vm1864 = vcmp.ge.f32.partialorder %v1399, 0.0
  %vm1865 = vcmp.ge.f32.partialorder %v1401, 0.0
  %vm1866 = vcmp.ge.f32.partialorder %v1404, 0.0
  %vm1867 = vcmp.ge.f32.partialorder %v1406, 0.0
  %vm1868 = vcmp.ge.f32.partialorder %v1409, 0.0
  %vm1869 = vcmp.ge.f32.partialorder %v1411, 0.0
  %vm1870 = vcmp.ge.f32.partialorder %v1414, 0.0
  %vm1871 = vcmp.ge.f32.partialorder %v1416, 0.0
  %vm1872 = vcmp.ge.f32.partialorder %v1419, 0.0
  %vm1873 = vcmp.ge.f32.partialorder %v1421, 0.0
  %vm1874 = vcmp.ge.f32.partialorder %v1424, 0.0
  %vm1875 = vcmp.ge.f32.partialorder %v1426, 0.0
  %vm1876 = vcmp.ge.f32.partialorder %v1429, 0.0
  %vm1877 = vcmp.ge.f32.partialorder %v1431, 0.0
  %vm1878 = vcmp.ge.f32.partialorder %v1434, 0.0
  %vm1879 = vcmp.ge.f32.partialorder %v1436, 0.0
  %vm1880 = vcmp.ge.f32.partialorder %v1439, 0.0
  %vm1881 = vcmp.ge.f32.partialorder %v1441, 0.0
  %vm1882 = vcmp.ge.f32.partialorder %v1444, 0.0
  %vm1883 = vcmp.ge.f32.partialorder %v1446, 0.0
  %vm1884 = vcmp.ge.f32.partialorder %v1449, 0.0
  %vm1885 = vcmp.ge.f32.partialorder %v1451, 0.0
  %vm1886 = vcmp.ge.f32.partialorder %v1454, 0.0
  %vm1887 = vcmp.ge.f32.partialorder %v1456, 0.0
  %vm1888 = vcmp.ge.f32.partialorder %v1459, 0.0
  %vm1889 = vcmp.ge.f32.partialorder %v1461, 0.0
  %vm1890 = vcmp.ge.f32.partialorder %v1464, 0.0
  %vm1891 = vcmp.ge.f32.partialorder %v1466, 0.0
  %vm1892 = vcmp.ge.f32.partialorder %v1469, 0.0
  %vm1893 = vcmp.ge.f32.partialorder %v1471, 0.0
  %vm1894 = vcmp.ge.f32.partialorder %v1474, 0.0
  %vm1895 = vcmp.ge.f32.partialorder %v1476, 0.0
  %vm1896 = vcmp.ge.f32.partialorder %v1479, 0.0
  %vm1897 = vcmp.ge.f32.partialorder %v1481, 0.0
  %vm1898 = vcmp.ge.f32.partialorder %v1484, 0.0
  %vm1899 = vcmp.ge.f32.partialorder %v1486, 0.0
  %vm1900 = vcmp.ge.f32.partialorder %v1489, 0.0
  %vm1901 = vcmp.ge.f32.partialorder %v1491, 0.0
  %vm1902 = vcmp.ge.f32.partialorder %v1494, 0.0
  %vm1903 = vcmp.ge.f32.partialorder %v1496, 0.0
  %vm1904 = vcmp.ge.f32.partialorder %v1499, 0.0
  %vm1905 = vcmp.ge.f32.partialorder %v1501, 0.0
  %vm1906 = vcmp.ge.f32.partialorder %v1504, 0.0
  %vm1907 = vcmp.ge.f32.partialorder %v1506, 0.0
  %vm1908 = vcmp.ge.f32.partialorder %v1509, 0.0
  %vm1909 = vcmp.ge.f32.partialorder %v1511, 0.0
  %vm1910 = vcmp.ge.f32.partialorder %v1514, 0.0
  %vm1911 = vcmp.ge.f32.partialorder %v1516, 0.0
  %vm1912 = vcmp.ge.f32.partialorder %v1519, 0.0
  %vm1913 = vcmp.ge.f32.partialorder %v1521, 0.0
  %vm1914 = vcmp.ge.f32.partialorder %v1524, 0.0
  %vm1915 = vcmp.ge.f32.partialorder %v1526, 0.0
  %vm1916 = vcmp.ge.f32.partialorder %v1529, 0.0
  %vm1917 = vcmp.ge.f32.partialorder %v1531, 0.0
  %vm1918 = vcmp.ge.f32.partialorder %v1534, 0.0
  %vm1919 = vcmp.ge.f32.partialorder %v1536, 0.0
  %vm1920 = vcmp.ge.f32.partialorder %v1539, 0.0
  %vm1921 = vcmp.ge.f32.partialorder %v1541, 0.0
  %vm1922 = vcmp.ge.f32.partialorder %v1544, 0.0
  %vm1923 = vcmp.ge.f32.partialorder %v1546, 0.0
  %vm1924 = vcmp.ge.f32.partialorder %v1549, 0.0
  %vm1925 = vcmp.ge.f32.partialorder %v1551, 0.0
  %vm1926 = vcmp.ge.f32.partialorder %v1554, 0.0
  %vm1927 = vcmp.ge.f32.partialorder %v1556, 0.0
  %vm1928 = vcmp.ge.f32.partialorder %v1559, 0.0
  %vm1929 = vcmp.ge.f32.partialorder %v1561, 0.0
  %vm1930 = vcmp.ge.f32.partialorder %v1564, 0.0
  %vm1931 = vcmp.ge.f32.partialorder %v1566, 0.0
  %vm1932 = vcmp.ge.f32.partialorder %v1569, 0.0
  %vm1933 = vcmp.ge.f32.partialorder %v1571, 0.0
  %vm1934 = vcmp.ge.f32.partialorder %v1574, 0.0
  %vm1935 = vcmp.ge.f32.partialorder %v1576, 0.0
  %vm1936 = vcmp.ge.f32.partialorder %v1579, 0.0
  %vm1937 = vcmp.ge.f32.partialorder %v1581, 0.0
  %vm1938 = vcmp.ge.f32.partialorder %v1584, 0.0
  %vm1939 = vcmp.ge.f32.partialorder %v1586, 0.0
  %vm1940 = vcmp.ge.f32.partialorder %v1589, 0.0
  %vm1941 = vcmp.ge.f32.partialorder %v1591, 0.0
  %vm1942 = vcmp.ge.f32.partialorder %v1594, 0.0
  %vm1943 = vcmp.ge.f32.partialorder %v1596, 0.0
  %vm1944 = vcmp.ge.f32.partialorder %v1599, 0.0
  %vm1945 = vcmp.ge.f32.partialorder %v1601, 0.0
  %vm1946 = vcmp.ge.f32.partialorder %v1604, 0.0
  %vm1947 = vcmp.ge.f32.partialorder %v1606, 0.0
  %vm1948 = vcmp.ge.f32.partialorder %v1609, 0.0
  %vm1949 = vcmp.ge.f32.partialorder %v1611, 0.0
  %vm1950 = vcmp.ge.f32.partialorder %v1614, 0.0
  %vm1951 = vcmp.ge.f32.partialorder %v1616, 0.0
  %vm1952 = vcmp.ge.f32.partialorder %v1619, 0.0
  %vm1953 = vcmp.ge.f32.partialorder %v1621, 0.0
  %vm1954 = vcmp.ge.f32.partialorder %v1624, 0.0
  %vm1955 = vcmp.ge.f32.partialorder %v1626, 0.0
  %vm1956 = vcmp.ge.f32.partialorder %v1629, 0.0
  %vm1957 = vcmp.ge.f32.partialorder %v1631, 0.0
  %vm1958 = vcmp.ge.f32.partialorder %v1634, 0.0
  %vm1959 = vcmp.ge.f32.partialorder %v1636, 0.0
  %vm1960 = vcmp.ge.f32.partialorder %v1639, 0.0
  %vm1961 = vcmp.ge.f32.partialorder %v1641, 0.0
  %vm1962 = vcmp.ge.f32.partialorder %v1644, 0.0
  %vm1963 = vcmp.ge.f32.partialorder %v1646, 0.0
  %vm1964 = vcmp.ge.f32.partialorder %v1649, 0.0
  %vm1965 = vcmp.ge.f32.partialorder %v1651, 0.0
  %vm1966 = vcmp.ge.f32.partialorder %v1654, 0.0
  %vm1967 = vcmp.ge.f32.partialorder %v1656, 0.0
  %vm1968 = vcmp.ge.f32.partialorder %v1659, 0.0
  %vm1969 = vcmp.ge.f32.partialorder %v1661, 0.0
  %vm1970 = vcmp.ge.f32.partialorder %v1664, 0.0
  %vm1971 = vcmp.ge.f32.partialorder %v1666, 0.0
  %vm1972 = vcmp.ge.f32.partialorder %v1669, 0.0
  %vm1973 = vcmp.ge.f32.partialorder %v1671, 0.0
  %vm1974 = vcmp.ge.f32.partialorder %v1674, 0.0
  %vm1975 = vcmp.ge.f32.partialorder %v1676, 0.0
  %vm1976 = vcmp.ge.f32.partialorder %v1679, 0.0
  %vm1977 = vcmp.ge.f32.partialorder %v1681, 0.0
  %vm1978 = vcmp.ge.f32.partialorder %v1684, 0.0
  %vm1979 = vcmp.ge.f32.partialorder %v1686, 0.0
  %vm1980 = vcmp.ge.f32.partialorder %v1689, 0.0
  %vm1981 = vcmp.ge.f32.partialorder %v1691, 0.0
  %vm1982 = vcmp.ge.f32.partialorder %v1694, 0.0
  %vm1983 = vcmp.ge.f32.partialorder %v1696, 0.0
  %vm1984 = vcmp.ge.f32.partialorder %v1699, 0.0
  %vm1985 = vcmp.ge.f32.partialorder %v1701, 0.0
  %vm1986 = vcmp.ge.f32.partialorder %v1704, 0.0
  %vm1987 = vcmp.ge.f32.partialorder %v1706, 0.0
  %vm1988 = vcmp.ge.f32.partialorder %v1709, 0.0
  %vm1989 = vcmp.ge.f32.partialorder %v1711, 0.0
  %vm1990 = vcmp.ge.f32.partialorder %v1714, 0.0
  %vm1991 = vcmp.ge.f32.partialorder %v1716, 0.0
  %vm1992 = vcmp.ge.f32.partialorder %v1719, 0.0
  %vm1993 = vcmp.ge.f32.partialorder %v1721, 0.0
  %vm1994 = vcmp.ge.f32.partialorder %v1724, 0.0
  %vm1995 = vcmp.ge.f32.partialorder %v1726, 0.0
  %vm1996 = vcmp.ge.f32.partialorder %v1729, 0.0
  %vm1997 = vcmp.ge.f32.partialorder %v1731, 0.0
  %vm1998 = vcmp.ge.f32.partialorder %v1734, 0.0
  %vm1999 = vcmp.ge.f32.partialorder %v1736, 0.0
  %vm2000 = vcmp.ge.f32.partialorder %v1739, 0.0
  %vm2001 = vcmp.ge.f32.partialorder %v1741, 0.0
  %vm2002 = vcmp.ge.f32.partialorder %v1744, 0.0
  %vm2003 = vcmp.ge.f32.partialorder %v1746, 0.0
  %v2004 = vmul.f32 %v1109, 0.2
  %v2005 = vmul.f32 %v1111, 0.2
  %v2006 = vmul.f32 %v1114, 0.2
  %v2007 = vmul.f32 %v1116, 0.2
  %v2008 = vmul.f32 %v1119, 0.2
  %v2009 = vmul.f32 %v1121, 0.2
  %v2010 = vmul.f32 %v1124, 0.2
  %v2011 = vmul.f32 %v1126, 0.2
  %v2012 = vmul.f32 %v1129, 0.2
  %v2013 = vmul.f32 %v1131, 0.2
  %v2014 = vmul.f32 %v1134, 0.2
  %v2015 = vmul.f32 %v1136, 0.2
  %v2016 = vmul.f32 %v1139, 0.2
  %v2017 = vmul.f32 %v1141, 0.2
  %v2018 = vmul.f32 %v1144, 0.2
  %v2019 = vmul.f32 %v1146, 0.2
  %v2020 = vmul.f32 %v1149, 0.2
  %v2021 = vmul.f32 %v1151, 0.2
  %v2022 = vmul.f32 %v1154, 0.2
  %v2023 = vmul.f32 %v1156, 0.2
  %v2024 = vmul.f32 %v1159, 0.2
  %v2025 = vmul.f32 %v1161, 0.2
  %v2026 = vmul.f32 %v1164, 0.2
  %v2027 = vmul.f32 %v1166, 0.2
  %v2028 = vmul.f32 %v1169, 0.2
  %v2029 = vmul.f32 %v1171, 0.2
  %v2030 = vmul.f32 %v1174, 0.2
  %v2031 = vmul.f32 %v1176, 0.2
  %v2032 = vmul.f32 %v1179, 0.2
  %v2033 = vmul.f32 %v1181, 0.2
  %v2034 = vmul.f32 %v1184, 0.2
  %v2035 = vmul.f32 %v1186, 0.2
  %v2036 = vmul.f32 %v1189, 0.2
  %v2037 = vmul.f32 %v1191, 0.2
  %v2038 = vmul.f32 %v1194, 0.2
  %v2039 = vmul.f32 %v1196, 0.2
  %v2040 = vmul.f32 %v1199, 0.2
  %v2041 = vmul.f32 %v1201, 0.2
  %v2042 = vmul.f32 %v1204, 0.2
  %v2043 = vmul.f32 %v1206, 0.2
  %v2044 = vmul.f32 %v1209, 0.2
  %v2045 = vmul.f32 %v1211, 0.2
  %v2046 = vmul.f32 %v1214, 0.2
  %v2047 = vmul.f32 %v1216, 0.2
  %v2048 = vmul.f32 %v1219, 0.2
  %v2049 = vmul.f32 %v1221, 0.2
  %v2050 = vmul.f32 %v1224, 0.2
  %v2051 = vmul.f32 %v1226, 0.2
  %v2052 = vmul.f32 %v1229, 0.2
  %v2053 = vmul.f32 %v1231, 0.2
  %v2054 = vmul.f32 %v1234, 0.2
  %v2055 = vmul.f32 %v1236, 0.2
  %v2056 = vmul.f32 %v1239, 0.2
  %v2057 = vmul.f32 %v1241, 0.2
  %v2058 = vmul.f32 %v1244, 0.2
  %v2059 = vmul.f32 %v1246, 0.2
  %v2060 = vmul.f32 %v1249, 0.2
  %v2061 = vmul.f32 %v1251, 0.2
  %v2062 = vmul.f32 %v1254, 0.2
  %v2063 = vmul.f32 %v1256, 0.2
  %v2064 = vmul.f32 %v1259, 0.2
  %v2065 = vmul.f32 %v1261, 0.2
  %v2066 = vmul.f32 %v1264, 0.2
  %v2067 = vmul.f32 %v1266, 0.2
  %v2068 = vmul.f32 %v1269, 0.2
  %v2069 = vmul.f32 %v1271, 0.2
  %v2070 = vmul.f32 %v1274, 0.2
  %v2071 = vmul.f32 %v1276, 0.2
  %v2072 = vmul.f32 %v1279, 0.2
  %v2073 = vmul.f32 %v1281, 0.2
  %v2074 = vmul.f32 %v1284, 0.2
  %v2075 = vmul.f32 %v1286, 0.2
  %v2076 = vmul.f32 %v1289, 0.2
  %v2077 = vmul.f32 %v1291, 0.2
  %v2078 = vmul.f32 %v1294, 0.2
  %v2079 = vmul.f32 %v1296, 0.2
  %v2080 = vmul.f32 %v1299, 0.2
  %v2081 = vmul.f32 %v1301, 0.2
  %v2082 = vmul.f32 %v1304, 0.2
  %v2083 = vmul.f32 %v1306, 0.2
  %v2084 = vmul.f32 %v1309, 0.2
  %v2085 = vmul.f32 %v1311, 0.2
  %v2086 = vmul.f32 %v1314, 0.2
  %v2087 = vmul.f32 %v1316, 0.2
  %v2088 = vmul.f32 %v1319, 0.2
  %v2089 = vmul.f32 %v1321, 0.2
  %v2090 = vmul.f32 %v1324, 0.2
  %v2091 = vmul.f32 %v1326, 0.2
  %v2092 = vmul.f32 %v1329, 0.2
  %v2093 = vmul.f32 %v1331, 0.2
  %v2094 = vmul.f32 %v1334, 0.2
  %v2095 = vmul.f32 %v1336, 0.2
  %v2096 = vmul.f32 %v1339, 0.2
  %v2097 = vmul.f32 %v1341, 0.2
  %v2098 = vmul.f32 %v1344, 0.2
  %v2099 = vmul.f32 %v1346, 0.2
  %v2100 = vmul.f32 %v1349, 0.2
  %v2101 = vmul.f32 %v1351, 0.2
  %v2102 = vmul.f32 %v1354, 0.2
  %v2103 = vmul.f32 %v1356, 0.2
  %v2104 = vmul.f32 %v1359, 0.2
  %v2105 = vmul.f32 %v1361, 0.2
  %v2106 = vmul.f32 %v1364, 0.2
  %v2107 = vmul.f32 %v1366, 0.2
  %v2108 = vmul.f32 %v1369, 0.2
  %v2109 = vmul.f32 %v1371, 0.2
  %v2110 = vmul.f32 %v1374, 0.2
  %v2111 = vmul.f32 %v1376, 0.2
  %v2112 = vmul.f32 %v1379, 0.2
  %v2113 = vmul.f32 %v1381, 0.2
  %v2114 = vmul.f32 %v1384, 0.2
  %v2115 = vmul.f32 %v1386, 0.2
  %v2116 = vmul.f32 %v1389, 0.2
  %v2117 = vmul.f32 %v1391, 0.2
  %v2118 = vmul.f32 %v1394, 0.2
  %v2119 = vmul.f32 %v1396, 0.2
  %v2120 = vmul.f32 %v1399, 0.2
  %v2121 = vmul.f32 %v1401, 0.2
  %v2122 = vmul.f32 %v1404, 0.2
  %v2123 = vmul.f32 %v1406, 0.2
  %v2124 = vmul.f32 %v1409, 0.2
  %v2125 = vmul.f32 %v1411, 0.2
  %v2126 = vmul.f32 %v1414, 0.2
  %v2127 = vmul.f32 %v1416, 0.2
  %v2128 = vmul.f32 %v1419, 0.2
  %v2129 = vmul.f32 %v1421, 0.2
  %v2130 = vmul.f32 %v1424, 0.2
  %v2131 = vmul.f32 %v1426, 0.2
  %v2132 = vmul.f32 %v1429, 0.2
  %v2133 = vmul.f32 %v1431, 0.2
  %v2134 = vmul.f32 %v1434, 0.2
  %v2135 = vmul.f32 %v1436, 0.2
  %v2136 = vmul.f32 %v1439, 0.2
  %v2137 = vmul.f32 %v1441, 0.2
  %v2138 = vmul.f32 %v1444, 0.2
  %v2139 = vmul.f32 %v1446, 0.2
  %v2140 = vmul.f32 %v1449, 0.2
  %v2141 = vmul.f32 %v1451, 0.2
  %v2142 = vmul.f32 %v1454, 0.2
  %v2143 = vmul.f32 %v1456, 0.2
  %v2144 = vmul.f32 %v1459, 0.2
  %v2145 = vmul.f32 %v1461, 0.2
  %v2146 = vmul.f32 %v1464, 0.2
  %v2147 = vmul.f32 %v1466, 0.2
  %v2148 = vmul.f32 %v1469, 0.2
  %v2149 = vmul.f32 %v1471, 0.2
  %v2150 = vmul.f32 %v1474, 0.2
  %v2151 = vmul.f32 %v1476, 0.2
  %v2152 = vmul.f32 %v1479, 0.2
  %v2153 = vmul.f32 %v1481, 0.2
  %v2154 = vmul.f32 %v1484, 0.2
  %v2155 = vmul.f32 %v1486, 0.2
  %v2156 = vmul.f32 %v1489, 0.2
  %v2157 = vmul.f32 %v1491, 0.2
  %v2158 = vmul.f32 %v1494, 0.2
  %v2159 = vmul.f32 %v1496, 0.2
  %v2160 = vmul.f32 %v1499, 0.2
  %v2161 = vmul.f32 %v1501, 0.2
  %v2162 = vmul.f32 %v1504, 0.2
  %v2163 = vmul.f32 %v1506, 0.2
  %v2164 = vmul.f32 %v1509, 0.2
  %v2165 = vmul.f32 %v1511, 0.2
  %v2166 = vmul.f32 %v1514, 0.2
  %v2167 = vmul.f32 %v1516, 0.2
  %v2168 = vmul.f32 %v1519, 0.2
  %v2169 = vmul.f32 %v1521, 0.2
  %v2170 = vmul.f32 %v1524, 0.2
  %v2171 = vmul.f32 %v1526, 0.2
  %v2172 = vmul.f32 %v1529, 0.2
  %v2173 = vmul.f32 %v1531, 0.2
  %v2174 = vmul.f32 %v1534, 0.2
  %v2175 = vmul.f32 %v1536, 0.2
  %v2176 = vmul.f32 %v1539, 0.2
  %v2177 = vmul.f32 %v1541, 0.2
  %v2178 = vmul.f32 %v1544, 0.2
  %v2179 = vmul.f32 %v1546, 0.2
  %v2180 = vmul.f32 %v1549, 0.2
  %v2181 = vmul.f32 %v1551, 0.2
  %v2182 = vmul.f32 %v1554, 0.2
  %v2183 = vmul.f32 %v1556, 0.2
  %v2184 = vmul.f32 %v1559, 0.2
  %v2185 = vmul.f32 %v1561, 0.2
  %v2186 = vmul.f32 %v1564, 0.2
  %v2187 = vmul.f32 %v1566, 0.2
  %v2188 = vmul.f32 %v1569, 0.2
  %v2189 = vmul.f32 %v1571, 0.2
  %v2190 = vmul.f32 %v1574, 0.2
  %v2191 = vmul.f32 %v1576, 0.2
  %v2192 = vmul.f32 %v1579, 0.2
  %v2193 = vmul.f32 %v1581, 0.2
  %v2194 = vmul.f32 %v1584, 0.2
  %v2195 = vmul.f32 %v1586, 0.2
  %v2196 = vmul.f32 %v1589, 0.2
  %v2197 = vmul.f32 %v1591, 0.2
  %v2198 = vmul.f32 %v1594, 0.2
  %v2199 = vmul.f32 %v1596, 0.2
  %v2200 = vmul.f32 %v1599, 0.2
  %v2201 = vmul.f32 %v1601, 0.2
  %v2202 = vmul.f32 %v1604, 0.2
  %v2203 = vmul.f32 %v1606, 0.2
  %v2204 = vmul.f32 %v1609, 0.2
  %v2205 = vmul.f32 %v1611, 0.2
  %v2206 = vmul.f32 %v1614, 0.2
  %v2207 = vmul.f32 %v1616, 0.2
  %v2208 = vmul.f32 %v1619, 0.2
  %v2209 = vmul.f32 %v1621, 0.2
  %v2210 = vmul.f32 %v1624, 0.2
  %v2211 = vmul.f32 %v1626, 0.2
  %v2212 = vmul.f32 %v1629, 0.2
  %v2213 = vmul.f32 %v1631, 0.2
  %v2214 = vmul.f32 %v1634, 0.2
  %v2215 = vmul.f32 %v1636, 0.2
  %v2216 = vmul.f32 %v1639, 0.2
  %v2217 = vmul.f32 %v1641, 0.2
  %v2218 = vmul.f32 %v1644, 0.2
  %v2219 = vmul.f32 %v1646, 0.2
  %v2220 = vmul.f32 %v1649, 0.2
  %v2221 = vmul.f32 %v1651, 0.2
  %v2222 = vmul.f32 %v1654, 0.2
  %v2223 = vmul.f32 %v1656, 0.2
  %v2224 = vmul.f32 %v1659, 0.2
  %v2225 = vmul.f32 %v1661, 0.2
  %v2226 = vmul.f32 %v1664, 0.2
  %v2227 = vmul.f32 %v1666, 0.2
  %v2228 = vmul.f32 %v1669, 0.2
  %v2229 = vmul.f32 %v1671, 0.2
  %v2230 = vmul.f32 %v1674, 0.2
  %v2231 = vmul.f32 %v1676, 0.2
  %v2232 = vmul.f32 %v1679, 0.2
  %v2233 = vmul.f32 %v1681, 0.2
  %v2234 = vmul.f32 %v1684, 0.2
  %v2235 = vmul.f32 %v1686, 0.2
  %v2236 = vmul.f32 %v1689, 0.2
  %v2237 = vmul.f32 %v1691, 0.2
  %v2238 = vmul.f32 %v1694, 0.2
  %v2239 = vmul.f32 %v1696, 0.2
  %v2240 = vmul.f32 %v1699, 0.2
  %v2241 = vmul.f32 %v1701, 0.2
  %v2242 = vmul.f32 %v1704, 0.2
  %v2243 = vmul.f32 %v1706, 0.2
  %v2244 = vmul.f32 %v1709, 0.2
  %v2245 = vmul.f32 %v1711, 0.2
  %v2246 = vmul.f32 %v1714, 0.2
  %v2247 = vmul.f32 %v1716, 0.2
  %v2248 = vmul.f32 %v1719, 0.2
  %v2249 = vmul.f32 %v1721, 0.2
  %v2250 = vmul.f32 %v1724, 0.2
  %v2251 = vmul.f32 %v1726, 0.2
  %v2252 = vmul.f32 %v1729, 0.2
  %v2253 = vmul.f32 %v1731, 0.2
  %v2254 = vmul.f32 %v1734, 0.2
  %v2255 = vmul.f32 %v1736, 0.2
  %v2256 = vmul.f32 %v1739, 0.2
  %v2257 = vmul.f32 %v1741, 0.2
  %v2258 = vmul.f32 %v1744, 0.2
  %v2259 = vmul.f32 %v1746, 0.2
  %v2260 = vsel %vm1748, %v1109, %v2004
  %v2261 = vsel %vm1749, %v1111, %v2005
  %v2262 = vsel %vm1750, %v1114, %v2006
  %v2263 = vsel %vm1751, %v1116, %v2007
  %v2264 = vsel %vm1752, %v1119, %v2008
  %v2265 = vsel %vm1753, %v1121, %v2009
  %v2266 = vsel %vm1754, %v1124, %v2010
  %v2267 = vsel %vm1755, %v1126, %v2011
  %v2268 = vsel %vm1756, %v1129, %v2012
  %v2269 = vsel %vm1757, %v1131, %v2013
  %v2270 = vsel %vm1758, %v1134, %v2014
  %v2271 = vsel %vm1759, %v1136, %v2015
  %v2272 = vsel %vm1760, %v1139, %v2016
  %v2273 = vsel %vm1761, %v1141, %v2017
  %v2274 = vsel %vm1762, %v1144, %v2018
  %v2275 = vsel %vm1763, %v1146, %v2019
  %v2276 = vsel %vm1764, %v1149, %v2020
  %v2277 = vsel %vm1765, %v1151, %v2021
  %v2278 = vsel %vm1766, %v1154, %v2022
  %v2279 = vsel %vm1767, %v1156, %v2023
  %v2280 = vsel %vm1768, %v1159, %v2024
  %v2281 = vsel %vm1769, %v1161, %v2025
  %v2282 = vsel %vm1770, %v1164, %v2026
  %v2283 = vsel %vm1771, %v1166, %v2027
  %v2284 = vsel %vm1772, %v1169, %v2028
  %v2285 = vsel %vm1773, %v1171, %v2029
  %v2286 = vsel %vm1774, %v1174, %v2030
  %v2287 = vsel %vm1775, %v1176, %v2031
  %v2288 = vsel %vm1776, %v1179, %v2032
  %v2289 = vsel %vm1777, %v1181, %v2033
  %v2290 = vsel %vm1778, %v1184, %v2034
  %v2291 = vsel %vm1779, %v1186, %v2035
  %v2292 = vsel %vm1780, %v1189, %v2036
  %v2293 = vsel %vm1781, %v1191, %v2037
  %v2294 = vsel %vm1782, %v1194, %v2038
  %v2295 = vsel %vm1783, %v1196, %v2039
  %v2296 = vsel %vm1784, %v1199, %v2040
  %v2297 = vsel %vm1785, %v1201, %v2041
  %v2298 = vsel %vm1786, %v1204, %v2042
  %v2299 = vsel %vm1787, %v1206, %v2043
  %v2300 = vsel %vm1788, %v1209, %v2044
  %v2301 = vsel %vm1789, %v1211, %v2045
  %v2302 = vsel %vm1790, %v1214, %v2046
  %v2303 = vsel %vm1791, %v1216, %v2047
  %v2304 = vsel %vm1792, %v1219, %v2048
  %v2305 = vsel %vm1793, %v1221, %v2049
  %v2306 = vsel %vm1794, %v1224, %v2050
  %v2307 = vsel %vm1795, %v1226, %v2051
  %v2308 = vsel %vm1796, %v1229, %v2052
  %v2309 = vsel %vm1797, %v1231, %v2053
  %v2310 = vsel %vm1798, %v1234, %v2054
  %v2311 = vsel %vm1799, %v1236, %v2055
  %v2312 = vsel %vm1800, %v1239, %v2056
  %v2313 = vsel %vm1801, %v1241, %v2057
  %v2314 = vsel %vm1802, %v1244, %v2058
  %v2315 = vsel %vm1803, %v1246, %v2059
  %v2316 = vsel %vm1804, %v1249, %v2060
  %v2317 = vsel %vm1805, %v1251, %v2061
  %v2318 = vsel %vm1806, %v1254, %v2062
  %v2319 = vsel %vm1807, %v1256, %v2063
  %v2320 = vsel %vm1808, %v1259, %v2064
  %v2321 = vsel %vm1809, %v1261, %v2065
  %v2322 = vsel %vm1810, %v1264, %v2066
  %v2323 = vsel %vm1811, %v1266, %v2067
  %v2324 = vsel %vm1812, %v1269, %v2068
  %v2325 = vsel %vm1813, %v1271, %v2069
  %v2326 = vsel %vm1814, %v1274, %v2070
  %v2327 = vsel %vm1815, %v1276, %v2071
  %v2328 = vsel %vm1816, %v1279, %v2072
  %v2329 = vsel %vm1817, %v1281, %v2073
  %v2330 = vsel %vm1818, %v1284, %v2074
  %v2331 = vsel %vm1819, %v1286, %v2075
  %v2332 = vsel %vm1820, %v1289, %v2076
  %v2333 = vsel %vm1821, %v1291, %v2077
  %v2334 = vsel %vm1822, %v1294, %v2078
  %v2335 = vsel %vm1823, %v1296, %v2079
  %v2336 = vsel %vm1824, %v1299, %v2080
  %v2337 = vsel %vm1825, %v1301, %v2081
  %v2338 = vsel %vm1826, %v1304, %v2082
  %v2339 = vsel %vm1827, %v1306, %v2083
  %v2340 = vsel %vm1828, %v1309, %v2084
  %v2341 = vsel %vm1829, %v1311, %v2085
  %v2342 = vsel %vm1830, %v1314, %v2086
  %v2343 = vsel %vm1831, %v1316, %v2087
  %v2344 = vsel %vm1832, %v1319, %v2088
  %v2345 = vsel %vm1833, %v1321, %v2089
  %v2346 = vsel %vm1834, %v1324, %v2090
  %v2347 = vsel %vm1835, %v1326, %v2091
  %v2348 = vsel %vm1836, %v1329, %v2092
  %v2349 = vsel %vm1837, %v1331, %v2093
  %v2350 = vsel %vm1838, %v1334, %v2094
  %v2351 = vsel %vm1839, %v1336, %v2095
  %v2352 = vsel %vm1840, %v1339, %v2096
  %v2353 = vsel %vm1841, %v1341, %v2097
  %v2354 = vsel %vm1842, %v1344, %v2098
  %v2355 = vsel %vm1843, %v1346, %v2099
  %v2356 = vsel %vm1844, %v1349, %v2100
  %v2357 = vsel %vm1845, %v1351, %v2101
  %v2358 = vsel %vm1846, %v1354, %v2102
  %v2359 = vsel %vm1847, %v1356, %v2103
  %v2360 = vsel %vm1848, %v1359, %v2104
  %v2361 = vsel %vm1849, %v1361, %v2105
  %v2362 = vsel %vm1850, %v1364, %v2106
  %v2363 = vsel %vm1851, %v1366, %v2107
  %v2364 = vsel %vm1852, %v1369, %v2108
  %v2365 = vsel %vm1853, %v1371, %v2109
  %v2366 = vsel %vm1854, %v1374, %v2110
  %v2367 = vsel %vm1855, %v1376, %v2111
  %v2368 = vsel %vm1856, %v1379, %v2112
  %v2369 = vsel %vm1857, %v1381, %v2113
  %v2370 = vsel %vm1858, %v1384, %v2114
  %v2371 = vsel %vm1859, %v1386, %v2115
  %v2372 = vsel %vm1860, %v1389, %v2116
  %v2373 = vsel %vm1861, %v1391, %v2117
  %v2374 = vsel %vm1862, %v1394, %v2118
  %v2375 = vsel %vm1863, %v1396, %v2119
  %v2376 = vsel %vm1864, %v1399, %v2120
  %v2377 = vsel %vm1865, %v1401, %v2121
  %v2378 = vsel %vm1866, %v1404, %v2122
  %v2379 = vsel %vm1867, %v1406, %v2123
  %v2380 = vsel %vm1868, %v1409, %v2124
  %v2381 = vsel %vm1869, %v1411, %v2125
  %v2382 = vsel %vm1870, %v1414, %v2126
  %v2383 = vsel %vm1871, %v1416, %v2127
  %v2384 = vsel %vm1872, %v1419, %v2128
  %v2385 = vsel %vm1873, %v1421, %v2129
  %v2386 = vsel %vm1874, %v1424, %v2130
  %v2387 = vsel %vm1875, %v1426, %v2131
  %v2388 = vsel %vm1876, %v1429, %v2132
  %v2389 = vsel %vm1877, %v1431, %v2133
  %v2390 = vsel %vm1878, %v1434, %v2134
  %v2391 = vsel %vm1879, %v1436, %v2135
  %v2392 = vsel %vm1880, %v1439, %v2136
  %v2393 = vsel %vm1881, %v1441, %v2137
  %v2394 = vsel %vm1882, %v1444, %v2138
  %v2395 = vsel %vm1883, %v1446, %v2139
  %v2396 = vsel %vm1884, %v1449, %v2140
  %v2397 = vsel %vm1885, %v1451, %v2141
  %v2398 = vsel %vm1886, %v1454, %v2142
  %v2399 = vsel %vm1887, %v1456, %v2143
  %v2400 = vsel %vm1888, %v1459, %v2144
  %v2401 = vsel %vm1889, %v1461, %v2145
  %v2402 = vsel %vm1890, %v1464, %v2146
  %v2403 = vsel %vm1891, %v1466, %v2147
  %v2404 = vsel %vm1892, %v1469, %v2148
  %v2405 = vsel %vm1893, %v1471, %v2149
  %v2406 = vsel %vm1894, %v1474, %v2150
  %v2407 = vsel %vm1895, %v1476, %v2151
  %v2408 = vsel %vm1896, %v1479, %v2152
  %v2409 = vsel %vm1897, %v1481, %v2153
  %v2410 = vsel %vm1898, %v1484, %v2154
  %v2411 = vsel %vm1899, %v1486, %v2155
  %v2412 = vsel %vm1900, %v1489, %v2156
  %v2413 = vsel %vm1901, %v1491, %v2157
  %v2414 = vsel %vm1902, %v1494, %v2158
  %v2415 = vsel %vm1903, %v1496, %v2159
  %v2416 = vsel %vm1904, %v1499, %v2160
  %v2417 = vsel %vm1905, %v1501, %v2161
  %v2418 = vsel %vm1906, %v1504, %v2162
  %v2419 = vsel %vm1907, %v1506, %v2163
  %v2420 = vsel %vm1908, %v1509, %v2164
  %v2421 = vsel %vm1909, %v1511, %v2165
  %v2422 = vsel %vm1910, %v1514, %v2166
  %v2423 = vsel %vm1911, %v1516, %v2167
  %v2424 = vsel %vm1912, %v1519, %v2168
  %v2425 = vsel %vm1913, %v1521, %v2169
  %v2426 = vsel %vm1914, %v1524, %v2170
  %v2427 = vsel %vm1915, %v1526, %v2171
  %v2428 = vsel %vm1916, %v1529, %v2172
  %v2429 = vsel %vm1917, %v1531, %v2173
  %v2430 = vsel %vm1918, %v1534, %v2174
  %v2431 = vsel %vm1919, %v1536, %v2175
  %v2432 = vsel %vm1920, %v1539, %v2176
  %v2433 = vsel %vm1921, %v1541, %v2177
  %v2434 = vsel %vm1922, %v1544, %v2178
  %v2435 = vsel %vm1923, %v1546, %v2179
  %v2436 = vsel %vm1924, %v1549, %v2180
  %v2437 = vsel %vm1925, %v1551, %v2181
  %v2438 = vsel %vm1926, %v1554, %v2182
  %v2439 = vsel %vm1927, %v1556, %v2183
  %v2440 = vsel %vm1928, %v1559, %v2184
  %v2441 = vsel %vm1929, %v1561, %v2185
  %v2442 = vsel %vm1930, %v1564, %v2186
  %v2443 = vsel %vm1931, %v1566, %v2187
  %v2444 = vsel %vm1932, %v1569, %v2188
  %v2445 = vsel %vm1933, %v1571, %v2189
  %v2446 = vsel %vm1934, %v1574, %v2190
  %v2447 = vsel %vm1935, %v1576, %v2191
  %v2448 = vsel %vm1936, %v1579, %v2192
  %v2449 = vsel %vm1937, %v1581, %v2193
  %v2450 = vsel %vm1938, %v1584, %v2194
  %v2451 = vsel %vm1939, %v1586, %v2195
  %v2452 = vsel %vm1940, %v1589, %v2196
  %v2453 = vsel %vm1941, %v1591, %v2197
  %v2454 = vsel %vm1942, %v1594, %v2198
  %v2455 = vsel %vm1943, %v1596, %v2199
  %v2456 = vsel %vm1944, %v1599, %v2200
  %v2457 = vsel %vm1945, %v1601, %v2201
  %v2458 = vsel %vm1946, %v1604, %v2202
  %v2459 = vsel %vm1947, %v1606, %v2203
  %v2460 = vsel %vm1948, %v1609, %v2204
  %v2461 = vsel %vm1949, %v1611, %v2205
  %v2462 = vsel %vm1950, %v1614, %v2206
  %v2463 = vsel %vm1951, %v1616, %v2207
  %v2464 = vsel %vm1952, %v1619, %v2208
  %v2465 = vsel %vm1953, %v1621, %v2209
  %v2466 = vsel %vm1954, %v1624, %v2210
  %v2467 = vsel %vm1955, %v1626, %v2211
  %v2468 = vsel %vm1956, %v1629, %v2212
  %v2469 = vsel %vm1957, %v1631, %v2213
  %v2470 = vsel %vm1958, %v1634, %v2214
  %v2471 = vsel %vm1959, %v1636, %v2215
  %v2472 = vsel %vm1960, %v1639, %v2216
  %v2473 = vsel %vm1961, %v1641, %v2217
  %v2474 = vsel %vm1962, %v1644, %v2218
  %v2475 = vsel %vm1963, %v1646, %v2219
  %v2476 = vsel %vm1964, %v1649, %v2220
  %v2477 = vsel %vm1965, %v1651, %v2221
  %v2478 = vsel %vm1966, %v1654, %v2222
  %v2479 = vsel %vm1967, %v1656, %v2223
  %v2480 = vsel %vm1968, %v1659, %v2224
  %v2481 = vsel %vm1969, %v1661, %v2225
  %v2482 = vsel %vm1970, %v1664, %v2226
  %v2483 = vsel %vm1971, %v1666, %v2227
  %v2484 = vsel %vm1972, %v1669, %v2228
  %v2485 = vsel %vm1973, %v1671, %v2229
  %v2486 = vsel %vm1974, %v1674, %v2230
  %v2487 = vsel %vm1975, %v1676, %v2231
  %v2488 = vsel %vm1976, %v1679, %v2232
  %v2489 = vsel %vm1977, %v1681, %v2233
  %v2490 = vsel %vm1978, %v1684, %v2234
  %v2491 = vsel %vm1979, %v1686, %v2235
  %v2492 = vsel %vm1980, %v1689, %v2236
  %v2493 = vsel %vm1981, %v1691, %v2237
  %v2494 = vsel %vm1982, %v1694, %v2238
  %v2495 = vsel %vm1983, %v1696, %v2239
  %v2496 = vsel %vm1984, %v1699, %v2240
  %v2497 = vsel %vm1985, %v1701, %v2241
  %v2498 = vsel %vm1986, %v1704, %v2242
  %v2499 = vsel %vm1987, %v1706, %v2243
  %v2500 = vsel %vm1988, %v1709, %v2244
  %v2501 = vsel %vm1989, %v1711, %v2245
  %v2502 = vsel %vm1990, %v1714, %v2246
  %v2503 = vsel %vm1991, %v1716, %v2247
  %v2504 = vsel %vm1992, %v1719, %v2248
  %v2505 = vsel %vm1993, %v1721, %v2249
  %v2506 = vsel %vm1994, %v1724, %v2250
  %v2507 = vsel %vm1995, %v1726, %v2251
  %v2508 = vsel %vm1996, %v1729, %v2252
  %v2509 = vsel %vm1997, %v1731, %v2253
  %v2510 = vsel %vm1998, %v1734, %v2254
  %v2511 = vsel %vm1999, %v1736, %v2255
  %v2512 = vsel %vm2000, %v1739, %v2256
  %v2513 = vsel %vm2001, %v1741, %v2257
  %v2514 = vsel %vm2002, %v1744, %v2258
  %v2515 = vsel %vm2003, %v1746, %v2259
  %v2516 = vpack.c.bf16 %v2260, %v2260
  %v2517 = vpack.c.bf16 %v2261, %v2261
  %v2518 = vpack.c.bf16 %v2262, %v2262
  %v2519 = vpack.c.bf16 %v2263, %v2263
  %v2520 = vpack.c.bf16 %v2264, %v2264
  %v2521 = vpack.c.bf16 %v2265, %v2265
  %v2522 = vpack.c.bf16 %v2266, %v2266
  %v2523 = vpack.c.bf16 %v2267, %v2267
  %v2524 = vpack.c.bf16 %v2268, %v2268
  %v2525 = vpack.c.bf16 %v2269, %v2269
  %v2526 = vpack.c.bf16 %v2270, %v2270
  %v2527 = vpack.c.bf16 %v2271, %v2271
  %v2528 = vpack.c.bf16 %v2272, %v2272
  %v2529 = vpack.c.bf16 %v2273, %v2273
  %v2530 = vpack.c.bf16 %v2274, %v2274
  %v2531 = vpack.c.bf16 %v2275, %v2275
  %v2532 = vpack.c.bf16 %v2276, %v2276
  %v2533 = vpack.c.bf16 %v2277, %v2277
  %v2534 = vpack.c.bf16 %v2278, %v2278
  %v2535 = vpack.c.bf16 %v2279, %v2279
  %v2536 = vpack.c.bf16 %v2280, %v2280
  %v2537 = vpack.c.bf16 %v2281, %v2281
  %v2538 = vpack.c.bf16 %v2282, %v2282
  %v2539 = vpack.c.bf16 %v2283, %v2283
  %v2540 = vpack.c.bf16 %v2284, %v2284
  %v2541 = vpack.c.bf16 %v2285, %v2285
  %v2542 = vpack.c.bf16 %v2286, %v2286
  %v2543 = vpack.c.bf16 %v2287, %v2287
  %v2544 = vpack.c.bf16 %v2288, %v2288
  %v2545 = vpack.c.bf16 %v2289, %v2289
  %v2546 = vpack.c.bf16 %v2290, %v2290
  %v2547 = vpack.c.bf16 %v2291, %v2291
  %v2548 = vpack.c.bf16 %v2292, %v2292
  %v2549 = vpack.c.bf16 %v2293, %v2293
  %v2550 = vpack.c.bf16 %v2294, %v2294
  %v2551 = vpack.c.bf16 %v2295, %v2295
  %v2552 = vpack.c.bf16 %v2296, %v2296
  %v2553 = vpack.c.bf16 %v2297, %v2297
  %v2554 = vpack.c.bf16 %v2298, %v2298
  %v2555 = vpack.c.bf16 %v2299, %v2299
  %v2556 = vpack.c.bf16 %v2300, %v2300
  %v2557 = vpack.c.bf16 %v2301, %v2301
  %v2558 = vpack.c.bf16 %v2302, %v2302
  %v2559 = vpack.c.bf16 %v2303, %v2303
  %v2560 = vpack.c.bf16 %v2304, %v2304
  %v2561 = vpack.c.bf16 %v2305, %v2305
  %v2562 = vpack.c.bf16 %v2306, %v2306
  %v2563 = vpack.c.bf16 %v2307, %v2307
  %v2564 = vpack.c.bf16 %v2308, %v2308
  %v2565 = vpack.c.bf16 %v2309, %v2309
  %v2566 = vpack.c.bf16 %v2310, %v2310
  %v2567 = vpack.c.bf16 %v2311, %v2311
  %v2568 = vpack.c.bf16 %v2312, %v2312
  %v2569 = vpack.c.bf16 %v2313, %v2313
  %v2570 = vpack.c.bf16 %v2314, %v2314
  %v2571 = vpack.c.bf16 %v2315, %v2315
  %v2572 = vpack.c.bf16 %v2316, %v2316
  %v2573 = vpack.c.bf16 %v2317, %v2317
  %v2574 = vpack.c.bf16 %v2318, %v2318
  %v2575 = vpack.c.bf16 %v2319, %v2319
  %v2576 = vpack.c.bf16 %v2320, %v2320
  %v2577 = vpack.c.bf16 %v2321, %v2321
  %v2578 = vpack.c.bf16 %v2322, %v2322
  %v2579 = vpack.c.bf16 %v2323, %v2323
  %v2580 = vpack.c.bf16 %v2324, %v2324
  %v2581 = vpack.c.bf16 %v2325, %v2325
  %v2582 = vpack.c.bf16 %v2326, %v2326
  %v2583 = vpack.c.bf16 %v2327, %v2327
  %v2584 = vpack.c.bf16 %v2328, %v2328
  %v2585 = vpack.c.bf16 %v2329, %v2329
  %v2586 = vpack.c.bf16 %v2330, %v2330
  %v2587 = vpack.c.bf16 %v2331, %v2331
  %v2588 = vpack.c.bf16 %v2332, %v2332
  %v2589 = vpack.c.bf16 %v2333, %v2333
  %v2590 = vpack.c.bf16 %v2334, %v2334
  %v2591 = vpack.c.bf16 %v2335, %v2335
  %v2592 = vpack.c.bf16 %v2336, %v2336
  %v2593 = vpack.c.bf16 %v2337, %v2337
  %v2594 = vpack.c.bf16 %v2338, %v2338
  %v2595 = vpack.c.bf16 %v2339, %v2339
  %v2596 = vpack.c.bf16 %v2340, %v2340
  %v2597 = vpack.c.bf16 %v2341, %v2341
  %v2598 = vpack.c.bf16 %v2342, %v2342
  %v2599 = vpack.c.bf16 %v2343, %v2343
  %v2600 = vpack.c.bf16 %v2344, %v2344
  %v2601 = vpack.c.bf16 %v2345, %v2345
  %v2602 = vpack.c.bf16 %v2346, %v2346
  %v2603 = vpack.c.bf16 %v2347, %v2347
  %v2604 = vpack.c.bf16 %v2348, %v2348
  %v2605 = vpack.c.bf16 %v2349, %v2349
  %v2606 = vpack.c.bf16 %v2350, %v2350
  %v2607 = vpack.c.bf16 %v2351, %v2351
  %v2608 = vpack.c.bf16 %v2352, %v2352
  %v2609 = vpack.c.bf16 %v2353, %v2353
  %v2610 = vpack.c.bf16 %v2354, %v2354
  %v2611 = vpack.c.bf16 %v2355, %v2355
  %v2612 = vpack.c.bf16 %v2356, %v2356
  %v2613 = vpack.c.bf16 %v2357, %v2357
  %v2614 = vpack.c.bf16 %v2358, %v2358
  %v2615 = vpack.c.bf16 %v2359, %v2359
  %v2616 = vpack.c.bf16 %v2360, %v2360
  %v2617 = vpack.c.bf16 %v2361, %v2361
  %v2618 = vpack.c.bf16 %v2362, %v2362
  %v2619 = vpack.c.bf16 %v2363, %v2363
  %v2620 = vpack.c.bf16 %v2364, %v2364
  %v2621 = vpack.c.bf16 %v2365, %v2365
  %v2622 = vpack.c.bf16 %v2366, %v2366
  %v2623 = vpack.c.bf16 %v2367, %v2367
  %v2624 = vpack.c.bf16 %v2368, %v2368
  %v2625 = vpack.c.bf16 %v2369, %v2369
  %v2626 = vpack.c.bf16 %v2370, %v2370
  %v2627 = vpack.c.bf16 %v2371, %v2371
  %v2628 = vpack.c.bf16 %v2372, %v2372
  %v2629 = vpack.c.bf16 %v2373, %v2373
  %v2630 = vpack.c.bf16 %v2374, %v2374
  %v2631 = vpack.c.bf16 %v2375, %v2375
  %v2632 = vpack.c.bf16 %v2376, %v2376
  %v2633 = vpack.c.bf16 %v2377, %v2377
  %v2634 = vpack.c.bf16 %v2378, %v2378
  %v2635 = vpack.c.bf16 %v2379, %v2379
  %v2636 = vpack.c.bf16 %v2380, %v2380
  %v2637 = vpack.c.bf16 %v2381, %v2381
  %v2638 = vpack.c.bf16 %v2382, %v2382
  %v2639 = vpack.c.bf16 %v2383, %v2383
  %v2640 = vpack.c.bf16 %v2384, %v2384
  %v2641 = vpack.c.bf16 %v2385, %v2385
  %v2642 = vpack.c.bf16 %v2386, %v2386
  %v2643 = vpack.c.bf16 %v2387, %v2387
  %v2644 = vpack.c.bf16 %v2388, %v2388
  %v2645 = vpack.c.bf16 %v2389, %v2389
  %v2646 = vpack.c.bf16 %v2390, %v2390
  %v2647 = vpack.c.bf16 %v2391, %v2391
  %v2648 = vpack.c.bf16 %v2392, %v2392
  %v2649 = vpack.c.bf16 %v2393, %v2393
  %v2650 = vpack.c.bf16 %v2394, %v2394
  %v2651 = vpack.c.bf16 %v2395, %v2395
  %v2652 = vpack.c.bf16 %v2396, %v2396
  %v2653 = vpack.c.bf16 %v2397, %v2397
  %v2654 = vpack.c.bf16 %v2398, %v2398
  %v2655 = vpack.c.bf16 %v2399, %v2399
  %v2656 = vpack.c.bf16 %v2400, %v2400
  %v2657 = vpack.c.bf16 %v2401, %v2401
  %v2658 = vpack.c.bf16 %v2402, %v2402
  %v2659 = vpack.c.bf16 %v2403, %v2403
  %v2660 = vpack.c.bf16 %v2404, %v2404
  %v2661 = vpack.c.bf16 %v2405, %v2405
  %v2662 = vpack.c.bf16 %v2406, %v2406
  %v2663 = vpack.c.bf16 %v2407, %v2407
  %v2664 = vpack.c.bf16 %v2408, %v2408
  %v2665 = vpack.c.bf16 %v2409, %v2409
  %v2666 = vpack.c.bf16 %v2410, %v2410
  %v2667 = vpack.c.bf16 %v2411, %v2411
  %v2668 = vpack.c.bf16 %v2412, %v2412
  %v2669 = vpack.c.bf16 %v2413, %v2413
  %v2670 = vpack.c.bf16 %v2414, %v2414
  %v2671 = vpack.c.bf16 %v2415, %v2415
  %v2672 = vpack.c.bf16 %v2416, %v2416
  %v2673 = vpack.c.bf16 %v2417, %v2417
  %v2674 = vpack.c.bf16 %v2418, %v2418
  %v2675 = vpack.c.bf16 %v2419, %v2419
  %v2676 = vpack.c.bf16 %v2420, %v2420
  %v2677 = vpack.c.bf16 %v2421, %v2421
  %v2678 = vpack.c.bf16 %v2422, %v2422
  %v2679 = vpack.c.bf16 %v2423, %v2423
  %v2680 = vpack.c.bf16 %v2424, %v2424
  %v2681 = vpack.c.bf16 %v2425, %v2425
  %v2682 = vpack.c.bf16 %v2426, %v2426
  %v2683 = vpack.c.bf16 %v2427, %v2427
  %v2684 = vpack.c.bf16 %v2428, %v2428
  %v2685 = vpack.c.bf16 %v2429, %v2429
  %v2686 = vpack.c.bf16 %v2430, %v2430
  %v2687 = vpack.c.bf16 %v2431, %v2431
  %v2688 = vpack.c.bf16 %v2432, %v2432
  %v2689 = vpack.c.bf16 %v2433, %v2433
  %v2690 = vpack.c.bf16 %v2434, %v2434
  %v2691 = vpack.c.bf16 %v2435, %v2435
  %v2692 = vpack.c.bf16 %v2436, %v2436
  %v2693 = vpack.c.bf16 %v2437, %v2437
  %v2694 = vpack.c.bf16 %v2438, %v2438
  %v2695 = vpack.c.bf16 %v2439, %v2439
  %v2696 = vpack.c.bf16 %v2440, %v2440
  %v2697 = vpack.c.bf16 %v2441, %v2441
  %v2698 = vpack.c.bf16 %v2442, %v2442
  %v2699 = vpack.c.bf16 %v2443, %v2443
  %v2700 = vpack.c.bf16 %v2444, %v2444
  %v2701 = vpack.c.bf16 %v2445, %v2445
  %v2702 = vpack.c.bf16 %v2446, %v2446
  %v2703 = vpack.c.bf16 %v2447, %v2447
  %v2704 = vpack.c.bf16 %v2448, %v2448
  %v2705 = vpack.c.bf16 %v2449, %v2449
  %v2706 = vpack.c.bf16 %v2450, %v2450
  %v2707 = vpack.c.bf16 %v2451, %v2451
  %v2708 = vpack.c.bf16 %v2452, %v2452
  %v2709 = vpack.c.bf16 %v2453, %v2453
  %v2710 = vpack.c.bf16 %v2454, %v2454
  %v2711 = vpack.c.bf16 %v2455, %v2455
  %v2712 = vpack.c.bf16 %v2456, %v2456
  %v2713 = vpack.c.bf16 %v2457, %v2457
  %v2714 = vpack.c.bf16 %v2458, %v2458
  %v2715 = vpack.c.bf16 %v2459, %v2459
  %v2716 = vpack.c.bf16 %v2460, %v2460
  %v2717 = vpack.c.bf16 %v2461, %v2461
  %v2718 = vpack.c.bf16 %v2462, %v2462
  %v2719 = vpack.c.bf16 %v2463, %v2463
  %v2720 = vpack.c.bf16 %v2464, %v2464
  %v2721 = vpack.c.bf16 %v2465, %v2465
  %v2722 = vpack.c.bf16 %v2466, %v2466
  %v2723 = vpack.c.bf16 %v2467, %v2467
  %v2724 = vpack.c.bf16 %v2468, %v2468
  %v2725 = vpack.c.bf16 %v2469, %v2469
  %v2726 = vpack.c.bf16 %v2470, %v2470
  %v2727 = vpack.c.bf16 %v2471, %v2471
  %v2728 = vpack.c.bf16 %v2472, %v2472
  %v2729 = vpack.c.bf16 %v2473, %v2473
  %v2730 = vpack.c.bf16 %v2474, %v2474
  %v2731 = vpack.c.bf16 %v2475, %v2475
  %v2732 = vpack.c.bf16 %v2476, %v2476
  %v2733 = vpack.c.bf16 %v2477, %v2477
  %v2734 = vpack.c.bf16 %v2478, %v2478
  %v2735 = vpack.c.bf16 %v2479, %v2479
  %v2736 = vpack.c.bf16 %v2480, %v2480
  %v2737 = vpack.c.bf16 %v2481, %v2481
  %v2738 = vpack.c.bf16 %v2482, %v2482
  %v2739 = vpack.c.bf16 %v2483, %v2483
  %v2740 = vpack.c.bf16 %v2484, %v2484
  %v2741 = vpack.c.bf16 %v2485, %v2485
  %v2742 = vpack.c.bf16 %v2486, %v2486
  %v2743 = vpack.c.bf16 %v2487, %v2487
  %v2744 = vpack.c.bf16 %v2488, %v2488
  %v2745 = vpack.c.bf16 %v2489, %v2489
  %v2746 = vpack.c.bf16 %v2490, %v2490
  %v2747 = vpack.c.bf16 %v2491, %v2491
  %v2748 = vpack.c.bf16 %v2492, %v2492
  %v2749 = vpack.c.bf16 %v2493, %v2493
  %v2750 = vpack.c.bf16 %v2494, %v2494
  %v2751 = vpack.c.bf16 %v2495, %v2495
  %v2752 = vpack.c.bf16 %v2496, %v2496
  %v2753 = vpack.c.bf16 %v2497, %v2497
  %v2754 = vpack.c.bf16 %v2498, %v2498
  %v2755 = vpack.c.bf16 %v2499, %v2499
  %v2756 = vpack.c.bf16 %v2500, %v2500
  %v2757 = vpack.c.bf16 %v2501, %v2501
  %v2758 = vpack.c.bf16 %v2502, %v2502
  %v2759 = vpack.c.bf16 %v2503, %v2503
  %v2760 = vpack.c.bf16 %v2504, %v2504
  %v2761 = vpack.c.bf16 %v2505, %v2505
  %v2762 = vpack.c.bf16 %v2506, %v2506
  %v2763 = vpack.c.bf16 %v2507, %v2507
  %v2764 = vpack.c.bf16 %v2508, %v2508
  %v2765 = vpack.c.bf16 %v2509, %v2509
  %v2766 = vpack.c.bf16 %v2510, %v2510
  %v2767 = vpack.c.bf16 %v2511, %v2511
  %v2768 = vpack.c.bf16 %v2512, %v2512
  %v2769 = vpack.c.bf16 %v2513, %v2513
  %v2770 = vpack.c.bf16 %v2514, %v2514
  %v2771 = vpack.c.bf16 %v2515, %v2515
  %2772 = vst [vmem:[%s2] sm:$0xf] %v2516
  %2773 = vst [vmem:[%s2 + $0x4] sm:$0xf] %v2517
  %2774 = vst [vmem:[%s2 + $0x8] sm:$0xf] %v2518
  %2775 = vst [vmem:[%s2 + $0xc] sm:$0xf] %v2519
  %2776 = vst [vmem:[%s2 + $0x10] sm:$0xf] %v2520
  %2777 = vst [vmem:[%s2 + $0x14] sm:$0xf] %v2521
  %2778 = vst [vmem:[%s2 + $0x18] sm:$0xf] %v2522
  %2779 = vst [vmem:[%s2 + $0x1c] sm:$0xf] %v2523
  %2780 = vst [vmem:[%s2 + $0x20] sm:$0xf] %v2524
  %2781 = vst [vmem:[%s2 + $0x24] sm:$0xf] %v2525
  %2782 = vst [vmem:[%s2 + $0x28] sm:$0xf] %v2526
  %2783 = vst [vmem:[%s2 + $0x2c] sm:$0xf] %v2527
  %2784 = vst [vmem:[%s2 + $0x30] sm:$0xf] %v2528
  %2785 = vst [vmem:[%s2 + $0x34] sm:$0xf] %v2529
  %2786 = vst [vmem:[%s2 + $0x38] sm:$0xf] %v2530
  %2787 = vst [vmem:[%s2 + $0x3c] sm:$0xf] %v2531
  %2788 = vst [vmem:[%s2 + $0x40] sm:$0xf] %v2532
  %2789 = vst [vmem:[%s2 + $0x44] sm:$0xf] %v2533
  %2790 = vst [vmem:[%s2 + $0x48] sm:$0xf] %v2534
  %2791 = vst [vmem:[%s2 + $0x4c] sm:$0xf] %v2535
  %2792 = vst [vmem:[%s2 + $0x50] sm:$0xf] %v2536
  %2793 = vst [vmem:[%s2 + $0x54] sm:$0xf] %v2537
  %2794 = vst [vmem:[%s2 + $0x58] sm:$0xf] %v2538
  %2795 = vst [vmem:[%s2 + $0x5c] sm:$0xf] %v2539
  %2796 = vst [vmem:[%s2 + $0x60] sm:$0xf] %v2540
  %2797 = vst [vmem:[%s2 + $0x64] sm:$0xf] %v2541
  %2798 = vst [vmem:[%s2 + $0x68] sm:$0xf] %v2542
  %2799 = vst [vmem:[%s2 + $0x6c] sm:$0xf] %v2543
  %2800 = vst [vmem:[%s2 + $0x70] sm:$0xf] %v2544
  %2801 = vst [vmem:[%s2 + $0x74] sm:$0xf] %v2545
  %2802 = vst [vmem:[%s2 + $0x78] sm:$0xf] %v2546
  %2803 = vst [vmem:[%s2 + $0x7c] sm:$0xf] %v2547
  %2804 = vst [vmem:[%s2 + $0x80] sm:$0xf] %v2548
  %2805 = vst [vmem:[%s2 + $0x84] sm:$0xf] %v2549
  %2806 = vst [vmem:[%s2 + $0x88] sm:$0xf] %v2550
  %2807 = vst [vmem:[%s2 + $0x8c] sm:$0xf] %v2551
  %2808 = vst [vmem:[%s2 + $0x90] sm:$0xf] %v2552
  %2809 = vst [vmem:[%s2 + $0x94] sm:$0xf] %v2553
  %2810 = vst [vmem:[%s2 + $0x98] sm:$0xf] %v2554
  %2811 = vst [vmem:[%s2 + $0x9c] sm:$0xf] %v2555
  %2812 = vst [vmem:[%s2 + $0xa0] sm:$0xf] %v2556
  %2813 = vst [vmem:[%s2 + $0xa4] sm:$0xf] %v2557
  %2814 = vst [vmem:[%s2 + $0xa8] sm:$0xf] %v2558
  %2815 = vst [vmem:[%s2 + $0xac] sm:$0xf] %v2559
  %2816 = vst [vmem:[%s2 + $0xb0] sm:$0xf] %v2560
  %2817 = vst [vmem:[%s2 + $0xb4] sm:$0xf] %v2561
  %2818 = vst [vmem:[%s2 + $0xb8] sm:$0xf] %v2562
  %2819 = vst [vmem:[%s2 + $0xbc] sm:$0xf] %v2563
  %2820 = vst [vmem:[%s2 + $0xc0] sm:$0xf] %v2564
  %2821 = vst [vmem:[%s2 + $0xc4] sm:$0xf] %v2565
  %2822 = vst [vmem:[%s2 + $0xc8] sm:$0xf] %v2566
  %2823 = vst [vmem:[%s2 + $0xcc] sm:$0xf] %v2567
  %2824 = vst [vmem:[%s2 + $0xd0] sm:$0xf] %v2568
  %2825 = vst [vmem:[%s2 + $0xd4] sm:$0xf] %v2569
  %2826 = vst [vmem:[%s2 + $0xd8] sm:$0xf] %v2570
  %2827 = vst [vmem:[%s2 + $0xdc] sm:$0xf] %v2571
  %2828 = vst [vmem:[%s2 + $0xe0] sm:$0xf] %v2572
  %2829 = vst [vmem:[%s2 + $0xe4] sm:$0xf] %v2573
  %2830 = vst [vmem:[%s2 + $0xe8] sm:$0xf] %v2574
  %2831 = vst [vmem:[%s2 + $0xec] sm:$0xf] %v2575
  %2832 = vst [vmem:[%s2 + $0xf0] sm:$0xf] %v2576
  %2833 = vst [vmem:[%s2 + $0xf4] sm:$0xf] %v2577
  %2834 = vst [vmem:[%s2 + $0xf8] sm:$0xf] %v2578
  %2835 = vst [vmem:[%s2 + $0xfc] sm:$0xf] %v2579
  %2836 = vst [vmem:[%s2 + $0x100] sm:$0xf] %v2580
  %2837 = vst [vmem:[%s2 + $0x104] sm:$0xf] %v2581
  %2838 = vst [vmem:[%s2 + $0x108] sm:$0xf] %v2582
  %2839 = vst [vmem:[%s2 + $0x10c] sm:$0xf] %v2583
  %2840 = vst [vmem:[%s2 + $0x110] sm:$0xf] %v2584
  %2841 = vst [vmem:[%s2 + $0x114] sm:$0xf] %v2585
  %2842 = vst [vmem:[%s2 + $0x118] sm:$0xf] %v2586
  %2843 = vst [vmem:[%s2 + $0x11c] sm:$0xf] %v2587
  %2844 = vst [vmem:[%s2 + $0x120] sm:$0xf] %v2588
  %2845 = vst [vmem:[%s2 + $0x124] sm:$0xf] %v2589
  %2846 = vst [vmem:[%s2 + $0x128] sm:$0xf] %v2590
  %2847 = vst [vmem:[%s2 + $0x12c] sm:$0xf] %v2591
  %2848 = vst [vmem:[%s2 + $0x130] sm:$0xf] %v2592
  %2849 = vst [vmem:[%s2 + $0x134] sm:$0xf] %v2593
  %2850 = vst [vmem:[%s2 + $0x138] sm:$0xf] %v2594
  %2851 = vst [vmem:[%s2 + $0x13c] sm:$0xf] %v2595
  %2852 = vst [vmem:[%s2 + $0x140] sm:$0xf] %v2596
  %2853 = vst [vmem:[%s2 + $0x144] sm:$0xf] %v2597
  %2854 = vst [vmem:[%s2 + $0x148] sm:$0xf] %v2598
  %2855 = vst [vmem:[%s2 + $0x14c] sm:$0xf] %v2599
  %2856 = vst [vmem:[%s2 + $0x150] sm:$0xf] %v2600
  %2857 = vst [vmem:[%s2 + $0x154] sm:$0xf] %v2601
  %2858 = vst [vmem:[%s2 + $0x158] sm:$0xf] %v2602
  %2859 = vst [vmem:[%s2 + $0x15c] sm:$0xf] %v2603
  %2860 = vst [vmem:[%s2 + $0x160] sm:$0xf] %v2604
  %2861 = vst [vmem:[%s2 + $0x164] sm:$0xf] %v2605
  %2862 = vst [vmem:[%s2 + $0x168] sm:$0xf] %v2606
  %2863 = vst [vmem:[%s2 + $0x16c] sm:$0xf] %v2607
  %2864 = vst [vmem:[%s2 + $0x170] sm:$0xf] %v2608
  %2865 = vst [vmem:[%s2 + $0x174] sm:$0xf] %v2609
  %2866 = vst [vmem:[%s2 + $0x178] sm:$0xf] %v2610
  %2867 = vst [vmem:[%s2 + $0x17c] sm:$0xf] %v2611
  %2868 = vst [vmem:[%s2 + $0x180] sm:$0xf] %v2612
  %2869 = vst [vmem:[%s2 + $0x184] sm:$0xf] %v2613
  %2870 = vst [vmem:[%s2 + $0x188] sm:$0xf] %v2614
  %2871 = vst [vmem:[%s2 + $0x18c] sm:$0xf] %v2615
  %2872 = vst [vmem:[%s2 + $0x190] sm:$0xf] %v2616
  %2873 = vst [vmem:[%s2 + $0x194] sm:$0xf] %v2617
  %2874 = vst [vmem:[%s2 + $0x198] sm:$0xf] %v2618
  %2875 = vst [vmem:[%s2 + $0x19c] sm:$0xf] %v2619
  %2876 = vst [vmem:[%s2 + $0x1a0] sm:$0xf] %v2620
  %2877 = vst [vmem:[%s2 + $0x1a4] sm:$0xf] %v2621
  %2878 = vst [vmem:[%s2 + $0x1a8] sm:$0xf] %v2622
  %2879 = vst [vmem:[%s2 + $0x1ac] sm:$0xf] %v2623
  %2880 = vst [vmem:[%s2 + $0x1b0] sm:$0xf] %v2624
  %2881 = vst [vmem:[%s2 + $0x1b4] sm:$0xf] %v2625
  %2882 = vst [vmem:[%s2 + $0x1b8] sm:$0xf] %v2626
  %2883 = vst [vmem:[%s2 + $0x1bc] sm:$0xf] %v2627
  %2884 = vst [vmem:[%s2 + $0x1c0] sm:$0xf] %v2628
  %2885 = vst [vmem:[%s2 + $0x1c4] sm:$0xf] %v2629
  %2886 = vst [vmem:[%s2 + $0x1c8] sm:$0xf] %v2630
  %2887 = vst [vmem:[%s2 + $0x1cc] sm:$0xf] %v2631
  %2888 = vst [vmem:[%s2 + $0x1d0] sm:$0xf] %v2632
  %2889 = vst [vmem:[%s2 + $0x1d4] sm:$0xf] %v2633
  %2890 = vst [vmem:[%s2 + $0x1d8] sm:$0xf] %v2634
  %2891 = vst [vmem:[%s2 + $0x1dc] sm:$0xf] %v2635
  %2892 = vst [vmem:[%s2 + $0x1e0] sm:$0xf] %v2636
  %2893 = vst [vmem:[%s2 + $0x1e4] sm:$0xf] %v2637
  %2894 = vst [vmem:[%s2 + $0x1e8] sm:$0xf] %v2638
  %2895 = vst [vmem:[%s2 + $0x1ec] sm:$0xf] %v2639
  %2896 = vst [vmem:[%s2 + $0x1f0] sm:$0xf] %v2640
  %2897 = vst [vmem:[%s2 + $0x1f4] sm:$0xf] %v2641
  %2898 = vst [vmem:[%s2 + $0x1f8] sm:$0xf] %v2642
  %2899 = vst [vmem:[%s2 + $0x1fc] sm:$0xf] %v2643
  %2900 = vst [vmem:[%s2 + $0x200] sm:$0xf] %v2644
  %2901 = vst [vmem:[%s2 + $0x204] sm:$0xf] %v2645
  %2902 = vst [vmem:[%s2 + $0x208] sm:$0xf] %v2646
  %2903 = vst [vmem:[%s2 + $0x20c] sm:$0xf] %v2647
  %2904 = vst [vmem:[%s2 + $0x210] sm:$0xf] %v2648
  %2905 = vst [vmem:[%s2 + $0x214] sm:$0xf] %v2649
  %2906 = vst [vmem:[%s2 + $0x218] sm:$0xf] %v2650
  %2907 = vst [vmem:[%s2 + $0x21c] sm:$0xf] %v2651
  %2908 = vst [vmem:[%s2 + $0x220] sm:$0xf] %v2652
  %2909 = vst [vmem:[%s2 + $0x224] sm:$0xf] %v2653
  %2910 = vst [vmem:[%s2 + $0x228] sm:$0xf] %v2654
  %2911 = vst [vmem:[%s2 + $0x22c] sm:$0xf] %v2655
  %2912 = vst [vmem:[%s2 + $0x230] sm:$0xf] %v2656
  %2913 = vst [vmem:[%s2 + $0x234] sm:$0xf] %v2657
  %2914 = vst [vmem:[%s2 + $0x238] sm:$0xf] %v2658
  %2915 = vst [vmem:[%s2 + $0x23c] sm:$0xf] %v2659
  %2916 = vst [vmem:[%s2 + $0x240] sm:$0xf] %v2660
  %2917 = vst [vmem:[%s2 + $0x244] sm:$0xf] %v2661
  %2918 = vst [vmem:[%s2 + $0x248] sm:$0xf] %v2662
  %2919 = vst [vmem:[%s2 + $0x24c] sm:$0xf] %v2663
  %2920 = vst [vmem:[%s2 + $0x250] sm:$0xf] %v2664
  %2921 = vst [vmem:[%s2 + $0x254] sm:$0xf] %v2665
  %2922 = vst [vmem:[%s2 + $0x258] sm:$0xf] %v2666
  %2923 = vst [vmem:[%s2 + $0x25c] sm:$0xf] %v2667
  %2924 = vst [vmem:[%s2 + $0x260] sm:$0xf] %v2668
  %2925 = vst [vmem:[%s2 + $0x264] sm:$0xf] %v2669
  %2926 = vst [vmem:[%s2 + $0x268] sm:$0xf] %v2670
  %2927 = vst [vmem:[%s2 + $0x26c] sm:$0xf] %v2671
  %2928 = vst [vmem:[%s2 + $0x270] sm:$0xf] %v2672
  %2929 = vst [vmem:[%s2 + $0x274] sm:$0xf] %v2673
  %2930 = vst [vmem:[%s2 + $0x278] sm:$0xf] %v2674
  %2931 = vst [vmem:[%s2 + $0x27c] sm:$0xf] %v2675
  %2932 = vst [vmem:[%s2 + $0x280] sm:$0xf] %v2676
  %2933 = vst [vmem:[%s2 + $0x284] sm:$0xf] %v2677
  %2934 = vst [vmem:[%s2 + $0x288] sm:$0xf] %v2678
  %2935 = vst [vmem:[%s2 + $0x28c] sm:$0xf] %v2679
  %2936 = vst [vmem:[%s2 + $0x290] sm:$0xf] %v2680
  %2937 = vst [vmem:[%s2 + $0x294] sm:$0xf] %v2681
  %2938 = vst [vmem:[%s2 + $0x298] sm:$0xf] %v2682
  %2939 = vst [vmem:[%s2 + $0x29c] sm:$0xf] %v2683
  %2940 = vst [vmem:[%s2 + $0x2a0] sm:$0xf] %v2684
  %2941 = vst [vmem:[%s2 + $0x2a4] sm:$0xf] %v2685
  %2942 = vst [vmem:[%s2 + $0x2a8] sm:$0xf] %v2686
  %2943 = vst [vmem:[%s2 + $0x2ac] sm:$0xf] %v2687
  %2944 = vst [vmem:[%s2 + $0x2b0] sm:$0xf] %v2688
  %2945 = vst [vmem:[%s2 + $0x2b4] sm:$0xf] %v2689
  %2946 = vst [vmem:[%s2 + $0x2b8] sm:$0xf] %v2690
  %2947 = vst [vmem:[%s2 + $0x2bc] sm:$0xf] %v2691
  %2948 = vst [vmem:[%s2 + $0x2c0] sm:$0xf] %v2692
  %2949 = vst [vmem:[%s2 + $0x2c4] sm:$0xf] %v2693
  %2950 = vst [vmem:[%s2 + $0x2c8] sm:$0xf] %v2694
  %2951 = vst [vmem:[%s2 + $0x2cc] sm:$0xf] %v2695
  %2952 = vst [vmem:[%s2 + $0x2d0] sm:$0xf] %v2696
  %2953 = vst [vmem:[%s2 + $0x2d4] sm:$0xf] %v2697
  %2954 = vst [vmem:[%s2 + $0x2d8] sm:$0xf] %v2698
  %2955 = vst [vmem:[%s2 + $0x2dc] sm:$0xf] %v2699
  %2956 = vst [vmem:[%s2 + $0x2e0] sm:$0xf] %v2700
  %2957 = vst [vmem:[%s2 + $0x2e4] sm:$0xf] %v2701
  %2958 = vst [vmem:[%s2 + $0x2e8] sm:$0xf] %v2702
  %2959 = vst [vmem:[%s2 + $0x2ec] sm:$0xf] %v2703
  %2960 = vst [vmem:[%s2 + $0x2f0] sm:$0xf] %v2704
  %2961 = vst [vmem:[%s2 + $0x2f4] sm:$0xf] %v2705
  %2962 = vst [vmem:[%s2 + $0x2f8] sm:$0xf] %v2706
  %2963 = vst [vmem:[%s2 + $0x2fc] sm:$0xf] %v2707
  %2964 = vst [vmem:[%s2 + $0x300] sm:$0xf] %v2708
  %2965 = vst [vmem:[%s2 + $0x304] sm:$0xf] %v2709
  %2966 = vst [vmem:[%s2 + $0x308] sm:$0xf] %v2710
  %2967 = vst [vmem:[%s2 + $0x30c] sm:$0xf] %v2711
  %2968 = vst [vmem:[%s2 + $0x310] sm:$0xf] %v2712
  %2969 = vst [vmem:[%s2 + $0x314] sm:$0xf] %v2713
  %2970 = vst [vmem:[%s2 + $0x318] sm:$0xf] %v2714
  %2971 = vst [vmem:[%s2 + $0x31c] sm:$0xf] %v2715
  %2972 = vst [vmem:[%s2 + $0x320] sm:$0xf] %v2716
  %2973 = vst [vmem:[%s2 + $0x324] sm:$0xf] %v2717
  %2974 = vst [vmem:[%s2 + $0x328] sm:$0xf] %v2718
  %2975 = vst [vmem:[%s2 + $0x32c] sm:$0xf] %v2719
  %2976 = vst [vmem:[%s2 + $0x330] sm:$0xf] %v2720
  %2977 = vst [vmem:[%s2 + $0x334] sm:$0xf] %v2721
  %2978 = vst [vmem:[%s2 + $0x338] sm:$0xf] %v2722
  %2979 = vst [vmem:[%s2 + $0x33c] sm:$0xf] %v2723
  %2980 = vst [vmem:[%s2 + $0x340] sm:$0xf] %v2724
  %2981 = vst [vmem:[%s2 + $0x344] sm:$0xf] %v2725
  %2982 = vst [vmem:[%s2 + $0x348] sm:$0xf] %v2726
  %2983 = vst [vmem:[%s2 + $0x34c] sm:$0xf] %v2727
  %2984 = vst [vmem:[%s2 + $0x350] sm:$0xf] %v2728
  %2985 = vst [vmem:[%s2 + $0x354] sm:$0xf] %v2729
  %2986 = vst [vmem:[%s2 + $0x358] sm:$0xf] %v2730
  %2987 = vst [vmem:[%s2 + $0x35c] sm:$0xf] %v2731
  %2988 = vst [vmem:[%s2 + $0x360] sm:$0xf] %v2732
  %2989 = vst [vmem:[%s2 + $0x364] sm:$0xf] %v2733
  %2990 = vst [vmem:[%s2 + $0x368] sm:$0xf] %v2734
  %2991 = vst [vmem:[%s2 + $0x36c] sm:$0xf] %v2735
  %2992 = vst [vmem:[%s2 + $0x370] sm:$0xf] %v2736
  %2993 = vst [vmem:[%s2 + $0x374] sm:$0xf] %v2737
  %2994 = vst [vmem:[%s2 + $0x378] sm:$0xf] %v2738
  %2995 = vst [vmem:[%s2 + $0x37c] sm:$0xf] %v2739
  %2996 = vst [vmem:[%s2 + $0x380] sm:$0xf] %v2740
  %2997 = vst [vmem:[%s2 + $0x384] sm:$0xf] %v2741
  %2998 = vst [vmem:[%s2 + $0x388] sm:$0xf] %v2742
  %2999 = vst [vmem:[%s2 + $0x38c] sm:$0xf] %v2743
  %3000 = vst [vmem:[%s2 + $0x390] sm:$0xf] %v2744
  %3001 = vst [vmem:[%s2 + $0x394] sm:$0xf] %v2745
  %3002 = vst [vmem:[%s2 + $0x398] sm:$0xf] %v2746
  %3003 = vst [vmem:[%s2 + $0x39c] sm:$0xf] %v2747
  %3004 = vst [vmem:[%s2 + $0x3a0] sm:$0xf] %v2748
  %3005 = vst [vmem:[%s2 + $0x3a4] sm:$0xf] %v2749
  %3006 = vst [vmem:[%s2 + $0x3a8] sm:$0xf] %v2750
  %3007 = vst [vmem:[%s2 + $0x3ac] sm:$0xf] %v2751
  %3008 = vst [vmem:[%s2 + $0x3b0] sm:$0xf] %v2752
  %3009 = vst [vmem:[%s2 + $0x3b4] sm:$0xf] %v2753
  %3010 = vst [vmem:[%s2 + $0x3b8] sm:$0xf] %v2754
  %3011 = vst [vmem:[%s2 + $0x3bc] sm:$0xf] %v2755
  %3012 = vst [vmem:[%s2 + $0x3c0] sm:$0xf] %v2756
  %3013 = vst [vmem:[%s2 + $0x3c4] sm:$0xf] %v2757
  %3014 = vst [vmem:[%s2 + $0x3c8] sm:$0xf] %v2758
  %3015 = vst [vmem:[%s2 + $0x3cc] sm:$0xf] %v2759
  %3016 = vst [vmem:[%s2 + $0x3d0] sm:$0xf] %v2760
  %3017 = vst [vmem:[%s2 + $0x3d4] sm:$0xf] %v2761
  %3018 = vst [vmem:[%s2 + $0x3d8] sm:$0xf] %v2762
  %3019 = vst [vmem:[%s2 + $0x3dc] sm:$0xf] %v2763
  %3020 = vst [vmem:[%s2 + $0x3e0] sm:$0xf] %v2764
  %3021 = vst [vmem:[%s2 + $0x3e4] sm:$0xf] %v2765
  %3022 = vst [vmem:[%s2 + $0x3e8] sm:$0xf] %v2766
  %3023 = vst [vmem:[%s2 + $0x3ec] sm:$0xf] %v2767
  %3024 = vst [vmem:[%s2 + $0x3f0] sm:$0xf] %v2768
  %3025 = vst [vmem:[%s2 + $0x3f4] sm:$0xf] %v2769
  %3026 = vst [vmem:[%s2 + $0x3f8] sm:$0xf] %v2770
  %3027 = vst [vmem:[%s2 + $0x3fc] sm:$0xf] %v2771
  // Predicated region
  $region10: #{discriminator_forward.8} parent=0 // pred_check
    _
  $region11: #{discriminator_forward.8} parent=0 // pred_check_branch
    %3029 = sbr.rel (0) target = $region13
  $region12: #{discriminator_forward.8} parent=0 // pred_region
    _
  $region13: #{discriminator_forward.8} parent=0 // pred_fallthru
    _
  // Predicated region
  $region14: #{discriminator_forward.8} parent=0 // pred_check
    _
  $region15: #{discriminator_forward.8} parent=0 // pred_check_branch
    %3031 = sbr.rel (0) target = $region17
  $region16: #{discriminator_forward.8} parent=0 // pred_region
    _
  $region17: #{discriminator_forward.8} parent=0 // pred_fallthru
    _

// kernel: discriminator_forward.9
$region0: #{discriminator_forward.9}
  #allocation0 [shape = 'u32[]', space=smem, size = 0x4, offset = 0x4, fixed_abs, tag = 'smem constant byte address 0x4 - core index']
  #allocation1 [shape = 'u32[72,128]{1,0:T(1,128)}', space=vmem, size = 0x9000, scoped, tag = 'internal scratch']
  %s0 = inlined_call_operand.vmem [shape: bf16[512,128], index: 0, kind: input, shape index: {}]
  %s1 = inlined_call_operand.vmem [shape: bf16[128,128], index: 1, kind: input, shape index: {}]
  %s2 = inlined_call_operand.vmem [shape: bf16[512,128], index: 2, kind: output, shape index: {0}]
  %s3 = inlined_call_operand.vmem [shape: f32[8,128], index: 3, kind: output, shape index: {1}]
  %4 = xla_tuple %s2, %s3
  %s5 = sld [smem:[#allocation0]]
  $region26: #{discriminator_forward.9} parent=0
    _
  %s7 = ssub.s32 1, %s5
  %s8 = scalar_select 0, %s7, %s5
  // Predicated region
  $region2: #{discriminator_forward.9} parent=0 // pred_check
    _
  $region3: #{discriminator_forward.9} parent=0 // pred_check_branch
    %10 = sbr.rel (0) target = $region5
  $region4: #{discriminator_forward.9} parent=0 // pred_region
    _
  $region5: #{discriminator_forward.9} parent=0 // pred_fallthru
    _
  // Predicated region
  $region6: #{discriminator_forward.9} parent=0 // pred_check
    _
  $region7: #{discriminator_forward.9} parent=0 // pred_check_branch
    %12 = sbr.rel (0) target = $region9
  $region8: #{discriminator_forward.9} parent=0 // pred_region
    _
  $region9: #{discriminator_forward.9} parent=0 // pred_fallthru
    _
  %v13 = vld [vmem:[%s0] sm:$0xf]
  %v14 = vld [vmem:[%s0 + $0x4] sm:$0xf]
  %v15 = vld [vmem:[%s0 + $0x8] sm:$0xf]
  %v16 = vld [vmem:[%s0 + $0xc] sm:$0xf]
  %v17 = vld [vmem:[%s0 + $0x10] sm:$0xf]
  %v18 = vld [vmem:[%s0 + $0x14] sm:$0xf]
  %v19 = vld [vmem:[%s0 + $0x18] sm:$0xf]
  %v20 = vld [vmem:[%s0 + $0x1c] sm:$0xf]
  %v21 = vld [vmem:[%s0 + $0x20] sm:$0xf]
  %v22 = vld [vmem:[%s0 + $0x24] sm:$0xf]
  %v23 = vld [vmem:[%s0 + $0x28] sm:$0xf]
  %v24 = vld [vmem:[%s0 + $0x2c] sm:$0xf]
  %v25 = vld [vmem:[%s0 + $0x30] sm:$0xf]
  %v26 = vld [vmem:[%s0 + $0x34] sm:$0xf]
  %v27 = vld [vmem:[%s0 + $0x38] sm:$0xf]
  %v28 = vld [vmem:[%s0 + $0x3c] sm:$0xf]
  %v29 = vld [vmem:[%s0 + $0x40] sm:$0xf]
  %v30 = vld [vmem:[%s0 + $0x44] sm:$0xf]
  %v31 = vld [vmem:[%s0 + $0x48] sm:$0xf]
  %v32 = vld [vmem:[%s0 + $0x4c] sm:$0xf]
  %v33 = vld [vmem:[%s0 + $0x50] sm:$0xf]
  %v34 = vld [vmem:[%s0 + $0x54] sm:$0xf]
  %v35 = vld [vmem:[%s0 + $0x58] sm:$0xf]
  %v36 = vld [vmem:[%s0 + $0x5c] sm:$0xf]
  %v37 = vld [vmem:[%s0 + $0x60] sm:$0xf]
  %v38 = vld [vmem:[%s0 + $0x64] sm:$0xf]
  %v39 = vld [vmem:[%s0 + $0x68] sm:$0xf]
  %v40 = vld [vmem:[%s0 + $0x6c] sm:$0xf]
  %v41 = vld [vmem:[%s0 + $0x70] sm:$0xf]
  %v42 = vld [vmem:[%s0 + $0x74] sm:$0xf]
  %v43 = vld [vmem:[%s0 + $0x78] sm:$0xf]
  %v44 = vld [vmem:[%s0 + $0x7c] sm:$0xf]
  %v45 = vld [vmem:[%s0 + $0x80] sm:$0xf]
  %v46 = vld [vmem:[%s0 + $0x84] sm:$0xf]
  %v47 = vld [vmem:[%s0 + $0x88] sm:$0xf]
  %v48 = vld [vmem:[%s0 + $0x8c] sm:$0xf]
  %v49 = vld [vmem:[%s0 + $0x90] sm:$0xf]
  %v50 = vld [vmem:[%s0 + $0x94] sm:$0xf]
  %v51 = vld [vmem:[%s0 + $0x98] sm:$0xf]
  %v52 = vld [vmem:[%s0 + $0x9c] sm:$0xf]
  %v53 = vld [vmem:[%s0 + $0xa0] sm:$0xf]
  %v54 = vld [vmem:[%s0 + $0xa4] sm:$0xf]
  %v55 = vld [vmem:[%s0 + $0xa8] sm:$0xf]
  %v56 = vld [vmem:[%s0 + $0xac] sm:$0xf]
  %v57 = vld [vmem:[%s0 + $0xb0] sm:$0xf]
  %v58 = vld [vmem:[%s0 + $0xb4] sm:$0xf]
  %v59 = vld [vmem:[%s0 + $0xb8] sm:$0xf]
  %v60 = vld [vmem:[%s0 + $0xbc] sm:$0xf]
  %v61 = vld [vmem:[%s0 + $0xc0] sm:$0xf]
  %v62 = vld [vmem:[%s0 + $0xc4] sm:$0xf]
  %v63 = vld [vmem:[%s0 + $0xc8] sm:$0xf]
  %v64 = vld [vmem:[%s0 + $0xcc] sm:$0xf]
  %v65 = vld [vmem:[%s0 + $0xd0] sm:$0xf]
  %v66 = vld [vmem:[%s0 + $0xd4] sm:$0xf]
  %v67 = vld [vmem:[%s0 + $0xd8] sm:$0xf]
  %v68 = vld [vmem:[%s0 + $0xdc] sm:$0xf]
  %v69 = vld [vmem:[%s0 + $0xe0] sm:$0xf]
  %v70 = vld [vmem:[%s0 + $0xe4] sm:$0xf]
  %v71 = vld [vmem:[%s0 + $0xe8] sm:$0xf]
  %v72 = vld [vmem:[%s0 + $0xec] sm:$0xf]
  %v73 = vld [vmem:[%s0 + $0xf0] sm:$0xf]
  %v74 = vld [vmem:[%s0 + $0xf4] sm:$0xf]
  %v75 = vld [vmem:[%s0 + $0xf8] sm:$0xf]
  %v76 = vld [vmem:[%s0 + $0xfc] sm:$0xf]
  %v77 = vld [vmem:[%s1] sm:$0xf]
  %v78 = vld [vmem:[%s1 + $0x4] sm:$0xf]
  %v79 = vld [vmem:[%s1 + $0x8] sm:$0xf]
  %v80 = vld [vmem:[%s1 + $0xc] sm:$0xf]
  %v81 = vld [vmem:[%s1 + $0x10] sm:$0xf]
  %v82 = vld [vmem:[%s1 + $0x14] sm:$0xf]
  %v83 = vld [vmem:[%s1 + $0x18] sm:$0xf]
  %v84 = vld [vmem:[%s1 + $0x1c] sm:$0xf]
  %v85 = vld [vmem:[%s1 + $0x20] sm:$0xf]
  %v86 = vld [vmem:[%s1 + $0x24] sm:$0xf]
  %v87 = vld [vmem:[%s1 + $0x28] sm:$0xf]
  %v88 = vld [vmem:[%s1 + $0x2c] sm:$0xf]
  %v89 = vld [vmem:[%s1 + $0x30] sm:$0xf]
  %v90 = vld [vmem:[%s1 + $0x34] sm:$0xf]
  %v91 = vld [vmem:[%s1 + $0x38] sm:$0xf]
  %v92 = vld [vmem:[%s1 + $0x3c] sm:$0xf]
  %v157 = vunpack.c.l.b16 %v13
  %v158 = vunpack.c.l.b16 %v14
  %v159 = vunpack.c.l.b16 %v15
  %v160 = vunpack.c.l.b16 %v16
  %v161 = vunpack.c.l.b16 %v17
  %v162 = vunpack.c.l.b16 %v18
  %v163 = vunpack.c.l.b16 %v19
  %v164 = vunpack.c.l.b16 %v20
  %v165 = vunpack.c.l.b16 %v21
  %v166 = vunpack.c.l.b16 %v22
  %v167 = vunpack.c.l.b16 %v23
  %v168 = vunpack.c.l.b16 %v24
  %v169 = vunpack.c.l.b16 %v25
  %v170 = vunpack.c.l.b16 %v26
  %v171 = vunpack.c.l.b16 %v27
  %v172 = vunpack.c.l.b16 %v28
  %v173 = vunpack.c.l.b16 %v29
  %v174 = vunpack.c.l.b16 %v30
  %v175 = vunpack.c.l.b16 %v31
  %v176 = vunpack.c.l.b16 %v32
  %v177 = vunpack.c.l.b16 %v33
  %v178 = vunpack.c.l.b16 %v34
  %v179 = vunpack.c.l.b16 %v35
  %v180 = vunpack.c.l.b16 %v36
  %v181 = vunpack.c.l.b16 %v37
  %v182 = vunpack.c.l.b16 %v38
  %v183 = vunpack.c.l.b16 %v39
  %v184 = vunpack.c.l.b16 %v40
  %v185 = vunpack.c.l.b16 %v41
  %v186 = vunpack.c.l.b16 %v42
  %v187 = vunpack.c.l.b16 %v43
  %v188 = vunpack.c.l.b16 %v44
  %v189 = vunpack.c.l.b16 %v45
  %v190 = vunpack.c.l.b16 %v46
  %v191 = vunpack.c.l.b16 %v47
  %v192 = vunpack.c.l.b16 %v48
  %v193 = vunpack.c.l.b16 %v49
  %v194 = vunpack.c.l.b16 %v50
  %v195 = vunpack.c.l.b16 %v51
  %v196 = vunpack.c.l.b16 %v52
  %v197 = vunpack.c.l.b16 %v53
  %v198 = vunpack.c.l.b16 %v54
  %v199 = vunpack.c.l.b16 %v55
  %v200 = vunpack.c.l.b16 %v56
  %v201 = vunpack.c.l.b16 %v57
  %v202 = vunpack.c.l.b16 %v58
  %v203 = vunpack.c.l.b16 %v59
  %v204 = vunpack.c.l.b16 %v60
  %v205 = vunpack.c.l.b16 %v61
  %v206 = vunpack.c.l.b16 %v62
  %v207 = vunpack.c.l.b16 %v63
  %v208 = vunpack.c.l.b16 %v64
  %v209 = vunpack.c.l.b16 %v65
  %v210 = vunpack.c.l.b16 %v66
  %v211 = vunpack.c.l.b16 %v67
  %v212 = vunpack.c.l.b16 %v68
  %v213 = vunpack.c.l.b16 %v69
  %v214 = vunpack.c.l.b16 %v70
  %v215 = vunpack.c.l.b16 %v71
  %v216 = vunpack.c.l.b16 %v72
  %v217 = vunpack.c.l.b16 %v73
  %v218 = vunpack.c.l.b16 %v74
  %v219 = vunpack.c.l.b16 %v75
  %v220 = vunpack.c.l.b16 %v76
  %v221 = vpack.c.b16 %v158, %v157
  %v222 = vpack.c.b16 %v160, %v159
  %v223 = vpack.c.b16 %v162, %v161
  %v224 = vpack.c.b16 %v164, %v163
  %v225 = vpack.c.b16 %v166, %v165
  %v226 = vpack.c.b16 %v168, %v167
  %v227 = vpack.c.b16 %v170, %v169
  %v228 = vpack.c.b16 %v172, %v171
  %v229 = vpack.c.b16 %v174, %v173
  %v230 = vpack.c.b16 %v176, %v175
  %v231 = vpack.c.b16 %v178, %v177
  %v232 = vpack.c.b16 %v180, %v179
  %v233 = vpack.c.b16 %v182, %v181
  %v234 = vpack.c.b16 %v184, %v183
  %v235 = vpack.c.b16 %v186, %v185
  %v236 = vpack.c.b16 %v188, %v187
  %v237 = vpack.c.b16 %v190, %v189
  %v238 = vpack.c.b16 %v192, %v191
  %v239 = vpack.c.b16 %v194, %v193
  %v240 = vpack.c.b16 %v196, %v195
  %v241 = vpack.c.b16 %v198, %v197
  %v242 = vpack.c.b16 %v200, %v199
  %v243 = vpack.c.b16 %v202, %v201
  %v244 = vpack.c.b16 %v204, %v203
  %v245 = vpack.c.b16 %v206, %v205
  %v246 = vpack.c.b16 %v208, %v207
  %v247 = vpack.c.b16 %v210, %v209
  %v248 = vpack.c.b16 %v212, %v211
  %v249 = vpack.c.b16 %v214, %v213
  %v250 = vpack.c.b16 %v216, %v215
  %v251 = vpack.c.b16 %v218, %v217
  %v252 = vpack.c.b16 %v220, %v219
  %v301 = vunpack.c.l.b16 %v77
  %v302 = vunpack.c.l.b16 %v78
  %v303 = vunpack.c.l.b16 %v79
  %v304 = vunpack.c.l.b16 %v80
  %v305 = vunpack.c.l.b16 %v81
  %v306 = vunpack.c.l.b16 %v82
  %v307 = vunpack.c.l.b16 %v83
  %v308 = vunpack.c.l.b16 %v84
  %v309 = vunpack.c.l.b16 %v85
  %v310 = vunpack.c.l.b16 %v86
  %v311 = vunpack.c.l.b16 %v87
  %v312 = vunpack.c.l.b16 %v88
  %v313 = vunpack.c.l.b16 %v89
  %v314 = vunpack.c.l.b16 %v90
  %v315 = vunpack.c.l.b16 %v91
  %v316 = vunpack.c.l.b16 %v92
  %v317 = vpack.c.b16 %v302, %v301
  %v318 = vpack.c.b16 %v304, %v303
  %v319 = vpack.c.b16 %v306, %v305
  %v320 = vpack.c.b16 %v308, %v307
  %v321 = vpack.c.b16 %v310, %v309
  %v322 = vpack.c.b16 %v312, %v311
  %v323 = vpack.c.b16 %v314, %v313
  %v324 = vpack.c.b16 %v316, %v315
  %333 = vmatpush.bf16.msra.mxu0 %v324
  %334 = vmatpush.bf16.msra.mxu0 %v323
  %335 = vmatpush.bf16.msra.mxu0 %v322
  %336 = vmatpush.bf16.msra.mxu0 %v321
  %337 = vmatpush.bf16.msra.mxu0 %v320
  %338 = vmatpush.bf16.msra.mxu0 %v319
  %339 = vmatpush.bf16.msra.mxu0 %v318
  %340 = vmatpush.bf16.msra.mxu0 %v317
  %341 = vmatmul.bf16.gmra.mxu0 %v221
  %v342 = vpop.f32.mrf.mxu0
  %v343 = vadd.f32 0.0, %v342
  %v344 = vpop.f32.mrf.mxu0
  %v345 = vadd.f32 0.0, %v344
  %346 = vmatmul.bf16.gmra.mxu0 %v222
  %v347 = vpop.f32.mrf.mxu0
  %v348 = vadd.f32 0.0, %v347
  %v349 = vpop.f32.mrf.mxu0
  %v350 = vadd.f32 0.0, %v349
  %351 = vmatmul.bf16.gmra.mxu0 %v223
  %v352 = vpop.f32.mrf.mxu0
  %v353 = vadd.f32 0.0, %v352
  %v354 = vpop.f32.mrf.mxu0
  %v355 = vadd.f32 0.0, %v354
  %356 = vmatmul.bf16.gmra.mxu0 %v224
  %v357 = vpop.f32.mrf.mxu0
  %v358 = vadd.f32 0.0, %v357
  %v359 = vpop.f32.mrf.mxu0
  %v360 = vadd.f32 0.0, %v359
  %361 = vmatmul.bf16.gmra.mxu0 %v225
  %v362 = vpop.f32.mrf.mxu0
  %v363 = vadd.f32 0.0, %v362
  %v364 = vpop.f32.mrf.mxu0
  %v365 = vadd.f32 0.0, %v364
  %366 = vmatmul.bf16.gmra.mxu0 %v226
  %v367 = vpop.f32.mrf.mxu0
  %v368 = vadd.f32 0.0, %v367
  %v369 = vpop.f32.mrf.mxu0
  %v370 = vadd.f32 0.0, %v369
  %371 = vmatmul.bf16.gmra.mxu0 %v227
  %v372 = vpop.f32.mrf.mxu0
  %v373 = vadd.f32 0.0, %v372
  %v374 = vpop.f32.mrf.mxu0
  %v375 = vadd.f32 0.0, %v374
  %376 = vmatmul.bf16.gmra.mxu0 %v228
  %v377 = vpop.f32.mrf.mxu0
  %v378 = vadd.f32 0.0, %v377
  %v379 = vpop.f32.mrf.mxu0
  %v380 = vadd.f32 0.0, %v379
  %381 = vmatmul.bf16.gmra.mxu0 %v229
  %v382 = vpop.f32.mrf.mxu0
  %v383 = vadd.f32 0.0, %v382
  %v384 = vpop.f32.mrf.mxu0
  %v385 = vadd.f32 0.0, %v384
  %386 = vmatmul.bf16.gmra.mxu0 %v230
  %v387 = vpop.f32.mrf.mxu0
  %v388 = vadd.f32 0.0, %v387
  %v389 = vpop.f32.mrf.mxu0
  %v390 = vadd.f32 0.0, %v389
  %391 = vmatmul.bf16.gmra.mxu0 %v231
  %v392 = vpop.f32.mrf.mxu0
  %v393 = vadd.f32 0.0, %v392
  %v394 = vpop.f32.mrf.mxu0
  %v395 = vadd.f32 0.0, %v394
  %396 = vmatmul.bf16.gmra.mxu0 %v232
  %v397 = vpop.f32.mrf.mxu0
  %v398 = vadd.f32 0.0, %v397
  %v399 = vpop.f32.mrf.mxu0
  %v400 = vadd.f32 0.0, %v399
  %401 = vmatmul.bf16.gmra.mxu0 %v233
  %v402 = vpop.f32.mrf.mxu0
  %v403 = vadd.f32 0.0, %v402
  %v404 = vpop.f32.mrf.mxu0
  %v405 = vadd.f32 0.0, %v404
  %406 = vmatmul.bf16.gmra.mxu0 %v234
  %v407 = vpop.f32.mrf.mxu0
  %v408 = vadd.f32 0.0, %v407
  %v409 = vpop.f32.mrf.mxu0
  %v410 = vadd.f32 0.0, %v409
  %411 = vmatmul.bf16.gmra.mxu0 %v235
  %v412 = vpop.f32.mrf.mxu0
  %v413 = vadd.f32 0.0, %v412
  %v414 = vpop.f32.mrf.mxu0
  %v415 = vadd.f32 0.0, %v414
  %416 = vmatmul.bf16.gmra.mxu0 %v236
  %v417 = vpop.f32.mrf.mxu0
  %v418 = vadd.f32 0.0, %v417
  %v419 = vpop.f32.mrf.mxu0
  %v420 = vadd.f32 0.0, %v419
  %421 = vmatmul.bf16.gmra.mxu0 %v237
  %v422 = vpop.f32.mrf.mxu0
  %v423 = vadd.f32 0.0, %v422
  %v424 = vpop.f32.mrf.mxu0
  %v425 = vadd.f32 0.0, %v424
  %426 = vmatmul.bf16.gmra.mxu0 %v238
  %v427 = vpop.f32.mrf.mxu0
  %v428 = vadd.f32 0.0, %v427
  %v429 = vpop.f32.mrf.mxu0
  %v430 = vadd.f32 0.0, %v429
  %431 = vmatmul.bf16.gmra.mxu0 %v239
  %v432 = vpop.f32.mrf.mxu0
  %v433 = vadd.f32 0.0, %v432
  %v434 = vpop.f32.mrf.mxu0
  %v435 = vadd.f32 0.0, %v434
  %436 = vmatmul.bf16.gmra.mxu0 %v240
  %v437 = vpop.f32.mrf.mxu0
  %v438 = vadd.f32 0.0, %v437
  %v439 = vpop.f32.mrf.mxu0
  %v440 = vadd.f32 0.0, %v439
  %441 = vmatmul.bf16.gmra.mxu0 %v241
  %v442 = vpop.f32.mrf.mxu0
  %v443 = vadd.f32 0.0, %v442
  %v444 = vpop.f32.mrf.mxu0
  %v445 = vadd.f32 0.0, %v444
  %446 = vmatmul.bf16.gmra.mxu0 %v242
  %v447 = vpop.f32.mrf.mxu0
  %v448 = vadd.f32 0.0, %v447
  %v449 = vpop.f32.mrf.mxu0
  %v450 = vadd.f32 0.0, %v449
  %451 = vmatmul.bf16.gmra.mxu0 %v243
  %v452 = vpop.f32.mrf.mxu0
  %v453 = vadd.f32 0.0, %v452
  %v454 = vpop.f32.mrf.mxu0
  %v455 = vadd.f32 0.0, %v454
  %456 = vmatmul.bf16.gmra.mxu0 %v244
  %v457 = vpop.f32.mrf.mxu0
  %v458 = vadd.f32 0.0, %v457
  %v459 = vpop.f32.mrf.mxu0
  %v460 = vadd.f32 0.0, %v459
  %461 = vmatmul.bf16.gmra.mxu0 %v245
  %v462 = vpop.f32.mrf.mxu0
  %v463 = vadd.f32 0.0, %v462
  %v464 = vpop.f32.mrf.mxu0
  %v465 = vadd.f32 0.0, %v464
  %466 = vmatmul.bf16.gmra.mxu0 %v246
  %v467 = vpop.f32.mrf.mxu0
  %v468 = vadd.f32 0.0, %v467
  %v469 = vpop.f32.mrf.mxu0
  %v470 = vadd.f32 0.0, %v469
  %471 = vmatmul.bf16.gmra.mxu0 %v247
  %v472 = vpop.f32.mrf.mxu0
  %v473 = vadd.f32 0.0, %v472
  %v474 = vpop.f32.mrf.mxu0
  %v475 = vadd.f32 0.0, %v474
  %476 = vmatmul.bf16.gmra.mxu0 %v248
  %v477 = vpop.f32.mrf.mxu0
  %v478 = vadd.f32 0.0, %v477
  %v479 = vpop.f32.mrf.mxu0
  %v480 = vadd.f32 0.0, %v479
  %481 = vmatmul.bf16.gmra.mxu0 %v249
  %v482 = vpop.f32.mrf.mxu0
  %v483 = vadd.f32 0.0, %v482
  %v484 = vpop.f32.mrf.mxu0
  %v485 = vadd.f32 0.0, %v484
  %486 = vmatmul.bf16.gmra.mxu0 %v250
  %v487 = vpop.f32.mrf.mxu0
  %v488 = vadd.f32 0.0, %v487
  %v489 = vpop.f32.mrf.mxu0
  %v490 = vadd.f32 0.0, %v489
  %491 = vmatmul.bf16.gmra.mxu0 %v251
  %v492 = vpop.f32.mrf.mxu0
  %v493 = vadd.f32 0.0, %v492
  %v494 = vpop.f32.mrf.mxu0
  %v495 = vadd.f32 0.0, %v494
  %496 = vmatmul.bf16.gmra.mxu0 %v252
  %v497 = vpop.f32.mrf.mxu0
  %v498 = vadd.f32 0.0, %v497
  %v499 = vpop.f32.mrf.mxu0
  %v500 = vadd.f32 0.0, %v499
  %501 = vdwg.mxu0
  %v502 = vpack.c.bf16 %v343, %v343
  %v503 = vpack.c.bf16 %v345, %v345
  %v504 = vpack.c.bf16 %v348, %v348
  %v505 = vpack.c.bf16 %v350, %v350
  %v506 = vpack.c.bf16 %v353, %v353
  %v507 = vpack.c.bf16 %v355, %v355
  %v508 = vpack.c.bf16 %v358, %v358
  %v509 = vpack.c.bf16 %v360, %v360
  %v510 = vpack.c.bf16 %v363, %v363
  %v511 = vpack.c.bf16 %v365, %v365
  %v512 = vpack.c.bf16 %v368, %v368
  %v513 = vpack.c.bf16 %v370, %v370
  %v514 = vpack.c.bf16 %v373, %v373
  %v515 = vpack.c.bf16 %v375, %v375
  %v516 = vpack.c.bf16 %v378, %v378
  %v517 = vpack.c.bf16 %v380, %v380
  %v518 = vpack.c.bf16 %v383, %v383
  %v519 = vpack.c.bf16 %v385, %v385
  %v520 = vpack.c.bf16 %v388, %v388
  %v521 = vpack.c.bf16 %v390, %v390
  %v522 = vpack.c.bf16 %v393, %v393
  %v523 = vpack.c.bf16 %v395, %v395
  %v524 = vpack.c.bf16 %v398, %v398
  %v525 = vpack.c.bf16 %v400, %v400
  %v526 = vpack.c.bf16 %v403, %v403
  %v527 = vpack.c.bf16 %v405, %v405
  %v528 = vpack.c.bf16 %v408, %v408
  %v529 = vpack.c.bf16 %v410, %v410
  %v530 = vpack.c.bf16 %v413, %v413
  %v531 = vpack.c.bf16 %v415, %v415
  %v532 = vpack.c.bf16 %v418, %v418
  %v533 = vpack.c.bf16 %v420, %v420
  %v534 = vpack.c.bf16 %v423, %v423
  %v535 = vpack.c.bf16 %v425, %v425
  %v536 = vpack.c.bf16 %v428, %v428
  %v537 = vpack.c.bf16 %v430, %v430
  %v538 = vpack.c.bf16 %v433, %v433
  %v539 = vpack.c.bf16 %v435, %v435
  %v540 = vpack.c.bf16 %v438, %v438
  %v541 = vpack.c.bf16 %v440, %v440
  %v542 = vpack.c.bf16 %v443, %v443
  %v543 = vpack.c.bf16 %v445, %v445
  %v544 = vpack.c.bf16 %v448, %v448
  %v545 = vpack.c.bf16 %v450, %v450
  %v546 = vpack.c.bf16 %v453, %v453
  %v547 = vpack.c.bf16 %v455, %v455
  %v548 = vpack.c.bf16 %v458, %v458
  %v549 = vpack.c.bf16 %v460, %v460
  %v550 = vpack.c.bf16 %v463, %v463
  %v551 = vpack.c.bf16 %v465, %v465
  %v552 = vpack.c.bf16 %v468, %v468
  %v553 = vpack.c.bf16 %v470, %v470
  %v554 = vpack.c.bf16 %v473, %v473
  %v555 = vpack.c.bf16 %v475, %v475
  %v556 = vpack.c.bf16 %v478, %v478
  %v557 = vpack.c.bf16 %v480, %v480
  %v558 = vpack.c.bf16 %v483, %v483
  %v559 = vpack.c.bf16 %v485, %v485
  %v560 = vpack.c.bf16 %v488, %v488
  %v561 = vpack.c.bf16 %v490, %v490
  %v562 = vpack.c.bf16 %v493, %v493
  %v563 = vpack.c.bf16 %v495, %v495
  %v564 = vpack.c.bf16 %v498, %v498
  %v565 = vpack.c.bf16 %v500, %v500
  %566 = vst [vmem:[%s2] sm:$0xf] %v502
  %567 = vst [vmem:[%s2 + $0x4] sm:$0xf] %v503
  %568 = vst [vmem:[%s2 + $0x8] sm:$0xf] %v504
  %569 = vst [vmem:[%s2 + $0xc] sm:$0xf] %v505
  %570 = vst [vmem:[%s2 + $0x10] sm:$0xf] %v506
  %571 = vst [vmem:[%s2 + $0x14] sm:$0xf] %v507
  %572 = vst [vmem:[%s2 + $0x18] sm:$0xf] %v508
  %573 = vst [vmem:[%s2 + $0x1c] sm:$0xf] %v509
  %574 = vst [vmem:[%s2 + $0x20] sm:$0xf] %v510
  %575 = vst [vmem:[%s2 + $0x24] sm:$0xf] %v511
  %576 = vst [vmem:[%s2 + $0x28] sm:$0xf] %v512
  %577 = vst [vmem:[%s2 + $0x2c] sm:$0xf] %v513
  %578 = vst [vmem:[%s2 + $0x30] sm:$0xf] %v514
  %579 = vst [vmem:[%s2 + $0x34] sm:$0xf] %v515
  %580 = vst [vmem:[%s2 + $0x38] sm:$0xf] %v516
  %581 = vst [vmem:[%s2 + $0x3c] sm:$0xf] %v517
  %582 = vst [vmem:[%s2 + $0x40] sm:$0xf] %v518
  %583 = vst [vmem:[%s2 + $0x44] sm:$0xf] %v519
  %584 = vst [vmem:[%s2 + $0x48] sm:$0xf] %v520
  %585 = vst [vmem:[%s2 + $0x4c] sm:$0xf] %v521
  %586 = vst [vmem:[%s2 + $0x50] sm:$0xf] %v522
  %587 = vst [vmem:[%s2 + $0x54] sm:$0xf] %v523
  %588 = vst [vmem:[%s2 + $0x58] sm:$0xf] %v524
  %589 = vst [vmem:[%s2 + $0x5c] sm:$0xf] %v525
  %590 = vst [vmem:[%s2 + $0x60] sm:$0xf] %v526
  %591 = vst [vmem:[%s2 + $0x64] sm:$0xf] %v527
  %592 = vst [vmem:[%s2 + $0x68] sm:$0xf] %v528
  %593 = vst [vmem:[%s2 + $0x6c] sm:$0xf] %v529
  %594 = vst [vmem:[%s2 + $0x70] sm:$0xf] %v530
  %595 = vst [vmem:[%s2 + $0x74] sm:$0xf] %v531
  %596 = vst [vmem:[%s2 + $0x78] sm:$0xf] %v532
  %597 = vst [vmem:[%s2 + $0x7c] sm:$0xf] %v533
  %598 = vst [vmem:[%s2 + $0x80] sm:$0xf] %v534
  %599 = vst [vmem:[%s2 + $0x84] sm:$0xf] %v535
  %600 = vst [vmem:[%s2 + $0x88] sm:$0xf] %v536
  %601 = vst [vmem:[%s2 + $0x8c] sm:$0xf] %v537
  %602 = vst [vmem:[%s2 + $0x90] sm:$0xf] %v538
  %603 = vst [vmem:[%s2 + $0x94] sm:$0xf] %v539
  %604 = vst [vmem:[%s2 + $0x98] sm:$0xf] %v540
  %605 = vst [vmem:[%s2 + $0x9c] sm:$0xf] %v541
  %606 = vst [vmem:[%s2 + $0xa0] sm:$0xf] %v542
  %607 = vst [vmem:[%s2 + $0xa4] sm:$0xf] %v543
  %608 = vst [vmem:[%s2 + $0xa8] sm:$0xf] %v544
  %609 = vst [vmem:[%s2 + $0xac] sm:$0xf] %v545
  %610 = vst [vmem:[%s2 + $0xb0] sm:$0xf] %v546
  %611 = vst [vmem:[%s2 + $0xb4] sm:$0xf] %v547
  %612 = vst [vmem:[%s2 + $0xb8] sm:$0xf] %v548
  %613 = vst [vmem:[%s2 + $0xbc] sm:$0xf] %v549
  %614 = vst [vmem:[%s2 + $0xc0] sm:$0xf] %v550
  %615 = vst [vmem:[%s2 + $0xc4] sm:$0xf] %v551
  %616 = vst [vmem:[%s2 + $0xc8] sm:$0xf] %v552
  %617 = vst [vmem:[%s2 + $0xcc] sm:$0xf] %v553
  %618 = vst [vmem:[%s2 + $0xd0] sm:$0xf] %v554
  %619 = vst [vmem:[%s2 + $0xd4] sm:$0xf] %v555
  %620 = vst [vmem:[%s2 + $0xd8] sm:$0xf] %v556
  %621 = vst [vmem:[%s2 + $0xdc] sm:$0xf] %v557
  %622 = vst [vmem:[%s2 + $0xe0] sm:$0xf] %v558
  %623 = vst [vmem:[%s2 + $0xe4] sm:$0xf] %v559
  %624 = vst [vmem:[%s2 + $0xe8] sm:$0xf] %v560
  %625 = vst [vmem:[%s2 + $0xec] sm:$0xf] %v561
  %626 = vst [vmem:[%s2 + $0xf0] sm:$0xf] %v562
  %627 = vst [vmem:[%s2 + $0xf4] sm:$0xf] %v563
  %628 = vst [vmem:[%s2 + $0xf8] sm:$0xf] %v564
  %629 = vst [vmem:[%s2 + $0xfc] sm:$0xf] %v565
  %v630 = vadd.f32 %v343, %v345
  %v631 = vadd.f32 %v630, %v348
  %v632 = vadd.f32 %v631, %v350
  %v633 = vadd.f32 %v632, %v353
  %v634 = vadd.f32 %v633, %v355
  %v635 = vadd.f32 %v634, %v358
  %v636 = vadd.f32 %v635, %v360
  %v637 = vadd.f32 %v636, %v363
  %v638 = vadd.f32 %v637, %v365
  %v639 = vadd.f32 %v638, %v368
  %v640 = vadd.f32 %v639, %v370
  %v641 = vadd.f32 %v640, %v373
  %v642 = vadd.f32 %v641, %v375
  %v643 = vadd.f32 %v642, %v378
  %v644 = vadd.f32 %v643, %v380
  %v645 = vadd.f32 %v644, %v383
  %v646 = vadd.f32 %v645, %v385
  %v647 = vadd.f32 %v646, %v388
  %v648 = vadd.f32 %v647, %v390
  %v649 = vadd.f32 %v648, %v393
  %v650 = vadd.f32 %v649, %v395
  %v651 = vadd.f32 %v650, %v398
  %v652 = vadd.f32 %v651, %v400
  %v653 = vadd.f32 %v652, %v403
  %v654 = vadd.f32 %v653, %v405
  %v655 = vadd.f32 %v654, %v408
  %v656 = vadd.f32 %v655, %v410
  %v657 = vadd.f32 %v656, %v413
  %v658 = vadd.f32 %v657, %v415
  %v659 = vadd.f32 %v658, %v418
  %v660 = vadd.f32 %v659, %v420
  %v661 = vadd.f32 %v660, %v423
  %v662 = vadd.f32 %v661, %v425
  %v663 = vadd.f32 %v662, %v428
  %v664 = vadd.f32 %v663, %v430
  %v665 = vadd.f32 %v664, %v433
  %v666 = vadd.f32 %v665, %v435
  %v667 = vadd.f32 %v666, %v438
  %v668 = vadd.f32 %v667, %v440
  %v669 = vadd.f32 %v668, %v443
  %v670 = vadd.f32 %v669, %v445
  %v671 = vadd.f32 %v670, %v448
  %v672 = vadd.f32 %v671, %v450
  %v673 = vadd.f32 %v672, %v453
  %v674 = vadd.f32 %v673, %v455
  %v675 = vadd.f32 %v674, %v458
  %v676 = vadd.f32 %v675, %v460
  %v677 = vadd.f32 %v676, %v463
  %v678 = vadd.f32 %v677, %v465
  %v679 = vadd.f32 %v678, %v468
  %v680 = vadd.f32 %v679, %v470
  %v681 = vadd.f32 %v680, %v473
  %v682 = vadd.f32 %v681, %v475
  %v683 = vadd.f32 %v682, %v478
  %v684 = vadd.f32 %v683, %v480
  %v685 = vadd.f32 %v684, %v483
  %v686 = vadd.f32 %v685, %v485
  %v687 = vadd.f32 %v686, %v488
  %v688 = vadd.f32 %v687, %v490
  %v689 = vadd.f32 %v688, %v493
  %v690 = vadd.f32 %v689, %v495
  %v691 = vadd.f32 %v690, %v498
  %v692 = vadd.f32 %v691, %v500
  %v693 = vrot.slane %v692, 4
  %v694 = vadd.f32 %v692, %v693
  %v695 = vrot.slane %v694, 2
  %v696 = vadd.f32 %v694, %v695
  %v697 = vrot.slane %v696, 1
  %v698 = vadd.f32 %v696, %v697
  %699 = vst [vmem:[%s3] sm:$0x1] %v698
  %v700 = vmul.f32 %v343, %v343
  %v701 = vmul.f32 %v345, %v345
  %v702 = vmul.f32 %v348, %v348
  %v703 = vmul.f32 %v350, %v350
  %v704 = vmul.f32 %v353, %v353
  %v705 = vmul.f32 %v355, %v355
  %v706 = vmul.f32 %v358, %v358
  %v707 = vmul.f32 %v360, %v360
  %v708 = vmul.f32 %v363, %v363
  %v709 = vmul.f32 %v365, %v365
  %v710 = vmul.f32 %v368, %v368
  %v711 = vmul.f32 %v370, %v370
  %v712 = vmul.f32 %v373, %v373
  %v713 = vmul.f32 %v375, %v375
  %v714 = vmul.f32 %v378, %v378
  %v715 = vmul.f32 %v380, %v380
  %v716 = vmul.f32 %v383, %v383
  %v717 = vmul.f32 %v385, %v385
  %v718 = vmul.f32 %v388, %v388
  %v719 = vmul.f32 %v390, %v390
  %v720 = vmul.f32 %v393, %v393
  %v721 = vmul.f32 %v395, %v395
  %v722 = vmul.f32 %v398, %v398
  %v723 = vmul.f32 %v400, %v400
  %v724 = vmul.f32 %v403, %v403
  %v725 = vmul.f32 %v405, %v405
  %v726 = vmul.f32 %v408, %v408
  %v727 = vmul.f32 %v410, %v410
  %v728 = vmul.f32 %v413, %v413
  %v729 = vmul.f32 %v415, %v415
  %v730 = vmul.f32 %v418, %v418
  %v731 = vmul.f32 %v420, %v420
  %v732 = vmul.f32 %v423, %v423
  %v733 = vmul.f32 %v425, %v425
  %v734 = vmul.f32 %v428, %v428
  %v735 = vmul.f32 %v430, %v430
  %v736 = vmul.f32 %v433, %v433
  %v737 = vmul.f32 %v435, %v435
  %v738 = vmul.f32 %v438, %v438
  %v739 = vmul.f32 %v440, %v440
  %v740 = vmul.f32 %v443, %v443
  %v741 = vmul.f32 %v445, %v445
  %v742 = vmul.f32 %v448, %v448
  %v743 = vmul.f32 %v450, %v450
  %v744 = vmul.f32 %v453, %v453
  %v745 = vmul.f32 %v455, %v455
  %v746 = vmul.f32 %v458, %v458
  %v747 = vmul.f32 %v460, %v460
  %v748 = vmul.f32 %v463, %v463
  %v749 = vmul.f32 %v465, %v465
  %v750 = vmul.f32 %v468, %v468
  %v751 = vmul.f32 %v470, %v470
  %v752 = vmul.f32 %v473, %v473
  %v753 = vmul.f32 %v475, %v475
  %v754 = vmul.f32 %v478, %v478
  %v755 = vmul.f32 %v480, %v480
  %v756 = vmul.f32 %v483, %v483
  %v757 = vmul.f32 %v485, %v485
  %v758 = vmul.f32 %v488, %v488
  %v759 = vmul.f32 %v490, %v490
  %v760 = vmul.f32 %v493, %v493
  %v761 = vmul.f32 %v495, %v495
  %v762 = vmul.f32 %v498, %v498
  %v763 = vmul.f32 %v500, %v500
  %v764 = vadd.f32 %v700, %v701
  %v765 = vadd.f32 %v764, %v702
  %v766 = vadd.f32 %v765, %v703
  %v767 = vadd.f32 %v766, %v704
  %v768 = vadd.f32 %v767, %v705
  %v769 = vadd.f32 %v768, %v706
  %v770 = vadd.f32 %v769, %v707
  %v771 = vadd.f32 %v770, %v708
  %v772 = vadd.f32 %v771, %v709
  %v773 = vadd.f32 %v772, %v710
  %v774 = vadd.f32 %v773, %v711
  %v775 = vadd.f32 %v774, %v712
  %v776 = vadd.f32 %v775, %v713
  %v777 = vadd.f32 %v776, %v714
  %v778 = vadd.f32 %v777, %v715
  %v779 = vadd.f32 %v778, %v716
  %v780 = vadd.f32 %v779, %v717
  %v781 = vadd.f32 %v780, %v718
  %v782 = vadd.f32 %v781, %v719
  %v783 = vadd.f32 %v782, %v720
  %v784 = vadd.f32 %v783, %v721
  %v785 = vadd.f32 %v784, %v722
  %v786 = vadd.f32 %v785, %v723
  %v787 = vadd.f32 %v786, %v724
  %v788 = vadd.f32 %v787, %v725
  %v789 = vadd.f32 %v788, %v726
  %v790 = vadd.f32 %v789, %v727
  %v791 = vadd.f32 %v790, %v728
  %v792 = vadd.f32 %v791, %v729
  %v793 = vadd.f32 %v792, %v730
  %v794 = vadd.f32 %v793, %v731
  %v795 = vadd.f32 %v794, %v732
  %v796 = vadd.f32 %v795, %v733
  %v797 = vadd.f32 %v796, %v734
  %v798 = vadd.f32 %v797, %v735
  %v799 = vadd.f32 %v798, %v736
  %v800 = vadd.f32 %v799, %v737
  %v801 = vadd.f32 %v800, %v738
  %v802 = vadd.f32 %v801, %v739
  %v803 = vadd.f32 %v802, %v740
  %v804 = vadd.f32 %v803, %v741
  %v805 = vadd.f32 %v804, %v742
  %v806 = vadd.f32 %v805, %v743
  %v807 = vadd.f32 %v806, %v744
  %v808 = vadd.f32 %v807, %v745
  %v809 = vadd.f32 %v808, %v746
  %v810 = vadd.f32 %v809, %v747
  %v811 = vadd.f32 %v810, %v748
  %v812 = vadd.f32 %v811, %v749
  %v813 = vadd.f32 %v812, %v750
  %v814 = vadd.f32 %v813, %v751
  %v815 = vadd.f32 %v814, %v752
  %v816 = vadd.f32 %v815, %v753
  %v817 = vadd.f32 %v816, %v754
  %v818 = vadd.f32 %v817, %v755
  %v819 = vadd.f32 %v818, %v756
  %v820 = vadd.f32 %v819, %v757
  %v821 = vadd.f32 %v820, %v758
  %v822 = vadd.f32 %v821, %v759
  %v823 = vadd.f32 %v822, %v760
  %v824 = vadd.f32 %v823, %v761
  %v825 = vadd.f32 %v824, %v762
  %v826 = vadd.f32 %v825, %v763
  %v827 = vrot.slane %v826, 4
  %v828 = vadd.f32 %v826, %v827
  %v829 = vrot.slane %v828, 2
  %v830 = vadd.f32 %v828, %v829
  %v831 = vrot.slane %v830, 1
  %v832 = vadd.f32 %v830, %v831
  %833 = vst [vmem:[%s3 + $0x1] sm:$0x1] %v832
  // Predicated region
  $region10: #{discriminator_forward.9} parent=0 // pred_check
    _
  $region11: #{discriminator_forward.9} parent=0 // pred_check_branch
    %835 = sbr.rel (0) target = $region13
  $region12: #{discriminator_forward.9} parent=0 // pred_region
    _
  $region13: #{discriminator_forward.9} parent=0 // pred_fallthru
    _
  // Predicated region
  $region14: #{discriminator_forward.9} parent=0 // pred_check
    _
  $region15: #{discriminator_forward.9} parent=0 // pred_check_branch
    %837 = sbr.rel (0) target = $region17
  $region16: #{discriminator_forward.9} parent=0 // pred_region
    _
  $region17: #{discriminator_forward.9} parent=0 // pred_fallthru
    _
  // Predicated region
  $region18: #{discriminator_forward.9} parent=0 // pred_check
    _
  $region19: #{discriminator_forward.9} parent=0 // pred_check_branch
    %839 = sbr.rel (0) target = $region21
  $region20: #{discriminator_forward.9} parent=0 // pred_region
    _
  $region21: #{discriminator_forward.9} parent=0 // pred_fallthru
    _
  // Predicated region
  $region22: #{discriminator_forward.9} parent=0 // pred_check
    _
  $region23: #{discriminator_forward.9} parent=0 // pred_check_branch
    %841 = sbr.rel (0) target = $region25
  $region24: #{discriminator_forward.9} parent=0 // pred_region
    _
  $region25: #{discriminator_forward.9} parent=0 // pred_fallthru
    _

// kernel: discriminator_forward.10
$region0: #{discriminator_forward.10}
  #allocation0 [shape = 'u32[]', space=smem, size = 0x4, offset = 0x4, fixed_abs, tag = 'smem constant byte address 0x4 - core index']
  #allocation1 [shape = 'u32[72,128]{1,0:T(1,128)}', space=vmem, size = 0x9000, scoped, tag = 'internal scratch']
  %s0 = inlined_call_operand.vmem [shape: bf16[512,128], index: 0, kind: input, shape index: {}]
  %s1 = inlined_call_operand.vmem [shape: f32[1,128], index: 1, kind: input, shape index: {}]
  %s2 = inlined_call_operand.vmem [shape: f32[1,128], index: 2, kind: input, shape index: {}]
  %s3 = inlined_call_operand.vmem [shape: bf16[512,128], index: 3, kind: output, shape index: {}]
  %s4 = sld [smem:[#allocation0]]
  $region22: #{discriminator_forward.10} parent=0
    _
  %s6 = ssub.s32 1, %s4
  %s7 = scalar_select 0, %s6, %s4
  // Predicated region
  $region2: #{discriminator_forward.10} parent=0 // pred_check
    _
  $region3: #{discriminator_forward.10} parent=0 // pred_check_branch
    %9 = sbr.rel (0) target = $region5
  $region4: #{discriminator_forward.10} parent=0 // pred_region
    _
  $region5: #{discriminator_forward.10} parent=0 // pred_fallthru
    _
  // Predicated region
  $region6: #{discriminator_forward.10} parent=0 // pred_check
    _
  $region7: #{discriminator_forward.10} parent=0 // pred_check_branch
    %11 = sbr.rel (0) target = $region9
  $region8: #{discriminator_forward.10} parent=0 // pred_region
    _
  $region9: #{discriminator_forward.10} parent=0 // pred_fallthru
    _
  // Predicated region
  $region10: #{discriminator_forward.10} parent=0 // pred_check
    _
  $region11: #{discriminator_forward.10} parent=0 // pred_check_branch
    %13 = sbr.rel (0) target = $region13
  $region12: #{discriminator_forward.10} parent=0 // pred_region
    _
  $region13: #{discriminator_forward.10} parent=0 // pred_fallthru
    _
  %v14 = vld [vmem:[%s0] sm:$0xf]
  %v15 = vld [vmem:[%s0 + $0x4] sm:$0xf]
  %v16 = vld [vmem:[%s0 + $0x8] sm:$0xf]
  %v17 = vld [vmem:[%s0 + $0xc] sm:$0xf]
  %v18 = vld [vmem:[%s0 + $0x10] sm:$0xf]
  %v19 = vld [vmem:[%s0 + $0x14] sm:$0xf]
  %v20 = vld [vmem:[%s0 + $0x18] sm:$0xf]
  %v21 = vld [vmem:[%s0 + $0x1c] sm:$0xf]
  %v22 = vld [vmem:[%s0 + $0x20] sm:$0xf]
  %v23 = vld [vmem:[%s0 + $0x24] sm:$0xf]
  %v24 = vld [vmem:[%s0 + $0x28] sm:$0xf]
  %v25 = vld [vmem:[%s0 + $0x2c] sm:$0xf]
  %v26 = vld [vmem:[%s0 + $0x30] sm:$0xf]
  %v27 = vld [vmem:[%s0 + $0x34] sm:$0xf]
  %v28 = vld [vmem:[%s0 + $0x38] sm:$0xf]
  %v29 = vld [vmem:[%s0 + $0x3c] sm:$0xf]
  %v30 = vld [vmem:[%s0 + $0x40] sm:$0xf]
  %v31 = vld [vmem:[%s0 + $0x44] sm:$0xf]
  %v32 = vld [vmem:[%s0 + $0x48] sm:$0xf]
  %v33 = vld [vmem:[%s0 + $0x4c] sm:$0xf]
  %v34 = vld [vmem:[%s0 + $0x50] sm:$0xf]
  %v35 = vld [vmem:[%s0 + $0x54] sm:$0xf]
  %v36 = vld [vmem:[%s0 + $0x58] sm:$0xf]
  %v37 = vld [vmem:[%s0 + $0x5c] sm:$0xf]
  %v38 = vld [vmem:[%s0 + $0x60] sm:$0xf]
  %v39 = vld [vmem:[%s0 + $0x64] sm:$0xf]
  %v40 = vld [vmem:[%s0 + $0x68] sm:$0xf]
  %v41 = vld [vmem:[%s0 + $0x6c] sm:$0xf]
  %v42 = vld [vmem:[%s0 + $0x70] sm:$0xf]
  %v43 = vld [vmem:[%s0 + $0x74] sm:$0xf]
  %v44 = vld [vmem:[%s0 + $0x78] sm:$0xf]
  %v45 = vld [vmem:[%s0 + $0x7c] sm:$0xf]
  %v46 = vld [vmem:[%s0 + $0x80] sm:$0xf]
  %v47 = vld [vmem:[%s0 + $0x84] sm:$0xf]
  %v48 = vld [vmem:[%s0 + $0x88] sm:$0xf]
  %v49 = vld [vmem:[%s0 + $0x8c] sm:$0xf]
  %v50 = vld [vmem:[%s0 + $0x90] sm:$0xf]
  %v51 = vld [vmem:[%s0 + $0x94] sm:$0xf]
  %v52 = vld [vmem:[%s0 + $0x98] sm:$0xf]
  %v53 = vld [vmem:[%s0 + $0x9c] sm:$0xf]
  %v54 = vld [vmem:[%s0 + $0xa0] sm:$0xf]
  %v55 = vld [vmem:[%s0 + $0xa4] sm:$0xf]
  %v56 = vld [vmem:[%s0 + $0xa8] sm:$0xf]
  %v57 = vld [vmem:[%s0 + $0xac] sm:$0xf]
  %v58 = vld [vmem:[%s0 + $0xb0] sm:$0xf]
  %v59 = vld [vmem:[%s0 + $0xb4] sm:$0xf]
  %v60 = vld [vmem:[%s0 + $0xb8] sm:$0xf]
  %v61 = vld [vmem:[%s0 + $0xbc] sm:$0xf]
  %v62 = vld [vmem:[%s0 + $0xc0] sm:$0xf]
  %v63 = vld [vmem:[%s0 + $0xc4] sm:$0xf]
  %v64 = vld [vmem:[%s0 + $0xc8] sm:$0xf]
  %v65 = vld [vmem:[%s0 + $0xcc] sm:$0xf]
  %v66 = vld [vmem:[%s0 + $0xd0] sm:$0xf]
  %v67 = vld [vmem:[%s0 + $0xd4] sm:$0xf]
  %v68 = vld [vmem:[%s0 + $0xd8] sm:$0xf]
  %v69 = vld [vmem:[%s0 + $0xdc] sm:$0xf]
  %v70 = vld [vmem:[%s0 + $0xe0] sm:$0xf]
  %v71 = vld [vmem:[%s0 + $0xe4] sm:$0xf]
  %v72 = vld [vmem:[%s0 + $0xe8] sm:$0xf]
  %v73 = vld [vmem:[%s0 + $0xec] sm:$0xf]
  %v74 = vld [vmem:[%s0 + $0xf0] sm:$0xf]
  %v75 = vld [vmem:[%s0 + $0xf4] sm:$0xf]
  %v76 = vld [vmem:[%s0 + $0xf8] sm:$0xf]
  %v77 = vld [vmem:[%s0 + $0xfc] sm:$0xf]
  %v78 = vunpack.c.l.bf16 %v14
  %v79 = vunpack.c.l.bf16 %v15
  %v80 = vunpack.c.l.bf16 %v16
  %v81 = vunpack.c.l.bf16 %v17
  %v82 = vunpack.c.l.bf16 %v18
  %v83 = vunpack.c.l.bf16 %v19
  %v84 = vunpack.c.l.bf16 %v20
  %v85 = vunpack.c.l.bf16 %v21
  %v86 = vunpack.c.l.bf16 %v22
  %v87 = vunpack.c.l.bf16 %v23
  %v88 = vunpack.c.l.bf16 %v24
  %v89 = vunpack.c.l.bf16 %v25
  %v90 = vunpack.c.l.bf16 %v26
  %v91 = vunpack.c.l.bf16 %v27
  %v92 = vunpack.c.l.bf16 %v28
  %v93 = vunpack.c.l.bf16 %v29
  %v94 = vunpack.c.l.bf16 %v30
  %v95 = vunpack.c.l.bf16 %v31
  %v96 = vunpack.c.l.bf16 %v32
  %v97 = vunpack.c.l.bf16 %v33
  %v98 = vunpack.c.l.bf16 %v34
  %v99 = vunpack.c.l.bf16 %v35
  %v100 = vunpack.c.l.bf16 %v36
  %v101 = vunpack.c.l.bf16 %v37
  %v102 = vunpack.c.l.bf16 %v38
  %v103 = vunpack.c.l.bf16 %v39
  %v104 = vunpack.c.l.bf16 %v40
  %v105 = vunpack.c.l.bf16 %v41
  %v106 = vunpack.c.l.bf16 %v42
  %v107 = vunpack.c.l.bf16 %v43
  %v108 = vunpack.c.l.bf16 %v44
  %v109 = vunpack.c.l.bf16 %v45
  %v110 = vunpack.c.l.bf16 %v46
  %v111 = vunpack.c.l.bf16 %v47
  %v112 = vunpack.c.l.bf16 %v48
  %v113 = vunpack.c.l.bf16 %v49
  %v114 = vunpack.c.l.bf16 %v50
  %v115 = vunpack.c.l.bf16 %v51
  %v116 = vunpack.c.l.bf16 %v52
  %v117 = vunpack.c.l.bf16 %v53
  %v118 = vunpack.c.l.bf16 %v54
  %v119 = vunpack.c.l.bf16 %v55
  %v120 = vunpack.c.l.bf16 %v56
  %v121 = vunpack.c.l.bf16 %v57
  %v122 = vunpack.c.l.bf16 %v58
  %v123 = vunpack.c.l.bf16 %v59
  %v124 = vunpack.c.l.bf16 %v60
  %v125 = vunpack.c.l.bf16 %v61
  %v126 = vunpack.c.l.bf16 %v62
  %v127 = vunpack.c.l.bf16 %v63
  %v128 = vunpack.c.l.bf16 %v64
  %v129 = vunpack.c.l.bf16 %v65
  %v130 = vunpack.c.l.bf16 %v66
  %v131 = vunpack.c.l.bf16 %v67
  %v132 = vunpack.c.l.bf16 %v68
  %v133 = vunpack.c.l.bf16 %v69
  %v134 = vunpack.c.l.bf16 %v70
  %v135 = vunpack.c.l.bf16 %v71
  %v136 = vunpack.c.l.bf16 %v72
  %v137 = vunpack.c.l.bf16 %v73
  %v138 = vunpack.c.l.bf16 %v74
  %v139 = vunpack.c.l.bf16 %v75
  %v140 = vunpack.c.l.bf16 %v76
  %v141 = vunpack.c.l.bf16 %v77
  %v142 = vld [vmem:[%s1] sm:$0x1]
  %v144 = vperm.slane %v142, 0
  %v146 = vmul.f32 %v78, %v144
  %v147 = vmul.f32 %v79, %v144
  %v148 = vmul.f32 %v80, %v144
  %v149 = vmul.f32 %v81, %v144
  %v150 = vmul.f32 %v82, %v144
  %v151 = vmul.f32 %v83, %v144
  %v152 = vmul.f32 %v84, %v144
  %v153 = vmul.f32 %v85, %v144
  %v154 = vmul.f32 %v86, %v144
  %v155 = vmul.f32 %v87, %v144
  %v156 = vmul.f32 %v88, %v144
  %v157 = vmul.f32 %v89, %v144
  %v158 = vmul.f32 %v90, %v144
  %v159 = vmul.f32 %v91, %v144
  %v160 = vmul.f32 %v92, %v144
  %v161 = vmul.f32 %v93, %v144
  %v162 = vmul.f32 %v94, %v144
  %v163 = vmul.f32 %v95, %v144
  %v164 = vmul.f32 %v96, %v144
  %v165 = vmul.f32 %v97, %v144
  %v166 = vmul.f32 %v98, %v144
  %v167 = vmul.f32 %v99, %v144
  %v168 = vmul.f32 %v100, %v144
  %v169 = vmul.f32 %v101, %v144
  %v170 = vmul.f32 %v102, %v144
  %v171 = vmul.f32 %v103, %v144
  %v172 = vmul.f32 %v104, %v144
  %v173 = vmul.f32 %v105, %v144
  %v174 = vmul.f32 %v106, %v144
  %v175 = vmul.f32 %v107, %v144
  %v176 = vmul.f32 %v108, %v144
  %v177 = vmul.f32 %v109, %v144
  %v178 = vmul.f32 %v110, %v144
  %v179 = vmul.f32 %v111, %v144
  %v180 = vmul.f32 %v112, %v144
  %v181 = vmul.f32 %v113, %v144
  %v182 = vmul.f32 %v114, %v144
  %v183 = vmul.f32 %v115, %v144
  %v184 = vmul.f32 %v116, %v144
  %v185 = vmul.f32 %v117, %v144
  %v186 = vmul.f32 %v118, %v144
  %v187 = vmul.f32 %v119, %v144
  %v188 = vmul.f32 %v120, %v144
  %v189 = vmul.f32 %v121, %v144
  %v190 = vmul.f32 %v122, %v144
  %v191 = vmul.f32 %v123, %v144
  %v192 = vmul.f32 %v124, %v144
  %v193 = vmul.f32 %v125, %v144
  %v194 = vmul.f32 %v126, %v144
  %v195 = vmul.f32 %v127, %v144
  %v196 = vmul.f32 %v128, %v144
  %v197 = vmul.f32 %v129, %v144
  %v198 = vmul.f32 %v130, %v144
  %v199 = vmul.f32 %v131, %v144
  %v200 = vmul.f32 %v132, %v144
  %v201 = vmul.f32 %v133, %v144
  %v202 = vmul.f32 %v134, %v144
  %v203 = vmul.f32 %v135, %v144
  %v204 = vmul.f32 %v136, %v144
  %v205 = vmul.f32 %v137, %v144
  %v206 = vmul.f32 %v138, %v144
  %v207 = vmul.f32 %v139, %v144
  %v208 = vmul.f32 %v140, %v144
  %v209 = vmul.f32 %v141, %v144
  %v210 = vld [vmem:[%s2] sm:$0x1]
  %v212 = vperm.slane %v210, 0
  %v214 = vadd.f32 %v146, %v212
  %v215 = vadd.f32 %v147, %v212
  %v216 = vadd.f32 %v148, %v212
  %v217 = vadd.f32 %v149, %v212
  %v218 = vadd.f32 %v150, %v212
  %v219 = vadd.f32 %v151, %v212
  %v220 = vadd.f32 %v152, %v212
  %v221 = vadd.f32 %v153, %v212
  %v222 = vadd.f32 %v154, %v212
  %v223 = vadd.f32 %v155, %v212
  %v224 = vadd.f32 %v156, %v212
  %v225 = vadd.f32 %v157, %v212
  %v226 = vadd.f32 %v158, %v212
  %v227 = vadd.f32 %v159, %v212
  %v228 = vadd.f32 %v160, %v212
  %v229 = vadd.f32 %v161, %v212
  %v230 = vadd.f32 %v162, %v212
  %v231 = vadd.f32 %v163, %v212
  %v232 = vadd.f32 %v164, %v212
  %v233 = vadd.f32 %v165, %v212
  %v234 = vadd.f32 %v166, %v212
  %v235 = vadd.f32 %v167, %v212
  %v236 = vadd.f32 %v168, %v212
  %v237 = vadd.f32 %v169, %v212
  %v238 = vadd.f32 %v170, %v212
  %v239 = vadd.f32 %v171, %v212
  %v240 = vadd.f32 %v172, %v212
  %v241 = vadd.f32 %v173, %v212
  %v242 = vadd.f32 %v174, %v212
  %v243 = vadd.f32 %v175, %v212
  %v244 = vadd.f32 %v176, %v212
  %v245 = vadd.f32 %v177, %v212
  %v246 = vadd.f32 %v178, %v212
  %v247 = vadd.f32 %v179, %v212
  %v248 = vadd.f32 %v180, %v212
  %v249 = vadd.f32 %v181, %v212
  %v250 = vadd.f32 %v182, %v212
  %v251 = vadd.f32 %v183, %v212
  %v252 = vadd.f32 %v184, %v212
  %v253 = vadd.f32 %v185, %v212
  %v254 = vadd.f32 %v186, %v212
  %v255 = vadd.f32 %v187, %v212
  %v256 = vadd.f32 %v188, %v212
  %v257 = vadd.f32 %v189, %v212
  %v258 = vadd.f32 %v190, %v212
  %v259 = vadd.f32 %v191, %v212
  %v260 = vadd.f32 %v192, %v212
  %v261 = vadd.f32 %v193, %v212
  %v262 = vadd.f32 %v194, %v212
  %v263 = vadd.f32 %v195, %v212
  %v264 = vadd.f32 %v196, %v212
  %v265 = vadd.f32 %v197, %v212
  %v266 = vadd.f32 %v198, %v212
  %v267 = vadd.f32 %v199, %v212
  %v268 = vadd.f32 %v200, %v212
  %v269 = vadd.f32 %v201, %v212
  %v270 = vadd.f32 %v202, %v212
  %v271 = vadd.f32 %v203, %v212
  %v272 = vadd.f32 %v204, %v212
  %v273 = vadd.f32 %v205, %v212
  %v274 = vadd.f32 %v206, %v212
  %v275 = vadd.f32 %v207, %v212
  %v276 = vadd.f32 %v208, %v212
  %v277 = vadd.f32 %v209, %v212
  %vm278 = vcmp.ge.f32.partialorder %v214, 0.0
  %vm279 = vcmp.ge.f32.partialorder %v215, 0.0
  %vm280 = vcmp.ge.f32.partialorder %v216, 0.0
  %vm281 = vcmp.ge.f32.partialorder %v217, 0.0
  %vm282 = vcmp.ge.f32.partialorder %v218, 0.0
  %vm283 = vcmp.ge.f32.partialorder %v219, 0.0
  %vm284 = vcmp.ge.f32.partialorder %v220, 0.0
  %vm285 = vcmp.ge.f32.partialorder %v221, 0.0
  %vm286 = vcmp.ge.f32.partialorder %v222, 0.0
  %vm287 = vcmp.ge.f32.partialorder %v223, 0.0
  %vm288 = vcmp.ge.f32.partialorder %v224, 0.0
  %vm289 = vcmp.ge.f32.partialorder %v225, 0.0
  %vm290 = vcmp.ge.f32.partialorder %v226, 0.0
  %vm291 = vcmp.ge.f32.partialorder %v227, 0.0
  %vm292 = vcmp.ge.f32.partialorder %v228, 0.0
  %vm293 = vcmp.ge.f32.partialorder %v229, 0.0
  %vm294 = vcmp.ge.f32.partialorder %v230, 0.0
  %vm295 = vcmp.ge.f32.partialorder %v231, 0.0
  %vm296 = vcmp.ge.f32.partialorder %v232, 0.0
  %vm297 = vcmp.ge.f32.partialorder %v233, 0.0
  %vm298 = vcmp.ge.f32.partialorder %v234, 0.0
  %vm299 = vcmp.ge.f32.partialorder %v235, 0.0
  %vm300 = vcmp.ge.f32.partialorder %v236, 0.0
  %vm301 = vcmp.ge.f32.partialorder %v237, 0.0
  %vm302 = vcmp.ge.f32.partialorder %v238, 0.0
  %vm303 = vcmp.ge.f32.partialorder %v239, 0.0
  %vm304 = vcmp.ge.f32.partialorder %v240, 0.0
  %vm305 = vcmp.ge.f32.partialorder %v241, 0.0
  %vm306 = vcmp.ge.f32.partialorder %v242, 0.0
  %vm307 = vcmp.ge.f32.partialorder %v243, 0.0
  %vm308 = vcmp.ge.f32.partialorder %v244, 0.0
  %vm309 = vcmp.ge.f32.partialorder %v245, 0.0
  %vm310 = vcmp.ge.f32.partialorder %v246, 0.0
  %vm311 = vcmp.ge.f32.partialorder %v247, 0.0
  %vm312 = vcmp.ge.f32.partialorder %v248, 0.0
  %vm313 = vcmp.ge.f32.partialorder %v249, 0.0
  %vm314 = vcmp.ge.f32.partialorder %v250, 0.0
  %vm315 = vcmp.ge.f32.partialorder %v251, 0.0
  %vm316 = vcmp.ge.f32.partialorder %v252, 0.0
  %vm317 = vcmp.ge.f32.partialorder %v253, 0.0
  %vm318 = vcmp.ge.f32.partialorder %v254, 0.0
  %vm319 = vcmp.ge.f32.partialorder %v255, 0.0
  %vm320 = vcmp.ge.f32.partialorder %v256, 0.0
  %vm321 = vcmp.ge.f32.partialorder %v257, 0.0
  %vm322 = vcmp.ge.f32.partialorder %v258, 0.0
  %vm323 = vcmp.ge.f32.partialorder %v259, 0.0
  %vm324 = vcmp.ge.f32.partialorder %v260, 0.0
  %vm325 = vcmp.ge.f32.partialorder %v261, 0.0
  %vm326 = vcmp.ge.f32.partialorder %v262, 0.0
  %vm327 = vcmp.ge.f32.partialorder %v263, 0.0
  %vm328 = vcmp.ge.f32.partialorder %v264, 0.0
  %vm329 = vcmp.ge.f32.partialorder %v265, 0.0
  %vm330 = vcmp.ge.f32.partialorder %v266, 0.0
  %vm331 = vcmp.ge.f32.partialorder %v267, 0.0
  %vm332 = vcmp.ge.f32.partialorder %v268, 0.0
  %vm333 = vcmp.ge.f32.partialorder %v269, 0.0
  %vm334 = vcmp.ge.f32.partialorder %v270, 0.0
  %vm335 = vcmp.ge.f32.partialorder %v271, 0.0
  %vm336 = vcmp.ge.f32.partialorder %v272, 0.0
  %vm337 = vcmp.ge.f32.partialorder %v273, 0.0
  %vm338 = vcmp.ge.f32.partialorder %v274, 0.0
  %vm339 = vcmp.ge.f32.partialorder %v275, 0.0
  %vm340 = vcmp.ge.f32.partialorder %v276, 0.0
  %vm341 = vcmp.ge.f32.partialorder %v277, 0.0
  %v342 = vmul.f32 %v214, 0.2
  %v343 = vmul.f32 %v215, 0.2
  %v344 = vmul.f32 %v216, 0.2
  %v345 = vmul.f32 %v217, 0.2
  %v346 = vmul.f32 %v218, 0.2
  %v347 = vmul.f32 %v219, 0.2
  %v348 = vmul.f32 %v220, 0.2
  %v349 = vmul.f32 %v221, 0.2
  %v350 = vmul.f32 %v222, 0.2
  %v351 = vmul.f32 %v223, 0.2
  %v352 = vmul.f32 %v224, 0.2
  %v353 = vmul.f32 %v225, 0.2
  %v354 = vmul.f32 %v226, 0.2
  %v355 = vmul.f32 %v227, 0.2
  %v356 = vmul.f32 %v228, 0.2
  %v357 = vmul.f32 %v229, 0.2
  %v358 = vmul.f32 %v230, 0.2
  %v359 = vmul.f32 %v231, 0.2
  %v360 = vmul.f32 %v232, 0.2
  %v361 = vmul.f32 %v233, 0.2
  %v362 = vmul.f32 %v234, 0.2
  %v363 = vmul.f32 %v235, 0.2
  %v364 = vmul.f32 %v236, 0.2
  %v365 = vmul.f32 %v237, 0.2
  %v366 = vmul.f32 %v238, 0.2
  %v367 = vmul.f32 %v239, 0.2
  %v368 = vmul.f32 %v240, 0.2
  %v369 = vmul.f32 %v241, 0.2
  %v370 = vmul.f32 %v242, 0.2
  %v371 = vmul.f32 %v243, 0.2
  %v372 = vmul.f32 %v244, 0.2
  %v373 = vmul.f32 %v245, 0.2
  %v374 = vmul.f32 %v246, 0.2
  %v375 = vmul.f32 %v247, 0.2
  %v376 = vmul.f32 %v248, 0.2
  %v377 = vmul.f32 %v249, 0.2
  %v378 = vmul.f32 %v250, 0.2
  %v379 = vmul.f32 %v251, 0.2
  %v380 = vmul.f32 %v252, 0.2
  %v381 = vmul.f32 %v253, 0.2
  %v382 = vmul.f32 %v254, 0.2
  %v383 = vmul.f32 %v255, 0.2
  %v384 = vmul.f32 %v256, 0.2
  %v385 = vmul.f32 %v257, 0.2
  %v386 = vmul.f32 %v258, 0.2
  %v387 = vmul.f32 %v259, 0.2
  %v388 = vmul.f32 %v260, 0.2
  %v389 = vmul.f32 %v261, 0.2
  %v390 = vmul.f32 %v262, 0.2
  %v391 = vmul.f32 %v263, 0.2
  %v392 = vmul.f32 %v264, 0.2
  %v393 = vmul.f32 %v265, 0.2
  %v394 = vmul.f32 %v266, 0.2
  %v395 = vmul.f32 %v267, 0.2
  %v396 = vmul.f32 %v268, 0.2
  %v397 = vmul.f32 %v269, 0.2
  %v398 = vmul.f32 %v270, 0.2
  %v399 = vmul.f32 %v271, 0.2
  %v400 = vmul.f32 %v272, 0.2
  %v401 = vmul.f32 %v273, 0.2
  %v402 = vmul.f32 %v274, 0.2
  %v403 = vmul.f32 %v275, 0.2
  %v404 = vmul.f32 %v276, 0.2
  %v405 = vmul.f32 %v277, 0.2
  %v406 = vsel %vm278, %v214, %v342
  %v407 = vsel %vm279, %v215, %v343
  %v408 = vsel %vm280, %v216, %v344
  %v409 = vsel %vm281, %v217, %v345
  %v410 = vsel %vm282, %v218, %v346
  %v411 = vsel %vm283, %v219, %v347
  %v412 = vsel %vm284, %v220, %v348
  %v413 = vsel %vm285, %v221, %v349
  %v414 = vsel %vm286, %v222, %v350
  %v415 = vsel %vm287, %v223, %v351
  %v416 = vsel %vm288, %v224, %v352
  %v417 = vsel %vm289, %v225, %v353
  %v418 = vsel %vm290, %v226, %v354
  %v419 = vsel %vm291, %v227, %v355
  %v420 = vsel %vm292, %v228, %v356
  %v421 = vsel %vm293, %v229, %v357
  %v422 = vsel %vm294, %v230, %v358
  %v423 = vsel %vm295, %v231, %v359
  %v424 = vsel %vm296, %v232, %v360
  %v425 = vsel %vm297, %v233, %v361
  %v426 = vsel %vm298, %v234, %v362
  %v427 = vsel %vm299, %v235, %v363
  %v428 = vsel %vm300, %v236, %v364
  %v429 = vsel %vm301, %v237, %v365
  %v430 = vsel %vm302, %v238, %v366
  %v431 = vsel %vm303, %v239, %v367
  %v432 = vsel %vm304, %v240, %v368
  %v433 = vsel %vm305, %v241, %v369
  %v434 = vsel %vm306, %v242, %v370
  %v435 = vsel %vm307, %v243, %v371
  %v436 = vsel %vm308, %v244, %v372
  %v437 = vsel %vm309, %v245, %v373
  %v438 = vsel %vm310, %v246, %v374
  %v439 = vsel %vm311, %v247, %v375
  %v440 = vsel %vm312, %v248, %v376
  %v441 = vsel %vm313, %v249, %v377
  %v442 = vsel %vm314, %v250, %v378
  %v443 = vsel %vm315, %v251, %v379
  %v444 = vsel %vm316, %v252, %v380
  %v445 = vsel %vm317, %v253, %v381
  %v446 = vsel %vm318, %v254, %v382
  %v447 = vsel %vm319, %v255, %v383
  %v448 = vsel %vm320, %v256, %v384
  %v449 = vsel %vm321, %v257, %v385
  %v450 = vsel %vm322, %v258, %v386
  %v451 = vsel %vm323, %v259, %v387
  %v452 = vsel %vm324, %v260, %v388
  %v453 = vsel %vm325, %v261, %v389
  %v454 = vsel %vm326, %v262, %v390
  %v455 = vsel %vm327, %v263, %v391
  %v456 = vsel %vm328, %v264, %v392
  %v457 = vsel %vm329, %v265, %v393
  %v458 = vsel %vm330, %v266, %v394
  %v459 = vsel %vm331, %v267, %v395
  %v460 = vsel %vm332, %v268, %v396
  %v461 = vsel %vm333, %v269, %v397
  %v462 = vsel %vm334, %v270, %v398
  %v463 = vsel %vm335, %v271, %v399
  %v464 = vsel %vm336, %v272, %v400
  %v465 = vsel %vm337, %v273, %v401
  %v466 = vsel %vm338, %v274, %v402
  %v467 = vsel %vm339, %v275, %v403
  %v468 = vsel %vm340, %v276, %v404
  %v469 = vsel %vm341, %v277, %v405
  %v470 = vpack.c.bf16 %v406, %v406
  %v471 = vpack.c.bf16 %v407, %v407
  %v472 = vpack.c.bf16 %v408, %v408
  %v473 = vpack.c.bf16 %v409, %v409
  %v474 = vpack.c.bf16 %v410, %v410
  %v475 = vpack.c.bf16 %v411, %v411
  %v476 = vpack.c.bf16 %v412, %v412
  %v477 = vpack.c.bf16 %v413, %v413
  %v478 = vpack.c.bf16 %v414, %v414
  %v479 = vpack.c.bf16 %v415, %v415
  %v480 = vpack.c.bf16 %v416, %v416
  %v481 = vpack.c.bf16 %v417, %v417
  %v482 = vpack.c.bf16 %v418, %v418
  %v483 = vpack.c.bf16 %v419, %v419
  %v484 = vpack.c.bf16 %v420, %v420
  %v485 = vpack.c.bf16 %v421, %v421
  %v486 = vpack.c.bf16 %v422, %v422
  %v487 = vpack.c.bf16 %v423, %v423
  %v488 = vpack.c.bf16 %v424, %v424
  %v489 = vpack.c.bf16 %v425, %v425
  %v490 = vpack.c.bf16 %v426, %v426
  %v491 = vpack.c.bf16 %v427, %v427
  %v492 = vpack.c.bf16 %v428, %v428
  %v493 = vpack.c.bf16 %v429, %v429
  %v494 = vpack.c.bf16 %v430, %v430
  %v495 = vpack.c.bf16 %v431, %v431
  %v496 = vpack.c.bf16 %v432, %v432
  %v497 = vpack.c.bf16 %v433, %v433
  %v498 = vpack.c.bf16 %v434, %v434
  %v499 = vpack.c.bf16 %v435, %v435
  %v500 = vpack.c.bf16 %v436, %v436
  %v501 = vpack.c.bf16 %v437, %v437
  %v502 = vpack.c.bf16 %v438, %v438
  %v503 = vpack.c.bf16 %v439, %v439
  %v504 = vpack.c.bf16 %v440, %v440
  %v505 = vpack.c.bf16 %v441, %v441
  %v506 = vpack.c.bf16 %v442, %v442
  %v507 = vpack.c.bf16 %v443, %v443
  %v508 = vpack.c.bf16 %v444, %v444
  %v509 = vpack.c.bf16 %v445, %v445
  %v510 = vpack.c.bf16 %v446, %v446
  %v511 = vpack.c.bf16 %v447, %v447
  %v512 = vpack.c.bf16 %v448, %v448
  %v513 = vpack.c.bf16 %v449, %v449
  %v514 = vpack.c.bf16 %v450, %v450
  %v515 = vpack.c.bf16 %v451, %v451
  %v516 = vpack.c.bf16 %v452, %v452
  %v517 = vpack.c.bf16 %v453, %v453
  %v518 = vpack.c.bf16 %v454, %v454
  %v519 = vpack.c.bf16 %v455, %v455
  %v520 = vpack.c.bf16 %v456, %v456
  %v521 = vpack.c.bf16 %v457, %v457
  %v522 = vpack.c.bf16 %v458, %v458
  %v523 = vpack.c.bf16 %v459, %v459
  %v524 = vpack.c.bf16 %v460, %v460
  %v525 = vpack.c.bf16 %v461, %v461
  %v526 = vpack.c.bf16 %v462, %v462
  %v527 = vpack.c.bf16 %v463, %v463
  %v528 = vpack.c.bf16 %v464, %v464
  %v529 = vpack.c.bf16 %v465, %v465
  %v530 = vpack.c.bf16 %v466, %v466
  %v531 = vpack.c.bf16 %v467, %v467
  %v532 = vpack.c.bf16 %v468, %v468
  %v533 = vpack.c.bf16 %v469, %v469
  %534 = vst [vmem:[%s3] sm:$0xf] %v470
  %535 = vst [vmem:[%s3 + $0x4] sm:$0xf] %v471
  %536 = vst [vmem:[%s3 + $0x8] sm:$0xf] %v472
  %537 = vst [vmem:[%s3 + $0xc] sm:$0xf] %v473
  %538 = vst [vmem:[%s3 + $0x10] sm:$0xf] %v474
  %539 = vst [vmem:[%s3 + $0x14] sm:$0xf] %v475
  %540 = vst [vmem:[%s3 + $0x18] sm:$0xf] %v476
  %541 = vst [vmem:[%s3 + $0x1c] sm:$0xf] %v477
  %542 = vst [vmem:[%s3 + $0x20] sm:$0xf] %v478
  %543 = vst [vmem:[%s3 + $0x24] sm:$0xf] %v479
  %544 = vst [vmem:[%s3 + $0x28] sm:$0xf] %v480
  %545 = vst [vmem:[%s3 + $0x2c] sm:$0xf] %v481
  %546 = vst [vmem:[%s3 + $0x30] sm:$0xf] %v482
  %547 = vst [vmem:[%s3 + $0x34] sm:$0xf] %v483
  %548 = vst [vmem:[%s3 + $0x38] sm:$0xf] %v484
  %549 = vst [vmem:[%s3 + $0x3c] sm:$0xf] %v485
  %550 = vst [vmem:[%s3 + $0x40] sm:$0xf] %v486
  %551 = vst [vmem:[%s3 + $0x44] sm:$0xf] %v487
  %552 = vst [vmem:[%s3 + $0x48] sm:$0xf] %v488
  %553 = vst [vmem:[%s3 + $0x4c] sm:$0xf] %v489
  %554 = vst [vmem:[%s3 + $0x50] sm:$0xf] %v490
  %555 = vst [vmem:[%s3 + $0x54] sm:$0xf] %v491
  %556 = vst [vmem:[%s3 + $0x58] sm:$0xf] %v492
  %557 = vst [vmem:[%s3 + $0x5c] sm:$0xf] %v493
  %558 = vst [vmem:[%s3 + $0x60] sm:$0xf] %v494
  %559 = vst [vmem:[%s3 + $0x64] sm:$0xf] %v495
  %560 = vst [vmem:[%s3 + $0x68] sm:$0xf] %v496
  %561 = vst [vmem:[%s3 + $0x6c] sm:$0xf] %v497
  %562 = vst [vmem:[%s3 + $0x70] sm:$0xf] %v498
  %563 = vst [vmem:[%s3 + $0x74] sm:$0xf] %v499
  %564 = vst [vmem:[%s3 + $0x78] sm:$0xf] %v500
  %565 = vst [vmem:[%s3 + $0x7c] sm:$0xf] %v501
  %566 = vst [vmem:[%s3 + $0x80] sm:$0xf] %v502
  %567 = vst [vmem:[%s3 + $0x84] sm:$0xf] %v503
  %568 = vst [vmem:[%s3 + $0x88] sm:$0xf] %v504
  %569 = vst [vmem:[%s3 + $0x8c] sm:$0xf] %v505
  %570 = vst [vmem:[%s3 + $0x90] sm:$0xf] %v506
  %571 = vst [vmem:[%s3 + $0x94] sm:$0xf] %v507
  %572 = vst [vmem:[%s3 + $0x98] sm:$0xf] %v508
  %573 = vst [vmem:[%s3 + $0x9c] sm:$0xf] %v509
  %574 = vst [vmem:[%s3 + $0xa0] sm:$0xf] %v510
  %575 = vst [vmem:[%s3 + $0xa4] sm:$0xf] %v511
  %576 = vst [vmem:[%s3 + $0xa8] sm:$0xf] %v512
  %577 = vst [vmem:[%s3 + $0xac] sm:$0xf] %v513
  %578 = vst [vmem:[%s3 + $0xb0] sm:$0xf] %v514
  %579 = vst [vmem:[%s3 + $0xb4] sm:$0xf] %v515
  %580 = vst [vmem:[%s3 + $0xb8] sm:$0xf] %v516
  %581 = vst [vmem:[%s3 + $0xbc] sm:$0xf] %v517
  %582 = vst [vmem:[%s3 + $0xc0] sm:$0xf] %v518
  %583 = vst [vmem:[%s3 + $0xc4] sm:$0xf] %v519
  %584 = vst [vmem:[%s3 + $0xc8] sm:$0xf] %v520
  %585 = vst [vmem:[%s3 + $0xcc] sm:$0xf] %v521
  %586 = vst [vmem:[%s3 + $0xd0] sm:$0xf] %v522
  %587 = vst [vmem:[%s3 + $0xd4] sm:$0xf] %v523
  %588 = vst [vmem:[%s3 + $0xd8] sm:$0xf] %v524
  %589 = vst [vmem:[%s3 + $0xdc] sm:$0xf] %v525
  %590 = vst [vmem:[%s3 + $0xe0] sm:$0xf] %v526
  %591 = vst [vmem:[%s3 + $0xe4] sm:$0xf] %v527
  %592 = vst [vmem:[%s3 + $0xe8] sm:$0xf] %v528
  %593 = vst [vmem:[%s3 + $0xec] sm:$0xf] %v529
  %594 = vst [vmem:[%s3 + $0xf0] sm:$0xf] %v530
  %595 = vst [vmem:[%s3 + $0xf4] sm:$0xf] %v531
  %596 = vst [vmem:[%s3 + $0xf8] sm:$0xf] %v532
  %597 = vst [vmem:[%s3 + $0xfc] sm:$0xf] %v533
  // Predicated region
  $region14: #{discriminator_forward.10} parent=0 // pred_check
    _
  $region15: #{discriminator_forward.10} parent=0 // pred_check_branch
    %599 = sbr.rel (0) target = $region17
  $region16: #{discriminator_forward.10} parent=0 // pred_region
    _
  $region17: #{discriminator_forward.10} parent=0 // pred_fallthru
    _
  // Predicated region
  $region18: #{discriminator_forward.10} parent=0 // pred_check
    _
  $region19: #{discriminator_forward.10} parent=0 // pred_check_branch
    %601 = sbr.rel (0) target = $region21
  $region20: #{discriminator_forward.10} parent=0 // pred_region
    _
  $region21: #{discriminator_forward.10} parent=0 // pred_fallthru
    _

// kernel: discriminator_forward.11
$region0: #{discriminator_forward.11}
  #allocation0 [shape = 'u32[]', space=smem, size = 0x4, offset = 0x4, fixed_abs, tag = 'smem constant byte address 0x4 - core index']
  #allocation1 [shape = 'u32[72,128]{1,0:T(1,128)}', space=vmem, size = 0x9000, scoped, tag = 'internal scratch']
  %s0 = inlined_call_operand.vmem [shape: bf16[128,256], index: 0, kind: input, shape index: {}]
  %s1 = inlined_call_operand.vmem [shape: bf16[256,128], index: 1, kind: input, shape index: {}]
  %s2 = inlined_call_operand.vmem [shape: bf16[128,128], index: 2, kind: output, shape index: {0}]
  %s3 = inlined_call_operand.vmem [shape: f32[8,128], index: 3, kind: output, shape index: {1}]
  %4 = xla_tuple %s2, %s3
  %s5 = sld [smem:[#allocation0]]
  $region26: #{discriminator_forward.11} parent=0
    _
  %s7 = ssub.s32 1, %s5
  %s8 = scalar_select 0, %s7, %s5
  // Predicated region
  $region2: #{discriminator_forward.11} parent=0 // pred_check
    _
  $region3: #{discriminator_forward.11} parent=0 // pred_check_branch
    %10 = sbr.rel (0) target = $region5
  $region4: #{discriminator_forward.11} parent=0 // pred_region
    _
  $region5: #{discriminator_forward.11} parent=0 // pred_fallthru
    _
  // Predicated region
  $region6: #{discriminator_forward.11} parent=0 // pred_check
    _
  $region7: #{discriminator_forward.11} parent=0 // pred_check_branch
    %12 = sbr.rel (0) target = $region9
  $region8: #{discriminator_forward.11} parent=0 // pred_region
    _
  $region9: #{discriminator_forward.11} parent=0 // pred_fallthru
    _
  %v13 = vld [vmem:[%s0] sm:$0xff]
  %v14 = vld [vmem:[%s0 + $0x8] sm:$0xff]
  %v15 = vld [vmem:[%s0 + $0x10] sm:$0xff]
  %v16 = vld [vmem:[%s0 + $0x18] sm:$0xff]
  %v17 = vld [vmem:[%s0 + $0x20] sm:$0xff]
  %v18 = vld [vmem:[%s0 + $0x28] sm:$0xff]
  %v19 = vld [vmem:[%s0 + $0x30] sm:$0xff]
  %v20 = vld [vmem:[%s0 + $0x38] sm:$0xff]
  %v21 = vld [vmem:[%s0 + $0x40] sm:$0xff]
  %v22 = vld [vmem:[%s0 + $0x48] sm:$0xff]
  %v23 = vld [vmem:[%s0 + $0x50] sm:$0xff]
  %v24 = vld [vmem:[%s0 + $0x58] sm:$0xff]
  %v25 = vld [vmem:[%s0 + $0x60] sm:$0xff]
  %v26 = vld [vmem:[%s0 + $0x68] sm:$0xff]
  %v27 = vld [vmem:[%s0 + $0x70] sm:$0xff]
  %v28 = vld [vmem:[%s0 + $0x78] sm:$0xff]
  %v29 = vld [vmem:[%s1] sm:$0xf]
  %v30 = vld [vmem:[%s1 + $0x4] sm:$0xf]
  %v31 = vld [vmem:[%s1 + $0x8] sm:$0xf]
  %v32 = vld [vmem:[%s1 + $0xc] sm:$0xf]
  %v33 = vld [vmem:[%s1 + $0x10] sm:$0xf]
  %v34 = vld [vmem:[%s1 + $0x14] sm:$0xf]
  %v35 = vld [vmem:[%s1 + $0x18] sm:$0xf]
  %v36 = vld [vmem:[%s1 + $0x1c] sm:$0xf]
  %v37 = vld [vmem:[%s1 + $0x20] sm:$0xf]
  %v38 = vld [vmem:[%s1 + $0x24] sm:$0xf]
  %v39 = vld [vmem:[%s1 + $0x28] sm:$0xf]
  %v40 = vld [vmem:[%s1 + $0x2c] sm:$0xf]
  %v41 = vld [vmem:[%s1 + $0x30] sm:$0xf]
  %v42 = vld [vmem:[%s1 + $0x34] sm:$0xf]
  %v43 = vld [vmem:[%s1 + $0x38] sm:$0xf]
  %v44 = vld [vmem:[%s1 + $0x3c] sm:$0xf]
  %v45 = vld [vmem:[%s1 + $0x40] sm:$0xf]
  %v46 = vld [vmem:[%s1 + $0x44] sm:$0xf]
  %v47 = vld [vmem:[%s1 + $0x48] sm:$0xf]
  %v48 = vld [vmem:[%s1 + $0x4c] sm:$0xf]
  %v49 = vld [vmem:[%s1 + $0x50] sm:$0xf]
  %v50 = vld [vmem:[%s1 + $0x54] sm:$0xf]
  %v51 = vld [vmem:[%s1 + $0x58] sm:$0xf]
  %v52 = vld [vmem:[%s1 + $0x5c] sm:$0xf]
  %v53 = vld [vmem:[%s1 + $0x60] sm:$0xf]
  %v54 = vld [vmem:[%s1 + $0x64] sm:$0xf]
  %v55 = vld [vmem:[%s1 + $0x68] sm:$0xf]
  %v56 = vld [vmem:[%s1 + $0x6c] sm:$0xf]
  %v57 = vld [vmem:[%s1 + $0x70] sm:$0xf]
  %v58 = vld [vmem:[%s1 + $0x74] sm:$0xf]
  %v59 = vld [vmem:[%s1 + $0x78] sm:$0xf]
  %v60 = vld [vmem:[%s1 + $0x7c] sm:$0xf]
  %v77 = vunpack.c.l.b16 %v13
  %v78 = vunpack.c.h.b16 %v13
  %v79 = vunpack.c.l.b16 %v14
  %v80 = vunpack.c.h.b16 %v14
  %v81 = vunpack.c.l.b16 %v15
  %v82 = vunpack.c.h.b16 %v15
  %v83 = vunpack.c.l.b16 %v16
  %v84 = vunpack.c.h.b16 %v16
  %v85 = vunpack.c.l.b16 %v17
  %v86 = vunpack.c.h.b16 %v17
  %v87 = vunpack.c.l.b16 %v18
  %v88 = vunpack.c.h.b16 %v18
  %v89 = vunpack.c.l.b16 %v19
  %v90 = vunpack.c.h.b16 %v19
  %v91 = vunpack.c.l.b16 %v20
  %v92 = vunpack.c.h.b16 %v20
  %v93 = vunpack.c.l.b16 %v21
  %v94 = vunpack.c.h.b16 %v21
  %v95 = vunpack.c.l.b16 %v22
  %v96 = vunpack.c.h.b16 %v22
  %v97 = vunpack.c.l.b16 %v23
  %v98 = vunpack.c.h.b16 %v23
  %v99 = vunpack.c.l.b16 %v24
  %v100 = vunpack.c.h.b16 %v24
  %v101 = vunpack.c.l.b16 %v25
  %v102 = vunpack.c.h.b16 %v25
  %v103 = vunpack.c.l.b16 %v26
  %v104 = vunpack.c.h.b16 %v26
  %v105 = vunpack.c.l.b16 %v27
  %v106 = vunpack.c.h.b16 %v27
  %v107 = vunpack.c.l.b16 %v28
  %v108 = vunpack.c.h.b16 %v28
  %v109 = vpack.c.b16 %v79, %v77
  %v110 = vpack.c.b16 %v80, %v78
  %v111 = vpack.c.b16 %v83, %v81
  %v112 = vpack.c.b16 %v84, %v82
  %v113 = vpack.c.b16 %v87, %v85
  %v114 = vpack.c.b16 %v88, %v86
  %v115 = vpack.c.b16 %v91, %v89
  %v116 = vpack.c.b16 %v92, %v90
  %v117 = vpack.c.b16 %v95, %v93
  %v118 = vpack.c.b16 %v96, %v94
  %v119 = vpack.c.b16 %v99, %v97
  %v120 = vpack.c.b16 %v100, %v98
  %v121 = vpack.c.b16 %v103, %v101
  %v122 = vpack.c.b16 %v104, %v102
  %v123 = vpack.c.b16 %v107, %v105
  %v124 = vpack.c.b16 %v108, %v106
  %v173 = vunpack.c.l.b16 %v29
  %v174 = vunpack.c.l.b16 %v30
  %v175 = vunpack.c.l.b16 %v31
  %v176 = vunpack.c.l.b16 %v32
  %v177 = vunpack.c.l.b16 %v33
  %v178 = vunpack.c.l.b16 %v34
  %v179 = vunpack.c.l.b16 %v35
  %v180 = vunpack.c.l.b16 %v36
  %v181 = vunpack.c.l.b16 %v37
  %v182 = vunpack.c.l.b16 %v38
  %v183 = vunpack.c.l.b16 %v39
  %v184 = vunpack.c.l.b16 %v40
  %v185 = vunpack.c.l.b16 %v41
  %v186 = vunpack.c.l.b16 %v42
  %v187 = vunpack.c.l.b16 %v43
  %v188 = vunpack.c.l.b16 %v44
  %v189 = vunpack.c.l.b16 %v45
  %v190 = vunpack.c.l.b16 %v46
  %v191 = vunpack.c.l.b16 %v47
  %v192 = vunpack.c.l.b16 %v48
  %v193 = vunpack.c.l.b16 %v49
  %v194 = vunpack.c.l.b16 %v50
  %v195 = vunpack.c.l.b16 %v51
  %v196 = vunpack.c.l.b16 %v52
  %v197 = vunpack.c.l.b16 %v53
  %v198 = vunpack.c.l.b16 %v54
  %v199 = vunpack.c.l.b16 %v55
  %v200 = vunpack.c.l.b16 %v56
  %v201 = vunpack.c.l.b16 %v57
  %v202 = vunpack.c.l.b16 %v58
  %v203 = vunpack.c.l.b16 %v59
  %v204 = vunpack.c.l.b16 %v60
  %v205 = vpack.c.b16 %v174, %v173
  %v206 = vpack.c.b16 %v176, %v175
  %v207 = vpack.c.b16 %v178, %v177
  %v208 = vpack.c.b16 %v180, %v179
  %v209 = vpack.c.b16 %v182, %v181
  %v210 = vpack.c.b16 %v184, %v183
  %v211 = vpack.c.b16 %v186, %v185
  %v212 = vpack.c.b16 %v188, %v187
  %v213 = vpack.c.b16 %v190, %v189
  %v214 = vpack.c.b16 %v192, %v191
  %v215 = vpack.c.b16 %v194, %v193
  %v216 = vpack.c.b16 %v196, %v195
  %v217 = vpack.c.b16 %v198, %v197
  %v218 = vpack.c.b16 %v200, %v199
  %v219 = vpack.c.b16 %v202, %v201
  %v220 = vpack.c.b16 %v204, %v203
  %237 = vmatpush.bf16.msra.mxu0 %v212
  %238 = vmatpush.bf16.msra.mxu0 %v211
  %239 = vmatpush.bf16.msra.mxu0 %v210
  %240 = vmatpush.bf16.msra.mxu0 %v209
  %241 = vmatpush.bf16.msra.mxu0 %v208
  %242 = vmatpush.bf16.msra.mxu0 %v207
  %243 = vmatpush.bf16.msra.mxu0 %v206
  %244 = vmatpush.bf16.msra.mxu0 %v205
  %245 = vmatmul.bf16.gmra.mxu0 %v109
  %v246 = vpop.f32.mrf.mxu0
  %v247 = vadd.f32 0.0, %v246
  %v248 = vpop.f32.mrf.mxu0
  %v249 = vadd.f32 0.0, %v248
  %250 = vmatmul.bf16.gmra.mxu0 %v111
  %v251 = vpop.f32.mrf.mxu0
  %v252 = vadd.f32 0.0, %v251
  %v253 = vpop.f32.mrf.mxu0
  %v254 = vadd.f32 0.0, %v253
  %255 = vmatmul.bf16.gmra.mxu0 %v113
  %v256 = vpop.f32.mrf.mxu0
  %v257 = vadd.f32 0.0, %v256
  %v258 = vpop.f32.mrf.mxu0
  %v259 = vadd.f32 0.0, %v258
  %260 = vmatmul.bf16.gmra.mxu0 %v115
  %v261 = vpop.f32.mrf.mxu0
  %v262 = vadd.f32 0.0, %v261
  %v263 = vpop.f32.mrf.mxu0
  %v264 = vadd.f32 0.0, %v263
  %265 = vmatmul.bf16.gmra.mxu0 %v117
  %v266 = vpop.f32.mrf.mxu0
  %v267 = vadd.f32 0.0, %v266
  %v268 = vpop.f32.mrf.mxu0
  %v269 = vadd.f32 0.0, %v268
  %270 = vmatmul.bf16.gmra.mxu0 %v119
  %v271 = vpop.f32.mrf.mxu0
  %v272 = vadd.f32 0.0, %v271
  %v273 = vpop.f32.mrf.mxu0
  %v274 = vadd.f32 0.0, %v273
  %275 = vmatmul.bf16.gmra.mxu0 %v121
  %v276 = vpop.f32.mrf.mxu0
  %v277 = vadd.f32 0.0, %v276
  %v278 = vpop.f32.mrf.mxu0
  %v279 = vadd.f32 0.0, %v278
  %280 = vmatmul.bf16.gmra.mxu0 %v123
  %v281 = vpop.f32.mrf.mxu0
  %v282 = vadd.f32 0.0, %v281
  %v283 = vpop.f32.mrf.mxu0
  %v284 = vadd.f32 0.0, %v283
  %285 = vdwg.mxu0
  %286 = vmatpush.bf16.msra.mxu0 %v220
  %287 = vmatpush.bf16.msra.mxu0 %v219
  %288 = vmatpush.bf16.msra.mxu0 %v218
  %289 = vmatpush.bf16.msra.mxu0 %v217
  %290 = vmatpush.bf16.msra.mxu0 %v216
  %291 = vmatpush.bf16.msra.mxu0 %v215
  %292 = vmatpush.bf16.msra.mxu0 %v214
  %293 = vmatpush.bf16.msra.mxu0 %v213
  %294 = vmatmul.bf16.gmra.mxu0 %v110
  %v295 = vpop.f32.mrf.mxu0
  %v296 = vadd.f32 %v247, %v295
  %v297 = vpop.f32.mrf.mxu0
  %v298 = vadd.f32 %v249, %v297
  %299 = vmatmul.bf16.gmra.mxu0 %v112
  %v300 = vpop.f32.mrf.mxu0
  %v301 = vadd.f32 %v252, %v300
  %v302 = vpop.f32.mrf.mxu0
  %v303 = vadd.f32 %v254, %v302
  %304 = vmatmul.bf16.gmra.mxu0 %v114
  %v305 = vpop.f32.mrf.mxu0
  %v306 = vadd.f32 %v257, %v305
  %v307 = vpop.f32.mrf.mxu0
  %v308 = vadd.f32 %v259, %v307
  %309 = vmatmul.bf16.gmra.mxu0 %v116
  %v310 = vpop.f32.mrf.mxu0
  %v311 = vadd.f32 %v262, %v310
  %v312 = vpop.f32.mrf.mxu0
  %v313 = vadd.f32 %v264, %v312
  %314 = vmatmul.bf16.gmra.mxu0 %v118
  %v315 = vpop.f32.mrf.mxu0
  %v316 = vadd.f32 %v267, %v315
  %v317 = vpop.f32.mrf.mxu0
  %v318 = vadd.f32 %v269, %v317
  %319 = vmatmul.bf16.gmra.mxu0 %v120
  %v320 = vpop.f32.mrf.mxu0
  %v321 = vadd.f32 %v272, %v320
  %v322 = vpop.f32.mrf.mxu0
  %v323 = vadd.f32 %v274, %v322
  %324 = vmatmul.bf16.gmra.mxu0 %v122
  %v325 = vpop.f32.mrf.mxu0
  %v326 = vadd.f32 %v277, %v325
  %v327 = vpop.f32.mrf.mxu0
  %v328 = vadd.f32 %v279, %v327
  %329 = vmatmul.bf16.gmra.mxu0 %v124
  %v330 = vpop.f32.mrf.mxu0
  %v331 = vadd.f32 %v282, %v330
  %v332 = vpop.f32.mrf.mxu0
  %v333 = vadd.f32 %v284, %v332
  %334 = vdwg.mxu0
  %v335 = vpack.c.bf16 %v296, %v296
  %v336 = vpack.c.bf16 %v298, %v298
  %v337 = vpack.c.bf16 %v301, %v301
  %v338 = vpack.c.bf16 %v303, %v303
  %v339 = vpack.c.bf16 %v306, %v306
  %v340 = vpack.c.bf16 %v308, %v308
  %v341 = vpack.c.bf16 %v311, %v311
  %v342 = vpack.c.bf16 %v313, %v313
  %v343 = vpack.c.bf16 %v316, %v316
  %v344 = vpack.c.bf16 %v318, %v318
  %v345 = vpack.c.bf16 %v321, %v321
  %v346 = vpack.c.bf16 %v323, %v323
  %v347 = vpack.c.bf16 %v326, %v326
  %v348 = vpack.c.bf16 %v328, %v328
  %v349 = vpack.c.bf16 %v331, %v331
  %v350 = vpack.c.bf16 %v333, %v333
  %351 = vst [vmem:[%s2] sm:$0xf] %v335
  %352 = vst [vmem:[%s2 + $0x4] sm:$0xf] %v336
  %353 = vst [vmem:[%s2 + $0x8] sm:$0xf] %v337
  %354 = vst [vmem:[%s2 + $0xc] sm:$0xf] %v338
  %355 = vst [vmem:[%s2 + $0x10] sm:$0xf] %v339
  %356 = vst [vmem:[%s2 + $0x14] sm:$0xf] %v340
  %357 = vst [vmem:[%s2 + $0x18] sm:$0xf] %v341
  %358 = vst [vmem:[%s2 + $0x1c] sm:$0xf] %v342
  %359 = vst [vmem:[%s2 + $0x20] sm:$0xf] %v343
  %360 = vst [vmem:[%s2 + $0x24] sm:$0xf] %v344
  %361 = vst [vmem:[%s2 + $0x28] sm:$0xf] %v345
  %362 = vst [vmem:[%s2 + $0x2c] sm:$0xf] %v346
  %363 = vst [vmem:[%s2 + $0x30] sm:$0xf] %v347
  %364 = vst [vmem:[%s2 + $0x34] sm:$0xf] %v348
  %365 = vst [vmem:[%s2 + $0x38] sm:$0xf] %v349
  %366 = vst [vmem:[%s2 + $0x3c] sm:$0xf] %v350
  %v367 = vadd.f32 %v296, %v298
  %v368 = vadd.f32 %v367, %v301
  %v369 = vadd.f32 %v368, %v303
  %v370 = vadd.f32 %v369, %v306
  %v371 = vadd.f32 %v370, %v308
  %v372 = vadd.f32 %v371, %v311
  %v373 = vadd.f32 %v372, %v313
  %v374 = vadd.f32 %v373, %v316
  %v375 = vadd.f32 %v374, %v318
  %v376 = vadd.f32 %v375, %v321
  %v377 = vadd.f32 %v376, %v323
  %v378 = vadd.f32 %v377, %v326
  %v379 = vadd.f32 %v378, %v328
  %v380 = vadd.f32 %v379, %v331
  %v381 = vadd.f32 %v380, %v333
  %v382 = vrot.slane %v381, 4
  %v383 = vadd.f32 %v381, %v382
  %v384 = vrot.slane %v383, 2
  %v385 = vadd.f32 %v383, %v384
  %v386 = vrot.slane %v385, 1
  %v387 = vadd.f32 %v385, %v386
  %388 = vst [vmem:[%s3] sm:$0x1] %v387
  %v389 = vmul.f32 %v296, %v296
  %v390 = vmul.f32 %v298, %v298
  %v391 = vmul.f32 %v301, %v301
  %v392 = vmul.f32 %v303, %v303
  %v393 = vmul.f32 %v306, %v306
  %v394 = vmul.f32 %v308, %v308
  %v395 = vmul.f32 %v311, %v311
  %v396 = vmul.f32 %v313, %v313
  %v397 = vmul.f32 %v316, %v316
  %v398 = vmul.f32 %v318, %v318
  %v399 = vmul.f32 %v321, %v321
  %v400 = vmul.f32 %v323, %v323
  %v401 = vmul.f32 %v326, %v326
  %v402 = vmul.f32 %v328, %v328
  %v403 = vmul.f32 %v331, %v331
  %v404 = vmul.f32 %v333, %v333
  %v405 = vadd.f32 %v389, %v390
  %v406 = vadd.f32 %v405, %v391
  %v407 = vadd.f32 %v406, %v392
  %v408 = vadd.f32 %v407, %v393
  %v409 = vadd.f32 %v408, %v394
  %v410 = vadd.f32 %v409, %v395
  %v411 = vadd.f32 %v410, %v396
  %v412 = vadd.f32 %v411, %v397
  %v413 = vadd.f32 %v412, %v398
  %v414 = vadd.f32 %v413, %v399
  %v415 = vadd.f32 %v414, %v400
  %v416 = vadd.f32 %v415, %v401
  %v417 = vadd.f32 %v416, %v402
  %v418 = vadd.f32 %v417, %v403
  %v419 = vadd.f32 %v418, %v404
  %v420 = vrot.slane %v419, 4
  %v421 = vadd.f32 %v419, %v420
  %v422 = vrot.slane %v421, 2
  %v423 = vadd.f32 %v421, %v422
  %v424 = vrot.slane %v423, 1
  %v425 = vadd.f32 %v423, %v424
  %426 = vst [vmem:[%s3 + $0x1] sm:$0x1] %v425
  // Predicated region
  $region10: #{discriminator_forward.11} parent=0 // pred_check
    _
  $region11: #{discriminator_forward.11} parent=0 // pred_check_branch
    %428 = sbr.rel (0) target = $region13
  $region12: #{discriminator_forward.11} parent=0 // pred_region
    _
  $region13: #{discriminator_forward.11} parent=0 // pred_fallthru
    _
  // Predicated region
  $region14: #{discriminator_forward.11} parent=0 // pred_check
    _
  $region15: #{discriminator_forward.11} parent=0 // pred_check_branch
    %430 = sbr.rel (0) target = $region17
  $region16: #{discriminator_forward.11} parent=0 // pred_region
    _
  $region17: #{discriminator_forward.11} parent=0 // pred_fallthru
    _
  // Predicated region
  $region18: #{discriminator_forward.11} parent=0 // pred_check
    _
  $region19: #{discriminator_forward.11} parent=0 // pred_check_branch
    %432 = sbr.rel (0) target = $region21
  $region20: #{discriminator_forward.11} parent=0 // pred_region
    _
  $region21: #{discriminator_forward.11} parent=0 // pred_fallthru
    _
  // Predicated region
  $region22: #{discriminator_forward.11} parent=0 // pred_check
    _
  $region23: #{discriminator_forward.11} parent=0 // pred_check_branch
    %434 = sbr.rel (0) target = $region25
  $region24: #{discriminator_forward.11} parent=0 // pred_region
    _
  $region25: #{discriminator_forward.11} parent=0 // pred_fallthru
    _

// kernel: discriminator_forward.12
$region0: #{discriminator_forward.12}
  #allocation0 [shape = 'u32[]', space=smem, size = 0x4, offset = 0x4, fixed_abs, tag = 'smem constant byte address 0x4 - core index']
  #allocation1 [shape = 'u32[72,128]{1,0:T(1,128)}', space=vmem, size = 0x9000, scoped, tag = 'internal scratch']
  %s0 = inlined_call_operand.vmem [shape: bf16[128,128], index: 0, kind: input, shape index: {}]
  %s1 = inlined_call_operand.vmem [shape: f32[1,128], index: 1, kind: input, shape index: {}]
  %s2 = inlined_call_operand.vmem [shape: f32[1,128], index: 2, kind: input, shape index: {}]
  %s3 = inlined_call_operand.vmem [shape: bf16[128,128], index: 3, kind: output, shape index: {}]
  %s4 = sld [smem:[#allocation0]]
  $region22: #{discriminator_forward.12} parent=0
    _
  %s6 = ssub.s32 1, %s4
  %s7 = scalar_select 0, %s6, %s4
  // Predicated region
  $region2: #{discriminator_forward.12} parent=0 // pred_check
    _
  $region3: #{discriminator_forward.12} parent=0 // pred_check_branch
    %9 = sbr.rel (0) target = $region5
  $region4: #{discriminator_forward.12} parent=0 // pred_region
    _
  $region5: #{discriminator_forward.12} parent=0 // pred_fallthru
    _
  // Predicated region
  $region6: #{discriminator_forward.12} parent=0 // pred_check
    _
  $region7: #{discriminator_forward.12} parent=0 // pred_check_branch
    %11 = sbr.rel (0) target = $region9
  $region8: #{discriminator_forward.12} parent=0 // pred_region
    _
  $region9: #{discriminator_forward.12} parent=0 // pred_fallthru
    _
  // Predicated region
  $region10: #{discriminator_forward.12} parent=0 // pred_check
    _
  $region11: #{discriminator_forward.12} parent=0 // pred_check_branch
    %13 = sbr.rel (0) target = $region13
  $region12: #{discriminator_forward.12} parent=0 // pred_region
    _
  $region13: #{discriminator_forward.12} parent=0 // pred_fallthru
    _
  %v14 = vld [vmem:[%s0] sm:$0xf]
  %v15 = vld [vmem:[%s0 + $0x4] sm:$0xf]
  %v16 = vld [vmem:[%s0 + $0x8] sm:$0xf]
  %v17 = vld [vmem:[%s0 + $0xc] sm:$0xf]
  %v18 = vld [vmem:[%s0 + $0x10] sm:$0xf]
  %v19 = vld [vmem:[%s0 + $0x14] sm:$0xf]
  %v20 = vld [vmem:[%s0 + $0x18] sm:$0xf]
  %v21 = vld [vmem:[%s0 + $0x1c] sm:$0xf]
  %v22 = vld [vmem:[%s0 + $0x20] sm:$0xf]
  %v23 = vld [vmem:[%s0 + $0x24] sm:$0xf]
  %v24 = vld [vmem:[%s0 + $0x28] sm:$0xf]
  %v25 = vld [vmem:[%s0 + $0x2c] sm:$0xf]
  %v26 = vld [vmem:[%s0 + $0x30] sm:$0xf]
  %v27 = vld [vmem:[%s0 + $0x34] sm:$0xf]
  %v28 = vld [vmem:[%s0 + $0x38] sm:$0xf]
  %v29 = vld [vmem:[%s0 + $0x3c] sm:$0xf]
  %v30 = vunpack.c.l.bf16 %v14
  %v31 = vunpack.c.l.bf16 %v15
  %v32 = vunpack.c.l.bf16 %v16
  %v33 = vunpack.c.l.bf16 %v17
  %v34 = vunpack.c.l.bf16 %v18
  %v35 = vunpack.c.l.bf16 %v19
  %v36 = vunpack.c.l.bf16 %v20
  %v37 = vunpack.c.l.bf16 %v21
  %v38 = vunpack.c.l.bf16 %v22
  %v39 = vunpack.c.l.bf16 %v23
  %v40 = vunpack.c.l.bf16 %v24
  %v41 = vunpack.c.l.bf16 %v25
  %v42 = vunpack.c.l.bf16 %v26
  %v43 = vunpack.c.l.bf16 %v27
  %v44 = vunpack.c.l.bf16 %v28
  %v45 = vunpack.c.l.bf16 %v29
  %v46 = vld [vmem:[%s1] sm:$0x1]
  %v48 = vperm.slane %v46, 0
  %v50 = vmul.f32 %v30, %v48
  %v51 = vmul.f32 %v31, %v48
  %v52 = vmul.f32 %v32, %v48
  %v53 = vmul.f32 %v33, %v48
  %v54 = vmul.f32 %v34, %v48
  %v55 = vmul.f32 %v35, %v48
  %v56 = vmul.f32 %v36, %v48
  %v57 = vmul.f32 %v37, %v48
  %v58 = vmul.f32 %v38, %v48
  %v59 = vmul.f32 %v39, %v48
  %v60 = vmul.f32 %v40, %v48
  %v61 = vmul.f32 %v41, %v48
  %v62 = vmul.f32 %v42, %v48
  %v63 = vmul.f32 %v43, %v48
  %v64 = vmul.f32 %v44, %v48
  %v65 = vmul.f32 %v45, %v48
  %v66 = vld [vmem:[%s2] sm:$0x1]
  %v68 = vperm.slane %v66, 0
  %v70 = vadd.f32 %v50, %v68
  %v71 = vadd.f32 %v51, %v68
  %v72 = vadd.f32 %v52, %v68
  %v73 = vadd.f32 %v53, %v68
  %v74 = vadd.f32 %v54, %v68
  %v75 = vadd.f32 %v55, %v68
  %v76 = vadd.f32 %v56, %v68
  %v77 = vadd.f32 %v57, %v68
  %v78 = vadd.f32 %v58, %v68
  %v79 = vadd.f32 %v59, %v68
  %v80 = vadd.f32 %v60, %v68
  %v81 = vadd.f32 %v61, %v68
  %v82 = vadd.f32 %v62, %v68
  %v83 = vadd.f32 %v63, %v68
  %v84 = vadd.f32 %v64, %v68
  %v85 = vadd.f32 %v65, %v68
  %vm86 = vcmp.ge.f32.partialorder %v70, 0.0
  %vm87 = vcmp.ge.f32.partialorder %v71, 0.0
  %vm88 = vcmp.ge.f32.partialorder %v72, 0.0
  %vm89 = vcmp.ge.f32.partialorder %v73, 0.0
  %vm90 = vcmp.ge.f32.partialorder %v74, 0.0
  %vm91 = vcmp.ge.f32.partialorder %v75, 0.0
  %vm92 = vcmp.ge.f32.partialorder %v76, 0.0
  %vm93 = vcmp.ge.f32.partialorder %v77, 0.0
  %vm94 = vcmp.ge.f32.partialorder %v78, 0.0
  %vm95 = vcmp.ge.f32.partialorder %v79, 0.0
  %vm96 = vcmp.ge.f32.partialorder %v80, 0.0
  %vm97 = vcmp.ge.f32.partialorder %v81, 0.0
  %vm98 = vcmp.ge.f32.partialorder %v82, 0.0
  %vm99 = vcmp.ge.f32.partialorder %v83, 0.0
  %vm100 = vcmp.ge.f32.partialorder %v84, 0.0
  %vm101 = vcmp.ge.f32.partialorder %v85, 0.0
  %v102 = vmul.f32 %v70, 0.2
  %v103 = vmul.f32 %v71, 0.2
  %v104 = vmul.f32 %v72, 0.2
  %v105 = vmul.f32 %v73, 0.2
  %v106 = vmul.f32 %v74, 0.2
  %v107 = vmul.f32 %v75, 0.2
  %v108 = vmul.f32 %v76, 0.2
  %v109 = vmul.f32 %v77, 0.2
  %v110 = vmul.f32 %v78, 0.2
  %v111 = vmul.f32 %v79, 0.2
  %v112 = vmul.f32 %v80, 0.2
  %v113 = vmul.f32 %v81, 0.2
  %v114 = vmul.f32 %v82, 0.2
  %v115 = vmul.f32 %v83, 0.2
  %v116 = vmul.f32 %v84, 0.2
  %v117 = vmul.f32 %v85, 0.2
  %v118 = vsel %vm86, %v70, %v102
  %v119 = vsel %vm87, %v71, %v103
  %v120 = vsel %vm88, %v72, %v104
  %v121 = vsel %vm89, %v73, %v105
  %v122 = vsel %vm90, %v74, %v106
  %v123 = vsel %vm91, %v75, %v107
  %v124 = vsel %vm92, %v76, %v108
  %v125 = vsel %vm93, %v77, %v109
  %v126 = vsel %vm94, %v78, %v110
  %v127 = vsel %vm95, %v79, %v111
  %v128 = vsel %vm96, %v80, %v112
  %v129 = vsel %vm97, %v81, %v113
  %v130 = vsel %vm98, %v82, %v114
  %v131 = vsel %vm99, %v83, %v115
  %v132 = vsel %vm100, %v84, %v116
  %v133 = vsel %vm101, %v85, %v117
  %v134 = vpack.c.bf16 %v118, %v118
  %v135 = vpack.c.bf16 %v119, %v119
  %v136 = vpack.c.bf16 %v120, %v120
  %v137 = vpack.c.bf16 %v121, %v121
  %v138 = vpack.c.bf16 %v122, %v122
  %v139 = vpack.c.bf16 %v123, %v123
  %v140 = vpack.c.bf16 %v124, %v124
  %v141 = vpack.c.bf16 %v125, %v125
  %v142 = vpack.c.bf16 %v126, %v126
  %v143 = vpack.c.bf16 %v127, %v127
  %v144 = vpack.c.bf16 %v128, %v128
  %v145 = vpack.c.bf16 %v129, %v129
  %v146 = vpack.c.bf16 %v130, %v130
  %v147 = vpack.c.bf16 %v131, %v131
  %v148 = vpack.c.bf16 %v132, %v132
  %v149 = vpack.c.bf16 %v133, %v133
  %150 = vst [vmem:[%s3] sm:$0xf] %v134
  %151 = vst [vmem:[%s3 + $0x4] sm:$0xf] %v135
  %152 = vst [vmem:[%s3 + $0x8] sm:$0xf] %v136
  %153 = vst [vmem:[%s3 + $0xc] sm:$0xf] %v137
  %154 = vst [vmem:[%s3 + $0x10] sm:$0xf] %v138
  %155 = vst [vmem:[%s3 + $0x14] sm:$0xf] %v139
  %156 = vst [vmem:[%s3 + $0x18] sm:$0xf] %v140
  %157 = vst [vmem:[%s3 + $0x1c] sm:$0xf] %v141
  %158 = vst [vmem:[%s3 + $0x20] sm:$0xf] %v142
  %159 = vst [vmem:[%s3 + $0x24] sm:$0xf] %v143
  %160 = vst [vmem:[%s3 + $0x28] sm:$0xf] %v144
  %161 = vst [vmem:[%s3 + $0x2c] sm:$0xf] %v145
  %162 = vst [vmem:[%s3 + $0x30] sm:$0xf] %v146
  %163 = vst [vmem:[%s3 + $0x34] sm:$0xf] %v147
  %164 = vst [vmem:[%s3 + $0x38] sm:$0xf] %v148
  %165 = vst [vmem:[%s3 + $0x3c] sm:$0xf] %v149
  // Predicated region
  $region14: #{discriminator_forward.12} parent=0 // pred_check
    _
  $region15: #{discriminator_forward.12} parent=0 // pred_check_branch
    %167 = sbr.rel (0) target = $region17
  $region16: #{discriminator_forward.12} parent=0 // pred_region
    _
  $region17: #{discriminator_forward.12} parent=0 // pred_fallthru
    _
  // Predicated region
  $region18: #{discriminator_forward.12} parent=0 // pred_check
    _
  $region19: #{discriminator_forward.12} parent=0 // pred_check_branch
    %169 = sbr.rel (0) target = $region21
  $region20: #{discriminator_forward.12} parent=0 // pred_region
    _
  $region21: #{discriminator_forward.12} parent=0 // pred_fallthru
    _

// kernel: discriminator_forward.13
$region0: #{discriminator_forward.13}
  #allocation0 [shape = 'u32[]', space=smem, size = 0x4, offset = 0x4, fixed_abs, tag = 'smem constant byte address 0x4 - core index']
  #allocation1 [shape = 'u32[72,128]{1,0:T(1,128)}', space=vmem, size = 0x9000, scoped, tag = 'internal scratch']
  %s0 = inlined_call_operand.vmem [shape: bf16[32,512], index: 0, kind: input, shape index: {}]
  %s1 = inlined_call_operand.vmem [shape: bf16[512,128], index: 1, kind: input, shape index: {}]
  %s2 = inlined_call_operand.vmem [shape: bf16[32,128], index: 2, kind: output, shape index: {0}]
  %s3 = inlined_call_operand.vmem [shape: f32[8,128], index: 3, kind: output, shape index: {1}]
  %4 = xla_tuple %s2, %s3
  %s5 = sld [smem:[#allocation0]]
  $region26: #{discriminator_forward.13} parent=0
    _
  %s7 = ssub.s32 1, %s5
  %s8 = scalar_select 0, %s7, %s5
  // Predicated region
  $region2: #{discriminator_forward.13} parent=0 // pred_check
    _
  $region3: #{discriminator_forward.13} parent=0 // pred_check_branch
    %10 = sbr.rel (0) target = $region5
  $region4: #{discriminator_forward.13} parent=0 // pred_region
    _
  $region5: #{discriminator_forward.13} parent=0 // pred_fallthru
    _
  // Predicated region
  $region6: #{discriminator_forward.13} parent=0 // pred_check
    _
  $region7: #{discriminator_forward.13} parent=0 // pred_check_branch
    %12 = sbr.rel (0) target = $region9
  $region8: #{discriminator_forward.13} parent=0 // pred_region
    _
  $region9: #{discriminator_forward.13} parent=0 // pred_fallthru
    _
  %v13 = vld [vmem:[%s0] sm:$0xff]
  %v14 = vld [vmem:[%s0 + $0x8] sm:$0xff]
  %v15 = vld [vmem:[%s0 + $0x10] sm:$0xff]
  %v16 = vld [vmem:[%s0 + $0x18] sm:$0xff]
  %v17 = vld [vmem:[%s0 + $0x20] sm:$0xff]
  %v18 = vld [vmem:[%s0 + $0x28] sm:$0xff]
  %v19 = vld [vmem:[%s0 + $0x30] sm:$0xff]
  %v20 = vld [vmem:[%s0 + $0x38] sm:$0xff]
  %v21 = vld [vmem:[%s1] sm:$0xf]
  %v22 = vld [vmem:[%s1 + $0x4] sm:$0xf]
  %v23 = vld [vmem:[%s1 + $0x8] sm:$0xf]
  %v24 = vld [vmem:[%s1 + $0xc] sm:$0xf]
  %v25 = vld [vmem:[%s1 + $0x10] sm:$0xf]
  %v26 = vld [vmem:[%s1 + $0x14] sm:$0xf]
  %v27 = vld [vmem:[%s1 + $0x18] sm:$0xf]
  %v28 = vld [vmem:[%s1 + $0x1c] sm:$0xf]
  %v29 = vld [vmem:[%s1 + $0x20] sm:$0xf]
  %v30 = vld [vmem:[%s1 + $0x24] sm:$0xf]
  %v31 = vld [vmem:[%s1 + $0x28] sm:$0xf]
  %v32 = vld [vmem:[%s1 + $0x2c] sm:$0xf]
  %v33 = vld [vmem:[%s1 + $0x30] sm:$0xf]
  %v34 = vld [vmem:[%s1 + $0x34] sm:$0xf]
  %v35 = vld [vmem:[%s1 + $0x38] sm:$0xf]
  %v36 = vld [vmem:[%s1 + $0x3c] sm:$0xf]
  %v37 = vld [vmem:[%s1 + $0x40] sm:$0xf]
  %v38 = vld [vmem:[%s1 + $0x44] sm:$0xf]
  %v39 = vld [vmem:[%s1 + $0x48] sm:$0xf]
  %v40 = vld [vmem:[%s1 + $0x4c] sm:$0xf]
  %v41 = vld [vmem:[%s1 + $0x50] sm:$0xf]
  %v42 = vld [vmem:[%s1 + $0x54] sm:$0xf]
  %v43 = vld [vmem:[%s1 + $0x58] sm:$0xf]
  %v44 = vld [vmem:[%s1 + $0x5c] sm:$0xf]
  %v45 = vld [vmem:[%s1 + $0x60] sm:$0xf]
  %v46 = vld [vmem:[%s1 + $0x64] sm:$0xf]
  %v47 = vld [vmem:[%s1 + $0x68] sm:$0xf]
  %v48 = vld [vmem:[%s1 + $0x6c] sm:$0xf]
  %v49 = vld [vmem:[%s1 + $0x70] sm:$0xf]
  %v50 = vld [vmem:[%s1 + $0x74] sm:$0xf]
  %v51 = vld [vmem:[%s1 + $0x78] sm:$0xf]
  %v52 = vld [vmem:[%s1 + $0x7c] sm:$0xf]
  %v53 = vld [vmem:[%s1 + $0x80] sm:$0xf]
  %v54 = vld [vmem:[%s1 + $0x84] sm:$0xf]
  %v55 = vld [vmem:[%s1 + $0x88] sm:$0xf]
  %v56 = vld [vmem:[%s1 + $0x8c] sm:$0xf]
  %v57 = vld [vmem:[%s1 + $0x90] sm:$0xf]
  %v58 = vld [vmem:[%s1 + $0x94] sm:$0xf]
  %v59 = vld [vmem:[%s1 + $0x98] sm:$0xf]
  %v60 = vld [vmem:[%s1 + $0x9c] sm:$0xf]
  %v61 = vld [vmem:[%s1 + $0xa0] sm:$0xf]
  %v62 = vld [vmem:[%s1 + $0xa4] sm:$0xf]
  %v63 = vld [vmem:[%s1 + $0xa8] sm:$0xf]
  %v64 = vld [vmem:[%s1 + $0xac] sm:$0xf]
  %v65 = vld [vmem:[%s1 + $0xb0] sm:$0xf]
  %v66 = vld [vmem:[%s1 + $0xb4] sm:$0xf]
  %v67 = vld [vmem:[%s1 + $0xb8] sm:$0xf]
  %v68 = vld [vmem:[%s1 + $0xbc] sm:$0xf]
  %v69 = vld [vmem:[%s1 + $0xc0] sm:$0xf]
  %v70 = vld [vmem:[%s1 + $0xc4] sm:$0xf]
  %v71 = vld [vmem:[%s1 + $0xc8] sm:$0xf]
  %v72 = vld [vmem:[%s1 + $0xcc] sm:$0xf]
  %v73 = vld [vmem:[%s1 + $0xd0] sm:$0xf]
  %v74 = vld [vmem:[%s1 + $0xd4] sm:$0xf]
  %v75 = vld [vmem:[%s1 + $0xd8] sm:$0xf]
  %v76 = vld [vmem:[%s1 + $0xdc] sm:$0xf]
  %v77 = vld [vmem:[%s1 + $0xe0] sm:$0xf]
  %v78 = vld [vmem:[%s1 + $0xe4] sm:$0xf]
  %v79 = vld [vmem:[%s1 + $0xe8] sm:$0xf]
  %v80 = vld [vmem:[%s1 + $0xec] sm:$0xf]
  %v81 = vld [vmem:[%s1 + $0xf0] sm:$0xf]
  %v82 = vld [vmem:[%s1 + $0xf4] sm:$0xf]
  %v83 = vld [vmem:[%s1 + $0xf8] sm:$0xf]
  %v84 = vld [vmem:[%s1 + $0xfc] sm:$0xf]
  %v93 = vunpack.c.l.b16 %v13
  %v94 = vunpack.c.h.b16 %v13
  %v95 = vunpack.c.l.b16 %v14
  %v96 = vunpack.c.h.b16 %v14
  %v97 = vunpack.c.l.b16 %v15
  %v98 = vunpack.c.h.b16 %v15
  %v99 = vunpack.c.l.b16 %v16
  %v100 = vunpack.c.h.b16 %v16
  %v101 = vunpack.c.l.b16 %v17
  %v102 = vunpack.c.h.b16 %v17
  %v103 = vunpack.c.l.b16 %v18
  %v104 = vunpack.c.h.b16 %v18
  %v105 = vunpack.c.l.b16 %v19
  %v106 = vunpack.c.h.b16 %v19
  %v107 = vunpack.c.l.b16 %v20
  %v108 = vunpack.c.h.b16 %v20
  %v109 = vpack.c.b16 %v97, %v93
  %v110 = vpack.c.b16 %v98, %v94
  %v111 = vpack.c.b16 %v99, %v95
  %v112 = vpack.c.b16 %v100, %v96
  %v113 = vpack.c.b16 %v105, %v101
  %v114 = vpack.c.b16 %v106, %v102
  %v115 = vpack.c.b16 %v107, %v103
  %v116 = vpack.c.b16 %v108, %v104
  %v189 = vunpack.c.l.b16 %v21
  %v190 = vunpack.c.l.b16 %v22
  %v191 = vunpack.c.l.b16 %v23
  %v192 = vunpack.c.l.b16 %v24
  %v193 = vunpack.c.l.b16 %v25
  %v194 = vunpack.c.l.b16 %v26
  %v195 = vunpack.c.l.b16 %v27
  %v196 = vunpack.c.l.b16 %v28
  %v197 = vunpack.c.l.b16 %v29
  %v198 = vunpack.c.l.b16 %v30
  %v199 = vunpack.c.l.b16 %v31
  %v200 = vunpack.c.l.b16 %v32
  %v201 = vunpack.c.l.b16 %v33
  %v202 = vunpack.c.l.b16 %v34
  %v203 = vunpack.c.l.b16 %v35
  %v204 = vunpack.c.l.b16 %v36
  %v205 = vunpack.c.l.b16 %v37
  %v206 = vunpack.c.l.b16 %v38
  %v207 = vunpack.c.l.b16 %v39
  %v208 = vunpack.c.l.b16 %v40
  %v209 = vunpack.c.l.b16 %v41
  %v210 = vunpack.c.l.b16 %v42
  %v211 = vunpack.c.l.b16 %v43
  %v212 = vunpack.c.l.b16 %v44
  %v213 = vunpack.c.l.b16 %v45
  %v214 = vunpack.c.l.b16 %v46
  %v215 = vunpack.c.l.b16 %v47
  %v216 = vunpack.c.l.b16 %v48
  %v217 = vunpack.c.l.b16 %v49
  %v218 = vunpack.c.l.b16 %v50
  %v219 = vunpack.c.l.b16 %v51
  %v220 = vunpack.c.l.b16 %v52
  %v221 = vunpack.c.l.b16 %v53
  %v222 = vunpack.c.l.b16 %v54
  %v223 = vunpack.c.l.b16 %v55
  %v224 = vunpack.c.l.b16 %v56
  %v225 = vunpack.c.l.b16 %v57
  %v226 = vunpack.c.l.b16 %v58
  %v227 = vunpack.c.l.b16 %v59
  %v228 = vunpack.c.l.b16 %v60
  %v229 = vunpack.c.l.b16 %v61
  %v230 = vunpack.c.l.b16 %v62
  %v231 = vunpack.c.l.b16 %v63
  %v232 = vunpack.c.l.b16 %v64
  %v233 = vunpack.c.l.b16 %v65
  %v234 = vunpack.c.l.b16 %v66
  %v235 = vunpack.c.l.b16 %v67
  %v236 = vunpack.c.l.b16 %v68
  %v237 = vunpack.c.l.b16 %v69
  %v238 = vunpack.c.l.b16 %v70
  %v239 = vunpack.c.l.b16 %v71
  %v240 = vunpack.c.l.b16 %v72
  %v241 = vunpack.c.l.b16 %v73
  %v242 = vunpack.c.l.b16 %v74
  %v243 = vunpack.c.l.b16 %v75
  %v244 = vunpack.c.l.b16 %v76
  %v245 = vunpack.c.l.b16 %v77
  %v246 = vunpack.c.l.b16 %v78
  %v247 = vunpack.c.l.b16 %v79
  %v248 = vunpack.c.l.b16 %v80
  %v249 = vunpack.c.l.b16 %v81
  %v250 = vunpack.c.l.b16 %v82
  %v251 = vunpack.c.l.b16 %v83
  %v252 = vunpack.c.l.b16 %v84
  %v253 = vpack.c.b16 %v190, %v189
  %v254 = vpack.c.b16 %v192, %v191
  %v255 = vpack.c.b16 %v194, %v193
  %v256 = vpack.c.b16 %v196, %v195
  %v257 = vpack.c.b16 %v198, %v197
  %v258 = vpack.c.b16 %v200, %v199
  %v259 = vpack.c.b16 %v202, %v201
  %v260 = vpack.c.b16 %v204, %v203
  %v261 = vpack.c.b16 %v206, %v205
  %v262 = vpack.c.b16 %v208, %v207
  %v263 = vpack.c.b16 %v210, %v209
  %v264 = vpack.c.b16 %v212, %v211
  %v265 = vpack.c.b16 %v214, %v213
  %v266 = vpack.c.b16 %v216, %v215
  %v267 = vpack.c.b16 %v218, %v217
  %v268 = vpack.c.b16 %v220, %v219
  %v269 = vpack.c.b16 %v222, %v221
  %v270 = vpack.c.b16 %v224, %v223
  %v271 = vpack.c.b16 %v226, %v225
  %v272 = vpack.c.b16 %v228, %v227
  %v273 = vpack.c.b16 %v230, %v229
  %v274 = vpack.c.b16 %v232, %v231
  %v275 = vpack.c.b16 %v234, %v233
  %v276 = vpack.c.b16 %v236, %v235
  %v277 = vpack.c.b16 %v238, %v237
  %v278 = vpack.c.b16 %v240, %v239
  %v279 = vpack.c.b16 %v242, %v241
  %v280 = vpack.c.b16 %v244, %v243
  %v281 = vpack.c.b16 %v246, %v245
  %v282 = vpack.c.b16 %v248, %v247
  %v283 = vpack.c.b16 %v250, %v249
  %v284 = vpack.c.b16 %v252, %v251
  %317 = vmatpush.bf16.msra.mxu0 %v260
  %318 = vmatpush.bf16.msra.mxu0 %v259
  %319 = vmatpush.bf16.msra.mxu0 %v258
  %320 = vmatpush.bf16.msra.mxu0 %v257
  %321 = vmatpush.bf16.msra.mxu0 %v256
  %322 = vmatpush.bf16.msra.mxu0 %v255
  %323 = vmatpush.bf16.msra.mxu0 %v254
  %324 = vmatpush.bf16.msra.mxu0 %v253
  %325 = vmatmul.bf16.gmra.mxu0 %v109
  %v326 = vpop.f32.mrf.mxu0
  %v327 = vadd.f32 0.0, %v326
  %v328 = vpop.f32.mrf.mxu0
  %v329 = vadd.f32 0.0, %v328
  %330 = vmatmul.bf16.gmra.mxu0 %v113
  %v331 = vpop.f32.mrf.mxu0
  %v332 = vadd.f32 0.0, %v331
  %v333 = vpop.f32.mrf.mxu0
  %v334 = vadd.f32 0.0, %v333
  %335 = vdwg.mxu0
  %336 = vmatpush.bf16.msra.mxu0 %v268
  %337 = vmatpush.bf16.msra.mxu0 %v267
  %338 = vmatpush.bf16.msra.mxu0 %v266
  %339 = vmatpush.bf16.msra.mxu0 %v265
  %340 = vmatpush.bf16.msra.mxu0 %v264
  %341 = vmatpush.bf16.msra.mxu0 %v263
  %342 = vmatpush.bf16.msra.mxu0 %v262
  %343 = vmatpush.bf16.msra.mxu0 %v261
  %344 = vmatmul.bf16.gmra.mxu0 %v110
  %v345 = vpop.f32.mrf.mxu0
  %v346 = vadd.f32 %v327, %v345
  %v347 = vpop.f32.mrf.mxu0
  %v348 = vadd.f32 %v329, %v347
  %349 = vmatmul.bf16.gmra.mxu0 %v114
  %v350 = vpop.f32.mrf.mxu0
  %v351 = vadd.f32 %v332, %v350
  %v352 = vpop.f32.mrf.mxu0
  %v353 = vadd.f32 %v334, %v352
  %354 = vdwg.mxu0
  %355 = vmatpush.bf16.msra.mxu0 %v276
  %356 = vmatpush.bf16.msra.mxu0 %v275
  %357 = vmatpush.bf16.msra.mxu0 %v274
  %358 = vmatpush.bf16.msra.mxu0 %v273
  %359 = vmatpush.bf16.msra.mxu0 %v272
  %360 = vmatpush.bf16.msra.mxu0 %v271
  %361 = vmatpush.bf16.msra.mxu0 %v270
  %362 = vmatpush.bf16.msra.mxu0 %v269
  %363 = vmatmul.bf16.gmra.mxu0 %v111
  %v364 = vpop.f32.mrf.mxu0
  %v365 = vadd.f32 %v346, %v364
  %v366 = vpop.f32.mrf.mxu0
  %v367 = vadd.f32 %v348, %v366
  %368 = vmatmul.bf16.gmra.mxu0 %v115
  %v369 = vpop.f32.mrf.mxu0
  %v370 = vadd.f32 %v351, %v369
  %v371 = vpop.f32.mrf.mxu0
  %v372 = vadd.f32 %v353, %v371
  %373 = vdwg.mxu0
  %374 = vmatpush.bf16.msra.mxu0 %v284
  %375 = vmatpush.bf16.msra.mxu0 %v283
  %376 = vmatpush.bf16.msra.mxu0 %v282
  %377 = vmatpush.bf16.msra.mxu0 %v281
  %378 = vmatpush.bf16.msra.mxu0 %v280
  %379 = vmatpush.bf16.msra.mxu0 %v279
  %380 = vmatpush.bf16.msra.mxu0 %v278
  %381 = vmatpush.bf16.msra.mxu0 %v277
  %382 = vmatmul.bf16.gmra.mxu0 %v112
  %v383 = vpop.f32.mrf.mxu0
  %v384 = vadd.f32 %v365, %v383
  %v385 = vpop.f32.mrf.mxu0
  %v386 = vadd.f32 %v367, %v385
  %387 = vmatmul.bf16.gmra.mxu0 %v116
  %v388 = vpop.f32.mrf.mxu0
  %v389 = vadd.f32 %v370, %v388
  %v390 = vpop.f32.mrf.mxu0
  %v391 = vadd.f32 %v372, %v390
  %392 = vdwg.mxu0
  %v393 = vpack.c.bf16 %v384, %v384
  %v394 = vpack.c.bf16 %v386, %v386
  %v395 = vpack.c.bf16 %v389, %v389
  %v396 = vpack.c.bf16 %v391, %v391
  %397 = vst [vmem:[%s2] sm:$0xf] %v393
  %398 = vst [vmem:[%s2 + $0x4] sm:$0xf] %v394
  %399 = vst [vmem:[%s2 + $0x8] sm:$0xf] %v395
  %400 = vst [vmem:[%s2 + $0xc] sm:$0xf] %v396
  %v401 = vadd.f32 %v384, %v386
  %v402 = vadd.f32 %v401, %v389
  %v403 = vadd.f32 %v402, %v391
  %v404 = vrot.slane %v403, 4
  %v405 = vadd.f32 %v403, %v404
  %v406 = vrot.slane %v405, 2
  %v407 = vadd.f32 %v405, %v406
  %v408 = vrot.slane %v407, 1
  %v409 = vadd.f32 %v407, %v408
  %410 = vst [vmem:[%s3] sm:$0x1] %v409
  %v411 = vmul.f32 %v384, %v384
  %v412 = vmul.f32 %v386, %v386
  %v413 = vmul.f32 %v389, %v389
  %v414 = vmul.f32 %v391, %v391
  %v415 = vadd.f32 %v411, %v412
  %v416 = vadd.f32 %v415, %v413
  %v417 = vadd.f32 %v416, %v414
  %v418 = vrot.slane %v417, 4
  %v419 = vadd.f32 %v417, %v418
  %v420 = vrot.slane %v419, 2
  %v421 = vadd.f32 %v419, %v420
  %v422 = vrot.slane %v421, 1
  %v423 = vadd.f32 %v421, %v422
  %424 = vst [vmem:[%s3 + $0x1] sm:$0x1] %v423
  // Predicated region
  $region10: #{discriminator_forward.13} parent=0 // pred_check
    _
  $region11: #{discriminator_forward.13} parent=0 // pred_check_branch
    %426 = sbr.rel (0) target = $region13
  $region12: #{discriminator_forward.13} parent=0 // pred_region
    _
  $region13: #{discriminator_forward.13} parent=0 // pred_fallthru
    _
  // Predicated region
  $region14: #{discriminator_forward.13} parent=0 // pred_check
    _
  $region15: #{discriminator_forward.13} parent=0 // pred_check_branch
    %428 = sbr.rel (0) target = $region17
  $region16: #{discriminator_forward.13} parent=0 // pred_region
    _
  $region17: #{discriminator_forward.13} parent=0 // pred_fallthru
    _
  // Predicated region
  $region18: #{discriminator_forward.13} parent=0 // pred_check
    _
  $region19: #{discriminator_forward.13} parent=0 // pred_check_branch
    %430 = sbr.rel (0) target = $region21
  $region20: #{discriminator_forward.13} parent=0 // pred_region
    _
  $region21: #{discriminator_forward.13} parent=0 // pred_fallthru
    _
  // Predicated region
  $region22: #{discriminator_forward.13} parent=0 // pred_check
    _
  $region23: #{discriminator_forward.13} parent=0 // pred_check_branch
    %432 = sbr.rel (0) target = $region25
  $region24: #{discriminator_forward.13} parent=0 // pred_region
    _
  $region25: #{discriminator_forward.13} parent=0 // pred_fallthru
    _

// kernel: discriminator_forward.14
$region0: #{discriminator_forward.14}
  #allocation0 [shape = 'u32[]', space=smem, size = 0x4, offset = 0x4, fixed_abs, tag = 'smem constant byte address 0x4 - core index']
  #allocation1 [shape = 'u32[72,128]{1,0:T(1,128)}', space=vmem, size = 0x9000, scoped, tag = 'internal scratch']
  %s0 = inlined_call_operand.vmem [shape: bf16[32,128], index: 0, kind: input, shape index: {}]
  %s1 = inlined_call_operand.vmem [shape: f32[1,128], index: 1, kind: input, shape index: {}]
  %s2 = inlined_call_operand.vmem [shape: f32[1,128], index: 2, kind: input, shape index: {}]
  %s3 = inlined_call_operand.vmem [shape: bf16[32,128], index: 3, kind: output, shape index: {}]
  %s4 = sld [smem:[#allocation0]]
  $region22: #{discriminator_forward.14} parent=0
    _
  %s6 = ssub.s32 1, %s4
  %s7 = scalar_select 0, %s6, %s4
  // Predicated region
  $region2: #{discriminator_forward.14} parent=0 // pred_check
    _
  $region3: #{discriminator_forward.14} parent=0 // pred_check_branch
    %9 = sbr.rel (0) target = $region5
  $region4: #{discriminator_forward.14} parent=0 // pred_region
    _
  $region5: #{discriminator_forward.14} parent=0 // pred_fallthru
    _
  // Predicated region
  $region6: #{discriminator_forward.14} parent=0 // pred_check
    _
  $region7: #{discriminator_forward.14} parent=0 // pred_check_branch
    %11 = sbr.rel (0) target = $region9
  $region8: #{discriminator_forward.14} parent=0 // pred_region
    _
  $region9: #{discriminator_forward.14} parent=0 // pred_fallthru
    _
  // Predicated region
  $region10: #{discriminator_forward.14} parent=0 // pred_check
    _
  $region11: #{discriminator_forward.14} parent=0 // pred_check_branch
    %13 = sbr.rel (0) target = $region13
  $region12: #{discriminator_forward.14} parent=0 // pred_region
    _
  $region13: #{discriminator_forward.14} parent=0 // pred_fallthru
    _
  %v14 = vld [vmem:[%s0] sm:$0xf]
  %v15 = vld [vmem:[%s0 + $0x4] sm:$0xf]
  %v16 = vld [vmem:[%s0 + $0x8] sm:$0xf]
  %v17 = vld [vmem:[%s0 + $0xc] sm:$0xf]
  %v18 = vunpack.c.l.bf16 %v14
  %v19 = vunpack.c.l.bf16 %v15
  %v20 = vunpack.c.l.bf16 %v16
  %v21 = vunpack.c.l.bf16 %v17
  %v22 = vld [vmem:[%s1] sm:$0x1]
  %v24 = vperm.slane %v22, 0
  %v26 = vmul.f32 %v18, %v24
  %v27 = vmul.f32 %v19, %v24
  %v28 = vmul.f32 %v20, %v24
  %v29 = vmul.f32 %v21, %v24
  %v30 = vld [vmem:[%s2] sm:$0x1]
  %v32 = vperm.slane %v30, 0
  %v34 = vadd.f32 %v26, %v32
  %v35 = vadd.f32 %v27, %v32
  %v36 = vadd.f32 %v28, %v32
  %v37 = vadd.f32 %v29, %v32
  %vm38 = vcmp.ge.f32.partialorder %v34, 0.0
  %vm39 = vcmp.ge.f32.partialorder %v35, 0.0
  %vm40 = vcmp.ge.f32.partialorder %v36, 0.0
  %vm41 = vcmp.ge.f32.partialorder %v37, 0.0
  %v42 = vmul.f32 %v34, 0.2
  %v43 = vmul.f32 %v35, 0.2
  %v44 = vmul.f32 %v36, 0.2
  %v45 = vmul.f32 %v37, 0.2
  %v46 = vsel %vm38, %v34, %v42
  %v47 = vsel %vm39, %v35, %v43
  %v48 = vsel %vm40, %v36, %v44
  %v49 = vsel %vm41, %v37, %v45
  %v50 = vpack.c.bf16 %v46, %v46
  %v51 = vpack.c.bf16 %v47, %v47
  %v52 = vpack.c.bf16 %v48, %v48
  %v53 = vpack.c.bf16 %v49, %v49
  %54 = vst [vmem:[%s3] sm:$0xf] %v50
  %55 = vst [vmem:[%s3 + $0x4] sm:$0xf] %v51
  %56 = vst [vmem:[%s3 + $0x8] sm:$0xf] %v52
  %57 = vst [vmem:[%s3 + $0xc] sm:$0xf] %v53
  // Predicated region
  $region14: #{discriminator_forward.14} parent=0 // pred_check
    _
  $region15: #{discriminator_forward.14} parent=0 // pred_check_branch
    %59 = sbr.rel (0) target = $region17
  $region16: #{discriminator_forward.14} parent=0 // pred_region
    _
  $region17: #{discriminator_forward.14} parent=0 // pred_fallthru
    _
  // Predicated region
  $region18: #{discriminator_forward.14} parent=0 // pred_check
    _
  $region19: #{discriminator_forward.14} parent=0 // pred_check_branch
    %61 = sbr.rel (0) target = $region21
  $region20: #{discriminator_forward.14} parent=0 // pred_region
    _
  $region21: #{discriminator_forward.14} parent=0 // pred_fallthru
    _

// kernel: discriminator_forward.15
$region0: #{discriminator_forward.15}
  #allocation0 [shape = 'u32[]', space=smem, size = 0x4, offset = 0x4, fixed_abs, tag = 'smem constant byte address 0x4 - core index']
  #allocation1 [shape = 'u32[72,128]{1,0:T(1,128)}', space=vmem, size = 0x9000, scoped, tag = 'internal scratch']
  %s0 = inlined_call_operand.vmem [shape: bf16[8,1024], index: 0, kind: input, shape index: {}]
  %s1 = inlined_call_operand.vmem [shape: bf16[1024,128], index: 1, kind: input, shape index: {}]
  %s2 = inlined_call_operand.vmem [shape: f32[8,128], index: 2, kind: output, shape index: {}]
  %s3 = sld [smem:[#allocation0]]
  $region18: #{discriminator_forward.15} parent=0
    _
  %s5 = ssub.s32 1, %s3
  %s6 = scalar_select 0, %s5, %s3
  // Predicated region
  $region2: #{discriminator_forward.15} parent=0 // pred_check
    _
  $region3: #{discriminator_forward.15} parent=0 // pred_check_branch
    %8 = sbr.rel (0) target = $region5
  $region4: #{discriminator_forward.15} parent=0 // pred_region
    _
  $region5: #{discriminator_forward.15} parent=0 // pred_fallthru
    _
  // Predicated region
  $region6: #{discriminator_forward.15} parent=0 // pred_check
    _
  $region7: #{discriminator_forward.15} parent=0 // pred_check_branch
    %10 = sbr.rel (0) target = $region9
  $region8: #{discriminator_forward.15} parent=0 // pred_region
    _
  $region9: #{discriminator_forward.15} parent=0 // pred_fallthru
    _
  %v11 = vld [vmem:[%s0] sm:$0xff]
  %v12 = vld [vmem:[%s0 + $0x8] sm:$0xff]
  %v13 = vld [vmem:[%s0 + $0x10] sm:$0xff]
  %v14 = vld [vmem:[%s0 + $0x18] sm:$0xff]
  %v15 = vld [vmem:[%s1] sm:$0xf]
  %v16 = vld [vmem:[%s1 + $0x4] sm:$0xf]
  %v17 = vld [vmem:[%s1 + $0x8] sm:$0xf]
  %v18 = vld [vmem:[%s1 + $0xc] sm:$0xf]
  %v19 = vld [vmem:[%s1 + $0x10] sm:$0xf]
  %v20 = vld [vmem:[%s1 + $0x14] sm:$0xf]
  %v21 = vld [vmem:[%s1 + $0x18] sm:$0xf]
  %v22 = vld [vmem:[%s1 + $0x1c] sm:$0xf]
  %v23 = vld [vmem:[%s1 + $0x20] sm:$0xf]
  %v24 = vld [vmem:[%s1 + $0x24] sm:$0xf]
  %v25 = vld [vmem:[%s1 + $0x28] sm:$0xf]
  %v26 = vld [vmem:[%s1 + $0x2c] sm:$0xf]
  %v27 = vld [vmem:[%s1 + $0x30] sm:$0xf]
  %v28 = vld [vmem:[%s1 + $0x34] sm:$0xf]
  %v29 = vld [vmem:[%s1 + $0x38] sm:$0xf]
  %v30 = vld [vmem:[%s1 + $0x3c] sm:$0xf]
  %v31 = vld [vmem:[%s1 + $0x40] sm:$0xf]
  %v32 = vld [vmem:[%s1 + $0x44] sm:$0xf]
  %v33 = vld [vmem:[%s1 + $0x48] sm:$0xf]
  %v34 = vld [vmem:[%s1 + $0x4c] sm:$0xf]
  %v35 = vld [vmem:[%s1 + $0x50] sm:$0xf]
  %v36 = vld [vmem:[%s1 + $0x54] sm:$0xf]
  %v37 = vld [vmem:[%s1 + $0x58] sm:$0xf]
  %v38 = vld [vmem:[%s1 + $0x5c] sm:$0xf]
  %v39 = vld [vmem:[%s1 + $0x60] sm:$0xf]
  %v40 = vld [vmem:[%s1 + $0x64] sm:$0xf]
  %v41 = vld [vmem:[%s1 + $0x68] sm:$0xf]
  %v42 = vld [vmem:[%s1 + $0x6c] sm:$0xf]
  %v43 = vld [vmem:[%s1 + $0x70] sm:$0xf]
  %v44 = vld [vmem:[%s1 + $0x74] sm:$0xf]
  %v45 = vld [vmem:[%s1 + $0x78] sm:$0xf]
  %v46 = vld [vmem:[%s1 + $0x7c] sm:$0xf]
  %v47 = vld [vmem:[%s1 + $0x80] sm:$0xf]
  %v48 = vld [vmem:[%s1 + $0x84] sm:$0xf]
  %v49 = vld [vmem:[%s1 + $0x88] sm:$0xf]
  %v50 = vld [vmem:[%s1 + $0x8c] sm:$0xf]
  %v51 = vld [vmem:[%s1 + $0x90] sm:$0xf]
  %v52 = vld [vmem:[%s1 + $0x94] sm:$0xf]
  %v53 = vld [vmem:[%s1 + $0x98] sm:$0xf]
  %v54 = vld [vmem:[%s1 + $0x9c] sm:$0xf]
  %v55 = vld [vmem:[%s1 + $0xa0] sm:$0xf]
  %v56 = vld [vmem:[%s1 + $0xa4] sm:$0xf]
  %v57 = vld [vmem:[%s1 + $0xa8] sm:$0xf]
  %v58 = vld [vmem:[%s1 + $0xac] sm:$0xf]
  %v59 = vld [vmem:[%s1 + $0xb0] sm:$0xf]
  %v60 = vld [vmem:[%s1 + $0xb4] sm:$0xf]
  %v61 = vld [vmem:[%s1 + $0xb8] sm:$0xf]
  %v62 = vld [vmem:[%s1 + $0xbc] sm:$0xf]
  %v63 = vld [vmem:[%s1 + $0xc0] sm:$0xf]
  %v64 = vld [vmem:[%s1 + $0xc4] sm:$0xf]
  %v65 = vld [vmem:[%s1 + $0xc8] sm:$0xf]
  %v66 = vld [vmem:[%s1 + $0xcc] sm:$0xf]
  %v67 = vld [vmem:[%s1 + $0xd0] sm:$0xf]
  %v68 = vld [vmem:[%s1 + $0xd4] sm:$0xf]
  %v69 = vld [vmem:[%s1 + $0xd8] sm:$0xf]
  %v70 = vld [vmem:[%s1 + $0xdc] sm:$0xf]
  %v71 = vld [vmem:[%s1 + $0xe0] sm:$0xf]
  %v72 = vld [vmem:[%s1 + $0xe4] sm:$0xf]
  %v73 = vld [vmem:[%s1 + $0xe8] sm:$0xf]
  %v74 = vld [vmem:[%s1 + $0xec] sm:$0xf]
  %v75 = vld [vmem:[%s1 + $0xf0] sm:$0xf]
  %v76 = vld [vmem:[%s1 + $0xf4] sm:$0xf]
  %v77 = vld [vmem:[%s1 + $0xf8] sm:$0xf]
  %v78 = vld [vmem:[%s1 + $0xfc] sm:$0xf]
  %v79 = vld [vmem:[%s1 + $0x100] sm:$0xf]
  %v80 = vld [vmem:[%s1 + $0x104] sm:$0xf]
  %v81 = vld [vmem:[%s1 + $0x108] sm:$0xf]
  %v82 = vld [vmem:[%s1 + $0x10c] sm:$0xf]
  %v83 = vld [vmem:[%s1 + $0x110] sm:$0xf]
  %v84 = vld [vmem:[%s1 + $0x114] sm:$0xf]
  %v85 = vld [vmem:[%s1 + $0x118] sm:$0xf]
  %v86 = vld [vmem:[%s1 + $0x11c] sm:$0xf]
  %v87 = vld [vmem:[%s1 + $0x120] sm:$0xf]
  %v88 = vld [vmem:[%s1 + $0x124] sm:$0xf]
  %v89 = vld [vmem:[%s1 + $0x128] sm:$0xf]
  %v90 = vld [vmem:[%s1 + $0x12c] sm:$0xf]
  %v91 = vld [vmem:[%s1 + $0x130] sm:$0xf]
  %v92 = vld [vmem:[%s1 + $0x134] sm:$0xf]
  %v93 = vld [vmem:[%s1 + $0x138] sm:$0xf]
  %v94 = vld [vmem:[%s1 + $0x13c] sm:$0xf]
  %v95 = vld [vmem:[%s1 + $0x140] sm:$0xf]
  %v96 = vld [vmem:[%s1 + $0x144] sm:$0xf]
  %v97 = vld [vmem:[%s1 + $0x148] sm:$0xf]
  %v98 = vld [vmem:[%s1 + $0x14c] sm:$0xf]
  %v99 = vld [vmem:[%s1 + $0x150] sm:$0xf]
  %v100 = vld [vmem:[%s1 + $0x154] sm:$0xf]
  %v101 = vld [vmem:[%s1 + $0x158] sm:$0xf]
  %v102 = vld [vmem:[%s1 + $0x15c] sm:$0xf]
  %v103 = vld [vmem:[%s1 + $0x160] sm:$0xf]
  %v104 = vld [vmem:[%s1 + $0x164] sm:$0xf]
  %v105 = vld [vmem:[%s1 + $0x168] sm:$0xf]
  %v106 = vld [vmem:[%s1 + $0x16c] sm:$0xf]
  %v107 = vld [vmem:[%s1 + $0x170] sm:$0xf]
  %v108 = vld [vmem:[%s1 + $0x174] sm:$0xf]
  %v109 = vld [vmem:[%s1 + $0x178] sm:$0xf]
  %v110 = vld [vmem:[%s1 + $0x17c] sm:$0xf]
  %v111 = vld [vmem:[%s1 + $0x180] sm:$0xf]
  %v112 = vld [vmem:[%s1 + $0x184] sm:$0xf]
  %v113 = vld [vmem:[%s1 + $0x188] sm:$0xf]
  %v114 = vld [vmem:[%s1 + $0x18c] sm:$0xf]
  %v115 = vld [vmem:[%s1 + $0x190] sm:$0xf]
  %v116 = vld [vmem:[%s1 + $0x194] sm:$0xf]
  %v117 = vld [vmem:[%s1 + $0x198] sm:$0xf]
  %v118 = vld [vmem:[%s1 + $0x19c] sm:$0xf]
  %v119 = vld [vmem:[%s1 + $0x1a0] sm:$0xf]
  %v120 = vld [vmem:[%s1 + $0x1a4] sm:$0xf]
  %v121 = vld [vmem:[%s1 + $0x1a8] sm:$0xf]
  %v122 = vld [vmem:[%s1 + $0x1ac] sm:$0xf]
  %v123 = vld [vmem:[%s1 + $0x1b0] sm:$0xf]
  %v124 = vld [vmem:[%s1 + $0x1b4] sm:$0xf]
  %v125 = vld [vmem:[%s1 + $0x1b8] sm:$0xf]
  %v126 = vld [vmem:[%s1 + $0x1bc] sm:$0xf]
  %v127 = vld [vmem:[%s1 + $0x1c0] sm:$0xf]
  %v128 = vld [vmem:[%s1 + $0x1c4] sm:$0xf]
  %v129 = vld [vmem:[%s1 + $0x1c8] sm:$0xf]
  %v130 = vld [vmem:[%s1 + $0x1cc] sm:$0xf]
  %v131 = vld [vmem:[%s1 + $0x1d0] sm:$0xf]
  %v132 = vld [vmem:[%s1 + $0x1d4] sm:$0xf]
  %v133 = vld [vmem:[%s1 + $0x1d8] sm:$0xf]
  %v134 = vld [vmem:[%s1 + $0x1dc] sm:$0xf]
  %v135 = vld [vmem:[%s1 + $0x1e0] sm:$0xf]
  %v136 = vld [vmem:[%s1 + $0x1e4] sm:$0xf]
  %v137 = vld [vmem:[%s1 + $0x1e8] sm:$0xf]
  %v138 = vld [vmem:[%s1 + $0x1ec] sm:$0xf]
  %v139 = vld [vmem:[%s1 + $0x1f0] sm:$0xf]
  %v140 = vld [vmem:[%s1 + $0x1f4] sm:$0xf]
  %v141 = vld [vmem:[%s1 + $0x1f8] sm:$0xf]
  %v142 = vld [vmem:[%s1 + $0x1fc] sm:$0xf]
  %v147 = vunpack.c.l.b16 %v11
  %v148 = vunpack.c.h.b16 %v11
  %v149 = vunpack.c.l.b16 %v12
  %v150 = vunpack.c.h.b16 %v12
  %v151 = vunpack.c.l.b16 %v13
  %v152 = vunpack.c.h.b16 %v13
  %v153 = vunpack.c.l.b16 %v14
  %v154 = vunpack.c.h.b16 %v14
  %v155 = vpack.c.b16 %v147, %v147
  %v156 = vpack.c.b16 %v148, %v148
  %v157 = vpack.c.b16 %v149, %v149
  %v158 = vpack.c.b16 %v150, %v150
  %v159 = vpack.c.b16 %v151, %v151
  %v160 = vpack.c.b16 %v152, %v152
  %v161 = vpack.c.b16 %v153, %v153
  %v162 = vpack.c.b16 %v154, %v154
  %v299 = vunpack.c.l.b16 %v15
  %v300 = vunpack.c.l.b16 %v16
  %v301 = vunpack.c.l.b16 %v17
  %v302 = vunpack.c.l.b16 %v18
  %v303 = vunpack.c.l.b16 %v19
  %v304 = vunpack.c.l.b16 %v20
  %v305 = vunpack.c.l.b16 %v21
  %v306 = vunpack.c.l.b16 %v22
  %v307 = vunpack.c.l.b16 %v23
  %v308 = vunpack.c.l.b16 %v24
  %v309 = vunpack.c.l.b16 %v25
  %v310 = vunpack.c.l.b16 %v26
  %v311 = vunpack.c.l.b16 %v27
  %v312 = vunpack.c.l.b16 %v28
  %v313 = vunpack.c.l.b16 %v29
  %v314 = vunpack.c.l.b16 %v30
  %v315 = vunpack.c.l.b16 %v31
  %v316 = vunpack.c.l.b16 %v32
  %v317 = vunpack.c.l.b16 %v33
  %v318 = vunpack.c.l.b16 %v34
  %v319 = vunpack.c.l.b16 %v35
  %v320 = vunpack.c.l.b16 %v36
  %v321 = vunpack.c.l.b16 %v37
  %v322 = vunpack.c.l.b16 %v38
  %v323 = vunpack.c.l.b16 %v39
  %v324 = vunpack.c.l.b16 %v40
  %v325 = vunpack.c.l.b16 %v41
  %v326 = vunpack.c.l.b16 %v42
  %v327 = vunpack.c.l.b16 %v43
  %v328 = vunpack.c.l.b16 %v44
  %v329 = vunpack.c.l.b16 %v45
  %v330 = vunpack.c.l.b16 %v46
  %v331 = vunpack.c.l.b16 %v47
  %v332 = vunpack.c.l.b16 %v48
  %v333 = vunpack.c.l.b16 %v49
  %v334 = vunpack.c.l.b16 %v50
  %v335 = vunpack.c.l.b16 %v51
  %v336 = vunpack.c.l.b16 %v52
  %v337 = vunpack.c.l.b16 %v53
  %v338 = vunpack.c.l.b16 %v54
  %v339 = vunpack.c.l.b16 %v55
  %v340 = vunpack.c.l.b16 %v56
  %v341 = vunpack.c.l.b16 %v57
  %v342 = vunpack.c.l.b16 %v58
  %v343 = vunpack.c.l.b16 %v59
  %v344 = vunpack.c.l.b16 %v60
  %v345 = vunpack.c.l.b16 %v61
  %v346 = vunpack.c.l.b16 %v62
  %v347 = vunpack.c.l.b16 %v63
  %v348 = vunpack.c.l.b16 %v64
  %v349 = vunpack.c.l.b16 %v65
  %v350 = vunpack.c.l.b16 %v66
  %v351 = vunpack.c.l.b16 %v67
  %v352 = vunpack.c.l.b16 %v68
  %v353 = vunpack.c.l.b16 %v69
  %v354 = vunpack.c.l.b16 %v70
  %v355 = vunpack.c.l.b16 %v71
  %v356 = vunpack.c.l.b16 %v72
  %v357 = vunpack.c.l.b16 %v73
  %v358 = vunpack.c.l.b16 %v74
  %v359 = vunpack.c.l.b16 %v75
  %v360 = vunpack.c.l.b16 %v76
  %v361 = vunpack.c.l.b16 %v77
  %v362 = vunpack.c.l.b16 %v78
  %v363 = vunpack.c.l.b16 %v79
  %v364 = vunpack.c.l.b16 %v80
  %v365 = vunpack.c.l.b16 %v81
  %v366 = vunpack.c.l.b16 %v82
  %v367 = vunpack.c.l.b16 %v83
  %v368 = vunpack.c.l.b16 %v84
  %v369 = vunpack.c.l.b16 %v85
  %v370 = vunpack.c.l.b16 %v86
  %v371 = vunpack.c.l.b16 %v87
  %v372 = vunpack.c.l.b16 %v88
  %v373 = vunpack.c.l.b16 %v89
  %v374 = vunpack.c.l.b16 %v90
  %v375 = vunpack.c.l.b16 %v91
  %v376 = vunpack.c.l.b16 %v92
  %v377 = vunpack.c.l.b16 %v93
  %v378 = vunpack.c.l.b16 %v94
  %v379 = vunpack.c.l.b16 %v95
  %v380 = vunpack.c.l.b16 %v96
  %v381 = vunpack.c.l.b16 %v97
  %v382 = vunpack.c.l.b16 %v98
  %v383 = vunpack.c.l.b16 %v99
  %v384 = vunpack.c.l.b16 %v100
  %v385 = vunpack.c.l.b16 %v101
  %v386 = vunpack.c.l.b16 %v102
  %v387 = vunpack.c.l.b16 %v103
  %v388 = vunpack.c.l.b16 %v104
  %v389 = vunpack.c.l.b16 %v105
  %v390 = vunpack.c.l.b16 %v106
  %v391 = vunpack.c.l.b16 %v107
  %v392 = vunpack.c.l.b16 %v108
  %v393 = vunpack.c.l.b16 %v109
  %v394 = vunpack.c.l.b16 %v110
  %v395 = vunpack.c.l.b16 %v111
  %v396 = vunpack.c.l.b16 %v112
  %v397 = vunpack.c.l.b16 %v113
  %v398 = vunpack.c.l.b16 %v114
  %v399 = vunpack.c.l.b16 %v115
  %v400 = vunpack.c.l.b16 %v116
  %v401 = vunpack.c.l.b16 %v117
  %v402 = vunpack.c.l.b16 %v118
  %v403 = vunpack.c.l.b16 %v119
  %v404 = vunpack.c.l.b16 %v120
  %v405 = vunpack.c.l.b16 %v121
  %v406 = vunpack.c.l.b16 %v122
  %v407 = vunpack.c.l.b16 %v123
  %v408 = vunpack.c.l.b16 %v124
  %v409 = vunpack.c.l.b16 %v125
  %v410 = vunpack.c.l.b16 %v126
  %v411 = vunpack.c.l.b16 %v127
  %v412 = vunpack.c.l.b16 %v128
  %v413 = vunpack.c.l.b16 %v129
  %v414 = vunpack.c.l.b16 %v130
  %v415 = vunpack.c.l.b16 %v131
  %v416 = vunpack.c.l.b16 %v132
  %v417 = vunpack.c.l.b16 %v133
  %v418 = vunpack.c.l.b16 %v134
  %v419 = vunpack.c.l.b16 %v135
  %v420 = vunpack.c.l.b16 %v136
  %v421 = vunpack.c.l.b16 %v137
  %v422 = vunpack.c.l.b16 %v138
  %v423 = vunpack.c.l.b16 %v139
  %v424 = vunpack.c.l.b16 %v140
  %v425 = vunpack.c.l.b16 %v141
  %v426 = vunpack.c.l.b16 %v142
  %v427 = vpack.c.b16 %v300, %v299
  %v428 = vpack.c.b16 %v302, %v301
  %v429 = vpack.c.b16 %v304, %v303
  %v430 = vpack.c.b16 %v306, %v305
  %v431 = vpack.c.b16 %v308, %v307
  %v432 = vpack.c.b16 %v310, %v309
  %v433 = vpack.c.b16 %v312, %v311
  %v434 = vpack.c.b16 %v314, %v313
  %v435 = vpack.c.b16 %v316, %v315
  %v436 = vpack.c.b16 %v318, %v317
  %v437 = vpack.c.b16 %v320, %v319
  %v438 = vpack.c.b16 %v322, %v321
  %v439 = vpack.c.b16 %v324, %v323
  %v440 = vpack.c.b16 %v326, %v325
  %v441 = vpack.c.b16 %v328, %v327
  %v442 = vpack.c.b16 %v330, %v329
  %v443 = vpack.c.b16 %v332, %v331
  %v444 = vpack.c.b16 %v334, %v333
  %v445 = vpack.c.b16 %v336, %v335
  %v446 = vpack.c.b16 %v338, %v337
  %v447 = vpack.c.b16 %v340, %v339
  %v448 = vpack.c.b16 %v342, %v341
  %v449 = vpack.c.b16 %v344, %v343
  %v450 = vpack.c.b16 %v346, %v345
  %v451 = vpack.c.b16 %v348, %v347
  %v452 = vpack.c.b16 %v350, %v349
  %v453 = vpack.c.b16 %v352, %v351
  %v454 = vpack.c.b16 %v354, %v353
  %v455 = vpack.c.b16 %v356, %v355
  %v456 = vpack.c.b16 %v358, %v357
  %v457 = vpack.c.b16 %v360, %v359
  %v458 = vpack.c.b16 %v362, %v361
  %v459 = vpack.c.b16 %v364, %v363
  %v460 = vpack.c.b16 %v366, %v365
  %v461 = vpack.c.b16 %v368, %v367
  %v462 = vpack.c.b16 %v370, %v369
  %v463 = vpack.c.b16 %v372, %v371
  %v464 = vpack.c.b16 %v374, %v373
  %v465 = vpack.c.b16 %v376, %v375
  %v466 = vpack.c.b16 %v378, %v377
  %v467 = vpack.c.b16 %v380, %v379
  %v468 = vpack.c.b16 %v382, %v381
  %v469 = vpack.c.b16 %v384, %v383
  %v470 = vpack.c.b16 %v386, %v385
  %v471 = vpack.c.b16 %v388, %v387
  %v472 = vpack.c.b16 %v390, %v389
  %v473 = vpack.c.b16 %v392, %v391
  %v474 = vpack.c.b16 %v394, %v393
  %v475 = vpack.c.b16 %v396, %v395
  %v476 = vpack.c.b16 %v398, %v397
  %v477 = vpack.c.b16 %v400, %v399
  %v478 = vpack.c.b16 %v402, %v401
  %v479 = vpack.c.b16 %v404, %v403
  %v480 = vpack.c.b16 %v406, %v405
  %v481 = vpack.c.b16 %v408, %v407
  %v482 = vpack.c.b16 %v410, %v409
  %v483 = vpack.c.b16 %v412, %v411
  %v484 = vpack.c.b16 %v414, %v413
  %v485 = vpack.c.b16 %v416, %v415
  %v486 = vpack.c.b16 %v418, %v417
  %v487 = vpack.c.b16 %v420, %v419
  %v488 = vpack.c.b16 %v422, %v421
  %v489 = vpack.c.b16 %v424, %v423
  %v490 = vpack.c.b16 %v426, %v425
  %555 = vmatpush.bf16.msra.mxu0 %v434
  %556 = vmatpush.bf16.msra.mxu0 %v433
  %557 = vmatpush.bf16.msra.mxu0 %v432
  %558 = vmatpush.bf16.msra.mxu0 %v431
  %559 = vmatpush.bf16.msra.mxu0 %v430
  %560 = vmatpush.bf16.msra.mxu0 %v429
  %561 = vmatpush.bf16.msra.mxu0 %v428
  %562 = vmatpush.bf16.msra.mxu0 %v427
  %563 = vmatmul.bf16.gmra.mxu0 %v155
  %v564 = vpop.f32.mrf.mxu0
  %v565 = vadd.f32 0.0, %v564
  %v566 = vpop.f32.mrf.mxu0
  %567 = vdwg.mxu0
  %568 = vmatpush.bf16.msra.mxu0 %v442
  %569 = vmatpush.bf16.msra.mxu0 %v441
  %570 = vmatpush.bf16.msra.mxu0 %v440
  %571 = vmatpush.bf16.msra.mxu0 %v439
  %572 = vmatpush.bf16.msra.mxu0 %v438
  %573 = vmatpush.bf16.msra.mxu0 %v437
  %574 = vmatpush.bf16.msra.mxu0 %v436
  %575 = vmatpush.bf16.msra.mxu0 %v435
  %576 = vmatmul.bf16.gmra.mxu0 %v156
  %v577 = vpop.f32.mrf.mxu0
  %v578 = vadd.f32 %v565, %v577
  %v579 = vpop.f32.mrf.mxu0
  %580 = vdwg.mxu0
  %581 = vmatpush.bf16.msra.mxu0 %v450
  %582 = vmatpush.bf16.msra.mxu0 %v449
  %583 = vmatpush.bf16.msra.mxu0 %v448
  %584 = vmatpush.bf16.msra.mxu0 %v447
  %585 = vmatpush.bf16.msra.mxu0 %v446
  %586 = vmatpush.bf16.msra.mxu0 %v445
  %587 = vmatpush.bf16.msra.mxu0 %v444
  %588 = vmatpush.bf16.msra.mxu0 %v443
  %589 = vmatmul.bf16.gmra.mxu0 %v157
  %v590 = vpop.f32.mrf.mxu0
  %v591 = vadd.f32 %v578, %v590
  %v592 = vpop.f32.mrf.mxu0
  %593 = vdwg.mxu0
  %594 = vmatpush.bf16.msra.mxu0 %v458
  %595 = vmatpush.bf16.msra.mxu0 %v457
  %596 = vmatpush.bf16.msra.mxu0 %v456
  %597 = vmatpush.bf16.msra.mxu0 %v455
  %598 = vmatpush.bf16.msra.mxu0 %v454
  %599 = vmatpush.bf16.msra.mxu0 %v453
  %600 = vmatpush.bf16.msra.mxu0 %v452
  %601 = vmatpush.bf16.msra.mxu0 %v451
  %602 = vmatmul.bf16.gmra.mxu0 %v158
  %v603 = vpop.f32.mrf.mxu0
  %v604 = vadd.f32 %v591, %v603
  %v605 = vpop.f32.mrf.mxu0
  %606 = vdwg.mxu0
  %607 = vmatpush.bf16.msra.mxu0 %v466
  %608 = vmatpush.bf16.msra.mxu0 %v465
  %609 = vmatpush.bf16.msra.mxu0 %v464
  %610 = vmatpush.bf16.msra.mxu0 %v463
  %611 = vmatpush.bf16.msra.mxu0 %v462
  %612 = vmatpush.bf16.msra.mxu0 %v461
  %613 = vmatpush.bf16.msra.mxu0 %v460
  %614 = vmatpush.bf16.msra.mxu0 %v459
  %615 = vmatmul.bf16.gmra.mxu0 %v159
  %v616 = vpop.f32.mrf.mxu0
  %v617 = vadd.f32 %v604, %v616
  %v618 = vpop.f32.mrf.mxu0
  %619 = vdwg.mxu0
  %620 = vmatpush.bf16.msra.mxu0 %v474
  %621 = vmatpush.bf16.msra.mxu0 %v473
  %622 = vmatpush.bf16.msra.mxu0 %v472
  %623 = vmatpush.bf16.msra.mxu0 %v471
  %624 = vmatpush.bf16.msra.mxu0 %v470
  %625 = vmatpush.bf16.msra.mxu0 %v469
  %626 = vmatpush.bf16.msra.mxu0 %v468
  %627 = vmatpush.bf16.msra.mxu0 %v467
  %628 = vmatmul.bf16.gmra.mxu0 %v160
  %v629 = vpop.f32.mrf.mxu0
  %v630 = vadd.f32 %v617, %v629
  %v631 = vpop.f32.mrf.mxu0
  %632 = vdwg.mxu0
  %633 = vmatpush.bf16.msra.mxu0 %v482
  %634 = vmatpush.bf16.msra.mxu0 %v481
  %635 = vmatpush.bf16.msra.mxu0 %v480
  %636 = vmatpush.bf16.msra.mxu0 %v479
  %637 = vmatpush.bf16.msra.mxu0 %v478
  %638 = vmatpush.bf16.msra.mxu0 %v477
  %639 = vmatpush.bf16.msra.mxu0 %v476
  %640 = vmatpush.bf16.msra.mxu0 %v475
  %641 = vmatmul.bf16.gmra.mxu0 %v161
  %v642 = vpop.f32.mrf.mxu0
  %v643 = vadd.f32 %v630, %v642
  %v644 = vpop.f32.mrf.mxu0
  %645 = vdwg.mxu0
  %646 = vmatpush.bf16.msra.mxu0 %v490
  %647 = vmatpush.bf16.msra.mxu0 %v489
  %648 = vmatpush.bf16.msra.mxu0 %v488
  %649 = vmatpush.bf16.msra.mxu0 %v487
  %650 = vmatpush.bf16.msra.mxu0 %v486
  %651 = vmatpush.bf16.msra.mxu0 %v485
  %652 = vmatpush.bf16.msra.mxu0 %v484
  %653 = vmatpush.bf16.msra.mxu0 %v483
  %654 = vmatmul.bf16.gmra.mxu0 %v162
  %v655 = vpop.f32.mrf.mxu0
  %v656 = vadd.f32 %v643, %v655
  %v657 = vpop.f32.mrf.mxu0
  %658 = vdwg.mxu0
  %v659 = vsub.f32 0.0, %v656
  %v660 = vmul.f32 %v659, 1.442695
  %v661 = vpow.pop %v660
  %v662 = vadd.f32 %v661, 1.0
  %v663 = vrcp.pop %v662
  %v664 = vmul.f32 %v662, %v663
  %v665 = vsub.f32 1.0, %v664
  %v666 = vmul.f32 %v663, %v665
  %v667 = vadd.f32 %v663, %v666
  %vm668 = vweird.f32 %v662
  %vm669 = vweird.f32 %v663
  %vm670 = vmor %vm668, %vm669
  %v671 = vsel %vm670, %v663, %v667
  %v672 = vand.u32 2147483647, %v662
  %vm673 = vcmp.eq.f32.partialorder %v672, 8.507059e+37
  %v674 = vand.u32 %v662, 2147483648
  %v675 = vor.u32 1.1754944e-38, %v674
  %v676 = vsel %vm673, %v675, %v671
  %v677 = vmul.f32 1.0, %v676
  %678 = vst [vmem:[%s2] sm:$0xff] %v677
  // Predicated region
  $region10: #{discriminator_forward.15} parent=0 // pred_check
    _
  $region11: #{discriminator_forward.15} parent=0 // pred_check_branch
    %680 = sbr.rel (0) target = $region13
  $region12: #{discriminator_forward.15} parent=0 // pred_region
    _
  $region13: #{discriminator_forward.15} parent=0 // pred_fallthru
    _
  // Predicated region
  $region14: #{discriminator_forward.15} parent=0 // pred_check
    _
  $region15: #{discriminator_forward.15} parent=0 // pred_check_branch
    %682 = sbr.rel (0) target = $region17
  $region16: #{discriminator_forward.15} parent=0 // pred_region
    _
  $region17: #{discriminator_forward.15} parent=0 // pred_fallthru
    _

</llo_original>
